<compile_context>
chip_gen: v7x
topology: tpu7x:2x2x1
jax: 0.10.0
libtpu: 0.0.40
codegen_flags: <defaults>
</compile_context>

<pallas_src>
import functools

import jax
import jax.numpy as jnp
from jax.experimental import pallas as pl
from jax.experimental.pallas import tpu as pltpu

_LN_EPS = 1e-5
_SQRT1_2 = 0.7071067811865476


# ------------------------------- small helpers ------------------------------ #

def _compiler_params(dims):
    cp_cls = getattr(pltpu, "CompilerParams", None) or getattr(pltpu, "TPUCompilerParams", None)
    if cp_cls is None:
        return None
    return cp_cls(dimension_semantics=tuple(dims))


def _pick_tile(dim, preferred, align):
    """Largest multiple of `align` that divides `dim` and is <= preferred.
    Falls back to the full dim (block == array extent is always legal)."""
    t = min(preferred, dim)
    t -= t % align
    while t >= align:
        if dim % t == 0:
            return t
        t -= align
    return dim


def _erf(x):
    # Abramowitz & Stegun 7.1.26 rational approximation (|err| < 1.5e-7, below
    # bf16 resolution).  Uses only exp/mul/add/select so it lowers on the
    # VPU/EUP without relying on a lax.erf Mosaic lowering.
    p = 0.3275911
    a1, a2, a3, a4, a5 = (0.254829592, -0.284496736, 1.421413741,
                          -1.453152027, 1.061405429)
    sign = jnp.where(x >= 0.0, 1.0, -1.0)
    ax = jnp.abs(x)
    t = 1.0 / (1.0 + p * ax)
    poly = ((((a5 * t + a4) * t + a3) * t + a2) * t + a1) * t
    return sign * (1.0 - poly * jnp.exp(-ax * ax))


def _gelu_exact(x):
    # nn.GELU() default (erf-based) GELU.
    return 0.5 * x * (1.0 + _erf(x * _SQRT1_2))


def _layernorm_f32(x, g, b):
    mu = jnp.mean(x, axis=-1, keepdims=True)
    var = jnp.mean(jnp.square(x - mu), axis=-1, keepdims=True)
    return (x - mu) * jax.lax.rsqrt(var + _LN_EPS) * g + b


def _softmax_rows_f32(logits):
    m = jnp.max(logits, axis=-1, keepdims=True)
    e = jnp.exp(logits - m)
    s = jnp.sum(e, axis=-1, keepdims=True)
    if hasattr(pl, "reciprocal"):
        return e * pl.reciprocal(s, approx=True)
    return e / s


# --------------------------------- kernels ---------------------------------- #

def _linear_kernel(*refs, ln, has_bias, has_residual, transpose_rhs):
    """[LN](x_tile) @ W_tile (+ bias) (+ residual) -> out_tile."""
    it = iter(refs)
    x_ref = next(it)
    if ln:
        g_ref, bln_ref = next(it), next(it)
    w_ref = next(it)
    b_ref = next(it) if has_bias else None
    r_ref = next(it) if has_residual else None
    o_ref = next(it)

    if ln:
        xn = _layernorm_f32(x_ref[...].astype(jnp.float32), g_ref[...], bln_ref[...])
        xm = xn.astype(w_ref.dtype)
    else:
        xm = x_ref[...].astype(w_ref.dtype)

    if transpose_rhs:
        # w block is (tn, K): contract last dims of both (no host-side W.T).
        acc = jax.lax.dot_general(xm, w_ref[...], (((1,), (1,)), ((), ())),
                                  preferred_element_type=jnp.float32)
    else:
        acc = jnp.dot(xm, w_ref[...], preferred_element_type=jnp.float32)

    if has_bias:
        acc = acc + b_ref[...]
    if has_residual:
        acc = acc + r_ref[...].astype(jnp.float32)
    o_ref[...] = acc.astype(o_ref.dtype)


def _mlp_kernel(x_ref, g_ref, b_ref, w1_ref, b1_ref, w2_ref, b2_ref, o_ref, acc_ref):
    """Fused LN -> w1 -> GELU -> w2 (+bias) (+residual); hidden axis is the
    reduction ("arbitrary") grid axis with an f32 VMEM accumulator."""
    j = pl.program_id(1)

    @pl.when(j == 0)
    def _init():
        acc_ref[...] = jnp.zeros_like(acc_ref)

    x = x_ref[...].astype(jnp.float32)                      # pre-LN residual input
    xn = _layernorm_f32(x, g_ref[...], b_ref[...]).astype(w1_ref.dtype)
    h = jnp.dot(xn, w1_ref[...], preferred_element_type=jnp.float32) + b1_ref[...]
    h = _gelu_exact(h).astype(w2_ref.dtype)
    acc_ref[...] += jnp.dot(h, w2_ref[...], preferred_element_type=jnp.float32)

    @pl.when(j == pl.num_programs(1) - 1)
    def _finalize():
        o_ref[...] = (acc_ref[...] + b2_ref[...] + x).astype(o_ref.dtype)


def _attention_kernel(q_ref, k_ref, v_ref, *rest, n_head, scale, has_mask):
    """Multi-head attention for one batch element; lane-dense (Tq, D) output."""
    if has_mask:
        mask_ref, o_ref = rest
    else:
        (o_ref,) = rest

    # scale applied once to q (net Dh**-0.5 == reference's Dh**-0.25 on q and k)
    q = (q_ref[0].astype(jnp.float32) * scale).astype(k_ref.dtype)  # (Tq, D)
    k = k_ref[0]                                                    # (S, D)
    v = v_ref[0]                                                    # (S, D)
    dh = q.shape[-1] // n_head

    heads = []
    for h in range(n_head):                       # static unroll over heads
        qh = q[:, h * dh:(h + 1) * dh]
        kh = k[:, h * dh:(h + 1) * dh]
        vh = v[:, h * dh:(h + 1) * dh]
        qk = jax.lax.dot_general(qh, kh, (((1,), (1,)), ((), ())),
                                 preferred_element_type=jnp.float32)  # (Tq, S)
        if has_mask:
            qk = qk + mask_ref[...]               # f32 mask add (handles -inf)
        p = _softmax_rows_f32(qk)                 # f32 stats
        heads.append(jnp.dot(p.astype(vh.dtype), vh,
                             preferred_element_type=jnp.float32))
    # One lane-dense (Tq, D) store; no post-kernel head transpose needed.
    o_ref[0] = jnp.concatenate(heads, axis=-1).astype(o_ref.dtype)


# --------------------------------- wrappers --------------------------------- #

def linear(x2d, w, bias=None, *, ln=None, residual=None, transpose_rhs=False,
           out_dtype=None, tm_pref=256, tn_pref=256):
    """y = [LN](x2d) @ W (+ bias) (+ residual), tiled over (rows, out-features).

    x2d: (M, K) bf16.  w: (K, N), or (N, K) if transpose_rhs.  bias: (1, N) f32.
    ln: optional (gamma, beta) each (1, K) f32 -> LayerNorm fused as prologue.
    residual: optional (M, N) tensor added in the epilogue.
    """
    M, K = x2d.shape
    N = w.shape[0] if transpose_rhs else w.shape[1]
    out_dtype = x2d.dtype if out_dtype is None else out_dtype
    tm = _pick_tile(M, tm_pref, 8)
    tn = _pick_tile(N, tn_pref, 128)
    grid = (M // tm, N // tn)

    in_specs = [pl.BlockSpec((tm, K), lambda i, j: (i, 0))]
    args = [x2d]
    if ln is not None:
        g, b_ln = ln
        in_specs += [pl.BlockSpec((1, K), lambda i, j: (0, 0)),
                     pl.BlockSpec((1, K), lambda i, j: (0, 0))]
        args += [jnp.asarray(g, jnp.float32).reshape(1, K),
                 jnp.asarray(b_ln, jnp.float32).reshape(1, K)]
    if transpose_rhs:
        in_specs.append(pl.BlockSpec((tn, K), lambda i, j: (j, 0)))
    else:
        in_specs.append(pl.BlockSpec((K, tn), lambda i, j: (0, j)))
    args.append(w)
    if bias is not None:
        in_specs.append(pl.BlockSpec((1, tn), lambda i, j: (0, j)))
        args.append(jnp.asarray(bias, jnp.float32).reshape(1, N))
    if residual is not None:
        in_specs.append(pl.BlockSpec((tm, tn), lambda i, j: (i, j)))
        args.append(residual)

    kernel = functools.partial(_linear_kernel, ln=ln is not None,
                               has_bias=bias is not None,
                               has_residual=residual is not None,
                               transpose_rhs=transpose_rhs)
    return pl.pallas_call(
        kernel,
        out_shape=jax.ShapeDtypeStruct((M, N), out_dtype),
        grid=grid,
        in_specs=in_specs,
        out_specs=pl.BlockSpec((tm, tn), lambda i, j: (i, j)),
        compiler_params=_compiler_params(("parallel", "parallel")),
    )(*args)


def fused_mlp(x2d, p, *, tm_pref=256, th_pref=512):
    """LN -> w1 -> GELU -> w2 (+b2) (+residual) in one pallas_call."""
    M, D = x2d.shape
    H = p["mlp_w1"].shape[1]
    tm = _pick_tile(M, tm_pref, 8)
    th = _pick_tile(H, th_pref, 128)
    return pl.pallas_call(
        _mlp_kernel,
        out_shape=jax.ShapeDtypeStruct((M, D), x2d.dtype),
        grid=(M // tm, H // th),
        in_specs=[
            pl.BlockSpec((tm, D), lambda i, j: (i, 0)),   # x (also the residual)
            pl.BlockSpec((1, D), lambda i, j: (0, 0)),    # ln gamma
            pl.BlockSpec((1, D), lambda i, j: (0, 0)),    # ln beta
            pl.BlockSpec((D, th), lambda i, j: (0, j)),   # w1 column tile
            pl.BlockSpec((1, th), lambda i, j: (0, j)),   # b1 tile
            pl.BlockSpec((th, D), lambda i, j: (j, 0)),   # w2 row tile
            pl.BlockSpec((1, D), lambda i, j: (0, 0)),    # b2
        ],
        out_specs=pl.BlockSpec((tm, D), lambda i, j: (i, 0)),
        scratch_shapes=[pltpu.VMEM((tm, D), jnp.float32)],
        compiler_params=_compiler_params(("parallel", "arbitrary")),
    )(x2d, p["mlp_ln_g"], p["mlp_ln_b"], p["mlp_w1"], p["mlp_b1"],
      p["mlp_w2"], p["mlp_b2"])


def attention(q_arr, k_arr, v_arr, n_head, n_state, mask=None,
              q_blk=0, k_blk=0, v_blk=0):
    """Multi-head attention on per-batch tiles.

    q_arr/k_arr/v_arr are (B, T, c*n_state) slabs; *_blk selects which
    n_state-wide column block holds the projection, so the fused QKV / KV
    matmul outputs feed this kernel directly with no HBM relayouts.
    """
    # TODO(synk): flash-style (Tq, S) tiling with online softmax for very long
    # cross-attention contexts; whole-S per-batch tiles are fine at these sizes.
    B, Tq = q_arr.shape[0], q_arr.shape[1]
    S = k_arr.shape[1]
    scale = float(n_state // n_head) ** -0.5
    in_specs = [
        pl.BlockSpec((1, Tq, n_state), lambda b: (b, 0, q_blk)),
        pl.BlockSpec((1, S, n_state), lambda b: (b, 0, k_blk)),
        pl.BlockSpec((1, S, n_state), lambda b: (b, 0, v_blk)),
    ]
    args = [q_arr, k_arr, v_arr]
    if mask is not None:
        in_specs.append(pl.BlockSpec((Tq, S), lambda b: (0, 0)))
        args.append(jnp.asarray(mask, jnp.float32))
    kernel = functools.partial(_attention_kernel, n_head=n_head, scale=scale,
                               has_mask=mask is not None)
    return pl.pallas_call(
        kernel,
        out_shape=jax.ShapeDtypeStruct((B, Tq, n_state), q_arr.dtype),
        grid=(B,),
        in_specs=in_specs,
        out_specs=pl.BlockSpec((1, Tq, n_state), lambda b: (b, 0, 0)),
        compiler_params=_compiler_params(("parallel",)),
    )(*args)


# ----------------------------- model forward glue --------------------------- #

def residual_block(x2d, xa2d, p, n_head, n_state, mask, B, T, S):
    """ResidualAttentionBlock.forward with cross_attention=True (kv_cache=None)."""
    # self-attention: LN fused into the fused-QKV projection; out-proj folds residual
    qkv = linear(x2d, p["attn"]["w_qkv"], p["attn"]["b_qkv"],
                 ln=(p["attn_ln_g"], p["attn_ln_b"]))
    qkv = qkv.reshape(B, T, 3 * n_state)
    sa = attention(qkv, qkv, qkv, n_head, n_state, mask=mask,
                   q_blk=0, k_blk=1, v_blk=2)
    x2d = linear(sa.reshape(B * T, n_state), p["attn"]["wo"], p["attn"]["bo"],
                 residual=x2d)

    # cross-attention: LN fused into the Q projection; K/V fused on xa
    q = linear(x2d, p["cross"]["wq"], p["cross"]["bq"],
               ln=(p["cross_ln_g"], p["cross_ln_b"]))
    kv = linear(xa2d, p["cross"]["w_kv"], p["cross"]["b_kv"])
    kv3 = kv.reshape(B, S, 2 * n_state)
    ca = attention(q.reshape(B, T, n_state), kv3, kv3, n_head, n_state,
                   mask=None, q_blk=0, k_blk=0, v_blk=1)
    x2d = linear(ca.reshape(B * T, n_state), p["cross"]["wo"], p["cross"]["bo"],
                 residual=x2d)

    # MLP: LN -> w1 -> GELU -> w2 -> +residual in a single fused kernel
    return fused_mlp(x2d, p)


def text_decoder_forward(tokens, xa, params, n_head):
    """TextDecoder.forward with kv_cache=None (offset=0)."""
    # TODO(synk): kv_cache path (dict keyed by nn.Module objects) not modeled.
    B, T = tokens.shape
    n_state = params["pos_emb"].shape[-1]
    cdt = params["tok_emb"].dtype                                 # bf16 compute dtype
    # embedding gather + positional add: plain-JAX glue
    x = (params["tok_emb"][tokens] + params["pos_emb"][:T]).astype(cdt)
    xa = xa.astype(cdt)
    S = xa.shape[1]
    mask = params["mask"][:T, :T]

    x2d = x.reshape(B * T, n_state)
    xa2d = xa.reshape(B * S, n_state)
    for p in params["blocks"]:
        x2d = residual_block(x2d, xa2d, p, n_head, n_state, mask, B, T, S)

    # final LN fused into the vocab-tiled logits matmul against the (V, D)
    # embedding (contracted on D in-kernel; no host-side emb.T copy).
    logits = linear(x2d, params["tok_emb"], None,
                    ln=(params["ln_g"], params["ln_b"]),
                    transpose_rhs=True, out_dtype=jnp.float32, tn_pref=512)
    return logits.reshape(B, T, -1)


# --------------------------------- param init -------------------------------- #

def _init_mha_self(key, n_state, dt):
    ks = jax.random.split(key, 7)
    s = 0.02
    wq = jax.random.normal(ks[0], (n_state, n_state), jnp.float32) * s
    wk = jax.random.normal(ks[1], (n_state, n_state), jnp.float32) * s
    wv = jax.random.normal(ks[2], (n_state, n_state), jnp.float32) * s
    bq = jax.random.normal(ks[3], (n_state,), jnp.float32) * s
    bv = jax.random.normal(ks[4], (n_state,), jnp.float32) * s
    wo = jax.random.normal(ks[5], (n_state, n_state), jnp.float32) * s
    bo = jax.random.normal(ks[6], (n_state,), jnp.float32) * s
    return {
        "w_qkv": jnp.concatenate([wq, wk, wv], axis=1).astype(dt),
        # key projection has no bias in the reference -> zero slice
        "b_qkv": jnp.concatenate([bq, jnp.zeros_like(bq), bv]).reshape(1, 3 * n_state),
        "wo": wo.astype(dt),
        "bo": bo.reshape(1, n_state),
    }


def _init_mha_cross(key, n_state, dt):
    ks = jax.random.split(key, 7)
    s = 0.02
    wq = jax.random.normal(ks[0], (n_state, n_state), jnp.float32) * s
    wk = jax.random.normal(ks[1], (n_state, n_state), jnp.float32) * s
    wv = jax.random.normal(ks[2], (n_state, n_state), jnp.float32) * s
    bq = jax.random.normal(ks[3], (n_state,), jnp.float32) * s
    bv = jax.random.normal(ks[4], (n_state,), jnp.float32) * s
    wo = jax.random.normal(ks[5], (n_state, n_state), jnp.float32) * s
    bo = jax.random.normal(ks[6], (n_state,), jnp.float32) * s
    return {
        "wq": wq.astype(dt),
        "bq": bq.reshape(1, n_state),
        "w_kv": jnp.concatenate([wk, wv], axis=1).astype(dt),
        "b_kv": jnp.concatenate([jnp.zeros_like(bq), bv]).reshape(1, 2 * n_state),
        "wo": wo.astype(dt),
        "bo": bo.reshape(1, n_state),
    }


def _init_block(key, n_state, dt):
    n_mlp = 4 * n_state
    ks = jax.random.split(key, 6)
    s = 0.02
    return {
        "attn": _init_mha_self(ks[0], n_state, dt),
        "attn_ln_g": jnp.ones((1, n_state), jnp.float32),
        "attn_ln_b": jnp.zeros((1, n_state), jnp.float32),
        "cross": _init_mha_cross(ks[1], n_state, dt),
        "cross_ln_g": jnp.ones((1, n_state), jnp.float32),
        "cross_ln_b": jnp.zeros((1, n_state), jnp.float32),
        "mlp_w1": (jax.random.normal(ks[2], (n_state, n_mlp), jnp.float32) * s).astype(dt),
        "mlp_b1": (jax.random.normal(ks[3], (n_mlp,), jnp.float32) * s).reshape(1, n_mlp),
        "mlp_w2": (jax.random.normal(ks[4], (n_mlp, n_state), jnp.float32) * s).astype(dt),
        "mlp_b2": (jax.random.normal(ks[5], (n_state,), jnp.float32) * s).reshape(1, n_state),
        "mlp_ln_g": jnp.ones((1, n_state), jnp.float32),
        "mlp_ln_b": jnp.zeros((1, n_state), jnp.float32),
    }


def init_text_decoder(key, n_vocab, n_ctx, n_state, n_layer, dtype=jnp.bfloat16):
    ks = jax.random.split(key, n_layer + 2)
    s = 0.02
    return {
        "tok_emb": (jax.random.normal(ks[0], (n_vocab, n_state), jnp.float32) * s).astype(dtype),
        "pos_emb": (jax.random.normal(ks[1], (n_ctx, n_state), jnp.float32) * s).astype(dtype),
        "blocks": [_init_block(ks[2 + i], n_state, dtype) for i in range(n_layer)],
        "ln_g": jnp.ones((1, n_state), jnp.float32),
        "ln_b": jnp.zeros((1, n_state), jnp.float32),
        # causal additive mask: -inf strictly above the diagonal
        "mask": jnp.triu(jnp.full((n_ctx, n_ctx), -jnp.inf, jnp.float32), k=1),
    }


# ------------------------------------ main ----------------------------------- #

if __name__ == "__main__":
    # Small but TPU-tile-friendly shapes (multiples of 8 / 128 where it matters).
    n_vocab, n_ctx, n_state, n_head, n_layer = 512, 64, 128, 2, 2
    n_audio_ctx, batch = 128, 2

    key = jax.random.PRNGKey(0)
    k_param, k_tok, k_xa = jax.random.split(key, 3)

    params = init_text_decoder(k_param, n_vocab, n_ctx, n_state, n_layer)
    tokens = jax.random.randint(k_tok, (batch, n_ctx), 0, n_vocab, dtype=jnp.int32)
    xa = jax.random.normal(k_xa, (batch, n_audio_ctx, n_state), jnp.float32)

    fwd = jax.jit(functools.partial(text_decoder_forward, n_head=n_head))
    logits = fwd(tokens, xa, params)
    logits = jax.block_until_ready(logits)

    assert logits.shape == (batch, n_ctx, n_vocab)
    assert logits.dtype == jnp.float32
    assert bool(jnp.all(jnp.isfinite(logits)))
    print("KERNEL_OK")
</pallas_src>

<mosaic_0001>
module attributes {stable_mosaic.version = 11 : i64} {
  func.func @_linear_kernel(%arg0: i32, %arg1: i32, %arg2: memref<128x128xbf16, #tpu.memory_space<vmem>>, %arg3: memref<128x128xbf16, #tpu.memory_space<vmem>>, %arg4: memref<1x128xf32, #tpu.memory_space<vmem>>, %arg5: memref<128x128xbf16, #tpu.memory_space<vmem>>, %arg6: memref<128x128xbf16, #tpu.memory_space<vmem>>) attributes {dimension_semantics = [#tpu.dimension_semantics<parallel>, #tpu.dimension_semantics<parallel>], iteration_bounds = array<i64: 1, 1>, scalar_prefetch = 0 : i64, scratch_operands = 0 : i64, tpu.core_type = #tpu.core_type<tc>, window_params = [{transform_indices = @transform_0, window_bounds = array<i64: 128, 128>}, {transform_indices = @transform_1, window_bounds = array<i64: 128, 128>}, {transform_indices = @transform_2, window_bounds = array<i64: 1, 128>}, {transform_indices = @transform_3, window_bounds = array<i64: 128, 128>}, {transform_indices = @transform_4, window_bounds = array<i64: 128, 128>}]} {
    %c0 = arith.constant 0 : index
    %c0_0 = arith.constant 0 : index
    %0 = vector.load %arg2[%c0, %c0_0] : memref<128x128xbf16, #tpu.memory_space<vmem>>, vector<128x128xbf16>
    %c0_1 = arith.constant 0 : index
    %c0_2 = arith.constant 0 : index
    %1 = vector.load %arg3[%c0_1, %c0_2] : memref<128x128xbf16, #tpu.memory_space<vmem>>, vector<128x128xbf16>
    %cst = arith.constant dense<0.000000e+00> : vector<128x128xf32>
    %2 = tpu.matmul %0, %1, %cst {dimension_numbers = #tpu.dot_dimension_numbers<[1], [0], [0], [1], [0, 0, 1, 1], [], []>} : vector<128x128xbf16>, vector<128x128xbf16>, vector<128x128xf32> -> vector<128x128xf32>
    %c0_3 = arith.constant 0 : index
    %c0_4 = arith.constant 0 : index
    %3 = vector.load %arg4[%c0_3, %c0_4] : memref<1x128xf32, #tpu.memory_space<vmem>>, vector<1x128xf32>
    %4 = vector.broadcast %3 : vector<1x128xf32> to vector<128x128xf32>
    %5 = arith.addf %2, %4 : vector<128x128xf32>
    %c0_5 = arith.constant 0 : index
    %c0_6 = arith.constant 0 : index
    %6 = vector.load %arg5[%c0_5, %c0_6] : memref<128x128xbf16, #tpu.memory_space<vmem>>, vector<128x128xbf16>
    %7 = arith.extf %6 : vector<128x128xbf16> to vector<128x128xf32>
    %8 = arith.addf %5, %7 : vector<128x128xf32>
    %9 = arith.truncf %8 : vector<128x128xf32> to vector<128x128xbf16>
    %c0_7 = arith.constant 0 : index
    %c0_8 = arith.constant 0 : index
    %10 = vector.load %arg6[%c0_7, %c0_8] : memref<128x128xbf16, #tpu.memory_space<vmem>>, vector<128x128xbf16>
    tpu.vector_store %arg6[%c0_7, %c0_8], %9 {strides = array<i32>} : memref<128x128xbf16, #tpu.memory_space<vmem>>, vector<128x128xbf16>,
    return
  }
  func.func @transform_0(%arg0: i32, %arg1: i32) -> (i32, i32) {
    %c0_i32 = arith.constant 0 : i32
    %c0_i32_0 = arith.constant 0 : i32
    return %arg0, %c0_i32 : i32, i32
  }
  func.func @transform_1(%arg0: i32, %arg1: i32) -> (i32, i32) {
    %c0_i32 = arith.constant 0 : i32
    %c0_i32_0 = arith.constant 0 : i32
    return %c0_i32, %arg1 : i32, i32
  }
  func.func @transform_2(%arg0: i32, %arg1: i32) -> (i32, i32) {
    %c0_i32 = arith.constant 0 : i32
    %c0_i32_0 = arith.constant 0 : i32
    return %c0_i32, %arg1 : i32, i32
  }
  func.func @transform_3(%arg0: i32, %arg1: i32) -> (i32, i32) {
    %c0_i32 = arith.constant 0 : i32
    return %arg0, %arg1 : i32, i32
  }
  func.func @transform_4(%arg0: i32, %arg1: i32) -> (i32, i32) {
    %c0_i32 = arith.constant 0 : i32
    return %arg0, %arg1 : i32, i32
  }
}

module attributes {stable_mosaic.version = 11 : i64} {
  func.func @_linear_kernel(%arg0: i32, %arg1: i32, %arg2: memref<128x128xbf16, #tpu.memory_space<vmem>>, %arg3: memref<1x128xf32, #tpu.memory_space<vmem>>, %arg4: memref<1x128xf32, #tpu.memory_space<vmem>>, %arg5: memref<128x128xbf16, #tpu.memory_space<vmem>>, %arg6: memref<1x128xf32, #tpu.memory_space<vmem>>, %arg7: memref<128x128xbf16, #tpu.memory_space<vmem>>) attributes {dimension_semantics = [#tpu.dimension_semantics<parallel>, #tpu.dimension_semantics<parallel>], iteration_bounds = array<i64: 1, 3>, scalar_prefetch = 0 : i64, scratch_operands = 0 : i64, tpu.core_type = #tpu.core_type<tc>, window_params = [{transform_indices = @transform_0, window_bounds = array<i64: 128, 128>}, {pipeline_mode = #tpu.pipeline_mode<synchronous>, transform_indices = @transform_1, window_bounds = array<i64: 1, 128>}, {pipeline_mode = #tpu.pipeline_mode<synchronous>, transform_indices = @transform_2, window_bounds = array<i64: 1, 128>}, {transform_indices = @transform_3, window_bounds = array<i64: 128, 128>}, {transform_indices = @transform_4, window_bounds = array<i64: 1, 128>}, {transform_indices = @transform_5, window_bounds = array<i64: 128, 128>}]} {
    %c0 = arith.constant 0 : index
    %c0_0 = arith.constant 0 : index
    %0 = vector.load %arg2[%c0, %c0_0] : memref<128x128xbf16, #tpu.memory_space<vmem>>, vector<128x128xbf16>
    %1 = arith.extf %0 : vector<128x128xbf16> to vector<128x128xf32>
    %c0_1 = arith.constant 0 : index
    %c0_2 = arith.constant 0 : index
    %2 = vector.load %arg3[%c0_1, %c0_2] : memref<1x128xf32, #tpu.memory_space<vmem>>, vector<1x128xf32>
    %c0_3 = arith.constant 0 : index
    %c0_4 = arith.constant 0 : index
    %3 = vector.load %arg4[%c0_3, %c0_4] : memref<1x128xf32, #tpu.memory_space<vmem>>, vector<1x128xf32>
    %cst = arith.constant dense<0.000000e+00> : vector<128xf32>
    %4 = vector.multi_reduction <add>, %1, %cst [1] : vector<128x128xf32> to vector<128xf32>
    %5 = vector.shape_cast %4 : vector<128xf32> to vector<128x1xf32>
    %cst_5 = arith.constant 1.280000e+02 : f32
    %6 = vector.broadcast %cst_5 : f32 to vector<128x1xf32>
    %7 = arith.divf %5, %6 : vector<128x1xf32>
    %8 = vector.broadcast %7 : vector<128x1xf32> to vector<128x128xf32>
    %9 = arith.subf %1, %8 : vector<128x128xf32>
    %10 = arith.mulf %9, %9 : vector<128x128xf32>
    %cst_6 = arith.constant dense<0.000000e+00> : vector<128xf32>
    %11 = vector.multi_reduction <add>, %10, %cst_6 [1] : vector<128x128xf32> to vector<128xf32>
    %12 = vector.shape_cast %11 : vector<128xf32> to vector<128x1xf32>
    %cst_7 = arith.constant 1.280000e+02 : f32
    %13 = vector.broadcast %cst_7 : f32 to vector<128x1xf32>
    %14 = arith.divf %12, %13 : vector<128x1xf32>
    %15 = vector.broadcast %7 : vector<128x1xf32> to vector<128x128xf32>
    %16 = arith.subf %1, %15 : vector<128x128xf32>
    %cst_8 = arith.constant 9.99999974E-6 : f32
    %17 = vector.broadcast %cst_8 : f32 to vector<128x1xf32>
    %18 = arith.addf %14, %17 : vector<128x1xf32>
    %19 = math.rsqrt %18 : vector<128x1xf32>
    %20 = vector.broadcast %19 : vector<128x1xf32> to vector<128x128xf32>
    %21 = arith.mulf %16, %20 : vector<128x128xf32>
    %22 = vector.broadcast %2 : vector<1x128xf32> to vector<128x128xf32>
    %23 = arith.mulf %21, %22 : vector<128x128xf32>
    %24 = vector.broadcast %3 : vector<1x128xf32> to vector<128x128xf32>
    %25 = arith.addf %23, %24 : vector<128x128xf32>
    %26 = arith.truncf %25 : vector<128x128xf32> to vector<128x128xbf16>
    %c0_9 = arith.constant 0 : index
    %c0_10 = arith.constant 0 : index
    %27 = vector.load %arg5[%c0_9, %c0_10] : memref<128x128xbf16, #tpu.memory_space<vmem>>, vector<128x128xbf16>
    %cst_11 = arith.constant dense<0.000000e+00> : vector<128x128xf32>
    %28 = tpu.matmul %26, %27, %cst_11 {dimension_numbers = #tpu.dot_dimension_numbers<[1], [0], [0], [1], [0, 0, 1, 1], [], []>} : vector<128x128xbf16>, vector<128x128xbf16>, vector<128x128xf32> -> vector<128x128xf32>
    %c0_12 = arith.constant 0 : index
    %c0_13 = arith.constant 0 : index
    %29 = vector.load %arg6[%c0_12, %c0_13] : memref<1x128xf32, #tpu.memory_space<vmem>>, vector<1x128xf32>
    %30 = vector.broadcast %29 : vector<1x128xf32> to vector<128x128xf32>
    %31 = arith.addf %28, %30 : vector<128x128xf32>
    %32 = arith.truncf %31 : vector<128x128xf32> to vector<128x128xbf16>
    %c0_14 = arith.constant 0 : index
    %c0_15 = arith.constant 0 : index
    %33 = vector.load %arg7[%c0_14, %c0_15] : memref<128x128xbf16, #tpu.memory_space<vmem>>, vector<128x128xbf16>
    tpu.vector_store %arg7[%c0_14, %c0_15], %32 {strides = array<i32>} : memref<128x128xbf16, #tpu.memory_space<vmem>>, vector<128x128xbf16>,
    return
  }
  func.func @transform_0(%arg0: i32, %arg1: i32) -> (i32, i32) {
    %c0_i32 = arith.constant 0 : i32
    %c0_i32_0 = arith.constant 0 : i32
    return %arg0, %c0_i32 : i32, i32
  }
  func.func @transform_1(%arg0: i32, %arg1: i32) -> (i32, i32) {
    %c0_i32 = arith.constant 0 : i32
    %c0_i32_0 = arith.constant 0 : i32
    %c0_i32_1 = arith.constant 0 : i32
    return %c0_i32, %c0_i32_0 : i32, i32
  }
  func.func @transform_2(%arg0: i32, %arg1: i32) -> (i32, i32) {
    %c0_i32 = arith.constant 0 : i32
    %c0_i32_0 = arith.constant 0 : i32
    %c0_i32_1 = arith.constant 0 : i32
    return %c0_i32, %c0_i32_0 : i32, i32
  }
  func.func @transform_3(%arg0: i32, %arg1: i32) -> (i32, i32) {
    %c0_i32 = arith.constant 0 : i32
    %c0_i32_0 = arith.constant 0 : i32
    return %c0_i32, %arg1 : i32, i32
  }
  func.func @transform_4(%arg0: i32, %arg1: i32) -> (i32, i32) {
    %c0_i32 = arith.constant 0 : i32
    %c0_i32_0 = arith.constant 0 : i32
    return %c0_i32, %arg1 : i32, i32
  }
  func.func @transform_5(%arg0: i32, %arg1: i32) -> (i32, i32) {
    %c0_i32 = arith.constant 0 : i32
    return %arg0, %arg1 : i32, i32
  }
}

module attributes {stable_mosaic.version = 11 : i64} {
  func.func @_linear_kernel(%arg0: i32, %arg1: i32, %arg2: memref<128x128xbf16, #tpu.memory_space<vmem>>, %arg3: memref<1x128xf32, #tpu.memory_space<vmem>>, %arg4: memref<1x128xf32, #tpu.memory_space<vmem>>, %arg5: memref<128x128xbf16, #tpu.memory_space<vmem>>, %arg6: memref<1x128xf32, #tpu.memory_space<vmem>>, %arg7: memref<128x128xbf16, #tpu.memory_space<vmem>>) attributes {dimension_semantics = [#tpu.dimension_semantics<parallel>, #tpu.dimension_semantics<parallel>], iteration_bounds = array<i64: 1, 1>, scalar_prefetch = 0 : i64, scratch_operands = 0 : i64, tpu.core_type = #tpu.core_type<tc>, window_params = [{transform_indices = @transform_0, window_bounds = array<i64: 128, 128>}, {pipeline_mode = #tpu.pipeline_mode<synchronous>, transform_indices = @transform_1, window_bounds = array<i64: 1, 128>}, {pipeline_mode = #tpu.pipeline_mode<synchronous>, transform_indices = @transform_2, window_bounds = array<i64: 1, 128>}, {transform_indices = @transform_3, window_bounds = array<i64: 128, 128>}, {transform_indices = @transform_4, window_bounds = array<i64: 1, 128>}, {transform_indices = @transform_5, window_bounds = array<i64: 128, 128>}]} {
    %c0 = arith.constant 0 : index
    %c0_0 = arith.constant 0 : index
    %0 = vector.load %arg2[%c0, %c0_0] : memref<128x128xbf16, #tpu.memory_space<vmem>>, vector<128x128xbf16>
    %1 = arith.extf %0 : vector<128x128xbf16> to vector<128x128xf32>
    %c0_1 = arith.constant 0 : index
    %c0_2 = arith.constant 0 : index
    %2 = vector.load %arg3[%c0_1, %c0_2] : memref<1x128xf32, #tpu.memory_space<vmem>>, vector<1x128xf32>
    %c0_3 = arith.constant 0 : index
    %c0_4 = arith.constant 0 : index
    %3 = vector.load %arg4[%c0_3, %c0_4] : memref<1x128xf32, #tpu.memory_space<vmem>>, vector<1x128xf32>
    %cst = arith.constant dense<0.000000e+00> : vector<128xf32>
    %4 = vector.multi_reduction <add>, %1, %cst [1] : vector<128x128xf32> to vector<128xf32>
    %5 = vector.shape_cast %4 : vector<128xf32> to vector<128x1xf32>
    %cst_5 = arith.constant 1.280000e+02 : f32
    %6 = vector.broadcast %cst_5 : f32 to vector<128x1xf32>
    %7 = arith.divf %5, %6 : vector<128x1xf32>
    %8 = vector.broadcast %7 : vector<128x1xf32> to vector<128x128xf32>
    %9 = arith.subf %1, %8 : vector<128x128xf32>
    %10 = arith.mulf %9, %9 : vector<128x128xf32>
    %cst_6 = arith.constant dense<0.000000e+00> : vector<128xf32>
    %11 = vector.multi_reduction <add>, %10, %cst_6 [1] : vector<128x128xf32> to vector<128xf32>
    %12 = vector.shape_cast %11 : vector<128xf32> to vector<128x1xf32>
    %cst_7 = arith.constant 1.280000e+02 : f32
    %13 = vector.broadcast %cst_7 : f32 to vector<128x1xf32>
    %14 = arith.divf %12, %13 : vector<128x1xf32>
    %15 = vector.broadcast %7 : vector<128x1xf32> to vector<128x128xf32>
    %16 = arith.subf %1, %15 : vector<128x128xf32>
    %cst_8 = arith.constant 9.99999974E-6 : f32
    %17 = vector.broadcast %cst_8 : f32 to vector<128x1xf32>
    %18 = arith.addf %14, %17 : vector<128x1xf32>
    %19 = math.rsqrt %18 : vector<128x1xf32>
    %20 = vector.broadcast %19 : vector<128x1xf32> to vector<128x128xf32>
    %21 = arith.mulf %16, %20 : vector<128x128xf32>
    %22 = vector.broadcast %2 : vector<1x128xf32> to vector<128x128xf32>
    %23 = arith.mulf %21, %22 : vector<128x128xf32>
    %24 = vector.broadcast %3 : vector<1x128xf32> to vector<128x128xf32>
    %25 = arith.addf %23, %24 : vector<128x128xf32>
    %26 = arith.truncf %25 : vector<128x128xf32> to vector<128x128xbf16>
    %c0_9 = arith.constant 0 : index
    %c0_10 = arith.constant 0 : index
    %27 = vector.load %arg5[%c0_9, %c0_10] : memref<128x128xbf16, #tpu.memory_space<vmem>>, vector<128x128xbf16>
    %cst_11 = arith.constant dense<0.000000e+00> : vector<128x128xf32>
    %28 = tpu.matmul %26, %27, %cst_11 {dimension_numbers = #tpu.dot_dimension_numbers<[1], [0], [0], [1], [0, 0, 1, 1], [], []>} : vector<128x128xbf16>, vector<128x128xbf16>, vector<128x128xf32> -> vector<128x128xf32>
    %c0_12 = arith.constant 0 : index
    %c0_13 = arith.constant 0 : index
    %29 = vector.load %arg6[%c0_12, %c0_13] : memref<1x128xf32, #tpu.memory_space<vmem>>, vector<1x128xf32>
    %30 = vector.broadcast %29 : vector<1x128xf32> to vector<128x128xf32>
    %31 = arith.addf %28, %30 : vector<128x128xf32>
    %32 = arith.truncf %31 : vector<128x128xf32> to vector<128x128xbf16>
    %c0_14 = arith.constant 0 : index
    %c0_15 = arith.constant 0 : index
    %33 = vector.load %arg7[%c0_14, %c0_15] : memref<128x128xbf16, #tpu.memory_space<vmem>>, vector<128x128xbf16>
    tpu.vector_store %arg7[%c0_14, %c0_15], %32 {strides = array<i32>} : memref<128x128xbf16, #tpu.memory_space<vmem>>, vector<128x128xbf16>,
    return
  }
  func.func @transform_0(%arg0: i32, %arg1: i32) -> (i32, i32) {
    %c0_i32 = arith.constant 0 : i32
    %c0_i32_0 = arith.constant 0 : i32
    return %arg0, %c0_i32 : i32, i32
  }
  func.func @transform_1(%arg0: i32, %arg1: i32) -> (i32, i32) {
    %c0_i32 = arith.constant 0 : i32
    %c0_i32_0 = arith.constant 0 : i32
    %c0_i32_1 = arith.constant 0 : i32
    return %c0_i32, %c0_i32_0 : i32, i32
  }
  func.func @transform_2(%arg0: i32, %arg1: i32) -> (i32, i32) {
    %c0_i32 = arith.constant 0 : i32
    %c0_i32_0 = arith.constant 0 : i32
    %c0_i32_1 = arith.constant 0 : i32
    return %c0_i32, %c0_i32_0 : i32, i32
  }
  func.func @transform_3(%arg0: i32, %arg1: i32) -> (i32, i32) {
    %c0_i32 = arith.constant 0 : i32
    %c0_i32_0 = arith.constant 0 : i32
    return %c0_i32, %arg1 : i32, i32
  }
  func.func @transform_4(%arg0: i32, %arg1: i32) -> (i32, i32) {
    %c0_i32 = arith.constant 0 : i32
    %c0_i32_0 = arith.constant 0 : i32
    return %c0_i32, %arg1 : i32, i32
  }
  func.func @transform_5(%arg0: i32, %arg1: i32) -> (i32, i32) {
    %c0_i32 = arith.constant 0 : i32
    return %arg0, %arg1 : i32, i32
  }
}

module attributes {stable_mosaic.version = 11 : i64} {
  func.func @_attention_kernel(%arg0: i32, %arg1: memref<1x64x128xbf16, #tpu.memory_space<vmem>>, %arg2: memref<1x64x128xbf16, #tpu.memory_space<vmem>>, %arg3: memref<1x64x128xbf16, #tpu.memory_space<vmem>>, %arg4: memref<64x64xf32, #tpu.memory_space<vmem>>, %arg5: memref<1x64x128xbf16, #tpu.memory_space<vmem>>) attributes {dimension_semantics = [#tpu.dimension_semantics<parallel>], iteration_bounds = array<i64: 2>, scalar_prefetch = 0 : i64, scratch_operands = 0 : i64, tpu.core_type = #tpu.core_type<tc>, window_params = [{transform_indices = @transform_0, window_bounds = array<i64: 1, 64, 128>}, {transform_indices = @transform_1, window_bounds = array<i64: 1, 64, 128>}, {transform_indices = @transform_2, window_bounds = array<i64: 1, 64, 128>}, {pipeline_mode = #tpu.pipeline_mode<synchronous>, transform_indices = @transform_3, window_bounds = array<i64: 64, 64>}, {transform_indices = @transform_4, window_bounds = array<i64: 1, 64, 128>}]} {
    %c0 = arith.constant 0 : index
    %c0_0 = arith.constant 0 : index
    %c0_1 = arith.constant 0 : index
    %0 = vector.load %arg1[%c0, %c0_0, %c0_1] : memref<1x64x128xbf16, #tpu.memory_space<vmem>>, vector<1x64x128xbf16>
    %1 = vector.shape_cast %0 : vector<1x64x128xbf16> to vector<64x128xbf16>
    %2 = arith.extf %1 : vector<64x128xbf16> to vector<64x128xf32>
    %cst = arith.constant 1.250000e-01 : f32
    %3 = vector.broadcast %cst : f32 to vector<64x128xf32>
    %4 = arith.mulf %2, %3 : vector<64x128xf32>
    %5 = arith.truncf %4 : vector<64x128xf32> to vector<64x128xbf16>
    %c0_2 = arith.constant 0 : index
    %c0_3 = arith.constant 0 : index
    %c0_4 = arith.constant 0 : index
    %6 = vector.load %arg2[%c0_2, %c0_3, %c0_4] : memref<1x64x128xbf16, #tpu.memory_space<vmem>>, vector<1x64x128xbf16>
    %7 = vector.shape_cast %6 : vector<1x64x128xbf16> to vector<64x128xbf16>
    %c0_5 = arith.constant 0 : index
    %c0_6 = arith.constant 0 : index
    %c0_7 = arith.constant 0 : index
    %8 = vector.load %arg3[%c0_5, %c0_6, %c0_7] : memref<1x64x128xbf16, #tpu.memory_space<vmem>>, vector<1x64x128xbf16>
    %9 = vector.shape_cast %8 : vector<1x64x128xbf16> to vector<64x128xbf16>
    %10 = vector.extract_strided_slice %5 {offsets = [0, 0], sizes = [64, 64], strides = [1, 1]} : vector<64x128xbf16> to vector<64x64xbf16>
    %11 = vector.extract_strided_slice %7 {offsets = [0, 0], sizes = [64, 64], strides = [1, 1]} : vector<64x128xbf16> to vector<64x64xbf16>
    %12 = vector.extract_strided_slice %9 {offsets = [0, 0], sizes = [64, 64], strides = [1, 1]} : vector<64x128xbf16> to vector<64x64xbf16>
    %cst_8 = arith.constant dense<0.000000e+00> : vector<64x64xf32>
    %13 = tpu.matmul %10, %11, %cst_8 {dimension_numbers = #tpu.dot_dimension_numbers<[1], [1], [0], [0], [0, 0, 1, 0], [], []>} : vector<64x64xbf16>, vector<64x64xbf16>, vector<64x64xf32> -> vector<64x64xf32>
    %c0_9 = arith.constant 0 : index
    %c0_10 = arith.constant 0 : index
    %14 = vector.load %arg4[%c0_9, %c0_10] : memref<64x64xf32, #tpu.memory_space<vmem>>, vector<64x64xf32>
    %15 = arith.addf %13, %14 : vector<64x64xf32>
    %cst_11 = arith.constant dense<0xFF800000> : vector<64xf32>
    %16 = vector.multi_reduction <maximumf>, %15, %cst_11 [1] : vector<64x64xf32> to vector<64xf32>
    %17 = vector.shape_cast %16 : vector<64xf32> to vector<64x1xf32>
    %18 = vector.broadcast %17 : vector<64x1xf32> to vector<64x64xf32>
    %19 = arith.subf %15, %18 : vector<64x64xf32>
    %20 = math.exp %19 : vector<64x64xf32>
    %cst_12 = arith.constant dense<0.000000e+00> : vector<64xf32>
    %21 = vector.multi_reduction <add>, %20, %cst_12 [1] : vector<64x64xf32> to vector<64xf32>
    %22 = vector.shape_cast %21 : vector<64xf32> to vector<64x1xf32>
    %23 = tpu.reciprocal %22 {approx = true} : vector<64x1xf32> -> vector<64x1xf32>
    %24 = vector.broadcast %23 : vector<64x1xf32> to vector<64x64xf32>
    %25 = arith.mulf %20, %24 : vector<64x64xf32>
    %26 = arith.truncf %25 : vector<64x64xf32> to vector<64x64xbf16>
    %cst_13 = arith.constant dense<0.000000e+00> : vector<64x64xf32>
    %27 = tpu.matmul %26, %12, %cst_13 {dimension_numbers = #tpu.dot_dimension_numbers<[1], [0], [0], [1], [0, 0, 1, 1], [], []>} : vector<64x64xbf16>, vector<64x64xbf16>, vector<64x64xf32> -> vector<64x64xf32>
    %28 = vector.extract_strided_slice %5 {offsets = [0, 64], sizes = [64, 64], strides = [1, 1]} : vector<64x128xbf16> to vector<64x64xbf16>
    %29 = vector.extract_strided_slice %7 {offsets = [0, 64], sizes = [64, 64], strides = [1, 1]} : vector<64x128xbf16> to vector<64x64xbf16>
    %30 = vector.extract_strided_slice %9 {offsets = [0, 64], sizes = [64, 64], strides = [1, 1]} : vector<64x128xbf16> to vector<64x64xbf16>
    %cst_14 = arith.constant dense<0.000000e+00> : vector<64x64xf32>
    %31 = tpu.matmul %28, %29, %cst_14 {dimension_numbers = #tpu.dot_dimension_numbers<[1], [1], [0], [0], [0, 0, 1, 0], [], []>} : vector<64x64xbf16>, vector<64x64xbf16>, vector<64x64xf32> -> vector<64x64xf32>
    %c0_15 = arith.constant 0 : index
    %c0_16 = arith.constant 0 : index
    %32 = vector.load %arg4[%c0_15, %c0_16] : memref<64x64xf32, #tpu.memory_space<vmem>>, vector<64x64xf32>
    %33 = arith.addf %31, %32 : vector<64x64xf32>
    %cst_17 = arith.constant dense<0xFF800000> : vector<64xf32>
    %34 = vector.multi_reduction <maximumf>, %33, %cst_17 [1] : vector<64x64xf32> to vector<64xf32>
    %35 = vector.shape_cast %34 : vector<64xf32> to vector<64x1xf32>
    %36 = vector.broadcast %35 : vector<64x1xf32> to vector<64x64xf32>
    %37 = arith.subf %33, %36 : vector<64x64xf32>
    %38 = math.exp %37 : vector<64x64xf32>
    %cst_18 = arith.constant dense<0.000000e+00> : vector<64xf32>
    %39 = vector.multi_reduction <add>, %38, %cst_18 [1] : vector<64x64xf32> to vector<64xf32>
    %40 = vector.shape_cast %39 : vector<64xf32> to vector<64x1xf32>
    %41 = tpu.reciprocal %40 {approx = true} : vector<64x1xf32> -> vector<64x1xf32>
    %42 = vector.broadcast %41 : vector<64x1xf32> to vector<64x64xf32>
    %43 = arith.mulf %38, %42 : vector<64x64xf32>
    %44 = arith.truncf %43 : vector<64x64xf32> to vector<64x64xbf16>
    %cst_19 = arith.constant dense<0.000000e+00> : vector<64x64xf32>
    %45 = tpu.matmul %44, %30, %cst_19 {dimension_numbers = #tpu.dot_dimension_numbers<[1], [0], [0], [1], [0, 0, 1, 1], [], []>} : vector<64x64xbf16>, vector<64x64xbf16>, vector<64x64xf32> -> vector<64x64xf32>
    %46 = tpu.concatenate %27, %45 in 1 : vector<64x64xf32>, vector<64x64xf32> -> vector<64x128xf32>
    %47 = arith.truncf %46 : vector<64x128xf32> to vector<64x128xbf16>
    %c0_20 = arith.constant 0 : index
    %c0_21 = arith.constant 0 : index
    %c0_22 = arith.constant 0 : index
    %48 = vector.load %arg5[%c0_20, %c0_21, %c0_22] : memref<1x64x128xbf16, #tpu.memory_space<vmem>>, vector<1x64x128xbf16>
    %49 = vector.shape_cast %48 : vector<1x64x128xbf16> to vector<64x128xbf16>
    %50 = vector.shape_cast %47 : vector<64x128xbf16> to vector<1x64x128xbf16>
    tpu.vector_store %arg5[%c0_20, %c0_21, %c0_22], %50 {strides = array<i32>} : memref<1x64x128xbf16, #tpu.memory_space<vmem>>, vector<1x64x128xbf16>,
    return
  }
  func.func @transform_0(%arg0: i32) -> (i32, i32, i32) {
    %c0_i32 = arith.constant 0 : i32
    %c0_i32_0 = arith.constant 0 : i32
    %c0_i32_1 = arith.constant 0 : i32
    return %arg0, %c0_i32, %c0_i32_0 : i32, i32, i32
  }
  func.func @transform_1(%arg0: i32) -> (i32, i32, i32) {
    %c0_i32 = arith.constant 0 : i32
    %c1_i32 = arith.constant 1 : i32
    %c0_i32_0 = arith.constant 0 : i32
    return %arg0, %c0_i32, %c1_i32 : i32, i32, i32
  }
  func.func @transform_2(%arg0: i32) -> (i32, i32, i32) {
    %c0_i32 = arith.constant 0 : i32
    %c2_i32 = arith.constant 2 : i32
    %c0_i32_0 = arith.constant 0 : i32
    return %arg0, %c0_i32, %c2_i32 : i32, i32, i32
  }
  func.func @transform_3(%arg0: i32) -> (i32, i32) {
    %c0_i32 = arith.constant 0 : i32
    %c0_i32_0 = arith.constant 0 : i32
    %c0_i32_1 = arith.constant 0 : i32
    return %c0_i32, %c0_i32_0 : i32, i32
  }
  func.func @transform_4(%arg0: i32) -> (i32, i32, i32) {
    %c0_i32 = arith.constant 0 : i32
    %c0_i32_0 = arith.constant 0 : i32
    %c0_i32_1 = arith.constant 0 : i32
    return %arg0, %c0_i32, %c0_i32_0 : i32, i32, i32
  }
}

module attributes {stable_mosaic.version = 11 : i64} {
  func.func @_linear_kernel(%arg0: i32, %arg1: i32, %arg2: memref<256x128xbf16, #tpu.memory_space<vmem>>, %arg3: memref<128x256xbf16, #tpu.memory_space<vmem>>, %arg4: memref<1x256xf32, #tpu.memory_space<vmem>>, %arg5: memref<256x256xbf16, #tpu.memory_space<vmem>>) attributes {dimension_semantics = [#tpu.dimension_semantics<parallel>, #tpu.dimension_semantics<parallel>], iteration_bounds = array<i64: 1, 1>, scalar_prefetch = 0 : i64, scratch_operands = 0 : i64, tpu.core_type = #tpu.core_type<tc>, window_params = [{transform_indices = @transform_0, window_bounds = array<i64: 256, 128>}, {transform_indices = @transform_1, window_bounds = array<i64: 128, 256>}, {transform_indices = @transform_2, window_bounds = array<i64: 1, 256>}, {transform_indices = @transform_3, window_bounds = array<i64: 256, 256>}]} {
    %c0 = arith.constant 0 : index
    %c0_0 = arith.constant 0 : index
    %0 = vector.load %arg2[%c0, %c0_0] : memref<256x128xbf16, #tpu.memory_space<vmem>>, vector<256x128xbf16>
    %c0_1 = arith.constant 0 : index
    %c0_2 = arith.constant 0 : index
    %1 = vector.load %arg3[%c0_1, %c0_2] : memref<128x256xbf16, #tpu.memory_space<vmem>>, vector<128x256xbf16>
    %cst = arith.constant dense<0.000000e+00> : vector<256x256xf32>
    %2 = tpu.matmul %0, %1, %cst {dimension_numbers = #tpu.dot_dimension_numbers<[1], [0], [0], [1], [0, 0, 1, 1], [], []>} : vector<256x128xbf16>, vector<128x256xbf16>, vector<256x256xf32> -> vector<256x256xf32>
    %c0_3 = arith.constant 0 : index
    %c0_4 = arith.constant 0 : index
    %3 = vector.load %arg4[%c0_3, %c0_4] : memref<1x256xf32, #tpu.memory_space<vmem>>, vector<1x256xf32>
    %4 = vector.broadcast %3 : vector<1x256xf32> to vector<256x256xf32>
    %5 = arith.addf %2, %4 : vector<256x256xf32>
    %6 = arith.truncf %5 : vector<256x256xf32> to vector<256x256xbf16>
    %c0_5 = arith.constant 0 : index
    %c0_6 = arith.constant 0 : index
    %7 = vector.load %arg5[%c0_5, %c0_6] : memref<256x256xbf16, #tpu.memory_space<vmem>>, vector<256x256xbf16>
    tpu.vector_store %arg5[%c0_5, %c0_6], %6 {strides = array<i32>} : memref<256x256xbf16, #tpu.memory_space<vmem>>, vector<256x256xbf16>,
    return
  }
  func.func @transform_0(%arg0: i32, %arg1: i32) -> (i32, i32) {
    %c0_i32 = arith.constant 0 : i32
    %c0_i32_0 = arith.constant 0 : i32
    return %arg0, %c0_i32 : i32, i32
  }
  func.func @transform_1(%arg0: i32, %arg1: i32) -> (i32, i32) {
    %c0_i32 = arith.constant 0 : i32
    %c0_i32_0 = arith.constant 0 : i32
    return %c0_i32, %arg1 : i32, i32
  }
  func.func @transform_2(%arg0: i32, %arg1: i32) -> (i32, i32) {
    %c0_i32 = arith.constant 0 : i32
    %c0_i32_0 = arith.constant 0 : i32
    return %c0_i32, %arg1 : i32, i32
  }
  func.func @transform_3(%arg0: i32, %arg1: i32) -> (i32, i32) {
    %c0_i32 = arith.constant 0 : i32
    return %arg0, %arg1 : i32, i32
  }
}

module attributes {stable_mosaic.version = 11 : i64} {
  func.func @_attention_kernel(%arg0: i32, %arg1: memref<1x64x128xbf16, #tpu.memory_space<vmem>>, %arg2: memref<1x128x128xbf16, #tpu.memory_space<vmem>>, %arg3: memref<1x128x128xbf16, #tpu.memory_space<vmem>>, %arg4: memref<1x64x128xbf16, #tpu.memory_space<vmem>>) attributes {dimension_semantics = [#tpu.dimension_semantics<parallel>], iteration_bounds = array<i64: 2>, scalar_prefetch = 0 : i64, scratch_operands = 0 : i64, tpu.core_type = #tpu.core_type<tc>, window_params = [{transform_indices = @transform_0, window_bounds = array<i64: 1, 64, 128>}, {transform_indices = @transform_1, window_bounds = array<i64: 1, 128, 128>}, {transform_indices = @transform_2, window_bounds = array<i64: 1, 128, 128>}, {transform_indices = @transform_3, window_bounds = array<i64: 1, 64, 128>}]} {
    %c0 = arith.constant 0 : index
    %c0_0 = arith.constant 0 : index
    %c0_1 = arith.constant 0 : index
    %0 = vector.load %arg1[%c0, %c0_0, %c0_1] : memref<1x64x128xbf16, #tpu.memory_space<vmem>>, vector<1x64x128xbf16>
    %1 = vector.shape_cast %0 : vector<1x64x128xbf16> to vector<64x128xbf16>
    %2 = arith.extf %1 : vector<64x128xbf16> to vector<64x128xf32>
    %cst = arith.constant 1.250000e-01 : f32
    %3 = vector.broadcast %cst : f32 to vector<64x128xf32>
    %4 = arith.mulf %2, %3 : vector<64x128xf32>
    %5 = arith.truncf %4 : vector<64x128xf32> to vector<64x128xbf16>
    %c0_2 = arith.constant 0 : index
    %c0_3 = arith.constant 0 : index
    %c0_4 = arith.constant 0 : index
    %6 = vector.load %arg2[%c0_2, %c0_3, %c0_4] : memref<1x128x128xbf16, #tpu.memory_space<vmem>>, vector<1x128x128xbf16>
    %7 = vector.shape_cast %6 : vector<1x128x128xbf16> to vector<128x128xbf16>
    %c0_5 = arith.constant 0 : index
    %c0_6 = arith.constant 0 : index
    %c0_7 = arith.constant 0 : index
    %8 = vector.load %arg3[%c0_5, %c0_6, %c0_7] : memref<1x128x128xbf16, #tpu.memory_space<vmem>>, vector<1x128x128xbf16>
    %9 = vector.shape_cast %8 : vector<1x128x128xbf16> to vector<128x128xbf16>
    %10 = vector.extract_strided_slice %5 {offsets = [0, 0], sizes = [64, 64], strides = [1, 1]} : vector<64x128xbf16> to vector<64x64xbf16>
    %11 = vector.extract_strided_slice %7 {offsets = [0, 0], sizes = [128, 64], strides = [1, 1]} : vector<128x128xbf16> to vector<128x64xbf16>
    %12 = vector.extract_strided_slice %9 {offsets = [0, 0], sizes = [128, 64], strides = [1, 1]} : vector<128x128xbf16> to vector<128x64xbf16>
    %cst_8 = arith.constant dense<0.000000e+00> : vector<64x128xf32>
    %13 = tpu.matmul %10, %11, %cst_8 {dimension_numbers = #tpu.dot_dimension_numbers<[1], [1], [0], [0], [0, 0, 1, 0], [], []>} : vector<64x64xbf16>, vector<128x64xbf16>, vector<64x128xf32> -> vector<64x128xf32>
    %cst_9 = arith.constant dense<0xFF800000> : vector<64xf32>
    %14 = vector.multi_reduction <maximumf>, %13, %cst_9 [1] : vector<64x128xf32> to vector<64xf32>
    %15 = vector.shape_cast %14 : vector<64xf32> to vector<64x1xf32>
    %16 = vector.broadcast %15 : vector<64x1xf32> to vector<64x128xf32>
    %17 = arith.subf %13, %16 : vector<64x128xf32>
    %18 = math.exp %17 : vector<64x128xf32>
    %cst_10 = arith.constant dense<0.000000e+00> : vector<64xf32>
    %19 = vector.multi_reduction <add>, %18, %cst_10 [1] : vector<64x128xf32> to vector<64xf32>
    %20 = vector.shape_cast %19 : vector<64xf32> to vector<64x1xf32>
    %21 = tpu.reciprocal %20 {approx = true} : vector<64x1xf32> -> vector<64x1xf32>
    %22 = vector.broadcast %21 : vector<64x1xf32> to vector<64x128xf32>
    %23 = arith.mulf %18, %22 : vector<64x128xf32>
    %24 = arith.truncf %23 : vector<64x128xf32> to vector<64x128xbf16>
    %cst_11 = arith.constant dense<0.000000e+00> : vector<64x64xf32>
    %25 = tpu.matmul %24, %12, %cst_11 {dimension_numbers = #tpu.dot_dimension_numbers<[1], [0], [0], [1], [0, 0, 1, 1], [], []>} : vector<64x128xbf16>, vector<128x64xbf16>, vector<64x64xf32> -> vector<64x64xf32>
    %26 = vector.extract_strided_slice %5 {offsets = [0, 64], sizes = [64, 64], strides = [1, 1]} : vector<64x128xbf16> to vector<64x64xbf16>
    %27 = vector.extract_strided_slice %7 {offsets = [0, 64], sizes = [128, 64], strides = [1, 1]} : vector<128x128xbf16> to vector<128x64xbf16>
    %28 = vector.extract_strided_slice %9 {offsets = [0, 64], sizes = [128, 64], strides = [1, 1]} : vector<128x128xbf16> to vector<128x64xbf16>
    %cst_12 = arith.constant dense<0.000000e+00> : vector<64x128xf32>
    %29 = tpu.matmul %26, %27, %cst_12 {dimension_numbers = #tpu.dot_dimension_numbers<[1], [1], [0], [0], [0, 0, 1, 0], [], []>} : vector<64x64xbf16>, vector<128x64xbf16>, vector<64x128xf32> -> vector<64x128xf32>
    %cst_13 = arith.constant dense<0xFF800000> : vector<64xf32>
    %30 = vector.multi_reduction <maximumf>, %29, %cst_13 [1] : vector<64x128xf32> to vector<64xf32>
    %31 = vector.shape_cast %30 : vector<64xf32> to vector<64x1xf32>
    %32 = vector.broadcast %31 : vector<64x1xf32> to vector<64x128xf32>
    %33 = arith.subf %29, %32 : vector<64x128xf32>
    %34 = math.exp %33 : vector<64x128xf32>
    %cst_14 = arith.constant dense<0.000000e+00> : vector<64xf32>
    %35 = vector.multi_reduction <add>, %34, %cst_14 [1] : vector<64x128xf32> to vector<64xf32>
    %36 = vector.shape_cast %35 : vector<64xf32> to vector<64x1xf32>
    %37 = tpu.reciprocal %36 {approx = true} : vector<64x1xf32> -> vector<64x1xf32>
    %38 = vector.broadcast %37 : vector<64x1xf32> to vector<64x128xf32>
    %39 = arith.mulf %34, %38 : vector<64x128xf32>
    %40 = arith.truncf %39 : vector<64x128xf32> to vector<64x128xbf16>
    %cst_15 = arith.constant dense<0.000000e+00> : vector<64x64xf32>
    %41 = tpu.matmul %40, %28, %cst_15 {dimension_numbers = #tpu.dot_dimension_numbers<[1], [0], [0], [1], [0, 0, 1, 1], [], []>} : vector<64x128xbf16>, vector<128x64xbf16>, vector<64x64xf32> -> vector<64x64xf32>
    %42 = tpu.concatenate %25, %41 in 1 : vector<64x64xf32>, vector<64x64xf32> -> vector<64x128xf32>
    %43 = arith.truncf %42 : vector<64x128xf32> to vector<64x128xbf16>
    %c0_16 = arith.constant 0 : index
    %c0_17 = arith.constant 0 : index
    %c0_18 = arith.constant 0 : index
    %44 = vector.load %arg4[%c0_16, %c0_17, %c0_18] : memref<1x64x128xbf16, #tpu.memory_space<vmem>>, vector<1x64x128xbf16>
    %45 = vector.shape_cast %44 : vector<1x64x128xbf16> to vector<64x128xbf16>
    %46 = vector.shape_cast %43 : vector<64x128xbf16> to vector<1x64x128xbf16>
    tpu.vector_store %arg4[%c0_16, %c0_17, %c0_18], %46 {strides = array<i32>} : memref<1x64x128xbf16, #tpu.memory_space<vmem>>, vector<1x64x128xbf16>,
    return
  }
  func.func @transform_0(%arg0: i32) -> (i32, i32, i32) {
    %c0_i32 = arith.constant 0 : i32
    %c0_i32_0 = arith.constant 0 : i32
    %c0_i32_1 = arith.constant 0 : i32
    return %arg0, %c0_i32, %c0_i32_0 : i32, i32, i32
  }
  func.func @transform_1(%arg0: i32) -> (i32, i32, i32) {
    %c0_i32 = arith.constant 0 : i32
    %c0_i32_0 = arith.constant 0 : i32
    %c0_i32_1 = arith.constant 0 : i32
    return %arg0, %c0_i32, %c0_i32_0 : i32, i32, i32
  }
  func.func @transform_2(%arg0: i32) -> (i32, i32, i32) {
    %c0_i32 = arith.constant 0 : i32
    %c1_i32 = arith.constant 1 : i32
    %c0_i32_0 = arith.constant 0 : i32
    return %arg0, %c0_i32, %c1_i32 : i32, i32, i32
  }
  func.func @transform_3(%arg0: i32) -> (i32, i32, i32) {
    %c0_i32 = arith.constant 0 : i32
    %c0_i32_0 = arith.constant 0 : i32
    %c0_i32_1 = arith.constant 0 : i32
    return %arg0, %c0_i32, %c0_i32_0 : i32, i32, i32
  }
}

module attributes {stable_mosaic.version = 11 : i64} {
  func.func @_mlp_kernel(%arg0: i32, %arg1: i32, %arg2: memref<128x128xbf16, #tpu.memory_space<vmem>>, %arg3: memref<1x128xf32, #tpu.memory_space<vmem>>, %arg4: memref<1x128xf32, #tpu.memory_space<vmem>>, %arg5: memref<128x512xbf16, #tpu.memory_space<vmem>>, %arg6: memref<1x512xf32, #tpu.memory_space<vmem>>, %arg7: memref<512x128xbf16, #tpu.memory_space<vmem>>, %arg8: memref<1x128xf32, #tpu.memory_space<vmem>>, %arg9: memref<128x128xbf16, #tpu.memory_space<vmem>>, %arg10: memref<128x128xf32, #tpu.memory_space<vmem>>) attributes {dimension_semantics = [#tpu.dimension_semantics<parallel>, #tpu.dimension_semantics<arbitrary>], iteration_bounds = array<i64: 1, 1>, scalar_prefetch = 0 : i64, scratch_operands = 1 : i64, tpu.core_type = #tpu.core_type<tc>, window_params = [{transform_indices = @transform_0, window_bounds = array<i64: 128, 128>}, {pipeline_mode = #tpu.pipeline_mode<synchronous>, transform_indices = @transform_1, window_bounds = array<i64: 1, 128>}, {pipeline_mode = #tpu.pipeline_mode<synchronous>, transform_indices = @transform_2, window_bounds = array<i64: 1, 128>}, {transform_indices = @transform_3, window_bounds = array<i64: 128, 512>}, {transform_indices = @transform_4, window_bounds = array<i64: 1, 512>}, {transform_indices = @transform_5, window_bounds = array<i64: 512, 128>}, {pipeline_mode = #tpu.pipeline_mode<synchronous>, transform_indices = @transform_6, window_bounds = array<i64: 1, 128>}, {transform_indices = @transform_7, window_bounds = array<i64: 128, 128>}]} {
    %c0_i32 = arith.constant 0 : i32
    %0 = arith.cmpi eq, %arg1, %c0_i32 : i32
    %1 = arith.extui %0 : i1 to i32
    %c0_i32_0 = arith.constant 0 : i32
    %2 = arith.cmpi ne, %1, %c0_i32_0 : i32
    scf.if %2 {
      %cst_40 = arith.constant 0.000000e+00 : f32
      %85 = vector.broadcast %cst_40 : f32 to vector<128x128xf32>
      %c0_41 = arith.constant 0 : index
      %c0_42 = arith.constant 0 : index
      %86 = vector.load %arg10[%c0_41, %c0_42] : memref<128x128xf32, #tpu.memory_space<vmem>>, vector<128x128xf32>
      tpu.vector_store %arg10[%c0_41, %c0_42], %85 {strides = array<i32>} : memref<128x128xf32, #tpu.memory_space<vmem>>, vector<128x128xf32>,
    } else {
    }
    %c0 = arith.constant 0 : index
    %c0_1 = arith.constant 0 : index
    %3 = vector.load %arg2[%c0, %c0_1] : memref<128x128xbf16, #tpu.memory_space<vmem>>, vector<128x128xbf16>
    %4 = arith.extf %3 : vector<128x128xbf16> to vector<128x128xf32>
    %c0_2 = arith.constant 0 : index
    %c0_3 = arith.constant 0 : index
    %5 = vector.load %arg3[%c0_2, %c0_3] : memref<1x128xf32, #tpu.memory_space<vmem>>, vector<1x128xf32>
    %c0_4 = arith.constant 0 : index
    %c0_5 = arith.constant 0 : index
    %6 = vector.load %arg4[%c0_4, %c0_5] : memref<1x128xf32, #tpu.memory_space<vmem>>, vector<1x128xf32>
    %cst = arith.constant dense<0.000000e+00> : vector<128xf32>
    %7 = vector.multi_reduction <add>, %4, %cst [1] : vector<128x128xf32> to vector<128xf32>
    %8 = vector.shape_cast %7 : vector<128xf32> to vector<128x1xf32>
    %cst_6 = arith.constant 1.280000e+02 : f32
    %9 = vector.broadcast %cst_6 : f32 to vector<128x1xf32>
    %10 = arith.divf %8, %9 : vector<128x1xf32>
    %11 = vector.broadcast %10 : vector<128x1xf32> to vector<128x128xf32>
    %12 = arith.subf %4, %11 : vector<128x128xf32>
    %13 = arith.mulf %12, %12 : vector<128x128xf32>
    %cst_7 = arith.constant dense<0.000000e+00> : vector<128xf32>
    %14 = vector.multi_reduction <add>, %13, %cst_7 [1] : vector<128x128xf32> to vector<128xf32>
    %15 = vector.shape_cast %14 : vector<128xf32> to vector<128x1xf32>
    %cst_8 = arith.constant 1.280000e+02 : f32
    %16 = vector.broadcast %cst_8 : f32 to vector<128x1xf32>
    %17 = arith.divf %15, %16 : vector<128x1xf32>
    %18 = vector.broadcast %10 : vector<128x1xf32> to vector<128x128xf32>
    %19 = arith.subf %4, %18 : vector<128x128xf32>
    %cst_9 = arith.constant 9.99999974E-6 : f32
    %20 = vector.broadcast %cst_9 : f32 to vector<128x1xf32>
    %21 = arith.addf %17, %20 : vector<128x1xf32>
    %22 = math.rsqrt %21 : vector<128x1xf32>
    %23 = vector.broadcast %22 : vector<128x1xf32> to vector<128x128xf32>
    %24 = arith.mulf %19, %23 : vector<128x128xf32>
    %25 = vector.broadcast %5 : vector<1x128xf32> to vector<128x128xf32>
    %26 = arith.mulf %24, %25 : vector<128x128xf32>
    %27 = vector.broadcast %6 : vector<1x128xf32> to vector<128x128xf32>
    %28 = arith.addf %26, %27 : vector<128x128xf32>
    %29 = arith.truncf %28 : vector<128x128xf32> to vector<128x128xbf16>
    %c0_10 = arith.constant 0 : index
    %c0_11 = arith.constant 0 : index
    %30 = vector.load %arg5[%c0_10, %c0_11] : memref<128x512xbf16, #tpu.memory_space<vmem>>, vector<128x512xbf16>
    %cst_12 = arith.constant dense<0.000000e+00> : vector<128x512xf32>
    %31 = tpu.matmul %29, %30, %cst_12 {dimension_numbers = #tpu.dot_dimension_numbers<[1], [0], [0], [1], [0, 0, 1, 1], [], []>} : vector<128x128xbf16>, vector<128x512xbf16>, vector<128x512xf32> -> vector<128x512xf32>
    %c0_13 = arith.constant 0 : index
    %c0_14 = arith.constant 0 : index
    %32 = vector.load %arg6[%c0_13, %c0_14] : memref<1x512xf32, #tpu.memory_space<vmem>>, vector<1x512xf32>
    %33 = vector.broadcast %32 : vector<1x512xf32> to vector<128x512xf32>
    %34 = arith.addf %31, %33 : vector<128x512xf32>
    %cst_15 = arith.constant 5.000000e-01 : f32
    %35 = vector.broadcast %cst_15 : f32 to vector<128x512xf32>
    %36 = arith.mulf %35, %34 : vector<128x512xf32>
    %cst_16 = arith.constant 0.707106769 : f32
    %37 = vector.broadcast %cst_16 : f32 to vector<128x512xf32>
    %38 = arith.mulf %34, %37 : vector<128x512xf32>
    %cst_17 = arith.constant 0.000000e+00 : f32
    %39 = vector.broadcast %cst_17 : f32 to vector<128x512xf32>
    %40 = arith.cmpf oge, %38, %39 : vector<128x512xf32>
    %cst_18 = arith.constant 1.000000e+00 : f32
    %cst_19 = arith.constant -1.000000e+00 : f32
    %41 = vector.broadcast %cst_18 : f32 to vector<128x512xf32>
    %42 = vector.broadcast %cst_19 : f32 to vector<128x512xf32>
    %43 = arith.select %40, %41, %42 : vector<128x512xi1>, vector<128x512xf32>
    %44 = math.absf %38 : vector<128x512xf32>
    %cst_20 = arith.constant 0.327591091 : f32
    %45 = vector.broadcast %cst_20 : f32 to vector<128x512xf32>
    %46 = arith.mulf %45, %44 : vector<128x512xf32>
    %cst_21 = arith.constant 1.000000e+00 : f32
    %47 = vector.broadcast %cst_21 : f32 to vector<128x512xf32>
    %48 = arith.addf %47, %46 : vector<128x512xf32>
    %cst_22 = arith.constant 1.000000e+00 : f32
    %49 = vector.broadcast %cst_22 : f32 to vector<128x512xf32>
    %50 = arith.divf %49, %48 : vector<128x512xf32>
    %cst_23 = arith.constant 1.06140542 : f32
    %51 = vector.broadcast %cst_23 : f32 to vector<128x512xf32>
    %52 = arith.mulf %51, %50 : vector<128x512xf32>
    %cst_24 = arith.constant -1.45315206 : f32
    %53 = vector.broadcast %cst_24 : f32 to vector<128x512xf32>
    %54 = arith.addf %52, %53 : vector<128x512xf32>
    %55 = arith.mulf %54, %50 : vector<128x512xf32>
    %cst_25 = arith.constant 1.42141378 : f32
    %56 = vector.broadcast %cst_25 : f32 to vector<128x512xf32>
    %57 = arith.addf %55, %56 : vector<128x512xf32>
    %58 = arith.mulf %57, %50 : vector<128x512xf32>
    %cst_26 = arith.constant -0.284496725 : f32
    %59 = vector.broadcast %cst_26 : f32 to vector<128x512xf32>
    %60 = arith.addf %58, %59 : vector<128x512xf32>
    %61 = arith.mulf %60, %50 : vector<128x512xf32>
    %cst_27 = arith.constant 0.254829586 : f32
    %62 = vector.broadcast %cst_27 : f32 to vector<128x512xf32>
    %63 = arith.addf %61, %62 : vector<128x512xf32>
    %64 = arith.mulf %63, %50 : vector<128x512xf32>
    %cst_28 = arith.constant 0.000000e+00 : f32
    %65 = vector.broadcast %cst_28 : f32 to vector<128x512xf32>
    %66 = arith.subf %65, %44 : vector<128x512xf32>
    %67 = arith.mulf %66, %44 : vector<128x512xf32>
    %68 = math.exp %67 : vector<128x512xf32>
    %69 = arith.mulf %64, %68 : vector<128x512xf32>
    %cst_29 = arith.constant 1.000000e+00 : f32
    %70 = vector.broadcast %cst_29 : f32 to vector<128x512xf32>
    %71 = arith.subf %70, %69 : vector<128x512xf32>
    %72 = arith.mulf %43, %71 : vector<128x512xf32>
    %cst_30 = arith.constant 1.000000e+00 : f32
    %73 = vector.broadcast %cst_30 : f32 to vector<128x512xf32>
    %74 = arith.addf %73, %72 : vector<128x512xf32>
    %75 = arith.mulf %36, %74 : vector<128x512xf32>
    %76 = arith.truncf %75 : vector<128x512xf32> to vector<128x512xbf16>
    %c0_31 = arith.constant 0 : index
    %c0_32 = arith.constant 0 : index
    %77 = vector.load %arg10[%c0_31, %c0_32] : memref<128x128xf32, #tpu.memory_space<vmem>>, vector<128x128xf32>
    %c0_33 = arith.constant 0 : index
    %c0_34 = arith.constant 0 : index
    %78 = vector.load %arg7[%c0_33, %c0_34] : memref<512x128xbf16, #tpu.memory_space<vmem>>, vector<512x128xbf16>
    %cst_35 = arith.constant dense<0.000000e+00> : vector<128x128xf32>
    %79 = tpu.matmul %76, %78, %cst_35 {dimension_numbers = #tpu.dot_dimension_numbers<[1], [0], [0], [1], [0, 0, 1, 1], [], []>} : vector<128x512xbf16>, vector<512x128xbf16>, vector<128x128xf32> -> vector<128x128xf32>
    %80 = arith.addf %77, %79 : vector<128x128xf32>
    %c0_36 = arith.constant 0 : index
    %c0_37 = arith.constant 0 : index
    %81 = vector.load %arg10[%c0_36, %c0_37] : memref<128x128xf32, #tpu.memory_space<vmem>>, vector<128x128xf32>
    tpu.vector_store %arg10[%c0_36, %c0_37], %80 {strides = array<i32>} : memref<128x128xf32, #tpu.memory_space<vmem>>, vector<128x128xf32>,
    %c0_i32_38 = arith.constant 0 : i32
    %82 = arith.cmpi eq, %arg1, %c0_i32_38 : i32
    %83 = arith.extui %82 : i1 to i32
    %c0_i32_39 = arith.constant 0 : i32
    %84 = arith.cmpi ne, %83, %c0_i32_39 : i32
    scf.if %84 {
      %c0_40 = arith.constant 0 : index
      %c0_41 = arith.constant 0 : index
      %85 = vector.load %arg10[%c0_40, %c0_41] : memref<128x128xf32, #tpu.memory_space<vmem>>, vector<128x128xf32>
      %c0_42 = arith.constant 0 : index
      %c0_43 = arith.constant 0 : index
      %86 = vector.load %arg8[%c0_42, %c0_43] : memref<1x128xf32, #tpu.memory_space<vmem>>, vector<1x128xf32>
      %87 = vector.broadcast %86 : vector<1x128xf32> to vector<128x128xf32>
      %88 = arith.addf %85, %87 : vector<128x128xf32>
      %89 = arith.addf %88, %4 : vector<128x128xf32>
      %90 = arith.truncf %89 : vector<128x128xf32> to vector<128x128xbf16>
      %c0_44 = arith.constant 0 : index
      %c0_45 = arith.constant 0 : index
      %91 = vector.load %arg9[%c0_44, %c0_45] : memref<128x128xbf16, #tpu.memory_space<vmem>>, vector<128x128xbf16>
      tpu.vector_store %arg9[%c0_44, %c0_45], %90 {strides = array<i32>} : memref<128x128xbf16, #tpu.memory_space<vmem>>, vector<128x128xbf16>,
    } else {
    }
    return
  }
  func.func @transform_0(%arg0: i32, %arg1: i32) -> (i32, i32) {
    %c0_i32 = arith.constant 0 : i32
    %c0_i32_0 = arith.constant 0 : i32
    return %arg0, %c0_i32 : i32, i32
  }
  func.func @transform_1(%arg0: i32, %arg1: i32) -> (i32, i32) {
    %c0_i32 = arith.constant 0 : i32
    %c0_i32_0 = arith.constant 0 : i32
    %c0_i32_1 = arith.constant 0 : i32
    return %c0_i32, %c0_i32_0 : i32, i32
  }
  func.func @transform_2(%arg0: i32, %arg1: i32) -> (i32, i32) {
    %c0_i32 = arith.constant 0 : i32
    %c0_i32_0 = arith.constant 0 : i32
    %c0_i32_1 = arith.constant 0 : i32
    return %c0_i32, %c0_i32_0 : i32, i32
  }
  func.func @transform_3(%arg0: i32, %arg1: i32) -> (i32, i32) {
    %c0_i32 = arith.constant 0 : i32
    %c0_i32_0 = arith.constant 0 : i32
    return %c0_i32, %arg1 : i32, i32
  }
  func.func @transform_4(%arg0: i32, %arg1: i32) -> (i32, i32) {
    %c0_i32 = arith.constant 0 : i32
    %c0_i32_0 = arith.constant 0 : i32
    return %c0_i32, %arg1 : i32, i32
  }
  func.func @transform_5(%arg0: i32, %arg1: i32) -> (i32, i32) {
    %c0_i32 = arith.constant 0 : i32
    %c0_i32_0 = arith.constant 0 : i32
    return %arg1, %c0_i32 : i32, i32
  }
  func.func @transform_6(%arg0: i32, %arg1: i32) -> (i32, i32) {
    %c0_i32 = arith.constant 0 : i32
    %c0_i32_0 = arith.constant 0 : i32
    %c0_i32_1 = arith.constant 0 : i32
    return %c0_i32, %c0_i32_0 : i32, i32
  }
  func.func @transform_7(%arg0: i32, %arg1: i32) -> (i32, i32) {
    %c0_i32 = arith.constant 0 : i32
    %c0_i32_0 = arith.constant 0 : i32
    return %arg0, %c0_i32 : i32, i32
  }
}

module attributes {stable_mosaic.version = 11 : i64} {
  func.func @_linear_kernel(%arg0: i32, %arg1: i32, %arg2: memref<128x128xbf16, #tpu.memory_space<vmem>>, %arg3: memref<1x128xf32, #tpu.memory_space<vmem>>, %arg4: memref<1x128xf32, #tpu.memory_space<vmem>>, %arg5: memref<512x128xbf16, #tpu.memory_space<vmem>>, %arg6: memref<128x512xf32, #tpu.memory_space<vmem>>) attributes {dimension_semantics = [#tpu.dimension_semantics<parallel>, #tpu.dimension_semantics<parallel>], iteration_bounds = array<i64: 1, 1>, scalar_prefetch = 0 : i64, scratch_operands = 0 : i64, tpu.core_type = #tpu.core_type<tc>, window_params = [{transform_indices = @transform_0, window_bounds = array<i64: 128, 128>}, {pipeline_mode = #tpu.pipeline_mode<synchronous>, transform_indices = @transform_1, window_bounds = array<i64: 1, 128>}, {pipeline_mode = #tpu.pipeline_mode<synchronous>, transform_indices = @transform_2, window_bounds = array<i64: 1, 128>}, {transform_indices = @transform_3, window_bounds = array<i64: 512, 128>}, {transform_indices = @transform_4, window_bounds = array<i64: 128, 512>}]} {
    %c0 = arith.constant 0 : index
    %c0_0 = arith.constant 0 : index
    %0 = vector.load %arg2[%c0, %c0_0] : memref<128x128xbf16, #tpu.memory_space<vmem>>, vector<128x128xbf16>
    %1 = arith.extf %0 : vector<128x128xbf16> to vector<128x128xf32>
    %c0_1 = arith.constant 0 : index
    %c0_2 = arith.constant 0 : index
    %2 = vector.load %arg3[%c0_1, %c0_2] : memref<1x128xf32, #tpu.memory_space<vmem>>, vector<1x128xf32>
    %c0_3 = arith.constant 0 : index
    %c0_4 = arith.constant 0 : index
    %3 = vector.load %arg4[%c0_3, %c0_4] : memref<1x128xf32, #tpu.memory_space<vmem>>, vector<1x128xf32>
    %cst = arith.constant dense<0.000000e+00> : vector<128xf32>
    %4 = vector.multi_reduction <add>, %1, %cst [1] : vector<128x128xf32> to vector<128xf32>
    %5 = vector.shape_cast %4 : vector<128xf32> to vector<128x1xf32>
    %cst_5 = arith.constant 1.280000e+02 : f32
    %6 = vector.broadcast %cst_5 : f32 to vector<128x1xf32>
    %7 = arith.divf %5, %6 : vector<128x1xf32>
    %8 = vector.broadcast %7 : vector<128x1xf32> to vector<128x128xf32>
    %9 = arith.subf %1, %8 : vector<128x128xf32>
    %10 = arith.mulf %9, %9 : vector<128x128xf32>
    %cst_6 = arith.constant dense<0.000000e+00> : vector<128xf32>
    %11 = vector.multi_reduction <add>, %10, %cst_6 [1] : vector<128x128xf32> to vector<128xf32>
    %12 = vector.shape_cast %11 : vector<128xf32> to vector<128x1xf32>
    %cst_7 = arith.constant 1.280000e+02 : f32
    %13 = vector.broadcast %cst_7 : f32 to vector<128x1xf32>
    %14 = arith.divf %12, %13 : vector<128x1xf32>
    %15 = vector.broadcast %7 : vector<128x1xf32> to vector<128x128xf32>
    %16 = arith.subf %1, %15 : vector<128x128xf32>
    %cst_8 = arith.constant 9.99999974E-6 : f32
    %17 = vector.broadcast %cst_8 : f32 to vector<128x1xf32>
    %18 = arith.addf %14, %17 : vector<128x1xf32>
    %19 = math.rsqrt %18 : vector<128x1xf32>
    %20 = vector.broadcast %19 : vector<128x1xf32> to vector<128x128xf32>
    %21 = arith.mulf %16, %20 : vector<128x128xf32>
    %22 = vector.broadcast %2 : vector<1x128xf32> to vector<128x128xf32>
    %23 = arith.mulf %21, %22 : vector<128x128xf32>
    %24 = vector.broadcast %3 : vector<1x128xf32> to vector<128x128xf32>
    %25 = arith.addf %23, %24 : vector<128x128xf32>
    %26 = arith.truncf %25 : vector<128x128xf32> to vector<128x128xbf16>
    %c0_9 = arith.constant 0 : index
    %c0_10 = arith.constant 0 : index
    %27 = vector.load %arg5[%c0_9, %c0_10] : memref<512x128xbf16, #tpu.memory_space<vmem>>, vector<512x128xbf16>
    %cst_11 = arith.constant dense<0.000000e+00> : vector<128x512xf32>
    %28 = tpu.matmul %26, %27, %cst_11 {dimension_numbers = #tpu.dot_dimension_numbers<[1], [1], [0], [0], [0, 0, 1, 0], [], []>} : vector<128x128xbf16>, vector<512x128xbf16>, vector<128x512xf32> -> vector<128x512xf32>
    %c0_12 = arith.constant 0 : index
    %c0_13 = arith.constant 0 : index
    %29 = vector.load %arg6[%c0_12, %c0_13] : memref<128x512xf32, #tpu.memory_space<vmem>>, vector<128x512xf32>
    tpu.vector_store %arg6[%c0_12, %c0_13], %28 {strides = array<i32>} : memref<128x512xf32, #tpu.memory_space<vmem>>, vector<128x512xf32>,
    return
  }
  func.func @transform_0(%arg0: i32, %arg1: i32) -> (i32, i32) {
    %c0_i32 = arith.constant 0 : i32
    %c0_i32_0 = arith.constant 0 : i32
    return %arg0, %c0_i32 : i32, i32
  }
  func.func @transform_1(%arg0: i32, %arg1: i32) -> (i32, i32) {
    %c0_i32 = arith.constant 0 : i32
    %c0_i32_0 = arith.constant 0 : i32
    %c0_i32_1 = arith.constant 0 : i32
    return %c0_i32, %c0_i32_0 : i32, i32
  }
  func.func @transform_2(%arg0: i32, %arg1: i32) -> (i32, i32) {
    %c0_i32 = arith.constant 0 : i32
    %c0_i32_0 = arith.constant 0 : i32
    %c0_i32_1 = arith.constant 0 : i32
    return %c0_i32, %c0_i32_0 : i32, i32
  }
  func.func @transform_3(%arg0: i32, %arg1: i32) -> (i32, i32) {
    %c0_i32 = arith.constant 0 : i32
    %c0_i32_0 = arith.constant 0 : i32
    return %arg1, %c0_i32 : i32, i32
  }
  func.func @transform_4(%arg0: i32, %arg1: i32) -> (i32, i32) {
    %c0_i32 = arith.constant 0 : i32
    return %arg0, %arg1 : i32, i32
  }
}

</mosaic_0001>

<llo_original>
// kernel: text_decoder_forward.17
$region0: #{text_decoder_forward.17}
  #allocation0 [shape = 'u32[]', space=smem, size = 0x4, offset = 0x4, fixed_abs, tag = 'smem constant byte address 0x4 - core index']
  #allocation1 [shape = 'u32[144,128]{1,0:T(1,128)}', space=vmem, size = 0x12000, scoped, tag = 'internal scratch']
  %s0 = inlined_call_operand.vmem [shape: bf16[128,128], index: 0, kind: input, shape index: {}]
  %s1 = inlined_call_operand.vmem [shape: f32[1,128], index: 1, kind: input, shape index: {}]
  %s2 = inlined_call_operand.vmem [shape: f32[1,128], index: 2, kind: input, shape index: {}]
  %s3 = inlined_call_operand.vmem [shape: bf16[128,384], index: 3, kind: input, shape index: {}]
  %s4 = inlined_call_operand.vmem [shape: f32[1,384], index: 4, kind: input, shape index: {}]
  %s5 = inlined_call_operand.vmem [shape: bf16[128,384], index: 5, kind: output, shape index: {}]
  %s6 = sld [smem:[#allocation0]]
  $region131: #{text_decoder_forward.17} parent=0
    _
  %s8 = ssub.s32 1, %s6
  %s9 = scalar_select 0, %s8, %s6
  $region1: #{text_decoder_forward.17} parent=0
    #allocation2 [shape = 'u8[65536]{0}', space=vmem, size = 0x10000, scoped, tag = 'input window, operand 3']
    #allocation3 [shape = 'u8[65536]{0}', space=vmem, size = 0x10000, scoped, tag = 'output window, operand 0']
    loop: start=0, step=1, limit=5
    $region2: #{text_decoder_forward.17} parent=1 // loop_pre_header
      _
    $region3: #{text_decoder_forward.17} parent=1 // loop_header
      %s11 = sphi 0, %s15
      %p12 = scmp.ge.s32.totalorder %s11, 5
      %s18 = sphi 0, %s30
      %s19 = sphi 0, %s26
      %s20 = sphi 0, %s18
      %s21 = sphi 0, %s19
      %s22 = sphi 0, %s20
      %s23 = sphi 0, %s21
      %s33 = sphi 0, %s35
      %s36 = sphi 0, %s33
      %s37 = sphi 0, %s36
      %s53 = sphi 0, %s37
      %s57 = sphi 0, %s57
      %s59 = sphi 0, %s57
      %s60 = sphi 0, %s59
      %s74 = sphi 0, %s60
      %s78 = sphi 0, %s78
      %s80 = sphi 0, %s78
      %s81 = sphi 0, %s80
      %s95 = sphi 0, %s81
      %s101 = sphi 0, %s103
      %s104 = sphi 0, %s101
      %s105 = sphi 0, %s104
      %s121 = sphi 0, %s105
      %s127 = sphi 0, %s129
      %s130 = sphi 0, %s127
      %s131 = sphi 0, %s130
      %s147 = sphi 0, %s131
      %s155 = sphi 0, %s157
      %s158 = sphi 0, %s155
      %s159 = sphi 0, %s158
      %s175 = sphi 0, %s159
    $region4: #{text_decoder_forward.17} parent=1 // loop_header_branch
      %14 = sbr.rel (%p12) target = $region8
    $region5: #{text_decoder_forward.17} parent=1 // loop_body
      %s16 = ssub.s32 %s11, 1
      %s17 = ssub.s32 %s11, 2
      %s24 = sadd.s32 1, %s19
      %p25 = scmp.ge.s32.totalorder %s24, 3
      %s26 = scalar_select %p25, 0, %s24
      %s27 = sadd.s32 1, %s18
      %s28 = scalar_select %p25, %s27, %s18
      %p29 = scmp.ge.s32.totalorder %s28, 1
      %s30 = scalar_select %p29, 0, %s28
      %s31 = ssub.s32 %s18, %s30
      %p32 = scmp.eq.s32.totalorder %s31, 0
      %s34 = sadd.s32 %s33, 1
      %s35 = scalar_select %p32, %s33, %s34
      %p38 = pneg %p32
      %p39 = scmp.eq.s32.totalorder %s11, 2
      %p40 = por %p38, %p39
      %p41 = scmp.ne.s32.totalorder %s33, %s36
      %p42 = scmp.eq.s32.totalorder %s11, 0
      %p43 = por %p41, %p42
      %p44 = scmp.ne.s32.totalorder %s33, %s36
      %p45 = scmp.eq.s32.totalorder %s16, 2
      %p46 = por %p44, %p45
      %p47 = scmp.ne.s32.totalorder %s36, %s37
      %p48 = scmp.eq.s32.totalorder %s16, 0
      %p49 = por %p47, %p48
      %p50 = scmp.ne.s32.totalorder %s36, %s37
      %p51 = scmp.eq.s32.totalorder %s17, 2
      %p52 = por %p50, %p51
      %p54 = scmp.ne.s32.totalorder %s37, %s53
      %p55 = scmp.eq.s32.totalorder %s17, 0
      %p56 = por %p54, %p55
      %s58 = sadd.s32 %s57, 1
      %p61 = scmp.eq.s32.totalorder %s11, 2
      %p62 = scmp.ne.s32.totalorder %s57, %s59
      %p63 = scmp.eq.s32.totalorder %s11, 0
      %p64 = por %p62, %p63
      %p65 = scmp.ne.s32.totalorder %s57, %s59
      %p66 = scmp.eq.s32.totalorder %s16, 2
      %p67 = por %p65, %p66
      %p68 = scmp.ne.s32.totalorder %s59, %s60
      %p69 = scmp.eq.s32.totalorder %s16, 0
      %p70 = por %p68, %p69
      %p71 = scmp.ne.s32.totalorder %s59, %s60
      %p72 = scmp.eq.s32.totalorder %s17, 2
      %p73 = por %p71, %p72
      %p75 = scmp.ne.s32.totalorder %s60, %s74
      %p76 = scmp.eq.s32.totalorder %s17, 0
      %p77 = por %p75, %p76
      %s79 = sadd.s32 %s78, 1
      %p82 = scmp.eq.s32.totalorder %s11, 2
      %p83 = scmp.ne.s32.totalorder %s78, %s80
      %p84 = scmp.eq.s32.totalorder %s11, 0
      %p85 = por %p83, %p84
      %p86 = scmp.ne.s32.totalorder %s78, %s80
      %p87 = scmp.eq.s32.totalorder %s16, 2
      %p88 = por %p86, %p87
      %p89 = scmp.ne.s32.totalorder %s80, %s81
      %p90 = scmp.eq.s32.totalorder %s16, 0
      %p91 = por %p89, %p90
      %p92 = scmp.ne.s32.totalorder %s80, %s81
      %p93 = scmp.eq.s32.totalorder %s17, 2
      %p94 = por %p92, %p93
      %p96 = scmp.ne.s32.totalorder %s81, %s95
      %p97 = scmp.eq.s32.totalorder %s17, 0
      %p98 = por %p96, %p97
      %s99 = ssub.s32 %s19, %s26
      %p100 = scmp.eq.s32.totalorder %s99, 0
      %s102 = sadd.s32 %s101, 1
      %s103 = scalar_select %p100, %s101, %s102
      %p106 = pneg %p100
      %p107 = scmp.eq.s32.totalorder %s11, 2
      %p108 = por %p106, %p107
      %p109 = scmp.ne.s32.totalorder %s101, %s104
      %p110 = scmp.eq.s32.totalorder %s11, 0
      %p111 = por %p109, %p110
      %p112 = scmp.ne.s32.totalorder %s101, %s104
      %p113 = scmp.eq.s32.totalorder %s16, 2
      %p114 = por %p112, %p113
      %p115 = scmp.ne.s32.totalorder %s104, %s105
      %p116 = scmp.eq.s32.totalorder %s16, 0
      %p117 = por %p115, %p116
      %p118 = scmp.ne.s32.totalorder %s104, %s105
      %p119 = scmp.eq.s32.totalorder %s17, 2
      %p120 = por %p118, %p119
      %p122 = scmp.ne.s32.totalorder %s105, %s121
      %p123 = scmp.eq.s32.totalorder %s17, 0
      %p124 = por %p122, %p123
      %s125 = ssub.s32 %s19, %s26
      %p126 = scmp.eq.s32.totalorder %s125, 0
      %s128 = sadd.s32 %s127, 1
      %s129 = scalar_select %p126, %s127, %s128
      %p132 = pneg %p126
      %p133 = scmp.eq.s32.totalorder %s11, 2
      %p134 = por %p132, %p133
      %p135 = scmp.ne.s32.totalorder %s127, %s130
      %p136 = scmp.eq.s32.totalorder %s11, 0
      %p137 = por %p135, %p136
      %p138 = scmp.ne.s32.totalorder %s127, %s130
      %p139 = scmp.eq.s32.totalorder %s16, 2
      %p140 = por %p138, %p139
      %p141 = scmp.ne.s32.totalorder %s130, %s131
      %p142 = scmp.eq.s32.totalorder %s16, 0
      %p143 = por %p141, %p142
      %p144 = scmp.ne.s32.totalorder %s130, %s131
      %p145 = scmp.eq.s32.totalorder %s17, 2
      %p146 = por %p144, %p145
      %p148 = scmp.ne.s32.totalorder %s131, %s147
      %p149 = scmp.eq.s32.totalorder %s17, 0
      %p150 = por %p148, %p149
      %s151 = ssub.s32 %s18, %s30
      %s152 = ssub.s32 %s19, %s26
      %s153 = sor.u32 %s151, %s152
      %p154 = scmp.eq.s32.totalorder %s153, 0
      %s156 = sadd.s32 %s155, 1
      %s157 = scalar_select %p154, %s155, %s156
      %p160 = pneg %p154
      %p161 = scmp.eq.s32.totalorder %s11, 2
      %p162 = por %p160, %p161
      %p163 = scmp.ne.s32.totalorder %s155, %s158
      %p164 = scmp.eq.s32.totalorder %s11, 0
      %p165 = por %p163, %p164
      %p166 = scmp.ne.s32.totalorder %s155, %s158
      %p167 = scmp.eq.s32.totalorder %s16, 2
      %p168 = por %p166, %p167
      %p169 = scmp.ne.s32.totalorder %s158, %s159
      %p170 = scmp.eq.s32.totalorder %s16, 0
      %p171 = por %p169, %p170
      %p172 = scmp.ne.s32.totalorder %s158, %s159
      %p173 = scmp.eq.s32.totalorder %s17, 2
      %p174 = por %p172, %p173
      %p176 = scmp.ne.s32.totalorder %s159, %s175
      %p177 = scmp.eq.s32.totalorder %s17, 0
      %p178 = por %p176, %p177
      %p179 = scmp.le.s32.totalorder 1, %s11
      %p180 = scmp.lt.s32.totalorder %s11, 4
      %p181 = pnand %p179, %p180
      %p182 = pneg %p181
      // Predicated region
      $region9: #{text_decoder_forward.17} parent=5 // pred_check
        _
      $region10: #{text_decoder_forward.17} parent=5 // pred_check_branch
        %184 = sbr.rel (%p181) target = $region12
      $region11: #{text_decoder_forward.17} parent=5 // pred_region
        %s185 = ssub.s32 %s11, 1
        // Predicated region
        $region13: #{text_decoder_forward.17} parent=11 // pred_check
          %p186 = pneg %p49
        $region14: #{text_decoder_forward.17} parent=11 // pred_check_branch
          %188 = sbr.rel (%p186) target = $region16
        $region15: #{text_decoder_forward.17} parent=11 // pred_region
          %s189 = smul.u32 16, %s20
          %p190 = scmp.lt.s32.totalorder %s189, 15
          %s191 = scalar_select %p190, %s189, 15
          %s192 = smul.addr %s191, 4
          %s193 = scalar_lea.vmem %s0, %s192
          %s194 = smul.u32 16, %s20
        $region16: #{text_decoder_forward.17} parent=11 // pred_fallthru
          _
        // Predicated region
        $region17: #{text_decoder_forward.17} parent=11 // pred_check
          %p195 = pneg %p70
        $region18: #{text_decoder_forward.17} parent=11 // pred_check_branch
          %197 = sbr.rel (%p195) target = $region20
        $region19: #{text_decoder_forward.17} parent=11 // pred_region
          _
        $region20: #{text_decoder_forward.17} parent=11 // pred_fallthru
          _
        // Predicated region
        $region21: #{text_decoder_forward.17} parent=11 // pred_check
          %p198 = pneg %p91
        $region22: #{text_decoder_forward.17} parent=11 // pred_check_branch
          %200 = sbr.rel (%p198) target = $region24
        $region23: #{text_decoder_forward.17} parent=11 // pred_region
          _
        $region24: #{text_decoder_forward.17} parent=11 // pred_fallthru
          _
      $region12: #{text_decoder_forward.17} parent=5 // pred_fallthru
        _
      %p201 = scmp.lt.s32.totalorder %s11, 3
      // Predicated region
      $region25: #{text_decoder_forward.17} parent=5 // pred_check
        %p202 = pneg %p201
      $region26: #{text_decoder_forward.17} parent=5 // pred_check_branch
        %204 = sbr.rel (%p202) target = $region28
      $region27: #{text_decoder_forward.17} parent=5 // pred_region
        // Predicated region
        $region29: #{text_decoder_forward.17} parent=27 // pred_check
          %p205 = pneg %p111
        $region30: #{text_decoder_forward.17} parent=27 // pred_check_branch
          %207 = sbr.rel (%p205) target = $region32
        $region31: #{text_decoder_forward.17} parent=27 // pred_region
          %s208 = sand.u32 %s101, 1
          %s209 = sand.u32 %s101, 1
          %s210 = smul.addr %s209, 64
          %s211 = scalar_lea.vmem [#allocation2], %s210
          %s212 = smul.addr %s19, 4
          %s213 = scalar_lea.vmem %s3, %s212
          // Predicated region
          $region33: #{text_decoder_forward.17} parent=31 // pred_check
            _
          $region34: #{text_decoder_forward.17} parent=31 // pred_check_branch
            %215 = sbr.rel (0) target = $region36
          $region35: #{text_decoder_forward.17} parent=31 // pred_region
            // Predicated region
            $region37: #{text_decoder_forward.17} parent=35 // pred_check
              _
            $region38: #{text_decoder_forward.17} parent=35 // pred_check_branch
              %217 = sbr.rel target = $region40
            $region39: #{text_decoder_forward.17} parent=35 // pred_region
              // Predicated region
              $region52: #{text_decoder_forward.17} parent=39 // pred_check
                _
              $region53: #{text_decoder_forward.17} parent=39 // pred_check_branch
                %262 = sbr.rel (0) target = $region55
              $region54: #{text_decoder_forward.17} parent=39 // pred_region
                loop: start=0, step=1, limit=1
                $region56: #{text_decoder_forward.17} parent=54 // loop_pre_header
                  _
                $region57: #{text_decoder_forward.17} parent=54 // loop_header
                  %s264 = sphi 0, %s268
                  %p265 = scmp.ge.s32.totalorder %s264, 1
                  %s269 = sphi %s213, %s213
                  %s270 = sphi %s211, %s211
                $region58: #{text_decoder_forward.17} parent=54 // loop_header_branch
                  %267 = sbr.rel (%p265) target = $region62
                $region59: #{text_decoder_forward.17} parent=54 // loop_body
                  _
                $region60: #{text_decoder_forward.17} parent=54 // loop_footer
                  %s268 = sadd.s32 1, %s264
                $region61: #{text_decoder_forward.17} parent=54 // loop_footer_branch
                  %263 = sbr.rel target = $region57
                $region62: #{text_decoder_forward.17} parent=54 // loop_exit
                  _
                loop: start=0, step=1, limit=1
                $region63: #{text_decoder_forward.17} parent=54 // loop_pre_header
                  _
                $region64: #{text_decoder_forward.17} parent=54 // loop_header
                  %s273 = sphi 0, %s277
                  %p274 = scmp.ge.s32.totalorder %s273, 1
                  %s278 = sphi %s213, %s213
                  %s279 = sphi %s211, %s211
                $region65: #{text_decoder_forward.17} parent=54 // loop_header_branch
                  %276 = sbr.rel (%p274) target = $region69
                $region66: #{text_decoder_forward.17} parent=54 // loop_body
                  %v280 = vld [vmem:[%s278] sm:$0xf]
                  %281 = vst [vmem:[%s279] sm:$0xf] %v280
                  %v282 = vld [vmem:[%s278 + $0xc] sm:$0xf]
                  %283 = vst [vmem:[%s279 + $0x4] sm:$0xf] %v282
                  %v284 = vld [vmem:[%s278 + $0x18] sm:$0xf]
                  %285 = vst [vmem:[%s279 + $0x8] sm:$0xf] %v284
                  %v286 = vld [vmem:[%s278 + $0x24] sm:$0xf]
                  %287 = vst [vmem:[%s279 + $0xc] sm:$0xf] %v286
                  %v288 = vld [vmem:[%s278 + $0x30] sm:$0xf]
                  %289 = vst [vmem:[%s279 + $0x10] sm:$0xf] %v288
                  %v290 = vld [vmem:[%s278 + $0x3c] sm:$0xf]
                  %291 = vst [vmem:[%s279 + $0x14] sm:$0xf] %v290
                  %v292 = vld [vmem:[%s278 + $0x48] sm:$0xf]
                  %293 = vst [vmem:[%s279 + $0x18] sm:$0xf] %v292
                  %v294 = vld [vmem:[%s278 + $0x54] sm:$0xf]
                  %295 = vst [vmem:[%s279 + $0x1c] sm:$0xf] %v294
                  %v296 = vld [vmem:[%s278 + $0x60] sm:$0xf]
                  %297 = vst [vmem:[%s279 + $0x20] sm:$0xf] %v296
                  %v298 = vld [vmem:[%s278 + $0x6c] sm:$0xf]
                  %299 = vst [vmem:[%s279 + $0x24] sm:$0xf] %v298
                  %v300 = vld [vmem:[%s278 + $0x78] sm:$0xf]
                  %301 = vst [vmem:[%s279 + $0x28] sm:$0xf] %v300
                  %v302 = vld [vmem:[%s278 + $0x84] sm:$0xf]
                  %303 = vst [vmem:[%s279 + $0x2c] sm:$0xf] %v302
                  %v304 = vld [vmem:[%s278 + $0x90] sm:$0xf]
                  %305 = vst [vmem:[%s279 + $0x30] sm:$0xf] %v304
                  %v306 = vld [vmem:[%s278 + $0x9c] sm:$0xf]
                  %307 = vst [vmem:[%s279 + $0x34] sm:$0xf] %v306
                  %v308 = vld [vmem:[%s278 + $0xa8] sm:$0xf]
                  %309 = vst [vmem:[%s279 + $0x38] sm:$0xf] %v308
                  %v310 = vld [vmem:[%s278 + $0xb4] sm:$0xf]
                  %311 = vst [vmem:[%s279 + $0x3c] sm:$0xf] %v310
                $region67: #{text_decoder_forward.17} parent=54 // loop_footer
                  %s277 = sadd.s32 1, %s273
                $region68: #{text_decoder_forward.17} parent=54 // loop_footer_branch
                  %272 = sbr.rel target = $region64
                $region69: #{text_decoder_forward.17} parent=54 // loop_exit
                  _
              $region55: #{text_decoder_forward.17} parent=39 // pred_fallthru
                _
            $region40: #{text_decoder_forward.17} parent=35 // pred_fallthru
              _
            // Predicated region
            $region41: #{text_decoder_forward.17} parent=35 // pred_check
              _
            $region42: #{text_decoder_forward.17} parent=35 // pred_check_branch
              %219 = sbr.rel (0) target = $region44
            $region43: #{text_decoder_forward.17} parent=35 // pred_region
              loop: start=0, step=1, limit=1
              $region45: #{text_decoder_forward.17} parent=43 // loop_pre_header
                _
              $region46: #{text_decoder_forward.17} parent=43 // loop_header
                %s222 = sphi 0, %s226
                %p223 = scmp.ge.s32.totalorder %s222, 1
                %s227 = sphi %s213, %s213
                %s228 = sphi %s211, %s211
              $region47: #{text_decoder_forward.17} parent=43 // loop_header_branch
                %225 = sbr.rel (%p223) target = $region51
              $region48: #{text_decoder_forward.17} parent=43 // loop_body
                %v229 = vld [vmem:[%s227] sm:$0xf]
                %230 = vst [vmem:[%s228] sm:$0xf] %v229
                %v231 = vld [vmem:[%s227 + $0xc] sm:$0xf]
                %232 = vst [vmem:[%s228 + $0x4] sm:$0xf] %v231
                %v233 = vld [vmem:[%s227 + $0x18] sm:$0xf]
                %234 = vst [vmem:[%s228 + $0x8] sm:$0xf] %v233
                %v235 = vld [vmem:[%s227 + $0x24] sm:$0xf]
                %236 = vst [vmem:[%s228 + $0xc] sm:$0xf] %v235
                %v237 = vld [vmem:[%s227 + $0x30] sm:$0xf]
                %238 = vst [vmem:[%s228 + $0x10] sm:$0xf] %v237
                %v239 = vld [vmem:[%s227 + $0x3c] sm:$0xf]
                %240 = vst [vmem:[%s228 + $0x14] sm:$0xf] %v239
                %v241 = vld [vmem:[%s227 + $0x48] sm:$0xf]
                %242 = vst [vmem:[%s228 + $0x18] sm:$0xf] %v241
                %v243 = vld [vmem:[%s227 + $0x54] sm:$0xf]
                %244 = vst [vmem:[%s228 + $0x1c] sm:$0xf] %v243
                %v245 = vld [vmem:[%s227 + $0x60] sm:$0xf]
                %246 = vst [vmem:[%s228 + $0x20] sm:$0xf] %v245
                %v247 = vld [vmem:[%s227 + $0x6c] sm:$0xf]
                %248 = vst [vmem:[%s228 + $0x24] sm:$0xf] %v247
                %v249 = vld [vmem:[%s227 + $0x78] sm:$0xf]
                %250 = vst [vmem:[%s228 + $0x28] sm:$0xf] %v249
                %v251 = vld [vmem:[%s227 + $0x84] sm:$0xf]
                %252 = vst [vmem:[%s228 + $0x2c] sm:$0xf] %v251
                %v253 = vld [vmem:[%s227 + $0x90] sm:$0xf]
                %254 = vst [vmem:[%s228 + $0x30] sm:$0xf] %v253
                %v255 = vld [vmem:[%s227 + $0x9c] sm:$0xf]
                %256 = vst [vmem:[%s228 + $0x34] sm:$0xf] %v255
                %v257 = vld [vmem:[%s227 + $0xa8] sm:$0xf]
                %258 = vst [vmem:[%s228 + $0x38] sm:$0xf] %v257
                %v259 = vld [vmem:[%s227 + $0xb4] sm:$0xf]
                %260 = vst [vmem:[%s228 + $0x3c] sm:$0xf] %v259
              $region49: #{text_decoder_forward.17} parent=43 // loop_footer
                %s226 = sadd.s32 1, %s222
              $region50: #{text_decoder_forward.17} parent=43 // loop_footer_branch
                %221 = sbr.rel target = $region46
              $region51: #{text_decoder_forward.17} parent=43 // loop_exit
                _
            $region44: #{text_decoder_forward.17} parent=35 // pred_fallthru
              _
          $region36: #{text_decoder_forward.17} parent=31 // pred_fallthru
            _
          %312 = vnop
        $region32: #{text_decoder_forward.17} parent=27 // pred_fallthru
          _
        // Predicated region
        $region70: #{text_decoder_forward.17} parent=27 // pred_check
          %p313 = pneg %p137
        $region71: #{text_decoder_forward.17} parent=27 // pred_check_branch
          %315 = sbr.rel (%p313) target = $region73
        $region72: #{text_decoder_forward.17} parent=27 // pred_region
          %p316 = scmp.lt.s32.totalorder %s19, 2
          %s317 = scalar_select %p316, %s19, 2
          %s318 = scalar_lea.vmem %s4, %s317
        $region73: #{text_decoder_forward.17} parent=27 // pred_fallthru
          _
      $region28: #{text_decoder_forward.17} parent=5 // pred_fallthru
        _
      %p319 = scmp.le.s32.totalorder 1, %s11
      %p320 = scmp.lt.s32.totalorder %s11, 4
      %p321 = pnand %p319, %p320
      %p322 = pneg %p321
      // Predicated region
      $region74: #{text_decoder_forward.17} parent=5 // pred_check
        _
      $region75: #{text_decoder_forward.17} parent=5 // pred_check_branch
        %324 = sbr.rel (%p321) target = $region77
      $region76: #{text_decoder_forward.17} parent=5 // pred_region
        %s325 = ssub.s32 %s11, 1
        %s326 = sand.u32 %s104, 1
        %s327 = sand.u32 %s104, 1
        %s328 = smul.addr %s327, 64
        %s329 = scalar_lea.vmem [#allocation2], %s328
        // Predicated region
        $region78: #{text_decoder_forward.17} parent=76 // pred_check
          %p330 = pneg %p117
        $region79: #{text_decoder_forward.17} parent=76 // pred_check_branch
          %332 = sbr.rel (%p330) target = $region81
        $region80: #{text_decoder_forward.17} parent=76 // pred_region
          _
        $region81: #{text_decoder_forward.17} parent=76 // pred_fallthru
          _
        %s333 = smul.u32 16, %s20
        %p334 = scmp.lt.s32.totalorder %s333, 15
        %s335 = scalar_select %p334, %s333, 15
        %s336 = smul.addr %s335, 4
        %s337 = scalar_lea.vmem %s0, %s336
        %p338 = pneg %p49
        %p339 = pneg %p46
        %p340 = pneg %p70
        %p341 = pneg %p67
        %p342 = pneg %p91
        %p343 = pneg %p88
        %s344 = sand.u32 %s104, 1
        %s345 = sand.u32 %s104, 1
        %s346 = smul.addr %s345, 64
        %s347 = scalar_lea.vmem [#allocation2], %s346
        %p348 = pneg %p117
        %p349 = pneg %p114
        %p350 = scmp.lt.s32.totalorder %s21, 2
        %s351 = scalar_select %p350, %s21, 2
        %s352 = scalar_lea.vmem %s4, %s351
        %p353 = pneg %p143
        %p354 = pneg %p140
        %p355 = pneg %p171
        %p356 = pneg %p168
        %s357 = sand.u32 %s158, 1
        %s358 = sand.u32 %s158, 1
        %s359 = smul.addr %s358, 64
        %s360 = scalar_lea.vmem [#allocation3], %s359
        %s361 = smul.u32 16, %s20
        %p362 = scmp.lt.s32.totalorder %s361, 15
        %s363 = scalar_select %p362, %s361, 15
        %s364 = smul.addr %s363, 4
        %s365 = scalar_lea.vmem %s0, %s364
        %s366 = smul.u32 16, %s20
        %p367 = scmp.lt.s32.totalorder %s21, 2
        %s368 = scalar_select %p367, %s21, 2
        %s369 = scalar_lea.vmem %s4, %s368
        %s370 = smul.u32 16, %s20
        %v372 = vld [vmem:[%s365] sm:$0xf]
        %v373 = vld [vmem:[%s365 + $0x4] sm:$0xf]
        %v374 = vld [vmem:[%s365 + $0x8] sm:$0xf]
        %v375 = vld [vmem:[%s365 + $0xc] sm:$0xf]
        %v376 = vld [vmem:[%s365 + $0x10] sm:$0xf]
        %v377 = vld [vmem:[%s365 + $0x14] sm:$0xf]
        %v378 = vld [vmem:[%s365 + $0x18] sm:$0xf]
        %v379 = vld [vmem:[%s365 + $0x1c] sm:$0xf]
        %v380 = vld [vmem:[%s365 + $0x20] sm:$0xf]
        %v381 = vld [vmem:[%s365 + $0x24] sm:$0xf]
        %v382 = vld [vmem:[%s365 + $0x28] sm:$0xf]
        %v383 = vld [vmem:[%s365 + $0x2c] sm:$0xf]
        %v384 = vld [vmem:[%s365 + $0x30] sm:$0xf]
        %v385 = vld [vmem:[%s365 + $0x34] sm:$0xf]
        %v386 = vld [vmem:[%s365 + $0x38] sm:$0xf]
        %v387 = vld [vmem:[%s365 + $0x3c] sm:$0xf]
        %v388 = vunpack.c.l.bf16 %v372
        %v389 = vunpack.c.l.bf16 %v373
        %v390 = vunpack.c.l.bf16 %v374
        %v391 = vunpack.c.l.bf16 %v375
        %v392 = vunpack.c.l.bf16 %v376
        %v393 = vunpack.c.l.bf16 %v377
        %v394 = vunpack.c.l.bf16 %v378
        %v395 = vunpack.c.l.bf16 %v379
        %v396 = vunpack.c.l.bf16 %v380
        %v397 = vunpack.c.l.bf16 %v381
        %v398 = vunpack.c.l.bf16 %v382
        %v399 = vunpack.c.l.bf16 %v383
        %v400 = vunpack.c.l.bf16 %v384
        %v401 = vunpack.c.l.bf16 %v385
        %v402 = vunpack.c.l.bf16 %v386
        %v403 = vunpack.c.l.bf16 %v387
        %v404 = vld [vmem:[%s1] sm:$0x1]
        %v405 = vld [vmem:[%s2] sm:$0x1]
        %406 = vadd.xlane.f32.xlu0 %v388
        %v407 = vpop.xlane.xlu0 %406
        %408 = vadd.xlane.f32.xlu0 %v389
        %v409 = vpop.xlane.xlu0 %408
        %410 = vadd.xlane.f32.xlu0 %v390
        %v411 = vpop.xlane.xlu0 %410
        %412 = vadd.xlane.f32.xlu0 %v391
        %v413 = vpop.xlane.xlu0 %412
        %414 = vadd.xlane.f32.xlu0 %v392
        %v415 = vpop.xlane.xlu0 %414
        %416 = vadd.xlane.f32.xlu0 %v393
        %v417 = vpop.xlane.xlu0 %416
        %418 = vadd.xlane.f32.xlu0 %v394
        %v419 = vpop.xlane.xlu0 %418
        %420 = vadd.xlane.f32.xlu0 %v395
        %v421 = vpop.xlane.xlu0 %420
        %422 = vadd.xlane.f32.xlu0 %v396
        %v423 = vpop.xlane.xlu0 %422
        %424 = vadd.xlane.f32.xlu0 %v397
        %v425 = vpop.xlane.xlu0 %424
        %426 = vadd.xlane.f32.xlu0 %v398
        %v427 = vpop.xlane.xlu0 %426
        %428 = vadd.xlane.f32.xlu0 %v399
        %v429 = vpop.xlane.xlu0 %428
        %430 = vadd.xlane.f32.xlu0 %v400
        %v431 = vpop.xlane.xlu0 %430
        %432 = vadd.xlane.f32.xlu0 %v401
        %v433 = vpop.xlane.xlu0 %432
        %434 = vadd.xlane.f32.xlu0 %v402
        %v435 = vpop.xlane.xlu0 %434
        %436 = vadd.xlane.f32.xlu0 %v403
        %v437 = vpop.xlane.xlu0 %436
        %v438 = vrcp.pop 128.0
        %v439 = vmul.f32 %v407, %v438
        %v440 = vmul.f32 %v409, %v438
        %v441 = vmul.f32 %v411, %v438
        %v442 = vmul.f32 %v413, %v438
        %v443 = vmul.f32 %v415, %v438
        %v444 = vmul.f32 %v417, %v438
        %v445 = vmul.f32 %v419, %v438
        %v446 = vmul.f32 %v421, %v438
        %v447 = vmul.f32 %v423, %v438
        %v448 = vmul.f32 %v425, %v438
        %v449 = vmul.f32 %v427, %v438
        %v450 = vmul.f32 %v429, %v438
        %v451 = vmul.f32 %v431, %v438
        %v452 = vmul.f32 %v433, %v438
        %v453 = vmul.f32 %v435, %v438
        %v454 = vmul.f32 %v437, %v438
        %v455 = vsub.f32 %v388, %v439
        %v456 = vsub.f32 %v389, %v440
        %v457 = vsub.f32 %v390, %v441
        %v458 = vsub.f32 %v391, %v442
        %v459 = vsub.f32 %v392, %v443
        %v460 = vsub.f32 %v393, %v444
        %v461 = vsub.f32 %v394, %v445
        %v462 = vsub.f32 %v395, %v446
        %v463 = vsub.f32 %v396, %v447
        %v464 = vsub.f32 %v397, %v448
        %v465 = vsub.f32 %v398, %v449
        %v466 = vsub.f32 %v399, %v450
        %v467 = vsub.f32 %v400, %v451
        %v468 = vsub.f32 %v401, %v452
        %v469 = vsub.f32 %v402, %v453
        %v470 = vsub.f32 %v403, %v454
        %v471 = vmul.f32 %v455, %v455
        %v472 = vmul.f32 %v456, %v456
        %v473 = vmul.f32 %v457, %v457
        %v474 = vmul.f32 %v458, %v458
        %v475 = vmul.f32 %v459, %v459
        %v476 = vmul.f32 %v460, %v460
        %v477 = vmul.f32 %v461, %v461
        %v478 = vmul.f32 %v462, %v462
        %v479 = vmul.f32 %v463, %v463
        %v480 = vmul.f32 %v464, %v464
        %v481 = vmul.f32 %v465, %v465
        %v482 = vmul.f32 %v466, %v466
        %v483 = vmul.f32 %v467, %v467
        %v484 = vmul.f32 %v468, %v468
        %v485 = vmul.f32 %v469, %v469
        %v486 = vmul.f32 %v470, %v470
        %487 = vadd.xlane.f32.xlu0 %v471
        %v488 = vpop.xlane.xlu0 %487
        %489 = vadd.xlane.f32.xlu0 %v472
        %v490 = vpop.xlane.xlu0 %489
        %491 = vadd.xlane.f32.xlu0 %v473
        %v492 = vpop.xlane.xlu0 %491
        %493 = vadd.xlane.f32.xlu0 %v474
        %v494 = vpop.xlane.xlu0 %493
        %495 = vadd.xlane.f32.xlu0 %v475
        %v496 = vpop.xlane.xlu0 %495
        %497 = vadd.xlane.f32.xlu0 %v476
        %v498 = vpop.xlane.xlu0 %497
        %499 = vadd.xlane.f32.xlu0 %v477
        %v500 = vpop.xlane.xlu0 %499
        %501 = vadd.xlane.f32.xlu0 %v478
        %v502 = vpop.xlane.xlu0 %501
        %503 = vadd.xlane.f32.xlu0 %v479
        %v504 = vpop.xlane.xlu0 %503
        %505 = vadd.xlane.f32.xlu0 %v480
        %v506 = vpop.xlane.xlu0 %505
        %507 = vadd.xlane.f32.xlu0 %v481
        %v508 = vpop.xlane.xlu0 %507
        %509 = vadd.xlane.f32.xlu0 %v482
        %v510 = vpop.xlane.xlu0 %509
        %511 = vadd.xlane.f32.xlu0 %v483
        %v512 = vpop.xlane.xlu0 %511
        %513 = vadd.xlane.f32.xlu0 %v484
        %v514 = vpop.xlane.xlu0 %513
        %515 = vadd.xlane.f32.xlu0 %v485
        %v516 = vpop.xlane.xlu0 %515
        %517 = vadd.xlane.f32.xlu0 %v486
        %v518 = vpop.xlane.xlu0 %517
        %v519 = vmul.f32 %v488, %v438
        %v520 = vmul.f32 %v490, %v438
        %v521 = vmul.f32 %v492, %v438
        %v522 = vmul.f32 %v494, %v438
        %v523 = vmul.f32 %v496, %v438
        %v524 = vmul.f32 %v498, %v438
        %v525 = vmul.f32 %v500, %v438
        %v526 = vmul.f32 %v502, %v438
        %v527 = vmul.f32 %v504, %v438
        %v528 = vmul.f32 %v506, %v438
        %v529 = vmul.f32 %v508, %v438
        %v530 = vmul.f32 %v510, %v438
        %v531 = vmul.f32 %v512, %v438
        %v532 = vmul.f32 %v514, %v438
        %v533 = vmul.f32 %v516, %v438
        %v534 = vmul.f32 %v518, %v438
        %v535 = vadd.f32 %v519, 1e-05
        %v536 = vadd.f32 %v520, 1e-05
        %v537 = vadd.f32 %v521, 1e-05
        %v538 = vadd.f32 %v522, 1e-05
        %v539 = vadd.f32 %v523, 1e-05
        %v540 = vadd.f32 %v524, 1e-05
        %v541 = vadd.f32 %v525, 1e-05
        %v542 = vadd.f32 %v526, 1e-05
        %v543 = vadd.f32 %v527, 1e-05
        %v544 = vadd.f32 %v528, 1e-05
        %v545 = vadd.f32 %v529, 1e-05
        %v546 = vadd.f32 %v530, 1e-05
        %v547 = vadd.f32 %v531, 1e-05
        %v548 = vadd.f32 %v532, 1e-05
        %v549 = vadd.f32 %v533, 1e-05
        %v550 = vadd.f32 %v534, 1e-05
        %v551 = vrsqrt.pop %v535
        %v552 = vrsqrt.pop %v536
        %v553 = vrsqrt.pop %v537
        %v554 = vrsqrt.pop %v538
        %v555 = vrsqrt.pop %v539
        %v556 = vrsqrt.pop %v540
        %v557 = vrsqrt.pop %v541
        %v558 = vrsqrt.pop %v542
        %v559 = vrsqrt.pop %v543
        %v560 = vrsqrt.pop %v544
        %v561 = vrsqrt.pop %v545
        %v562 = vrsqrt.pop %v546
        %v563 = vrsqrt.pop %v547
        %v564 = vrsqrt.pop %v548
        %v565 = vrsqrt.pop %v549
        %v566 = vrsqrt.pop %v550
        %v567 = vmul.f32 %v455, %v551
        %v568 = vmul.f32 %v456, %v552
        %v569 = vmul.f32 %v457, %v553
        %v570 = vmul.f32 %v458, %v554
        %v571 = vmul.f32 %v459, %v555
        %v572 = vmul.f32 %v460, %v556
        %v573 = vmul.f32 %v461, %v557
        %v574 = vmul.f32 %v462, %v558
        %v575 = vmul.f32 %v463, %v559
        %v576 = vmul.f32 %v464, %v560
        %v577 = vmul.f32 %v465, %v561
        %v578 = vmul.f32 %v466, %v562
        %v579 = vmul.f32 %v467, %v563
        %v580 = vmul.f32 %v468, %v564
        %v581 = vmul.f32 %v469, %v565
        %v582 = vmul.f32 %v470, %v566
        %v584 = vlaneseq
        %v585 = vshrl.u32 %v584, 7
        %v586 = vsub.s32 0, %v585
        %v587 = vrot.slane %v404, %v586
        %v589 = vmul.f32 %v567, %v587
        %v590 = vmul.f32 %v568, %v587
        %v591 = vmul.f32 %v569, %v587
        %v592 = vmul.f32 %v570, %v587
        %v593 = vmul.f32 %v571, %v587
        %v594 = vmul.f32 %v572, %v587
        %v595 = vmul.f32 %v573, %v587
        %v596 = vmul.f32 %v574, %v587
        %v597 = vmul.f32 %v575, %v587
        %v598 = vmul.f32 %v576, %v587
        %v599 = vmul.f32 %v577, %v587
        %v600 = vmul.f32 %v578, %v587
        %v601 = vmul.f32 %v579, %v587
        %v602 = vmul.f32 %v580, %v587
        %v603 = vmul.f32 %v581, %v587
        %v604 = vmul.f32 %v582, %v587
        %v606 = vlaneseq
        %v607 = vshrl.u32 %v606, 7
        %v608 = vsub.s32 0, %v607
        %v609 = vrot.slane %v405, %v608
        %v611 = vadd.f32 %v589, %v609
        %v612 = vadd.f32 %v590, %v609
        %v613 = vadd.f32 %v591, %v609
        %v614 = vadd.f32 %v592, %v609
        %v615 = vadd.f32 %v593, %v609
        %v616 = vadd.f32 %v594, %v609
        %v617 = vadd.f32 %v595, %v609
        %v618 = vadd.f32 %v596, %v609
        %v619 = vadd.f32 %v597, %v609
        %v620 = vadd.f32 %v598, %v609
        %v621 = vadd.f32 %v599, %v609
        %v622 = vadd.f32 %v600, %v609
        %v623 = vadd.f32 %v601, %v609
        %v624 = vadd.f32 %v602, %v609
        %v625 = vadd.f32 %v603, %v609
        %v626 = vadd.f32 %v604, %v609
        %v627 = vpack.c.bf16 %v612, %v611
        %v628 = vpack.c.bf16 %v614, %v613
        %v629 = vpack.c.bf16 %v616, %v615
        %v630 = vpack.c.bf16 %v618, %v617
        %v631 = vpack.c.bf16 %v620, %v619
        %v632 = vpack.c.bf16 %v622, %v621
        %v633 = vpack.c.bf16 %v624, %v623
        %v634 = vpack.c.bf16 %v626, %v625
        %v635 = vld [vmem:[%s329] sm:$0xf]
        %v636 = vld [vmem:[%s329 + $0x4] sm:$0xf]
        %v637 = vld [vmem:[%s329 + $0x8] sm:$0xf]
        %v638 = vld [vmem:[%s329 + $0xc] sm:$0xf]
        %v639 = vld [vmem:[%s329 + $0x10] sm:$0xf]
        %v640 = vld [vmem:[%s329 + $0x14] sm:$0xf]
        %v641 = vld [vmem:[%s329 + $0x18] sm:$0xf]
        %v642 = vld [vmem:[%s329 + $0x1c] sm:$0xf]
        %v643 = vld [vmem:[%s329 + $0x20] sm:$0xf]
        %v644 = vld [vmem:[%s329 + $0x24] sm:$0xf]
        %v645 = vld [vmem:[%s329 + $0x28] sm:$0xf]
        %v646 = vld [vmem:[%s329 + $0x2c] sm:$0xf]
        %v647 = vld [vmem:[%s329 + $0x30] sm:$0xf]
        %v648 = vld [vmem:[%s329 + $0x34] sm:$0xf]
        %v649 = vld [vmem:[%s329 + $0x38] sm:$0xf]
        %v650 = vld [vmem:[%s329 + $0x3c] sm:$0xf]
        %v651 = vld [vmem:[%s369] sm:$0x1]
        %v653 = vlaneseq
        %v654 = vshrl.u32 %v653, 7
        %v655 = vsub.s32 0, %v654
        %v656 = vrot.slane %v651, %v655
        %v674 = vunpack.c.l.b16 %v635
        %v675 = vunpack.c.l.b16 %v636
        %v676 = vunpack.c.l.b16 %v637
        %v677 = vunpack.c.l.b16 %v638
        %v678 = vunpack.c.l.b16 %v639
        %v679 = vunpack.c.l.b16 %v640
        %v680 = vunpack.c.l.b16 %v641
        %v681 = vunpack.c.l.b16 %v642
        %v682 = vunpack.c.l.b16 %v643
        %v683 = vunpack.c.l.b16 %v644
        %v684 = vunpack.c.l.b16 %v645
        %v685 = vunpack.c.l.b16 %v646
        %v686 = vunpack.c.l.b16 %v647
        %v687 = vunpack.c.l.b16 %v648
        %v688 = vunpack.c.l.b16 %v649
        %v689 = vunpack.c.l.b16 %v650
        %v690 = vpack.c.b16 %v675, %v674
        %v691 = vpack.c.b16 %v677, %v676
        %v692 = vpack.c.b16 %v679, %v678
        %v693 = vpack.c.b16 %v681, %v680
        %v694 = vpack.c.b16 %v683, %v682
        %v695 = vpack.c.b16 %v685, %v684
        %v696 = vpack.c.b16 %v687, %v686
        %v697 = vpack.c.b16 %v689, %v688
        %706 = vmatprep.subr.bf16.mxu0 0
        %707 = vmatpush1.bf16.msra.mxu0 %v690
        %708 = vmatprep.subr.bf16.mxu0 0
        %709 = vmatpush1.bf16.msra.mxu0 %v691
        %710 = vmatprep.subr.bf16.mxu0 0
        %711 = vmatpush1.bf16.msra.mxu0 %v692
        %712 = vmatprep.subr.bf16.mxu0 0
        %713 = vmatpush1.bf16.msra.mxu0 %v693
        %714 = vmatprep.subr.bf16.mxu0 0
        %715 = vmatpush1.bf16.msra.mxu0 %v694
        %716 = vmatprep.subr.bf16.mxu0 0
        %717 = vmatpush1.bf16.msra.mxu0 %v695
        %718 = vmatprep.subr.bf16.mxu0 0
        %719 = vmatpush1.bf16.msra.mxu0 %v696
        %720 = vmatprep.subr.bf16.mxu0 0
        %721 = vmatpush1.bf16.msra.mxu0 %v697
        %722 = vmatprep.subr.bf16.mxu0 0
        %723 = vmatpush1.bf16.msra.mxu0 0
        %724 = vmatprep.subr.bf16.mxu0 0
        %725 = vmatpush1.bf16.msra.mxu0 0
        %726 = vmatprep.subr.bf16.mxu0 0
        %727 = vmatpush1.bf16.msra.mxu0 0
        %728 = vmatprep.subr.bf16.mxu0 0
        %729 = vmatpush1.bf16.msra.mxu0 0
        %730 = vmatprep.subr.bf16.mxu0 0
        %731 = vmatpush1.bf16.msra.mxu0 0
        %732 = vmatprep.subr.bf16.mxu0 0
        %733 = vmatpush1.bf16.msra.mxu0 0
        %734 = vmatprep.subr.bf16.mxu0 0
        %735 = vmatpush1.bf16.msra.mxu0 0
        %736 = vmatprep.subr.bf16.mxu0 0
        %737 = vmatpush1.bf16.msra.mxu0 0
        %738 = vmatprep.mubr.bf16.mxu0 0
        %739 = vmatmul.mubr.bf16.gmra.mrb[0].mxu0 %v627
        %v740 = vpop.f32.mrb[0].mxu0
        %v741 = vadd.f32 %v656, %v740
        %v742 = vpop.f32.mrb[0].mxu0
        %v743 = vpop.f32.mrb[0].mxu0
        %v744 = vadd.f32 %v656, %v743
        %v745 = vpop.f32.mrb[0].mxu0
        %746 = vmatprep.mubr.bf16.mxu0 0
        %747 = vmatmul.mubr.bf16.gmra.mrb[0].mxu0 %v628
        %v748 = vpop.f32.mrb[0].mxu0
        %v749 = vadd.f32 %v656, %v748
        %v750 = vpop.f32.mrb[0].mxu0
        %v751 = vpop.f32.mrb[0].mxu0
        %v752 = vadd.f32 %v656, %v751
        %v753 = vpop.f32.mrb[0].mxu0
        %754 = vmatprep.mubr.bf16.mxu0 0
        %755 = vmatmul.mubr.bf16.gmra.mrb[0].mxu0 %v629
        %v756 = vpop.f32.mrb[0].mxu0
        %v757 = vadd.f32 %v656, %v756
        %v758 = vpop.f32.mrb[0].mxu0
        %v759 = vpop.f32.mrb[0].mxu0
        %v760 = vadd.f32 %v656, %v759
        %v761 = vpop.f32.mrb[0].mxu0
        %762 = vmatprep.mubr.bf16.mxu0 0
        %763 = vmatmul.mubr.bf16.gmra.mrb[0].mxu0 %v630
        %v764 = vpop.f32.mrb[0].mxu0
        %v765 = vadd.f32 %v656, %v764
        %v766 = vpop.f32.mrb[0].mxu0
        %v767 = vpop.f32.mrb[0].mxu0
        %v768 = vadd.f32 %v656, %v767
        %v769 = vpop.f32.mrb[0].mxu0
        %770 = vmatprep.mubr.bf16.mxu0 0
        %771 = vmatmul.mubr.bf16.gmra.mrb[0].mxu0 %v631
        %v772 = vpop.f32.mrb[0].mxu0
        %v773 = vadd.f32 %v656, %v772
        %v774 = vpop.f32.mrb[0].mxu0
        %v775 = vpop.f32.mrb[0].mxu0
        %v776 = vadd.f32 %v656, %v775
        %v777 = vpop.f32.mrb[0].mxu0
        %778 = vmatprep.mubr.bf16.mxu0 0
        %779 = vmatmul.mubr.bf16.gmra.mrb[0].mxu0 %v632
        %v780 = vpop.f32.mrb[0].mxu0
        %v781 = vadd.f32 %v656, %v780
        %v782 = vpop.f32.mrb[0].mxu0
        %v783 = vpop.f32.mrb[0].mxu0
        %v784 = vadd.f32 %v656, %v783
        %v785 = vpop.f32.mrb[0].mxu0
        %786 = vmatprep.mubr.bf16.mxu0 0
        %787 = vmatmul.mubr.bf16.gmra.mrb[0].mxu0 %v633
        %v788 = vpop.f32.mrb[0].mxu0
        %v789 = vadd.f32 %v656, %v788
        %v790 = vpop.f32.mrb[0].mxu0
        %v791 = vpop.f32.mrb[0].mxu0
        %v792 = vadd.f32 %v656, %v791
        %v793 = vpop.f32.mrb[0].mxu0
        %794 = vmatprep.mubr.bf16.mxu0 0
        %795 = vmatmul.mubr.bf16.gmra.mrb[0].mxu0 %v634
        %v796 = vpop.f32.mrb[0].mxu0
        %v797 = vadd.f32 %v656, %v796
        %v798 = vpop.f32.mrb[0].mxu0
        %v799 = vpop.f32.mrb[0].mxu0
        %v800 = vadd.f32 %v656, %v799
        %v801 = vpop.f32.mrb[0].mxu0
        %802 = vdwg.mxu0
        %v803 = vpack.c.bf16 %v744, %v741
        %v804 = vpack.c.bf16 %v752, %v749
        %v805 = vpack.c.bf16 %v760, %v757
        %v806 = vpack.c.bf16 %v768, %v765
        %v807 = vpack.c.bf16 %v776, %v773
        %v808 = vpack.c.bf16 %v784, %v781
        %v809 = vpack.c.bf16 %v792, %v789
        %v810 = vpack.c.bf16 %v800, %v797
        %v819 = vunpack.c.l.b16 %v803
        %v820 = vunpack.c.h.b16 %v803
        %v821 = vunpack.c.l.b16 %v804
        %v822 = vunpack.c.h.b16 %v804
        %v823 = vunpack.c.l.b16 %v805
        %v824 = vunpack.c.h.b16 %v805
        %v825 = vunpack.c.l.b16 %v806
        %v826 = vunpack.c.h.b16 %v806
        %v827 = vunpack.c.l.b16 %v807
        %v828 = vunpack.c.h.b16 %v807
        %v829 = vunpack.c.l.b16 %v808
        %v830 = vunpack.c.h.b16 %v808
        %v831 = vunpack.c.l.b16 %v809
        %v832 = vunpack.c.h.b16 %v809
        %v833 = vunpack.c.l.b16 %v810
        %v834 = vunpack.c.h.b16 %v810
        %v835 = vpack.c.b16 %v819, %v819
        %v836 = vpack.c.b16 %v820, %v820
        %v837 = vpack.c.b16 %v821, %v821
        %v838 = vpack.c.b16 %v822, %v822
        %v839 = vpack.c.b16 %v823, %v823
        %v840 = vpack.c.b16 %v824, %v824
        %v841 = vpack.c.b16 %v825, %v825
        %v842 = vpack.c.b16 %v826, %v826
        %v843 = vpack.c.b16 %v827, %v827
        %v844 = vpack.c.b16 %v828, %v828
        %v845 = vpack.c.b16 %v829, %v829
        %v846 = vpack.c.b16 %v830, %v830
        %v847 = vpack.c.b16 %v831, %v831
        %v848 = vpack.c.b16 %v832, %v832
        %v849 = vpack.c.b16 %v833, %v833
        %v850 = vpack.c.b16 %v834, %v834
        %867 = vst [vmem:[%s360] sm:$0xf] %v835
        %868 = vst [vmem:[%s360 + $0x4] sm:$0xf] %v836
        %869 = vst [vmem:[%s360 + $0x8] sm:$0xf] %v837
        %870 = vst [vmem:[%s360 + $0xc] sm:$0xf] %v838
        %871 = vst [vmem:[%s360 + $0x10] sm:$0xf] %v839
        %872 = vst [vmem:[%s360 + $0x14] sm:$0xf] %v840
        %873 = vst [vmem:[%s360 + $0x18] sm:$0xf] %v841
        %874 = vst [vmem:[%s360 + $0x1c] sm:$0xf] %v842
        %875 = vst [vmem:[%s360 + $0x20] sm:$0xf] %v843
        %876 = vst [vmem:[%s360 + $0x24] sm:$0xf] %v844
        %877 = vst [vmem:[%s360 + $0x28] sm:$0xf] %v845
        %878 = vst [vmem:[%s360 + $0x2c] sm:$0xf] %v846
        %879 = vst [vmem:[%s360 + $0x30] sm:$0xf] %v847
        %880 = vst [vmem:[%s360 + $0x34] sm:$0xf] %v848
        %881 = vst [vmem:[%s360 + $0x38] sm:$0xf] %v849
        %882 = vst [vmem:[%s360 + $0x3c] sm:$0xf] %v850
        %s883 = sand.u32 %s158, 1
        %s884 = sand.u32 %s158, 1
        %s885 = smul.addr %s884, 64
        %s886 = scalar_lea.vmem [#allocation3], %s885
        // Predicated region
        $region82: #{text_decoder_forward.17} parent=76 // pred_check
          %p887 = pneg %p168
        $region83: #{text_decoder_forward.17} parent=76 // pred_check_branch
          %889 = sbr.rel (%p887) target = $region85
        $region84: #{text_decoder_forward.17} parent=76 // pred_region
          %s890 = smul.u32 16, %s20
          %s891 = smul.addr %s890, 3
          %s892 = sadd.s32 %s21, %s891
          %s893 = smul.addr %s892, 4
          %s894 = scalar_lea.vmem %s5, %s893
          // Predicated region
          $region86: #{text_decoder_forward.17} parent=84 // pred_check
            _
          $region87: #{text_decoder_forward.17} parent=84 // pred_check_branch
            %896 = sbr.rel (0) target = $region89
          $region88: #{text_decoder_forward.17} parent=84 // pred_region
            // Predicated region
            $region90: #{text_decoder_forward.17} parent=88 // pred_check
              _
            $region91: #{text_decoder_forward.17} parent=88 // pred_check_branch
              %898 = sbr.rel target = $region93
            $region92: #{text_decoder_forward.17} parent=88 // pred_region
              // Predicated region
              $region105: #{text_decoder_forward.17} parent=92 // pred_check
                _
              $region106: #{text_decoder_forward.17} parent=92 // pred_check_branch
                %943 = sbr.rel (0) target = $region108
              $region107: #{text_decoder_forward.17} parent=92 // pred_region
                loop: start=0, step=1, limit=1
                $region109: #{text_decoder_forward.17} parent=107 // loop_pre_header
                  _
                $region110: #{text_decoder_forward.17} parent=107 // loop_header
                  %s945 = sphi 0, %s949
                  %p946 = scmp.ge.s32.totalorder %s945, 1
                  %s950 = sphi %s886, %s886
                  %s951 = sphi %s894, %s894
                $region111: #{text_decoder_forward.17} parent=107 // loop_header_branch
                  %948 = sbr.rel (%p946) target = $region115
                $region112: #{text_decoder_forward.17} parent=107 // loop_body
                  _
                $region113: #{text_decoder_forward.17} parent=107 // loop_footer
                  %s949 = sadd.s32 1, %s945
                $region114: #{text_decoder_forward.17} parent=107 // loop_footer_branch
                  %944 = sbr.rel target = $region110
                $region115: #{text_decoder_forward.17} parent=107 // loop_exit
                  _
                loop: start=0, step=1, limit=1
                $region116: #{text_decoder_forward.17} parent=107 // loop_pre_header
                  _
                $region117: #{text_decoder_forward.17} parent=107 // loop_header
                  %s954 = sphi 0, %s958
                  %p955 = scmp.ge.s32.totalorder %s954, 1
                  %s959 = sphi %s886, %s886
                  %s960 = sphi %s894, %s894
                $region118: #{text_decoder_forward.17} parent=107 // loop_header_branch
                  %957 = sbr.rel (%p955) target = $region122
                $region119: #{text_decoder_forward.17} parent=107 // loop_body
                  %v961 = vld [vmem:[%s959] sm:$0xf]
                  %962 = vst [vmem:[%s960] sm:$0xf] %v961
                  %v963 = vld [vmem:[%s959 + $0x4] sm:$0xf]
                  %964 = vst [vmem:[%s960 + $0xc] sm:$0xf] %v963
                  %v965 = vld [vmem:[%s959 + $0x8] sm:$0xf]
                  %966 = vst [vmem:[%s960 + $0x18] sm:$0xf] %v965
                  %v967 = vld [vmem:[%s959 + $0xc] sm:$0xf]
                  %968 = vst [vmem:[%s960 + $0x24] sm:$0xf] %v967
                  %v969 = vld [vmem:[%s959 + $0x10] sm:$0xf]
                  %970 = vst [vmem:[%s960 + $0x30] sm:$0xf] %v969
                  %v971 = vld [vmem:[%s959 + $0x14] sm:$0xf]
                  %972 = vst [vmem:[%s960 + $0x3c] sm:$0xf] %v971
                  %v973 = vld [vmem:[%s959 + $0x18] sm:$0xf]
                  %974 = vst [vmem:[%s960 + $0x48] sm:$0xf] %v973
                  %v975 = vld [vmem:[%s959 + $0x1c] sm:$0xf]
                  %976 = vst [vmem:[%s960 + $0x54] sm:$0xf] %v975
                  %v977 = vld [vmem:[%s959 + $0x20] sm:$0xf]
                  %978 = vst [vmem:[%s960 + $0x60] sm:$0xf] %v977
                  %v979 = vld [vmem:[%s959 + $0x24] sm:$0xf]
                  %980 = vst [vmem:[%s960 + $0x6c] sm:$0xf] %v979
                  %v981 = vld [vmem:[%s959 + $0x28] sm:$0xf]
                  %982 = vst [vmem:[%s960 + $0x78] sm:$0xf] %v981
                  %v983 = vld [vmem:[%s959 + $0x2c] sm:$0xf]
                  %984 = vst [vmem:[%s960 + $0x84] sm:$0xf] %v983
                  %v985 = vld [vmem:[%s959 + $0x30] sm:$0xf]
                  %986 = vst [vmem:[%s960 + $0x90] sm:$0xf] %v985
                  %v987 = vld [vmem:[%s959 + $0x34] sm:$0xf]
                  %988 = vst [vmem:[%s960 + $0x9c] sm:$0xf] %v987
                  %v989 = vld [vmem:[%s959 + $0x38] sm:$0xf]
                  %990 = vst [vmem:[%s960 + $0xa8] sm:$0xf] %v989
                  %v991 = vld [vmem:[%s959 + $0x3c] sm:$0xf]
                  %992 = vst [vmem:[%s960 + $0xb4] sm:$0xf] %v991
                $region120: #{text_decoder_forward.17} parent=107 // loop_footer
                  %s958 = sadd.s32 1, %s954
                $region121: #{text_decoder_forward.17} parent=107 // loop_footer_branch
                  %953 = sbr.rel target = $region117
                $region122: #{text_decoder_forward.17} parent=107 // loop_exit
                  _
              $region108: #{text_decoder_forward.17} parent=92 // pred_fallthru
                _
            $region93: #{text_decoder_forward.17} parent=88 // pred_fallthru
              _
            // Predicated region
            $region94: #{text_decoder_forward.17} parent=88 // pred_check
              _
            $region95: #{text_decoder_forward.17} parent=88 // pred_check_branch
              %900 = sbr.rel (0) target = $region97
            $region96: #{text_decoder_forward.17} parent=88 // pred_region
              loop: start=0, step=1, limit=1
              $region98: #{text_decoder_forward.17} parent=96 // loop_pre_header
                _
              $region99: #{text_decoder_forward.17} parent=96 // loop_header
                %s903 = sphi 0, %s907
                %p904 = scmp.ge.s32.totalorder %s903, 1
                %s908 = sphi %s886, %s886
                %s909 = sphi %s894, %s894
              $region100: #{text_decoder_forward.17} parent=96 // loop_header_branch
                %906 = sbr.rel (%p904) target = $region104
              $region101: #{text_decoder_forward.17} parent=96 // loop_body
                %v910 = vld [vmem:[%s908] sm:$0xf]
                %911 = vst [vmem:[%s909] sm:$0xf] %v910
                %v912 = vld [vmem:[%s908 + $0x4] sm:$0xf]
                %913 = vst [vmem:[%s909 + $0xc] sm:$0xf] %v912
                %v914 = vld [vmem:[%s908 + $0x8] sm:$0xf]
                %915 = vst [vmem:[%s909 + $0x18] sm:$0xf] %v914
                %v916 = vld [vmem:[%s908 + $0xc] sm:$0xf]
                %917 = vst [vmem:[%s909 + $0x24] sm:$0xf] %v916
                %v918 = vld [vmem:[%s908 + $0x10] sm:$0xf]
                %919 = vst [vmem:[%s909 + $0x30] sm:$0xf] %v918
                %v920 = vld [vmem:[%s908 + $0x14] sm:$0xf]
                %921 = vst [vmem:[%s909 + $0x3c] sm:$0xf] %v920
                %v922 = vld [vmem:[%s908 + $0x18] sm:$0xf]
                %923 = vst [vmem:[%s909 + $0x48] sm:$0xf] %v922
                %v924 = vld [vmem:[%s908 + $0x1c] sm:$0xf]
                %925 = vst [vmem:[%s909 + $0x54] sm:$0xf] %v924
                %v926 = vld [vmem:[%s908 + $0x20] sm:$0xf]
                %927 = vst [vmem:[%s909 + $0x60] sm:$0xf] %v926
                %v928 = vld [vmem:[%s908 + $0x24] sm:$0xf]
                %929 = vst [vmem:[%s909 + $0x6c] sm:$0xf] %v928
                %v930 = vld [vmem:[%s908 + $0x28] sm:$0xf]
                %931 = vst [vmem:[%s909 + $0x78] sm:$0xf] %v930
                %v932 = vld [vmem:[%s908 + $0x2c] sm:$0xf]
                %933 = vst [vmem:[%s909 + $0x84] sm:$0xf] %v932
                %v934 = vld [vmem:[%s908 + $0x30] sm:$0xf]
                %935 = vst [vmem:[%s909 + $0x90] sm:$0xf] %v934
                %v936 = vld [vmem:[%s908 + $0x34] sm:$0xf]
                %937 = vst [vmem:[%s909 + $0x9c] sm:$0xf] %v936
                %v938 = vld [vmem:[%s908 + $0x38] sm:$0xf]
                %939 = vst [vmem:[%s909 + $0xa8] sm:$0xf] %v938
                %v940 = vld [vmem:[%s908 + $0x3c] sm:$0xf]
                %941 = vst [vmem:[%s909 + $0xb4] sm:$0xf] %v940
              $region102: #{text_decoder_forward.17} parent=96 // loop_footer
                %s907 = sadd.s32 1, %s903
              $region103: #{text_decoder_forward.17} parent=96 // loop_footer_branch
                %902 = sbr.rel target = $region99
              $region104: #{text_decoder_forward.17} parent=96 // loop_exit
                _
            $region97: #{text_decoder_forward.17} parent=88 // pred_fallthru
              _
          $region89: #{text_decoder_forward.17} parent=84 // pred_fallthru
            _
          %993 = vnop
        $region85: #{text_decoder_forward.17} parent=76 // pred_fallthru
          _
      $region77: #{text_decoder_forward.17} parent=5 // pred_fallthru
        _
      %p994 = scmp.le.s32.totalorder 2, %s11
      // Predicated region
      $region123: #{text_decoder_forward.17} parent=5 // pred_check
        %p995 = pneg %p994
      $region124: #{text_decoder_forward.17} parent=5 // pred_check_branch
        %997 = sbr.rel (%p995) target = $region126
      $region125: #{text_decoder_forward.17} parent=5 // pred_region
        %s998 = ssub.s32 %s11, 2
        // Predicated region
        $region127: #{text_decoder_forward.17} parent=125 // pred_check
          %p999 = pneg %p174
        $region128: #{text_decoder_forward.17} parent=125 // pred_check_branch
          %1001 = sbr.rel (%p999) target = $region130
        $region129: #{text_decoder_forward.17} parent=125 // pred_region
          %s1002 = sand.u32 %s159, 1
          %s1003 = sand.u32 %s159, 1
          %s1004 = smul.addr %s1003, 64
          %s1005 = scalar_lea.vmem [#allocation3], %s1004
        $region130: #{text_decoder_forward.17} parent=125 // pred_fallthru
          _
      $region126: #{text_decoder_forward.17} parent=5 // pred_fallthru
        _
    $region6: #{text_decoder_forward.17} parent=1 // loop_footer
      %s15 = sadd.s32 1, %s11
    $region7: #{text_decoder_forward.17} parent=1 // loop_footer_branch
      %10 = sbr.rel target = $region3
    $region8: #{text_decoder_forward.17} parent=1 // loop_exit
      _

// kernel: text_decoder_forward.20
$region0: #{text_decoder_forward.20}
  #allocation0 [shape = 'u32[]', space=smem, size = 0x4, offset = 0x4, fixed_abs, tag = 'smem constant byte address 0x4 - core index']
  #allocation1 [shape = 'u32[144,128]{1,0:T(1,128)}', space=vmem, size = 0x12000, scoped, tag = 'internal scratch']
  %s0 = inlined_call_operand.vmem [shape: bf16[128,128], index: 0, kind: input, shape index: {}]
  %s1 = inlined_call_operand.vmem [shape: f32[1,128], index: 1, kind: input, shape index: {}]
  %s2 = inlined_call_operand.vmem [shape: f32[1,128], index: 2, kind: input, shape index: {}]
  %s3 = inlined_call_operand.vmem [shape: bf16[128,128], index: 3, kind: input, shape index: {}]
  %s4 = inlined_call_operand.vmem [shape: f32[1,128], index: 4, kind: input, shape index: {}]
  %s5 = inlined_call_operand.vmem [shape: bf16[128,128], index: 5, kind: output, shape index: {}]
  %s6 = sld [smem:[#allocation0]]
  $region30: #{text_decoder_forward.20} parent=0
    _
  %s8 = ssub.s32 1, %s6
  %s9 = scalar_select 0, %s8, %s6
  // Predicated region
  $region2: #{text_decoder_forward.20} parent=0 // pred_check
    _
  $region3: #{text_decoder_forward.20} parent=0 // pred_check_branch
    %11 = sbr.rel (0) target = $region5
  $region4: #{text_decoder_forward.20} parent=0 // pred_region
    _
  $region5: #{text_decoder_forward.20} parent=0 // pred_fallthru
    _
  // Predicated region
  $region6: #{text_decoder_forward.20} parent=0 // pred_check
    _
  $region7: #{text_decoder_forward.20} parent=0 // pred_check_branch
    %13 = sbr.rel (0) target = $region9
  $region8: #{text_decoder_forward.20} parent=0 // pred_region
    _
  $region9: #{text_decoder_forward.20} parent=0 // pred_fallthru
    _
  // Predicated region
  $region10: #{text_decoder_forward.20} parent=0 // pred_check
    _
  $region11: #{text_decoder_forward.20} parent=0 // pred_check_branch
    %15 = sbr.rel (0) target = $region13
  $region12: #{text_decoder_forward.20} parent=0 // pred_region
    _
  $region13: #{text_decoder_forward.20} parent=0 // pred_fallthru
    _
  // Predicated region
  $region14: #{text_decoder_forward.20} parent=0 // pred_check
    _
  $region15: #{text_decoder_forward.20} parent=0 // pred_check_branch
    %17 = sbr.rel (0) target = $region17
  $region16: #{text_decoder_forward.20} parent=0 // pred_region
    _
  $region17: #{text_decoder_forward.20} parent=0 // pred_fallthru
    _
  // Predicated region
  $region18: #{text_decoder_forward.20} parent=0 // pred_check
    _
  $region19: #{text_decoder_forward.20} parent=0 // pred_check_branch
    %19 = sbr.rel (0) target = $region21
  $region20: #{text_decoder_forward.20} parent=0 // pred_region
    _
  $region21: #{text_decoder_forward.20} parent=0 // pred_fallthru
    _
  %v21 = vld [vmem:[%s0] sm:$0xf]
  %v22 = vld [vmem:[%s0 + $0x4] sm:$0xf]
  %v23 = vld [vmem:[%s0 + $0x8] sm:$0xf]
  %v24 = vld [vmem:[%s0 + $0xc] sm:$0xf]
  %v25 = vld [vmem:[%s0 + $0x10] sm:$0xf]
  %v26 = vld [vmem:[%s0 + $0x14] sm:$0xf]
  %v27 = vld [vmem:[%s0 + $0x18] sm:$0xf]
  %v28 = vld [vmem:[%s0 + $0x1c] sm:$0xf]
  %v29 = vld [vmem:[%s0 + $0x20] sm:$0xf]
  %v30 = vld [vmem:[%s0 + $0x24] sm:$0xf]
  %v31 = vld [vmem:[%s0 + $0x28] sm:$0xf]
  %v32 = vld [vmem:[%s0 + $0x2c] sm:$0xf]
  %v33 = vld [vmem:[%s0 + $0x30] sm:$0xf]
  %v34 = vld [vmem:[%s0 + $0x34] sm:$0xf]
  %v35 = vld [vmem:[%s0 + $0x38] sm:$0xf]
  %v36 = vld [vmem:[%s0 + $0x3c] sm:$0xf]
  %v37 = vunpack.c.l.bf16 %v21
  %v38 = vunpack.c.l.bf16 %v22
  %v39 = vunpack.c.l.bf16 %v23
  %v40 = vunpack.c.l.bf16 %v24
  %v41 = vunpack.c.l.bf16 %v25
  %v42 = vunpack.c.l.bf16 %v26
  %v43 = vunpack.c.l.bf16 %v27
  %v44 = vunpack.c.l.bf16 %v28
  %v45 = vunpack.c.l.bf16 %v29
  %v46 = vunpack.c.l.bf16 %v30
  %v47 = vunpack.c.l.bf16 %v31
  %v48 = vunpack.c.l.bf16 %v32
  %v49 = vunpack.c.l.bf16 %v33
  %v50 = vunpack.c.l.bf16 %v34
  %v51 = vunpack.c.l.bf16 %v35
  %v52 = vunpack.c.l.bf16 %v36
  %v53 = vld [vmem:[%s1] sm:$0x1]
  %v54 = vld [vmem:[%s2] sm:$0x1]
  %55 = vadd.xlane.f32.xlu0 %v37
  %v56 = vpop.xlane.xlu0 %55
  %57 = vadd.xlane.f32.xlu0 %v38
  %v58 = vpop.xlane.xlu0 %57
  %59 = vadd.xlane.f32.xlu0 %v39
  %v60 = vpop.xlane.xlu0 %59
  %61 = vadd.xlane.f32.xlu0 %v40
  %v62 = vpop.xlane.xlu0 %61
  %63 = vadd.xlane.f32.xlu0 %v41
  %v64 = vpop.xlane.xlu0 %63
  %65 = vadd.xlane.f32.xlu0 %v42
  %v66 = vpop.xlane.xlu0 %65
  %67 = vadd.xlane.f32.xlu0 %v43
  %v68 = vpop.xlane.xlu0 %67
  %69 = vadd.xlane.f32.xlu0 %v44
  %v70 = vpop.xlane.xlu0 %69
  %71 = vadd.xlane.f32.xlu0 %v45
  %v72 = vpop.xlane.xlu0 %71
  %73 = vadd.xlane.f32.xlu0 %v46
  %v74 = vpop.xlane.xlu0 %73
  %75 = vadd.xlane.f32.xlu0 %v47
  %v76 = vpop.xlane.xlu0 %75
  %77 = vadd.xlane.f32.xlu0 %v48
  %v78 = vpop.xlane.xlu0 %77
  %79 = vadd.xlane.f32.xlu0 %v49
  %v80 = vpop.xlane.xlu0 %79
  %81 = vadd.xlane.f32.xlu0 %v50
  %v82 = vpop.xlane.xlu0 %81
  %83 = vadd.xlane.f32.xlu0 %v51
  %v84 = vpop.xlane.xlu0 %83
  %85 = vadd.xlane.f32.xlu0 %v52
  %v86 = vpop.xlane.xlu0 %85
  %v87 = vrcp.pop 128.0
  %v88 = vmul.f32 %v56, %v87
  %v89 = vmul.f32 %v58, %v87
  %v90 = vmul.f32 %v60, %v87
  %v91 = vmul.f32 %v62, %v87
  %v92 = vmul.f32 %v64, %v87
  %v93 = vmul.f32 %v66, %v87
  %v94 = vmul.f32 %v68, %v87
  %v95 = vmul.f32 %v70, %v87
  %v96 = vmul.f32 %v72, %v87
  %v97 = vmul.f32 %v74, %v87
  %v98 = vmul.f32 %v76, %v87
  %v99 = vmul.f32 %v78, %v87
  %v100 = vmul.f32 %v80, %v87
  %v101 = vmul.f32 %v82, %v87
  %v102 = vmul.f32 %v84, %v87
  %v103 = vmul.f32 %v86, %v87
  %v104 = vsub.f32 %v37, %v88
  %v105 = vsub.f32 %v38, %v89
  %v106 = vsub.f32 %v39, %v90
  %v107 = vsub.f32 %v40, %v91
  %v108 = vsub.f32 %v41, %v92
  %v109 = vsub.f32 %v42, %v93
  %v110 = vsub.f32 %v43, %v94
  %v111 = vsub.f32 %v44, %v95
  %v112 = vsub.f32 %v45, %v96
  %v113 = vsub.f32 %v46, %v97
  %v114 = vsub.f32 %v47, %v98
  %v115 = vsub.f32 %v48, %v99
  %v116 = vsub.f32 %v49, %v100
  %v117 = vsub.f32 %v50, %v101
  %v118 = vsub.f32 %v51, %v102
  %v119 = vsub.f32 %v52, %v103
  %v120 = vmul.f32 %v104, %v104
  %v121 = vmul.f32 %v105, %v105
  %v122 = vmul.f32 %v106, %v106
  %v123 = vmul.f32 %v107, %v107
  %v124 = vmul.f32 %v108, %v108
  %v125 = vmul.f32 %v109, %v109
  %v126 = vmul.f32 %v110, %v110
  %v127 = vmul.f32 %v111, %v111
  %v128 = vmul.f32 %v112, %v112
  %v129 = vmul.f32 %v113, %v113
  %v130 = vmul.f32 %v114, %v114
  %v131 = vmul.f32 %v115, %v115
  %v132 = vmul.f32 %v116, %v116
  %v133 = vmul.f32 %v117, %v117
  %v134 = vmul.f32 %v118, %v118
  %v135 = vmul.f32 %v119, %v119
  %136 = vadd.xlane.f32.xlu0 %v120
  %v137 = vpop.xlane.xlu0 %136
  %138 = vadd.xlane.f32.xlu0 %v121
  %v139 = vpop.xlane.xlu0 %138
  %140 = vadd.xlane.f32.xlu0 %v122
  %v141 = vpop.xlane.xlu0 %140
  %142 = vadd.xlane.f32.xlu0 %v123
  %v143 = vpop.xlane.xlu0 %142
  %144 = vadd.xlane.f32.xlu0 %v124
  %v145 = vpop.xlane.xlu0 %144
  %146 = vadd.xlane.f32.xlu0 %v125
  %v147 = vpop.xlane.xlu0 %146
  %148 = vadd.xlane.f32.xlu0 %v126
  %v149 = vpop.xlane.xlu0 %148
  %150 = vadd.xlane.f32.xlu0 %v127
  %v151 = vpop.xlane.xlu0 %150
  %152 = vadd.xlane.f32.xlu0 %v128
  %v153 = vpop.xlane.xlu0 %152
  %154 = vadd.xlane.f32.xlu0 %v129
  %v155 = vpop.xlane.xlu0 %154
  %156 = vadd.xlane.f32.xlu0 %v130
  %v157 = vpop.xlane.xlu0 %156
  %158 = vadd.xlane.f32.xlu0 %v131
  %v159 = vpop.xlane.xlu0 %158
  %160 = vadd.xlane.f32.xlu0 %v132
  %v161 = vpop.xlane.xlu0 %160
  %162 = vadd.xlane.f32.xlu0 %v133
  %v163 = vpop.xlane.xlu0 %162
  %164 = vadd.xlane.f32.xlu0 %v134
  %v165 = vpop.xlane.xlu0 %164
  %166 = vadd.xlane.f32.xlu0 %v135
  %v167 = vpop.xlane.xlu0 %166
  %v168 = vmul.f32 %v137, %v87
  %v169 = vmul.f32 %v139, %v87
  %v170 = vmul.f32 %v141, %v87
  %v171 = vmul.f32 %v143, %v87
  %v172 = vmul.f32 %v145, %v87
  %v173 = vmul.f32 %v147, %v87
  %v174 = vmul.f32 %v149, %v87
  %v175 = vmul.f32 %v151, %v87
  %v176 = vmul.f32 %v153, %v87
  %v177 = vmul.f32 %v155, %v87
  %v178 = vmul.f32 %v157, %v87
  %v179 = vmul.f32 %v159, %v87
  %v180 = vmul.f32 %v161, %v87
  %v181 = vmul.f32 %v163, %v87
  %v182 = vmul.f32 %v165, %v87
  %v183 = vmul.f32 %v167, %v87
  %v184 = vadd.f32 %v168, 1e-05
  %v185 = vadd.f32 %v169, 1e-05
  %v186 = vadd.f32 %v170, 1e-05
  %v187 = vadd.f32 %v171, 1e-05
  %v188 = vadd.f32 %v172, 1e-05
  %v189 = vadd.f32 %v173, 1e-05
  %v190 = vadd.f32 %v174, 1e-05
  %v191 = vadd.f32 %v175, 1e-05
  %v192 = vadd.f32 %v176, 1e-05
  %v193 = vadd.f32 %v177, 1e-05
  %v194 = vadd.f32 %v178, 1e-05
  %v195 = vadd.f32 %v179, 1e-05
  %v196 = vadd.f32 %v180, 1e-05
  %v197 = vadd.f32 %v181, 1e-05
  %v198 = vadd.f32 %v182, 1e-05
  %v199 = vadd.f32 %v183, 1e-05
  %v200 = vrsqrt.pop %v184
  %v201 = vrsqrt.pop %v185
  %v202 = vrsqrt.pop %v186
  %v203 = vrsqrt.pop %v187
  %v204 = vrsqrt.pop %v188
  %v205 = vrsqrt.pop %v189
  %v206 = vrsqrt.pop %v190
  %v207 = vrsqrt.pop %v191
  %v208 = vrsqrt.pop %v192
  %v209 = vrsqrt.pop %v193
  %v210 = vrsqrt.pop %v194
  %v211 = vrsqrt.pop %v195
  %v212 = vrsqrt.pop %v196
  %v213 = vrsqrt.pop %v197
  %v214 = vrsqrt.pop %v198
  %v215 = vrsqrt.pop %v199
  %v216 = vmul.f32 %v104, %v200
  %v217 = vmul.f32 %v105, %v201
  %v218 = vmul.f32 %v106, %v202
  %v219 = vmul.f32 %v107, %v203
  %v220 = vmul.f32 %v108, %v204
  %v221 = vmul.f32 %v109, %v205
  %v222 = vmul.f32 %v110, %v206
  %v223 = vmul.f32 %v111, %v207
  %v224 = vmul.f32 %v112, %v208
  %v225 = vmul.f32 %v113, %v209
  %v226 = vmul.f32 %v114, %v210
  %v227 = vmul.f32 %v115, %v211
  %v228 = vmul.f32 %v116, %v212
  %v229 = vmul.f32 %v117, %v213
  %v230 = vmul.f32 %v118, %v214
  %v231 = vmul.f32 %v119, %v215
  %v233 = vlaneseq
  %v234 = vshrl.u32 %v233, 7
  %v235 = vsub.s32 0, %v234
  %v236 = vrot.slane %v53, %v235
  %v238 = vmul.f32 %v216, %v236
  %v239 = vmul.f32 %v217, %v236
  %v240 = vmul.f32 %v218, %v236
  %v241 = vmul.f32 %v219, %v236
  %v242 = vmul.f32 %v220, %v236
  %v243 = vmul.f32 %v221, %v236
  %v244 = vmul.f32 %v222, %v236
  %v245 = vmul.f32 %v223, %v236
  %v246 = vmul.f32 %v224, %v236
  %v247 = vmul.f32 %v225, %v236
  %v248 = vmul.f32 %v226, %v236
  %v249 = vmul.f32 %v227, %v236
  %v250 = vmul.f32 %v228, %v236
  %v251 = vmul.f32 %v229, %v236
  %v252 = vmul.f32 %v230, %v236
  %v253 = vmul.f32 %v231, %v236
  %v255 = vlaneseq
  %v256 = vshrl.u32 %v255, 7
  %v257 = vsub.s32 0, %v256
  %v258 = vrot.slane %v54, %v257
  %v260 = vadd.f32 %v238, %v258
  %v261 = vadd.f32 %v239, %v258
  %v262 = vadd.f32 %v240, %v258
  %v263 = vadd.f32 %v241, %v258
  %v264 = vadd.f32 %v242, %v258
  %v265 = vadd.f32 %v243, %v258
  %v266 = vadd.f32 %v244, %v258
  %v267 = vadd.f32 %v245, %v258
  %v268 = vadd.f32 %v246, %v258
  %v269 = vadd.f32 %v247, %v258
  %v270 = vadd.f32 %v248, %v258
  %v271 = vadd.f32 %v249, %v258
  %v272 = vadd.f32 %v250, %v258
  %v273 = vadd.f32 %v251, %v258
  %v274 = vadd.f32 %v252, %v258
  %v275 = vadd.f32 %v253, %v258
  %v276 = vpack.c.bf16 %v261, %v260
  %v277 = vpack.c.bf16 %v263, %v262
  %v278 = vpack.c.bf16 %v265, %v264
  %v279 = vpack.c.bf16 %v267, %v266
  %v280 = vpack.c.bf16 %v269, %v268
  %v281 = vpack.c.bf16 %v271, %v270
  %v282 = vpack.c.bf16 %v273, %v272
  %v283 = vpack.c.bf16 %v275, %v274
  %v284 = vld [vmem:[%s3] sm:$0xf]
  %v285 = vld [vmem:[%s3 + $0x4] sm:$0xf]
  %v286 = vld [vmem:[%s3 + $0x8] sm:$0xf]
  %v287 = vld [vmem:[%s3 + $0xc] sm:$0xf]
  %v288 = vld [vmem:[%s3 + $0x10] sm:$0xf]
  %v289 = vld [vmem:[%s3 + $0x14] sm:$0xf]
  %v290 = vld [vmem:[%s3 + $0x18] sm:$0xf]
  %v291 = vld [vmem:[%s3 + $0x1c] sm:$0xf]
  %v292 = vld [vmem:[%s3 + $0x20] sm:$0xf]
  %v293 = vld [vmem:[%s3 + $0x24] sm:$0xf]
  %v294 = vld [vmem:[%s3 + $0x28] sm:$0xf]
  %v295 = vld [vmem:[%s3 + $0x2c] sm:$0xf]
  %v296 = vld [vmem:[%s3 + $0x30] sm:$0xf]
  %v297 = vld [vmem:[%s3 + $0x34] sm:$0xf]
  %v298 = vld [vmem:[%s3 + $0x38] sm:$0xf]
  %v299 = vld [vmem:[%s3 + $0x3c] sm:$0xf]
  %v300 = vld [vmem:[%s4] sm:$0x1]
  %v302 = vlaneseq
  %v303 = vshrl.u32 %v302, 7
  %v304 = vsub.s32 0, %v303
  %v305 = vrot.slane %v300, %v304
  %v323 = vunpack.c.l.b16 %v284
  %v324 = vunpack.c.l.b16 %v285
  %v325 = vunpack.c.l.b16 %v286
  %v326 = vunpack.c.l.b16 %v287
  %v327 = vunpack.c.l.b16 %v288
  %v328 = vunpack.c.l.b16 %v289
  %v329 = vunpack.c.l.b16 %v290
  %v330 = vunpack.c.l.b16 %v291
  %v331 = vunpack.c.l.b16 %v292
  %v332 = vunpack.c.l.b16 %v293
  %v333 = vunpack.c.l.b16 %v294
  %v334 = vunpack.c.l.b16 %v295
  %v335 = vunpack.c.l.b16 %v296
  %v336 = vunpack.c.l.b16 %v297
  %v337 = vunpack.c.l.b16 %v298
  %v338 = vunpack.c.l.b16 %v299
  %v339 = vpack.c.b16 %v324, %v323
  %v340 = vpack.c.b16 %v326, %v325
  %v341 = vpack.c.b16 %v328, %v327
  %v342 = vpack.c.b16 %v330, %v329
  %v343 = vpack.c.b16 %v332, %v331
  %v344 = vpack.c.b16 %v334, %v333
  %v345 = vpack.c.b16 %v336, %v335
  %v346 = vpack.c.b16 %v338, %v337
  %355 = vmatprep.subr.bf16.mxu0 0
  %356 = vmatpush1.bf16.msra.mxu0 %v339
  %357 = vmatprep.subr.bf16.mxu0 0
  %358 = vmatpush1.bf16.msra.mxu0 %v340
  %359 = vmatprep.subr.bf16.mxu0 0
  %360 = vmatpush1.bf16.msra.mxu0 %v341
  %361 = vmatprep.subr.bf16.mxu0 0
  %362 = vmatpush1.bf16.msra.mxu0 %v342
  %363 = vmatprep.subr.bf16.mxu0 0
  %364 = vmatpush1.bf16.msra.mxu0 %v343
  %365 = vmatprep.subr.bf16.mxu0 0
  %366 = vmatpush1.bf16.msra.mxu0 %v344
  %367 = vmatprep.subr.bf16.mxu0 0
  %368 = vmatpush1.bf16.msra.mxu0 %v345
  %369 = vmatprep.subr.bf16.mxu0 0
  %370 = vmatpush1.bf16.msra.mxu0 %v346
  %371 = vmatprep.subr.bf16.mxu0 0
  %372 = vmatpush1.bf16.msra.mxu0 0
  %373 = vmatprep.subr.bf16.mxu0 0
  %374 = vmatpush1.bf16.msra.mxu0 0
  %375 = vmatprep.subr.bf16.mxu0 0
  %376 = vmatpush1.bf16.msra.mxu0 0
  %377 = vmatprep.subr.bf16.mxu0 0
  %378 = vmatpush1.bf16.msra.mxu0 0
  %379 = vmatprep.subr.bf16.mxu0 0
  %380 = vmatpush1.bf16.msra.mxu0 0
  %381 = vmatprep.subr.bf16.mxu0 0
  %382 = vmatpush1.bf16.msra.mxu0 0
  %383 = vmatprep.subr.bf16.mxu0 0
  %384 = vmatpush1.bf16.msra.mxu0 0
  %385 = vmatprep.subr.bf16.mxu0 0
  %386 = vmatpush1.bf16.msra.mxu0 0
  %387 = vmatprep.mubr.bf16.mxu0 0
  %388 = vmatmul.mubr.bf16.gmra.mrb[0].mxu0 %v276
  %v389 = vpop.f32.mrb[0].mxu0
  %v390 = vadd.f32 %v305, %v389
  %v391 = vpop.f32.mrb[0].mxu0
  %v392 = vpop.f32.mrb[0].mxu0
  %v393 = vadd.f32 %v305, %v392
  %v394 = vpop.f32.mrb[0].mxu0
  %395 = vmatprep.mubr.bf16.mxu0 0
  %396 = vmatmul.mubr.bf16.gmra.mrb[0].mxu0 %v277
  %v397 = vpop.f32.mrb[0].mxu0
  %v398 = vadd.f32 %v305, %v397
  %v399 = vpop.f32.mrb[0].mxu0
  %v400 = vpop.f32.mrb[0].mxu0
  %v401 = vadd.f32 %v305, %v400
  %v402 = vpop.f32.mrb[0].mxu0
  %403 = vmatprep.mubr.bf16.mxu0 0
  %404 = vmatmul.mubr.bf16.gmra.mrb[0].mxu0 %v278
  %v405 = vpop.f32.mrb[0].mxu0
  %v406 = vadd.f32 %v305, %v405
  %v407 = vpop.f32.mrb[0].mxu0
  %v408 = vpop.f32.mrb[0].mxu0
  %v409 = vadd.f32 %v305, %v408
  %v410 = vpop.f32.mrb[0].mxu0
  %411 = vmatprep.mubr.bf16.mxu0 0
  %412 = vmatmul.mubr.bf16.gmra.mrb[0].mxu0 %v279
  %v413 = vpop.f32.mrb[0].mxu0
  %v414 = vadd.f32 %v305, %v413
  %v415 = vpop.f32.mrb[0].mxu0
  %v416 = vpop.f32.mrb[0].mxu0
  %v417 = vadd.f32 %v305, %v416
  %v418 = vpop.f32.mrb[0].mxu0
  %419 = vmatprep.mubr.bf16.mxu0 0
  %420 = vmatmul.mubr.bf16.gmra.mrb[0].mxu0 %v280
  %v421 = vpop.f32.mrb[0].mxu0
  %v422 = vadd.f32 %v305, %v421
  %v423 = vpop.f32.mrb[0].mxu0
  %v424 = vpop.f32.mrb[0].mxu0
  %v425 = vadd.f32 %v305, %v424
  %v426 = vpop.f32.mrb[0].mxu0
  %427 = vmatprep.mubr.bf16.mxu0 0
  %428 = vmatmul.mubr.bf16.gmra.mrb[0].mxu0 %v281
  %v429 = vpop.f32.mrb[0].mxu0
  %v430 = vadd.f32 %v305, %v429
  %v431 = vpop.f32.mrb[0].mxu0
  %v432 = vpop.f32.mrb[0].mxu0
  %v433 = vadd.f32 %v305, %v432
  %v434 = vpop.f32.mrb[0].mxu0
  %435 = vmatprep.mubr.bf16.mxu0 0
  %436 = vmatmul.mubr.bf16.gmra.mrb[0].mxu0 %v282
  %v437 = vpop.f32.mrb[0].mxu0
  %v438 = vadd.f32 %v305, %v437
  %v439 = vpop.f32.mrb[0].mxu0
  %v440 = vpop.f32.mrb[0].mxu0
  %v441 = vadd.f32 %v305, %v440
  %v442 = vpop.f32.mrb[0].mxu0
  %443 = vmatprep.mubr.bf16.mxu0 0
  %444 = vmatmul.mubr.bf16.gmra.mrb[0].mxu0 %v283
  %v445 = vpop.f32.mrb[0].mxu0
  %v446 = vadd.f32 %v305, %v445
  %v447 = vpop.f32.mrb[0].mxu0
  %v448 = vpop.f32.mrb[0].mxu0
  %v449 = vadd.f32 %v305, %v448
  %v450 = vpop.f32.mrb[0].mxu0
  %451 = vdwg.mxu0
  %v452 = vpack.c.bf16 %v393, %v390
  %v453 = vpack.c.bf16 %v401, %v398
  %v454 = vpack.c.bf16 %v409, %v406
  %v455 = vpack.c.bf16 %v417, %v414
  %v456 = vpack.c.bf16 %v425, %v422
  %v457 = vpack.c.bf16 %v433, %v430
  %v458 = vpack.c.bf16 %v441, %v438
  %v459 = vpack.c.bf16 %v449, %v446
  %v468 = vunpack.c.l.b16 %v452
  %v469 = vunpack.c.h.b16 %v452
  %v470 = vunpack.c.l.b16 %v453
  %v471 = vunpack.c.h.b16 %v453
  %v472 = vunpack.c.l.b16 %v454
  %v473 = vunpack.c.h.b16 %v454
  %v474 = vunpack.c.l.b16 %v455
  %v475 = vunpack.c.h.b16 %v455
  %v476 = vunpack.c.l.b16 %v456
  %v477 = vunpack.c.h.b16 %v456
  %v478 = vunpack.c.l.b16 %v457
  %v479 = vunpack.c.h.b16 %v457
  %v480 = vunpack.c.l.b16 %v458
  %v481 = vunpack.c.h.b16 %v458
  %v482 = vunpack.c.l.b16 %v459
  %v483 = vunpack.c.h.b16 %v459
  %v484 = vpack.c.b16 %v468, %v468
  %v485 = vpack.c.b16 %v469, %v469
  %v486 = vpack.c.b16 %v470, %v470
  %v487 = vpack.c.b16 %v471, %v471
  %v488 = vpack.c.b16 %v472, %v472
  %v489 = vpack.c.b16 %v473, %v473
  %v490 = vpack.c.b16 %v474, %v474
  %v491 = vpack.c.b16 %v475, %v475
  %v492 = vpack.c.b16 %v476, %v476
  %v493 = vpack.c.b16 %v477, %v477
  %v494 = vpack.c.b16 %v478, %v478
  %v495 = vpack.c.b16 %v479, %v479
  %v496 = vpack.c.b16 %v480, %v480
  %v497 = vpack.c.b16 %v481, %v481
  %v498 = vpack.c.b16 %v482, %v482
  %v499 = vpack.c.b16 %v483, %v483
  %516 = vst [vmem:[%s5] sm:$0xf] %v484
  %517 = vst [vmem:[%s5 + $0x4] sm:$0xf] %v485
  %518 = vst [vmem:[%s5 + $0x8] sm:$0xf] %v486
  %519 = vst [vmem:[%s5 + $0xc] sm:$0xf] %v487
  %520 = vst [vmem:[%s5 + $0x10] sm:$0xf] %v488
  %521 = vst [vmem:[%s5 + $0x14] sm:$0xf] %v489
  %522 = vst [vmem:[%s5 + $0x18] sm:$0xf] %v490
  %523 = vst [vmem:[%s5 + $0x1c] sm:$0xf] %v491
  %524 = vst [vmem:[%s5 + $0x20] sm:$0xf] %v492
  %525 = vst [vmem:[%s5 + $0x24] sm:$0xf] %v493
  %526 = vst [vmem:[%s5 + $0x28] sm:$0xf] %v494
  %527 = vst [vmem:[%s5 + $0x2c] sm:$0xf] %v495
  %528 = vst [vmem:[%s5 + $0x30] sm:$0xf] %v496
  %529 = vst [vmem:[%s5 + $0x34] sm:$0xf] %v497
  %530 = vst [vmem:[%s5 + $0x38] sm:$0xf] %v498
  %531 = vst [vmem:[%s5 + $0x3c] sm:$0xf] %v499
  // Predicated region
  $region22: #{text_decoder_forward.20} parent=0 // pred_check
    _
  $region23: #{text_decoder_forward.20} parent=0 // pred_check_branch
    %533 = sbr.rel (0) target = $region25
  $region24: #{text_decoder_forward.20} parent=0 // pred_region
    _
  $region25: #{text_decoder_forward.20} parent=0 // pred_fallthru
    _
  // Predicated region
  $region26: #{text_decoder_forward.20} parent=0 // pred_check
    _
  $region27: #{text_decoder_forward.20} parent=0 // pred_check_branch
    %535 = sbr.rel (0) target = $region29
  $region28: #{text_decoder_forward.20} parent=0 // pred_region
    _
  $region29: #{text_decoder_forward.20} parent=0 // pred_fallthru
    _

// kernel: text_decoder_forward.19
$region0: #{text_decoder_forward.19}
  #allocation0 [shape = 'u32[]', space=smem, size = 0x4, offset = 0x4, fixed_abs, tag = 'smem constant byte address 0x4 - core index']
  #allocation1 [shape = 'u32[144,128]{1,0:T(1,128)}', space=vmem, size = 0x12000, scoped, tag = 'internal scratch']
  %s0 = inlined_call_operand.vmem [shape: bf16[128,128], index: 0, kind: input, shape index: {}]
  %s1 = inlined_call_operand.vmem [shape: bf16[128,128], index: 1, kind: input, shape index: {}]
  %s2 = inlined_call_operand.vmem [shape: f32[1,128], index: 2, kind: input, shape index: {}]
  %s3 = inlined_call_operand.vmem [shape: bf16[128,128], index: 3, kind: input, shape index: {}]
  %s4 = inlined_call_operand.vmem [shape: bf16[128,128], index: 4, kind: output, shape index: {}]
  %s5 = sld [smem:[#allocation0]]
  $region26: #{text_decoder_forward.19} parent=0
    _
  %s7 = ssub.s32 1, %s5
  %s8 = scalar_select 0, %s7, %s5
  // Predicated region
  $region2: #{text_decoder_forward.19} parent=0 // pred_check
    _
  $region3: #{text_decoder_forward.19} parent=0 // pred_check_branch
    %10 = sbr.rel (0) target = $region5
  $region4: #{text_decoder_forward.19} parent=0 // pred_region
    _
  $region5: #{text_decoder_forward.19} parent=0 // pred_fallthru
    _
  // Predicated region
  $region6: #{text_decoder_forward.19} parent=0 // pred_check
    _
  $region7: #{text_decoder_forward.19} parent=0 // pred_check_branch
    %12 = sbr.rel (0) target = $region9
  $region8: #{text_decoder_forward.19} parent=0 // pred_region
    _
  $region9: #{text_decoder_forward.19} parent=0 // pred_fallthru
    _
  // Predicated region
  $region10: #{text_decoder_forward.19} parent=0 // pred_check
    _
  $region11: #{text_decoder_forward.19} parent=0 // pred_check_branch
    %14 = sbr.rel (0) target = $region13
  $region12: #{text_decoder_forward.19} parent=0 // pred_region
    _
  $region13: #{text_decoder_forward.19} parent=0 // pred_fallthru
    _
  // Predicated region
  $region14: #{text_decoder_forward.19} parent=0 // pred_check
    _
  $region15: #{text_decoder_forward.19} parent=0 // pred_check_branch
    %16 = sbr.rel (0) target = $region17
  $region16: #{text_decoder_forward.19} parent=0 // pred_region
    _
  $region17: #{text_decoder_forward.19} parent=0 // pred_fallthru
    _
  %v18 = vld [vmem:[%s0] sm:$0xf]
  %v19 = vld [vmem:[%s0 + $0x4] sm:$0xf]
  %v20 = vld [vmem:[%s0 + $0x8] sm:$0xf]
  %v21 = vld [vmem:[%s0 + $0xc] sm:$0xf]
  %v22 = vld [vmem:[%s0 + $0x10] sm:$0xf]
  %v23 = vld [vmem:[%s0 + $0x14] sm:$0xf]
  %v24 = vld [vmem:[%s0 + $0x18] sm:$0xf]
  %v25 = vld [vmem:[%s0 + $0x1c] sm:$0xf]
  %v26 = vld [vmem:[%s0 + $0x20] sm:$0xf]
  %v27 = vld [vmem:[%s0 + $0x24] sm:$0xf]
  %v28 = vld [vmem:[%s0 + $0x28] sm:$0xf]
  %v29 = vld [vmem:[%s0 + $0x2c] sm:$0xf]
  %v30 = vld [vmem:[%s0 + $0x30] sm:$0xf]
  %v31 = vld [vmem:[%s0 + $0x34] sm:$0xf]
  %v32 = vld [vmem:[%s0 + $0x38] sm:$0xf]
  %v33 = vld [vmem:[%s0 + $0x3c] sm:$0xf]
  %v34 = vld [vmem:[%s1] sm:$0xf]
  %v35 = vld [vmem:[%s1 + $0x4] sm:$0xf]
  %v36 = vld [vmem:[%s1 + $0x8] sm:$0xf]
  %v37 = vld [vmem:[%s1 + $0xc] sm:$0xf]
  %v38 = vld [vmem:[%s1 + $0x10] sm:$0xf]
  %v39 = vld [vmem:[%s1 + $0x14] sm:$0xf]
  %v40 = vld [vmem:[%s1 + $0x18] sm:$0xf]
  %v41 = vld [vmem:[%s1 + $0x1c] sm:$0xf]
  %v42 = vld [vmem:[%s1 + $0x20] sm:$0xf]
  %v43 = vld [vmem:[%s1 + $0x24] sm:$0xf]
  %v44 = vld [vmem:[%s1 + $0x28] sm:$0xf]
  %v45 = vld [vmem:[%s1 + $0x2c] sm:$0xf]
  %v46 = vld [vmem:[%s1 + $0x30] sm:$0xf]
  %v47 = vld [vmem:[%s1 + $0x34] sm:$0xf]
  %v48 = vld [vmem:[%s1 + $0x38] sm:$0xf]
  %v49 = vld [vmem:[%s1 + $0x3c] sm:$0xf]
  %v50 = vld [vmem:[%s2] sm:$0x1]
  %v52 = vlaneseq
  %v53 = vshrl.u32 %v52, 7
  %v54 = vsub.s32 0, %v53
  %v55 = vrot.slane %v50, %v54
  %v73 = vunpack.c.l.b16 %v18
  %v74 = vunpack.c.l.b16 %v19
  %v75 = vunpack.c.l.b16 %v20
  %v76 = vunpack.c.l.b16 %v21
  %v77 = vunpack.c.l.b16 %v22
  %v78 = vunpack.c.l.b16 %v23
  %v79 = vunpack.c.l.b16 %v24
  %v80 = vunpack.c.l.b16 %v25
  %v81 = vunpack.c.l.b16 %v26
  %v82 = vunpack.c.l.b16 %v27
  %v83 = vunpack.c.l.b16 %v28
  %v84 = vunpack.c.l.b16 %v29
  %v85 = vunpack.c.l.b16 %v30
  %v86 = vunpack.c.l.b16 %v31
  %v87 = vunpack.c.l.b16 %v32
  %v88 = vunpack.c.l.b16 %v33
  %v89 = vpack.c.b16 %v74, %v73
  %v90 = vpack.c.b16 %v76, %v75
  %v91 = vpack.c.b16 %v78, %v77
  %v92 = vpack.c.b16 %v80, %v79
  %v93 = vpack.c.b16 %v82, %v81
  %v94 = vpack.c.b16 %v84, %v83
  %v95 = vpack.c.b16 %v86, %v85
  %v96 = vpack.c.b16 %v88, %v87
  %v121 = vunpack.c.l.b16 %v34
  %v122 = vunpack.c.l.b16 %v35
  %v123 = vunpack.c.l.b16 %v36
  %v124 = vunpack.c.l.b16 %v37
  %v125 = vunpack.c.l.b16 %v38
  %v126 = vunpack.c.l.b16 %v39
  %v127 = vunpack.c.l.b16 %v40
  %v128 = vunpack.c.l.b16 %v41
  %v129 = vunpack.c.l.b16 %v42
  %v130 = vunpack.c.l.b16 %v43
  %v131 = vunpack.c.l.b16 %v44
  %v132 = vunpack.c.l.b16 %v45
  %v133 = vunpack.c.l.b16 %v46
  %v134 = vunpack.c.l.b16 %v47
  %v135 = vunpack.c.l.b16 %v48
  %v136 = vunpack.c.l.b16 %v49
  %v137 = vpack.c.b16 %v122, %v121
  %v138 = vpack.c.b16 %v124, %v123
  %v139 = vpack.c.b16 %v126, %v125
  %v140 = vpack.c.b16 %v128, %v127
  %v141 = vpack.c.b16 %v130, %v129
  %v142 = vpack.c.b16 %v132, %v131
  %v143 = vpack.c.b16 %v134, %v133
  %v144 = vpack.c.b16 %v136, %v135
  %153 = vmatprep.subr.bf16.mxu0 0
  %154 = vmatpush1.bf16.msra.mxu0 %v137
  %155 = vmatprep.subr.bf16.mxu0 0
  %156 = vmatpush1.bf16.msra.mxu0 %v138
  %157 = vmatprep.subr.bf16.mxu0 0
  %158 = vmatpush1.bf16.msra.mxu0 %v139
  %159 = vmatprep.subr.bf16.mxu0 0
  %160 = vmatpush1.bf16.msra.mxu0 %v140
  %161 = vmatprep.subr.bf16.mxu0 0
  %162 = vmatpush1.bf16.msra.mxu0 %v141
  %163 = vmatprep.subr.bf16.mxu0 0
  %164 = vmatpush1.bf16.msra.mxu0 %v142
  %165 = vmatprep.subr.bf16.mxu0 0
  %166 = vmatpush1.bf16.msra.mxu0 %v143
  %167 = vmatprep.subr.bf16.mxu0 0
  %168 = vmatpush1.bf16.msra.mxu0 %v144
  %169 = vmatprep.subr.bf16.mxu0 0
  %170 = vmatpush1.bf16.msra.mxu0 0
  %171 = vmatprep.subr.bf16.mxu0 0
  %172 = vmatpush1.bf16.msra.mxu0 0
  %173 = vmatprep.subr.bf16.mxu0 0
  %174 = vmatpush1.bf16.msra.mxu0 0
  %175 = vmatprep.subr.bf16.mxu0 0
  %176 = vmatpush1.bf16.msra.mxu0 0
  %177 = vmatprep.subr.bf16.mxu0 0
  %178 = vmatpush1.bf16.msra.mxu0 0
  %179 = vmatprep.subr.bf16.mxu0 0
  %180 = vmatpush1.bf16.msra.mxu0 0
  %181 = vmatprep.subr.bf16.mxu0 0
  %182 = vmatpush1.bf16.msra.mxu0 0
  %183 = vmatprep.subr.bf16.mxu0 0
  %184 = vmatpush1.bf16.msra.mxu0 0
  %185 = vmatprep.mubr.bf16.mxu0 0
  %186 = vmatmul.mubr.bf16.gmra.mrb[0].mxu0 %v89
  %v187 = vpop.f32.mrb[0].mxu0
  %v188 = vadd.f32 %v55, %v187
  %v189 = vpop.f32.mrb[0].mxu0
  %v190 = vpop.f32.mrb[0].mxu0
  %v191 = vadd.f32 %v55, %v190
  %v192 = vpop.f32.mrb[0].mxu0
  %193 = vmatprep.mubr.bf16.mxu0 0
  %194 = vmatmul.mubr.bf16.gmra.mrb[0].mxu0 %v90
  %v195 = vpop.f32.mrb[0].mxu0
  %v196 = vadd.f32 %v55, %v195
  %v197 = vpop.f32.mrb[0].mxu0
  %v198 = vpop.f32.mrb[0].mxu0
  %v199 = vadd.f32 %v55, %v198
  %v200 = vpop.f32.mrb[0].mxu0
  %201 = vmatprep.mubr.bf16.mxu0 0
  %202 = vmatmul.mubr.bf16.gmra.mrb[0].mxu0 %v91
  %v203 = vpop.f32.mrb[0].mxu0
  %v204 = vadd.f32 %v55, %v203
  %v205 = vpop.f32.mrb[0].mxu0
  %v206 = vpop.f32.mrb[0].mxu0
  %v207 = vadd.f32 %v55, %v206
  %v208 = vpop.f32.mrb[0].mxu0
  %209 = vmatprep.mubr.bf16.mxu0 0
  %210 = vmatmul.mubr.bf16.gmra.mrb[0].mxu0 %v92
  %v211 = vpop.f32.mrb[0].mxu0
  %v212 = vadd.f32 %v55, %v211
  %v213 = vpop.f32.mrb[0].mxu0
  %v214 = vpop.f32.mrb[0].mxu0
  %v215 = vadd.f32 %v55, %v214
  %v216 = vpop.f32.mrb[0].mxu0
  %217 = vmatprep.mubr.bf16.mxu0 0
  %218 = vmatmul.mubr.bf16.gmra.mrb[0].mxu0 %v93
  %v219 = vpop.f32.mrb[0].mxu0
  %v220 = vadd.f32 %v55, %v219
  %v221 = vpop.f32.mrb[0].mxu0
  %v222 = vpop.f32.mrb[0].mxu0
  %v223 = vadd.f32 %v55, %v222
  %v224 = vpop.f32.mrb[0].mxu0
  %225 = vmatprep.mubr.bf16.mxu0 0
  %226 = vmatmul.mubr.bf16.gmra.mrb[0].mxu0 %v94
  %v227 = vpop.f32.mrb[0].mxu0
  %v228 = vadd.f32 %v55, %v227
  %v229 = vpop.f32.mrb[0].mxu0
  %v230 = vpop.f32.mrb[0].mxu0
  %v231 = vadd.f32 %v55, %v230
  %v232 = vpop.f32.mrb[0].mxu0
  %233 = vmatprep.mubr.bf16.mxu0 0
  %234 = vmatmul.mubr.bf16.gmra.mrb[0].mxu0 %v95
  %v235 = vpop.f32.mrb[0].mxu0
  %v236 = vadd.f32 %v55, %v235
  %v237 = vpop.f32.mrb[0].mxu0
  %v238 = vpop.f32.mrb[0].mxu0
  %v239 = vadd.f32 %v55, %v238
  %v240 = vpop.f32.mrb[0].mxu0
  %241 = vmatprep.mubr.bf16.mxu0 0
  %242 = vmatmul.mubr.bf16.gmra.mrb[0].mxu0 %v96
  %v243 = vpop.f32.mrb[0].mxu0
  %v244 = vadd.f32 %v55, %v243
  %v245 = vpop.f32.mrb[0].mxu0
  %v246 = vpop.f32.mrb[0].mxu0
  %v247 = vadd.f32 %v55, %v246
  %v248 = vpop.f32.mrb[0].mxu0
  %249 = vdwg.mxu0
  %v250 = vld [vmem:[%s3] sm:$0xf]
  %v251 = vld [vmem:[%s3 + $0x4] sm:$0xf]
  %v252 = vld [vmem:[%s3 + $0x8] sm:$0xf]
  %v253 = vld [vmem:[%s3 + $0xc] sm:$0xf]
  %v254 = vld [vmem:[%s3 + $0x10] sm:$0xf]
  %v255 = vld [vmem:[%s3 + $0x14] sm:$0xf]
  %v256 = vld [vmem:[%s3 + $0x18] sm:$0xf]
  %v257 = vld [vmem:[%s3 + $0x1c] sm:$0xf]
  %v258 = vld [vmem:[%s3 + $0x20] sm:$0xf]
  %v259 = vld [vmem:[%s3 + $0x24] sm:$0xf]
  %v260 = vld [vmem:[%s3 + $0x28] sm:$0xf]
  %v261 = vld [vmem:[%s3 + $0x2c] sm:$0xf]
  %v262 = vld [vmem:[%s3 + $0x30] sm:$0xf]
  %v263 = vld [vmem:[%s3 + $0x34] sm:$0xf]
  %v264 = vld [vmem:[%s3 + $0x38] sm:$0xf]
  %v265 = vld [vmem:[%s3 + $0x3c] sm:$0xf]
  %v266 = vunpack.c.l.bf16 %v250
  %v267 = vunpack.c.l.bf16 %v251
  %v268 = vunpack.c.l.bf16 %v252
  %v269 = vunpack.c.l.bf16 %v253
  %v270 = vunpack.c.l.bf16 %v254
  %v271 = vunpack.c.l.bf16 %v255
  %v272 = vunpack.c.l.bf16 %v256
  %v273 = vunpack.c.l.bf16 %v257
  %v274 = vunpack.c.l.bf16 %v258
  %v275 = vunpack.c.l.bf16 %v259
  %v276 = vunpack.c.l.bf16 %v260
  %v277 = vunpack.c.l.bf16 %v261
  %v278 = vunpack.c.l.bf16 %v262
  %v279 = vunpack.c.l.bf16 %v263
  %v280 = vunpack.c.l.bf16 %v264
  %v281 = vunpack.c.l.bf16 %v265
  %v282 = vadd.f32 %v188, %v266
  %v283 = vadd.f32 %v191, %v267
  %v284 = vadd.f32 %v196, %v268
  %v285 = vadd.f32 %v199, %v269
  %v286 = vadd.f32 %v204, %v270
  %v287 = vadd.f32 %v207, %v271
  %v288 = vadd.f32 %v212, %v272
  %v289 = vadd.f32 %v215, %v273
  %v290 = vadd.f32 %v220, %v274
  %v291 = vadd.f32 %v223, %v275
  %v292 = vadd.f32 %v228, %v276
  %v293 = vadd.f32 %v231, %v277
  %v294 = vadd.f32 %v236, %v278
  %v295 = vadd.f32 %v239, %v279
  %v296 = vadd.f32 %v244, %v280
  %v297 = vadd.f32 %v247, %v281
  %v298 = vpack.c.bf16 %v283, %v282
  %v299 = vpack.c.bf16 %v285, %v284
  %v300 = vpack.c.bf16 %v287, %v286
  %v301 = vpack.c.bf16 %v289, %v288
  %v302 = vpack.c.bf16 %v291, %v290
  %v303 = vpack.c.bf16 %v293, %v292
  %v304 = vpack.c.bf16 %v295, %v294
  %v305 = vpack.c.bf16 %v297, %v296
  %v314 = vunpack.c.l.b16 %v298
  %v315 = vunpack.c.h.b16 %v298
  %v316 = vunpack.c.l.b16 %v299
  %v317 = vunpack.c.h.b16 %v299
  %v318 = vunpack.c.l.b16 %v300
  %v319 = vunpack.c.h.b16 %v300
  %v320 = vunpack.c.l.b16 %v301
  %v321 = vunpack.c.h.b16 %v301
  %v322 = vunpack.c.l.b16 %v302
  %v323 = vunpack.c.h.b16 %v302
  %v324 = vunpack.c.l.b16 %v303
  %v325 = vunpack.c.h.b16 %v303
  %v326 = vunpack.c.l.b16 %v304
  %v327 = vunpack.c.h.b16 %v304
  %v328 = vunpack.c.l.b16 %v305
  %v329 = vunpack.c.h.b16 %v305
  %v330 = vpack.c.b16 %v314, %v314
  %v331 = vpack.c.b16 %v315, %v315
  %v332 = vpack.c.b16 %v316, %v316
  %v333 = vpack.c.b16 %v317, %v317
  %v334 = vpack.c.b16 %v318, %v318
  %v335 = vpack.c.b16 %v319, %v319
  %v336 = vpack.c.b16 %v320, %v320
  %v337 = vpack.c.b16 %v321, %v321
  %v338 = vpack.c.b16 %v322, %v322
  %v339 = vpack.c.b16 %v323, %v323
  %v340 = vpack.c.b16 %v324, %v324
  %v341 = vpack.c.b16 %v325, %v325
  %v342 = vpack.c.b16 %v326, %v326
  %v343 = vpack.c.b16 %v327, %v327
  %v344 = vpack.c.b16 %v328, %v328
  %v345 = vpack.c.b16 %v329, %v329
  %362 = vst [vmem:[%s4] sm:$0xf] %v330
  %363 = vst [vmem:[%s4 + $0x4] sm:$0xf] %v331
  %364 = vst [vmem:[%s4 + $0x8] sm:$0xf] %v332
  %365 = vst [vmem:[%s4 + $0xc] sm:$0xf] %v333
  %366 = vst [vmem:[%s4 + $0x10] sm:$0xf] %v334
  %367 = vst [vmem:[%s4 + $0x14] sm:$0xf] %v335
  %368 = vst [vmem:[%s4 + $0x18] sm:$0xf] %v336
  %369 = vst [vmem:[%s4 + $0x1c] sm:$0xf] %v337
  %370 = vst [vmem:[%s4 + $0x20] sm:$0xf] %v338
  %371 = vst [vmem:[%s4 + $0x24] sm:$0xf] %v339
  %372 = vst [vmem:[%s4 + $0x28] sm:$0xf] %v340
  %373 = vst [vmem:[%s4 + $0x2c] sm:$0xf] %v341
  %374 = vst [vmem:[%s4 + $0x30] sm:$0xf] %v342
  %375 = vst [vmem:[%s4 + $0x34] sm:$0xf] %v343
  %376 = vst [vmem:[%s4 + $0x38] sm:$0xf] %v344
  %377 = vst [vmem:[%s4 + $0x3c] sm:$0xf] %v345
  // Predicated region
  $region18: #{text_decoder_forward.19} parent=0 // pred_check
    _
  $region19: #{text_decoder_forward.19} parent=0 // pred_check_branch
    %379 = sbr.rel (0) target = $region21
  $region20: #{text_decoder_forward.19} parent=0 // pred_region
    _
  $region21: #{text_decoder_forward.19} parent=0 // pred_fallthru
    _
  // Predicated region
  $region22: #{text_decoder_forward.19} parent=0 // pred_check
    _
  $region23: #{text_decoder_forward.19} parent=0 // pred_check_branch
    %381 = sbr.rel (0) target = $region25
  $region24: #{text_decoder_forward.19} parent=0 // pred_region
    _
  $region25: #{text_decoder_forward.19} parent=0 // pred_fallthru
    _

// kernel: text_decoder_forward.18
$region0: #{text_decoder_forward.18}
  #allocation0 [shape = 'u32[]', space=smem, size = 0x4, offset = 0x4, fixed_abs, tag = 'smem constant byte address 0x4 - core index']
  #allocation1 [shape = 'u32[144,128]{1,0:T(1,128)}', space=vmem, size = 0x12000, scoped, tag = 'internal scratch']
  %s0 = inlined_call_operand.vmem [shape: bf16[2,64,384], index: 0, kind: input, shape index: {}, may-alias: {0,1,2}]
  %s1 = inlined_call_operand.vmem [shape: bf16[2,64,384], index: 1, kind: input, shape index: {}, may-alias: {0,1,2}]
  %s2 = inlined_call_operand.vmem [shape: bf16[2,64,384], index: 2, kind: input, shape index: {}, may-alias: {0,1,2}]
  %s3 = inlined_call_operand.vmem [shape: f32[64,64], index: 3, kind: input, shape index: {}]
  %s4 = inlined_call_operand.vmem [shape: bf16[2,64,128], index: 4, kind: output, shape index: {}]
  %s5 = sld [smem:[#allocation0]]
  $region172: #{text_decoder_forward.18} parent=0
    _
  %s7 = ssub.s32 1, %s5
  %s8 = scalar_select 0, %s7, %s5
  $region1: #{text_decoder_forward.18} parent=0
    #allocation2 [shape = 'u8[32768]{0}', space=vmem, size = 0x8000, scoped, tag = 'input window, operand 0']
    #allocation3 [shape = 'u8[32768]{0}', space=vmem, size = 0x8000, scoped, tag = 'input window, operand 1']
    #allocation4 [shape = 'u8[32768]{0}', space=vmem, size = 0x8000, scoped, tag = 'input window, operand 2']
    loop: start=0, step=1, limit=4
    $region2: #{text_decoder_forward.18} parent=1 // loop_pre_header
      _
    $region3: #{text_decoder_forward.18} parent=1 // loop_header
      %s10 = sphi 0, %s14
      %p11 = scmp.ge.s32.totalorder %s10, 4
      %s20 = sphi 0, %s22
      %s23 = sphi 0, %s20
      %s24 = sphi 0, %s23
      %s40 = sphi 0, %s24
      %s46 = sphi 0, %s48
      %s49 = sphi 0, %s46
      %s50 = sphi 0, %s49
      %s66 = sphi 0, %s50
      %s72 = sphi 0, %s74
      %s75 = sphi 0, %s72
      %s76 = sphi 0, %s75
      %s92 = sphi 0, %s76
      %s96 = sphi 0, %s96
      %s98 = sphi 0, %s96
      %s99 = sphi 0, %s98
      %s113 = sphi 0, %s99
      %s119 = sphi 0, %s121
      %s122 = sphi 0, %s119
      %s123 = sphi 0, %s122
      %s139 = sphi 0, %s123
    $region4: #{text_decoder_forward.18} parent=1 // loop_header_branch
      %13 = sbr.rel (%p11) target = $region8
    $region5: #{text_decoder_forward.18} parent=1 // loop_body
      %s15 = ssub.s32 %s10, 1
      %s16 = ssub.s32 %s10, 2
      %s17 = sadd.s32 %s10, 1
      %s18 = ssub.s32 %s10, %s17
      %p19 = scmp.eq.s32.totalorder %s18, 0
      %s21 = sadd.s32 %s20, 1
      %s22 = scalar_select %p19, %s20, %s21
      %p25 = pneg %p19
      %p26 = scmp.eq.s32.totalorder %s10, 1
      %p27 = por %p25, %p26
      %p28 = scmp.ne.s32.totalorder %s20, %s23
      %p29 = scmp.eq.s32.totalorder %s10, 0
      %p30 = por %p28, %p29
      %p31 = scmp.ne.s32.totalorder %s20, %s23
      %p32 = scmp.eq.s32.totalorder %s15, 1
      %p33 = por %p31, %p32
      %p34 = scmp.ne.s32.totalorder %s23, %s24
      %p35 = scmp.eq.s32.totalorder %s15, 0
      %p36 = por %p34, %p35
      %p37 = scmp.ne.s32.totalorder %s23, %s24
      %p38 = scmp.eq.s32.totalorder %s16, 1
      %p39 = por %p37, %p38
      %p41 = scmp.ne.s32.totalorder %s24, %s40
      %p42 = scmp.eq.s32.totalorder %s16, 0
      %p43 = por %p41, %p42
      %s44 = ssub.s32 %s10, %s17
      %p45 = scmp.eq.s32.totalorder %s44, 0
      %s47 = sadd.s32 %s46, 1
      %s48 = scalar_select %p45, %s46, %s47
      %p51 = pneg %p45
      %p52 = scmp.eq.s32.totalorder %s10, 1
      %p53 = por %p51, %p52
      %p54 = scmp.ne.s32.totalorder %s46, %s49
      %p55 = scmp.eq.s32.totalorder %s10, 0
      %p56 = por %p54, %p55
      %p57 = scmp.ne.s32.totalorder %s46, %s49
      %p58 = scmp.eq.s32.totalorder %s15, 1
      %p59 = por %p57, %p58
      %p60 = scmp.ne.s32.totalorder %s49, %s50
      %p61 = scmp.eq.s32.totalorder %s15, 0
      %p62 = por %p60, %p61
      %p63 = scmp.ne.s32.totalorder %s49, %s50
      %p64 = scmp.eq.s32.totalorder %s16, 1
      %p65 = por %p63, %p64
      %p67 = scmp.ne.s32.totalorder %s50, %s66
      %p68 = scmp.eq.s32.totalorder %s16, 0
      %p69 = por %p67, %p68
      %s70 = ssub.s32 %s10, %s17
      %p71 = scmp.eq.s32.totalorder %s70, 0
      %s73 = sadd.s32 %s72, 1
      %s74 = scalar_select %p71, %s72, %s73
      %p77 = pneg %p71
      %p78 = scmp.eq.s32.totalorder %s10, 1
      %p79 = por %p77, %p78
      %p80 = scmp.ne.s32.totalorder %s72, %s75
      %p81 = scmp.eq.s32.totalorder %s10, 0
      %p82 = por %p80, %p81
      %p83 = scmp.ne.s32.totalorder %s72, %s75
      %p84 = scmp.eq.s32.totalorder %s15, 1
      %p85 = por %p83, %p84
      %p86 = scmp.ne.s32.totalorder %s75, %s76
      %p87 = scmp.eq.s32.totalorder %s15, 0
      %p88 = por %p86, %p87
      %p89 = scmp.ne.s32.totalorder %s75, %s76
      %p90 = scmp.eq.s32.totalorder %s16, 1
      %p91 = por %p89, %p90
      %p93 = scmp.ne.s32.totalorder %s76, %s92
      %p94 = scmp.eq.s32.totalorder %s16, 0
      %p95 = por %p93, %p94
      %s97 = sadd.s32 %s96, 1
      %p100 = scmp.eq.s32.totalorder %s10, 1
      %p101 = scmp.ne.s32.totalorder %s96, %s98
      %p102 = scmp.eq.s32.totalorder %s10, 0
      %p103 = por %p101, %p102
      %p104 = scmp.ne.s32.totalorder %s96, %s98
      %p105 = scmp.eq.s32.totalorder %s15, 1
      %p106 = por %p104, %p105
      %p107 = scmp.ne.s32.totalorder %s98, %s99
      %p108 = scmp.eq.s32.totalorder %s15, 0
      %p109 = por %p107, %p108
      %p110 = scmp.ne.s32.totalorder %s98, %s99
      %p111 = scmp.eq.s32.totalorder %s16, 1
      %p112 = por %p110, %p111
      %p114 = scmp.ne.s32.totalorder %s99, %s113
      %p115 = scmp.eq.s32.totalorder %s16, 0
      %p116 = por %p114, %p115
      %s117 = ssub.s32 %s10, %s17
      %p118 = scmp.eq.s32.totalorder %s117, 0
      %s120 = sadd.s32 %s119, 1
      %s121 = scalar_select %p118, %s119, %s120
      %p124 = pneg %p118
      %p125 = scmp.eq.s32.totalorder %s10, 1
      %p126 = por %p124, %p125
      %p127 = scmp.ne.s32.totalorder %s119, %s122
      %p128 = scmp.eq.s32.totalorder %s10, 0
      %p129 = por %p127, %p128
      %p130 = scmp.ne.s32.totalorder %s119, %s122
      %p131 = scmp.eq.s32.totalorder %s15, 1
      %p132 = por %p130, %p131
      %p133 = scmp.ne.s32.totalorder %s122, %s123
      %p134 = scmp.eq.s32.totalorder %s15, 0
      %p135 = por %p133, %p134
      %p136 = scmp.ne.s32.totalorder %s122, %s123
      %p137 = scmp.eq.s32.totalorder %s16, 1
      %p138 = por %p136, %p137
      %p140 = scmp.ne.s32.totalorder %s123, %s139
      %p141 = scmp.eq.s32.totalorder %s16, 0
      %p142 = por %p140, %p141
      %p143 = scmp.le.s32.totalorder 1, %s10
      %p144 = scmp.lt.s32.totalorder %s10, 3
      %p145 = pnand %p143, %p144
      %p146 = pneg %p145
      // Predicated region
      $region9: #{text_decoder_forward.18} parent=5 // pred_check
        _
      $region10: #{text_decoder_forward.18} parent=5 // pred_check_branch
        %148 = sbr.rel (%p145) target = $region12
      $region11: #{text_decoder_forward.18} parent=5 // pred_region
        %s149 = ssub.s32 %s10, 1
        // Predicated region
        $region13: #{text_decoder_forward.18} parent=11 // pred_check
          %p150 = pneg %p109
        $region14: #{text_decoder_forward.18} parent=11 // pred_check_branch
          %152 = sbr.rel (%p150) target = $region16
        $region15: #{text_decoder_forward.18} parent=11 // pred_region
          _
        $region16: #{text_decoder_forward.18} parent=11 // pred_fallthru
          _
      $region12: #{text_decoder_forward.18} parent=5 // pred_fallthru
        _
      %p153 = scmp.lt.s32.totalorder %s10, 2
      // Predicated region
      $region17: #{text_decoder_forward.18} parent=5 // pred_check
        %p154 = pneg %p153
      $region18: #{text_decoder_forward.18} parent=5 // pred_check_branch
        %156 = sbr.rel (%p154) target = $region20
      $region19: #{text_decoder_forward.18} parent=5 // pred_region
        // Predicated region
        $region21: #{text_decoder_forward.18} parent=19 // pred_check
          %p157 = pneg %p30
        $region22: #{text_decoder_forward.18} parent=19 // pred_check_branch
          %159 = sbr.rel (%p157) target = $region24
        $region23: #{text_decoder_forward.18} parent=19 // pred_region
          %s160 = sand.u32 %s20, 1
          %s161 = sand.u32 %s20, 1
          %s162 = smul.addr %s161, 32
          %s163 = scalar_lea.vmem [#allocation2], %s162
          %s164 = smul.addr %s10, 24
          %s165 = smul.addr %s164, 4
          %s166 = scalar_lea.vmem %s0, %s165
          // Predicated region
          $region25: #{text_decoder_forward.18} parent=23 // pred_check
            _
          $region26: #{text_decoder_forward.18} parent=23 // pred_check_branch
            %168 = sbr.rel (0) target = $region28
          $region27: #{text_decoder_forward.18} parent=23 // pred_region
            // Predicated region
            $region29: #{text_decoder_forward.18} parent=27 // pred_check
              _
            $region30: #{text_decoder_forward.18} parent=27 // pred_check_branch
              %170 = sbr.rel target = $region32
            $region31: #{text_decoder_forward.18} parent=27 // pred_region
              // Predicated region
              $region44: #{text_decoder_forward.18} parent=31 // pred_check
                _
              $region45: #{text_decoder_forward.18} parent=31 // pred_check_branch
                %199 = sbr.rel (0) target = $region47
              $region46: #{text_decoder_forward.18} parent=31 // pred_region
                loop: start=0, step=1, limit=1
                $region48: #{text_decoder_forward.18} parent=46 // loop_pre_header
                  _
                $region49: #{text_decoder_forward.18} parent=46 // loop_header
                  %s201 = sphi 0, %s205
                  %p202 = scmp.ge.s32.totalorder %s201, 1
                  %s206 = sphi %s166, %s166
                  %s207 = sphi %s163, %s163
                $region50: #{text_decoder_forward.18} parent=46 // loop_header_branch
                  %204 = sbr.rel (%p202) target = $region54
                $region51: #{text_decoder_forward.18} parent=46 // loop_body
                  _
                $region52: #{text_decoder_forward.18} parent=46 // loop_footer
                  %s205 = sadd.s32 1, %s201
                $region53: #{text_decoder_forward.18} parent=46 // loop_footer_branch
                  %200 = sbr.rel target = $region49
                $region54: #{text_decoder_forward.18} parent=46 // loop_exit
                  _
                loop: start=0, step=1, limit=1
                $region55: #{text_decoder_forward.18} parent=46 // loop_pre_header
                  _
                $region56: #{text_decoder_forward.18} parent=46 // loop_header
                  %s210 = sphi 0, %s214
                  %p211 = scmp.ge.s32.totalorder %s210, 1
                  %s215 = sphi %s166, %s166
                  %s216 = sphi %s163, %s163
                $region57: #{text_decoder_forward.18} parent=46 // loop_header_branch
                  %213 = sbr.rel (%p211) target = $region61
                $region58: #{text_decoder_forward.18} parent=46 // loop_body
                  %v217 = vld [vmem:[%s215] sm:$0xf]
                  %218 = vst [vmem:[%s216] sm:$0xf] %v217
                  %v219 = vld [vmem:[%s215 + $0xc] sm:$0xf]
                  %220 = vst [vmem:[%s216 + $0x4] sm:$0xf] %v219
                  %v221 = vld [vmem:[%s215 + $0x18] sm:$0xf]
                  %222 = vst [vmem:[%s216 + $0x8] sm:$0xf] %v221
                  %v223 = vld [vmem:[%s215 + $0x24] sm:$0xf]
                  %224 = vst [vmem:[%s216 + $0xc] sm:$0xf] %v223
                  %v225 = vld [vmem:[%s215 + $0x30] sm:$0xf]
                  %226 = vst [vmem:[%s216 + $0x10] sm:$0xf] %v225
                  %v227 = vld [vmem:[%s215 + $0x3c] sm:$0xf]
                  %228 = vst [vmem:[%s216 + $0x14] sm:$0xf] %v227
                  %v229 = vld [vmem:[%s215 + $0x48] sm:$0xf]
                  %230 = vst [vmem:[%s216 + $0x18] sm:$0xf] %v229
                  %v231 = vld [vmem:[%s215 + $0x54] sm:$0xf]
                  %232 = vst [vmem:[%s216 + $0x1c] sm:$0xf] %v231
                $region59: #{text_decoder_forward.18} parent=46 // loop_footer
                  %s214 = sadd.s32 1, %s210
                $region60: #{text_decoder_forward.18} parent=46 // loop_footer_branch
                  %209 = sbr.rel target = $region56
                $region61: #{text_decoder_forward.18} parent=46 // loop_exit
                  _
              $region47: #{text_decoder_forward.18} parent=31 // pred_fallthru
                _
            $region32: #{text_decoder_forward.18} parent=27 // pred_fallthru
              _
            // Predicated region
            $region33: #{text_decoder_forward.18} parent=27 // pred_check
              _
            $region34: #{text_decoder_forward.18} parent=27 // pred_check_branch
              %172 = sbr.rel (0) target = $region36
            $region35: #{text_decoder_forward.18} parent=27 // pred_region
              loop: start=0, step=1, limit=1
              $region37: #{text_decoder_forward.18} parent=35 // loop_pre_header
                _
              $region38: #{text_decoder_forward.18} parent=35 // loop_header
                %s175 = sphi 0, %s179
                %p176 = scmp.ge.s32.totalorder %s175, 1
                %s180 = sphi %s166, %s166
                %s181 = sphi %s163, %s163
              $region39: #{text_decoder_forward.18} parent=35 // loop_header_branch
                %178 = sbr.rel (%p176) target = $region43
              $region40: #{text_decoder_forward.18} parent=35 // loop_body
                %v182 = vld [vmem:[%s180] sm:$0xf]
                %183 = vst [vmem:[%s181] sm:$0xf] %v182
                %v184 = vld [vmem:[%s180 + $0xc] sm:$0xf]
                %185 = vst [vmem:[%s181 + $0x4] sm:$0xf] %v184
                %v186 = vld [vmem:[%s180 + $0x18] sm:$0xf]
                %187 = vst [vmem:[%s181 + $0x8] sm:$0xf] %v186
                %v188 = vld [vmem:[%s180 + $0x24] sm:$0xf]
                %189 = vst [vmem:[%s181 + $0xc] sm:$0xf] %v188
                %v190 = vld [vmem:[%s180 + $0x30] sm:$0xf]
                %191 = vst [vmem:[%s181 + $0x10] sm:$0xf] %v190
                %v192 = vld [vmem:[%s180 + $0x3c] sm:$0xf]
                %193 = vst [vmem:[%s181 + $0x14] sm:$0xf] %v192
                %v194 = vld [vmem:[%s180 + $0x48] sm:$0xf]
                %195 = vst [vmem:[%s181 + $0x18] sm:$0xf] %v194
                %v196 = vld [vmem:[%s180 + $0x54] sm:$0xf]
                %197 = vst [vmem:[%s181 + $0x1c] sm:$0xf] %v196
              $region41: #{text_decoder_forward.18} parent=35 // loop_footer
                %s179 = sadd.s32 1, %s175
              $region42: #{text_decoder_forward.18} parent=35 // loop_footer_branch
                %174 = sbr.rel target = $region38
              $region43: #{text_decoder_forward.18} parent=35 // loop_exit
                _
            $region36: #{text_decoder_forward.18} parent=27 // pred_fallthru
              _
          $region28: #{text_decoder_forward.18} parent=23 // pred_fallthru
            _
          %233 = vnop
        $region24: #{text_decoder_forward.18} parent=19 // pred_fallthru
          _
        // Predicated region
        $region62: #{text_decoder_forward.18} parent=19 // pred_check
          %p234 = pneg %p56
        $region63: #{text_decoder_forward.18} parent=19 // pred_check_branch
          %236 = sbr.rel (%p234) target = $region65
        $region64: #{text_decoder_forward.18} parent=19 // pred_region
          %s237 = sand.u32 %s46, 1
          %s238 = sand.u32 %s46, 1
          %s239 = smul.addr %s238, 32
          %s240 = scalar_lea.vmem [#allocation3], %s239
          %s241 = smul.addr %s10, 24
          %s242 = sadd.s32 1, %s241
          %s243 = smul.addr %s242, 4
          %s244 = scalar_lea.vmem %s1, %s243
          // Predicated region
          $region66: #{text_decoder_forward.18} parent=64 // pred_check
            _
          $region67: #{text_decoder_forward.18} parent=64 // pred_check_branch
            %246 = sbr.rel (0) target = $region69
          $region68: #{text_decoder_forward.18} parent=64 // pred_region
            // Predicated region
            $region70: #{text_decoder_forward.18} parent=68 // pred_check
              _
            $region71: #{text_decoder_forward.18} parent=68 // pred_check_branch
              %248 = sbr.rel target = $region73
            $region72: #{text_decoder_forward.18} parent=68 // pred_region
              // Predicated region
              $region85: #{text_decoder_forward.18} parent=72 // pred_check
                _
              $region86: #{text_decoder_forward.18} parent=72 // pred_check_branch
                %277 = sbr.rel (0) target = $region88
              $region87: #{text_decoder_forward.18} parent=72 // pred_region
                loop: start=0, step=1, limit=1
                $region89: #{text_decoder_forward.18} parent=87 // loop_pre_header
                  _
                $region90: #{text_decoder_forward.18} parent=87 // loop_header
                  %s279 = sphi 0, %s283
                  %p280 = scmp.ge.s32.totalorder %s279, 1
                  %s284 = sphi %s244, %s244
                  %s285 = sphi %s240, %s240
                $region91: #{text_decoder_forward.18} parent=87 // loop_header_branch
                  %282 = sbr.rel (%p280) target = $region95
                $region92: #{text_decoder_forward.18} parent=87 // loop_body
                  _
                $region93: #{text_decoder_forward.18} parent=87 // loop_footer
                  %s283 = sadd.s32 1, %s279
                $region94: #{text_decoder_forward.18} parent=87 // loop_footer_branch
                  %278 = sbr.rel target = $region90
                $region95: #{text_decoder_forward.18} parent=87 // loop_exit
                  _
                loop: start=0, step=1, limit=1
                $region96: #{text_decoder_forward.18} parent=87 // loop_pre_header
                  _
                $region97: #{text_decoder_forward.18} parent=87 // loop_header
                  %s288 = sphi 0, %s292
                  %p289 = scmp.ge.s32.totalorder %s288, 1
                  %s293 = sphi %s244, %s244
                  %s294 = sphi %s240, %s240
                $region98: #{text_decoder_forward.18} parent=87 // loop_header_branch
                  %291 = sbr.rel (%p289) target = $region102
                $region99: #{text_decoder_forward.18} parent=87 // loop_body
                  %v295 = vld [vmem:[%s293] sm:$0xf]
                  %296 = vst [vmem:[%s294] sm:$0xf] %v295
                  %v297 = vld [vmem:[%s293 + $0xc] sm:$0xf]
                  %298 = vst [vmem:[%s294 + $0x4] sm:$0xf] %v297
                  %v299 = vld [vmem:[%s293 + $0x18] sm:$0xf]
                  %300 = vst [vmem:[%s294 + $0x8] sm:$0xf] %v299
                  %v301 = vld [vmem:[%s293 + $0x24] sm:$0xf]
                  %302 = vst [vmem:[%s294 + $0xc] sm:$0xf] %v301
                  %v303 = vld [vmem:[%s293 + $0x30] sm:$0xf]
                  %304 = vst [vmem:[%s294 + $0x10] sm:$0xf] %v303
                  %v305 = vld [vmem:[%s293 + $0x3c] sm:$0xf]
                  %306 = vst [vmem:[%s294 + $0x14] sm:$0xf] %v305
                  %v307 = vld [vmem:[%s293 + $0x48] sm:$0xf]
                  %308 = vst [vmem:[%s294 + $0x18] sm:$0xf] %v307
                  %v309 = vld [vmem:[%s293 + $0x54] sm:$0xf]
                  %310 = vst [vmem:[%s294 + $0x1c] sm:$0xf] %v309
                $region100: #{text_decoder_forward.18} parent=87 // loop_footer
                  %s292 = sadd.s32 1, %s288
                $region101: #{text_decoder_forward.18} parent=87 // loop_footer_branch
                  %287 = sbr.rel target = $region97
                $region102: #{text_decoder_forward.18} parent=87 // loop_exit
                  _
              $region88: #{text_decoder_forward.18} parent=72 // pred_fallthru
                _
            $region73: #{text_decoder_forward.18} parent=68 // pred_fallthru
              _
            // Predicated region
            $region74: #{text_decoder_forward.18} parent=68 // pred_check
              _
            $region75: #{text_decoder_forward.18} parent=68 // pred_check_branch
              %250 = sbr.rel (0) target = $region77
            $region76: #{text_decoder_forward.18} parent=68 // pred_region
              loop: start=0, step=1, limit=1
              $region78: #{text_decoder_forward.18} parent=76 // loop_pre_header
                _
              $region79: #{text_decoder_forward.18} parent=76 // loop_header
                %s253 = sphi 0, %s257
                %p254 = scmp.ge.s32.totalorder %s253, 1
                %s258 = sphi %s244, %s244
                %s259 = sphi %s240, %s240
              $region80: #{text_decoder_forward.18} parent=76 // loop_header_branch
                %256 = sbr.rel (%p254) target = $region84
              $region81: #{text_decoder_forward.18} parent=76 // loop_body
                %v260 = vld [vmem:[%s258] sm:$0xf]
                %261 = vst [vmem:[%s259] sm:$0xf] %v260
                %v262 = vld [vmem:[%s258 + $0xc] sm:$0xf]
                %263 = vst [vmem:[%s259 + $0x4] sm:$0xf] %v262
                %v264 = vld [vmem:[%s258 + $0x18] sm:$0xf]
                %265 = vst [vmem:[%s259 + $0x8] sm:$0xf] %v264
                %v266 = vld [vmem:[%s258 + $0x24] sm:$0xf]
                %267 = vst [vmem:[%s259 + $0xc] sm:$0xf] %v266
                %v268 = vld [vmem:[%s258 + $0x30] sm:$0xf]
                %269 = vst [vmem:[%s259 + $0x10] sm:$0xf] %v268
                %v270 = vld [vmem:[%s258 + $0x3c] sm:$0xf]
                %271 = vst [vmem:[%s259 + $0x14] sm:$0xf] %v270
                %v272 = vld [vmem:[%s258 + $0x48] sm:$0xf]
                %273 = vst [vmem:[%s259 + $0x18] sm:$0xf] %v272
                %v274 = vld [vmem:[%s258 + $0x54] sm:$0xf]
                %275 = vst [vmem:[%s259 + $0x1c] sm:$0xf] %v274
              $region82: #{text_decoder_forward.18} parent=76 // loop_footer
                %s257 = sadd.s32 1, %s253
              $region83: #{text_decoder_forward.18} parent=76 // loop_footer_branch
                %252 = sbr.rel target = $region79
              $region84: #{text_decoder_forward.18} parent=76 // loop_exit
                _
            $region77: #{text_decoder_forward.18} parent=68 // pred_fallthru
              _
          $region69: #{text_decoder_forward.18} parent=64 // pred_fallthru
            _
          %311 = vnop
        $region65: #{text_decoder_forward.18} parent=19 // pred_fallthru
          _
        // Predicated region
        $region103: #{text_decoder_forward.18} parent=19 // pred_check
          %p312 = pneg %p82
        $region104: #{text_decoder_forward.18} parent=19 // pred_check_branch
          %314 = sbr.rel (%p312) target = $region106
        $region105: #{text_decoder_forward.18} parent=19 // pred_region
          %s315 = sand.u32 %s72, 1
          %s316 = sand.u32 %s72, 1
          %s317 = smul.addr %s316, 32
          %s318 = scalar_lea.vmem [#allocation4], %s317
          %s319 = smul.addr %s10, 24
          %s320 = sadd.s32 2, %s319
          %s321 = smul.addr %s320, 4
          %s322 = scalar_lea.vmem %s2, %s321
          // Predicated region
          $region107: #{text_decoder_forward.18} parent=105 // pred_check
            _
          $region108: #{text_decoder_forward.18} parent=105 // pred_check_branch
            %324 = sbr.rel (0) target = $region110
          $region109: #{text_decoder_forward.18} parent=105 // pred_region
            // Predicated region
            $region111: #{text_decoder_forward.18} parent=109 // pred_check
              _
            $region112: #{text_decoder_forward.18} parent=109 // pred_check_branch
              %326 = sbr.rel target = $region114
            $region113: #{text_decoder_forward.18} parent=109 // pred_region
              // Predicated region
              $region126: #{text_decoder_forward.18} parent=113 // pred_check
                _
              $region127: #{text_decoder_forward.18} parent=113 // pred_check_branch
                %355 = sbr.rel (0) target = $region129
              $region128: #{text_decoder_forward.18} parent=113 // pred_region
                loop: start=0, step=1, limit=1
                $region130: #{text_decoder_forward.18} parent=128 // loop_pre_header
                  _
                $region131: #{text_decoder_forward.18} parent=128 // loop_header
                  %s357 = sphi 0, %s361
                  %p358 = scmp.ge.s32.totalorder %s357, 1
                  %s362 = sphi %s322, %s322
                  %s363 = sphi %s318, %s318
                $region132: #{text_decoder_forward.18} parent=128 // loop_header_branch
                  %360 = sbr.rel (%p358) target = $region136
                $region133: #{text_decoder_forward.18} parent=128 // loop_body
                  _
                $region134: #{text_decoder_forward.18} parent=128 // loop_footer
                  %s361 = sadd.s32 1, %s357
                $region135: #{text_decoder_forward.18} parent=128 // loop_footer_branch
                  %356 = sbr.rel target = $region131
                $region136: #{text_decoder_forward.18} parent=128 // loop_exit
                  _
                loop: start=0, step=1, limit=1
                $region137: #{text_decoder_forward.18} parent=128 // loop_pre_header
                  _
                $region138: #{text_decoder_forward.18} parent=128 // loop_header
                  %s366 = sphi 0, %s370
                  %p367 = scmp.ge.s32.totalorder %s366, 1
                  %s371 = sphi %s322, %s322
                  %s372 = sphi %s318, %s318
                $region139: #{text_decoder_forward.18} parent=128 // loop_header_branch
                  %369 = sbr.rel (%p367) target = $region143
                $region140: #{text_decoder_forward.18} parent=128 // loop_body
                  %v373 = vld [vmem:[%s371] sm:$0xf]
                  %374 = vst [vmem:[%s372] sm:$0xf] %v373
                  %v375 = vld [vmem:[%s371 + $0xc] sm:$0xf]
                  %376 = vst [vmem:[%s372 + $0x4] sm:$0xf] %v375
                  %v377 = vld [vmem:[%s371 + $0x18] sm:$0xf]
                  %378 = vst [vmem:[%s372 + $0x8] sm:$0xf] %v377
                  %v379 = vld [vmem:[%s371 + $0x24] sm:$0xf]
                  %380 = vst [vmem:[%s372 + $0xc] sm:$0xf] %v379
                  %v381 = vld [vmem:[%s371 + $0x30] sm:$0xf]
                  %382 = vst [vmem:[%s372 + $0x10] sm:$0xf] %v381
                  %v383 = vld [vmem:[%s371 + $0x3c] sm:$0xf]
                  %384 = vst [vmem:[%s372 + $0x14] sm:$0xf] %v383
                  %v385 = vld [vmem:[%s371 + $0x48] sm:$0xf]
                  %386 = vst [vmem:[%s372 + $0x18] sm:$0xf] %v385
                  %v387 = vld [vmem:[%s371 + $0x54] sm:$0xf]
                  %388 = vst [vmem:[%s372 + $0x1c] sm:$0xf] %v387
                $region141: #{text_decoder_forward.18} parent=128 // loop_footer
                  %s370 = sadd.s32 1, %s366
                $region142: #{text_decoder_forward.18} parent=128 // loop_footer_branch
                  %365 = sbr.rel target = $region138
                $region143: #{text_decoder_forward.18} parent=128 // loop_exit
                  _
              $region129: #{text_decoder_forward.18} parent=113 // pred_fallthru
                _
            $region114: #{text_decoder_forward.18} parent=109 // pred_fallthru
              _
            // Predicated region
            $region115: #{text_decoder_forward.18} parent=109 // pred_check
              _
            $region116: #{text_decoder_forward.18} parent=109 // pred_check_branch
              %328 = sbr.rel (0) target = $region118
            $region117: #{text_decoder_forward.18} parent=109 // pred_region
              loop: start=0, step=1, limit=1
              $region119: #{text_decoder_forward.18} parent=117 // loop_pre_header
                _
              $region120: #{text_decoder_forward.18} parent=117 // loop_header
                %s331 = sphi 0, %s335
                %p332 = scmp.ge.s32.totalorder %s331, 1
                %s336 = sphi %s322, %s322
                %s337 = sphi %s318, %s318
              $region121: #{text_decoder_forward.18} parent=117 // loop_header_branch
                %334 = sbr.rel (%p332) target = $region125
              $region122: #{text_decoder_forward.18} parent=117 // loop_body
                %v338 = vld [vmem:[%s336] sm:$0xf]
                %339 = vst [vmem:[%s337] sm:$0xf] %v338
                %v340 = vld [vmem:[%s336 + $0xc] sm:$0xf]
                %341 = vst [vmem:[%s337 + $0x4] sm:$0xf] %v340
                %v342 = vld [vmem:[%s336 + $0x18] sm:$0xf]
                %343 = vst [vmem:[%s337 + $0x8] sm:$0xf] %v342
                %v344 = vld [vmem:[%s336 + $0x24] sm:$0xf]
                %345 = vst [vmem:[%s337 + $0xc] sm:$0xf] %v344
                %v346 = vld [vmem:[%s336 + $0x30] sm:$0xf]
                %347 = vst [vmem:[%s337 + $0x10] sm:$0xf] %v346
                %v348 = vld [vmem:[%s336 + $0x3c] sm:$0xf]
                %349 = vst [vmem:[%s337 + $0x14] sm:$0xf] %v348
                %v350 = vld [vmem:[%s336 + $0x48] sm:$0xf]
                %351 = vst [vmem:[%s337 + $0x18] sm:$0xf] %v350
                %v352 = vld [vmem:[%s336 + $0x54] sm:$0xf]
                %353 = vst [vmem:[%s337 + $0x1c] sm:$0xf] %v352
              $region123: #{text_decoder_forward.18} parent=117 // loop_footer
                %s335 = sadd.s32 1, %s331
              $region124: #{text_decoder_forward.18} parent=117 // loop_footer_branch
                %330 = sbr.rel target = $region120
              $region125: #{text_decoder_forward.18} parent=117 // loop_exit
                _
            $region118: #{text_decoder_forward.18} parent=109 // pred_fallthru
              _
          $region110: #{text_decoder_forward.18} parent=105 // pred_fallthru
            _
          %389 = vnop
        $region106: #{text_decoder_forward.18} parent=19 // pred_fallthru
          _
      $region20: #{text_decoder_forward.18} parent=5 // pred_fallthru
        _
      %p390 = scmp.le.s32.totalorder 1, %s10
      %p391 = scmp.lt.s32.totalorder %s10, 3
      %p392 = pnand %p390, %p391
      %p393 = pneg %p392
      // Predicated region
      $region144: #{text_decoder_forward.18} parent=5 // pred_check
        _
      $region145: #{text_decoder_forward.18} parent=5 // pred_check_branch
        %395 = sbr.rel (%p392) target = $region147
      $region146: #{text_decoder_forward.18} parent=5 // pred_region
        %s396 = ssub.s32 %s10, 1
        %s397 = sand.u32 %s23, 1
        %s398 = sand.u32 %s23, 1
        %s399 = smul.addr %s398, 32
        %s400 = scalar_lea.vmem [#allocation2], %s399
        // Predicated region
        $region148: #{text_decoder_forward.18} parent=146 // pred_check
          %p401 = pneg %p36
        $region149: #{text_decoder_forward.18} parent=146 // pred_check_branch
          %403 = sbr.rel (%p401) target = $region151
        $region150: #{text_decoder_forward.18} parent=146 // pred_region
          _
        $region151: #{text_decoder_forward.18} parent=146 // pred_fallthru
          _
        %s404 = sand.u32 %s49, 1
        %s405 = sand.u32 %s49, 1
        %s406 = smul.addr %s405, 32
        %s407 = scalar_lea.vmem [#allocation3], %s406
        // Predicated region
        $region152: #{text_decoder_forward.18} parent=146 // pred_check
          %p408 = pneg %p62
        $region153: #{text_decoder_forward.18} parent=146 // pred_check_branch
          %410 = sbr.rel (%p408) target = $region155
        $region154: #{text_decoder_forward.18} parent=146 // pred_region
          _
        $region155: #{text_decoder_forward.18} parent=146 // pred_fallthru
          _
        %s411 = sand.u32 %s75, 1
        %s412 = sand.u32 %s75, 1
        %s413 = smul.addr %s412, 32
        %s414 = scalar_lea.vmem [#allocation4], %s413
        // Predicated region
        $region156: #{text_decoder_forward.18} parent=146 // pred_check
          %p415 = pneg %p88
        $region157: #{text_decoder_forward.18} parent=146 // pred_check_branch
          %417 = sbr.rel (%p415) target = $region159
        $region158: #{text_decoder_forward.18} parent=146 // pred_region
          _
        $region159: #{text_decoder_forward.18} parent=146 // pred_fallthru
          _
        %s418 = sand.u32 %s23, 1
        %s419 = sand.u32 %s23, 1
        %s420 = smul.addr %s419, 32
        %s421 = scalar_lea.vmem [#allocation2], %s420
        %p422 = pneg %p36
        %p423 = pneg %p33
        %s424 = sand.u32 %s49, 1
        %s425 = sand.u32 %s49, 1
        %s426 = smul.addr %s425, 32
        %s427 = scalar_lea.vmem [#allocation3], %s426
        %p428 = pneg %p62
        %p429 = pneg %p59
        %s430 = sand.u32 %s75, 1
        %s431 = sand.u32 %s75, 1
        %s432 = smul.addr %s431, 32
        %s433 = scalar_lea.vmem [#allocation4], %s432
        %p434 = pneg %p88
        %p435 = pneg %p85
        %p436 = pneg %p109
        %p437 = pneg %p106
        %p438 = pneg %p135
        %p439 = pneg %p132
        %p440 = scmp.lt.s32.totalorder %s15, 1
        %s441 = scalar_select %p440, %s15, 1
        %s442 = smul.addr %s441, 8
        %s443 = smul.addr %s442, 4
        %s444 = scalar_lea.vmem %s4, %s443
        %p445 = scmp.lt.s32.totalorder %s15, 1
        %s446 = scalar_select %p445, %s15, 1
        %s447 = smul.addr %s446, 8
        %s448 = smul.addr %s447, 4
        %s449 = scalar_lea.vmem %s4, %s448
        %v451 = vld [vmem:[%s400] sm:$0xf]
        %v452 = vld [vmem:[%s400 + $0x4] sm:$0xf]
        %v453 = vld [vmem:[%s400 + $0x8] sm:$0xf]
        %v454 = vld [vmem:[%s400 + $0xc] sm:$0xf]
        %v455 = vld [vmem:[%s400 + $0x10] sm:$0xf]
        %v456 = vld [vmem:[%s400 + $0x14] sm:$0xf]
        %v457 = vld [vmem:[%s400 + $0x18] sm:$0xf]
        %v458 = vld [vmem:[%s400 + $0x1c] sm:$0xf]
        %v459 = vunpack.c.l.bf16 %v451
        %v460 = vunpack.c.l.bf16 %v452
        %v461 = vunpack.c.l.bf16 %v453
        %v462 = vunpack.c.l.bf16 %v454
        %v463 = vunpack.c.l.bf16 %v455
        %v464 = vunpack.c.l.bf16 %v456
        %v465 = vunpack.c.l.bf16 %v457
        %v466 = vunpack.c.l.bf16 %v458
        %v467 = vmul.f32 %v459, 0.125
        %v468 = vmul.f32 %v460, 0.125
        %v469 = vmul.f32 %v461, 0.125
        %v470 = vmul.f32 %v462, 0.125
        %v471 = vmul.f32 %v463, 0.125
        %v472 = vmul.f32 %v464, 0.125
        %v473 = vmul.f32 %v465, 0.125
        %v474 = vmul.f32 %v466, 0.125
        %v475 = vpack.c.bf16 %v468, %v467
        %v476 = vpack.c.bf16 %v470, %v469
        %v477 = vpack.c.bf16 %v472, %v471
        %v478 = vpack.c.bf16 %v474, %v473
        %v479 = vld [vmem:[%s407] sm:$0xf]
        %v480 = vld [vmem:[%s407 + $0x4] sm:$0xf]
        %v481 = vld [vmem:[%s407 + $0x8] sm:$0xf]
        %v482 = vld [vmem:[%s407 + $0xc] sm:$0xf]
        %v483 = vld [vmem:[%s407 + $0x10] sm:$0xf]
        %v484 = vld [vmem:[%s407 + $0x14] sm:$0xf]
        %v485 = vld [vmem:[%s407 + $0x18] sm:$0xf]
        %v486 = vld [vmem:[%s407 + $0x1c] sm:$0xf]
        %v487 = vld [vmem:[%s414] sm:$0xf]
        %v488 = vld [vmem:[%s414 + $0x4] sm:$0xf]
        %v489 = vld [vmem:[%s414 + $0x8] sm:$0xf]
        %v490 = vld [vmem:[%s414 + $0xc] sm:$0xf]
        %v491 = vld [vmem:[%s414 + $0x10] sm:$0xf]
        %v492 = vld [vmem:[%s414 + $0x14] sm:$0xf]
        %v493 = vld [vmem:[%s414 + $0x18] sm:$0xf]
        %v494 = vld [vmem:[%s414 + $0x1c] sm:$0xf]
        %v495 = vld [vmem:[%s3] sm:$0xff]
        %v496 = vld [vmem:[%s3 + $0x8] sm:$0xff]
        %v497 = vld [vmem:[%s3 + $0x10] sm:$0xff]
        %v498 = vld [vmem:[%s3 + $0x18] sm:$0xff]
        %v499 = vld [vmem:[%s3 + $0x20] sm:$0xff]
        %v500 = vld [vmem:[%s3 + $0x28] sm:$0xff]
        %v501 = vld [vmem:[%s3 + $0x30] sm:$0xff]
        %v502 = vld [vmem:[%s3 + $0x38] sm:$0xff]
        %v511 = vunpack.c.l.b16 %v479
        %v512 = vunpack.c.l.b16 %v480
        %v513 = vunpack.c.l.b16 %v481
        %v514 = vunpack.c.l.b16 %v482
        %v515 = vunpack.c.l.b16 %v483
        %v516 = vunpack.c.l.b16 %v484
        %v517 = vunpack.c.l.b16 %v485
        %v518 = vunpack.c.l.b16 %v486
        %v519 = vpack.c.b16 %v512, %v511
        %v520 = vpack.c.b16 %v514, %v513
        %v521 = vpack.c.b16 %v516, %v515
        %v522 = vpack.c.b16 %v518, %v517
        %vm523 = vcmask 523264
        %v525 = vsel %vm523, %v475, 0
        %v528 = vsel %vm523, %v476, 0
        %v531 = vsel %vm523, %v477, 0
        %v534 = vsel %vm523, %v478, 0
        %v537 = vsel %vm523, %v519, 0
        %v540 = vsel %vm523, %v520, 0
        %v543 = vsel %vm523, %v521, 0
        %v546 = vsel %vm523, %v522, 0
        %548 = vmatprep.subr.bf16.mxu0 0
        %549 = vmatpush1.bf16.xpose.msra.mxu0 %v537
        %550 = vmatprep.subr.bf16.mxu0 0
        %551 = vmatpush1.bf16.xpose.msra.mxu0 %v540
        %552 = vmatprep.subr.bf16.mxu0 0
        %553 = vmatpush1.bf16.xpose.msra.mxu0 %v543
        %554 = vmatprep.subr.bf16.mxu0 0
        %555 = vmatpush1.bf16.xpose.msra.mxu0 %v546
        %556 = vmatprep.subr.bf16.mxu0 0
        %557 = vmatpush1.bf16.xpose.msra.mxu0 0
        %558 = vmatprep.subr.bf16.mxu0 0
        %559 = vmatpush1.bf16.xpose.msra.mxu0 0
        %560 = vmatprep.subr.bf16.mxu0 0
        %561 = vmatpush1.bf16.xpose.msra.mxu0 0
        %562 = vmatprep.subr.bf16.mxu0 0
        %563 = vmatpush1.bf16.xpose.msra.mxu0 0
        %564 = vmatprep.subr.bf16.mxu0 0
        %565 = vmatpush1.bf16.xpose.msra.mxu0 0
        %566 = vmatprep.subr.bf16.mxu0 0
        %567 = vmatpush1.bf16.xpose.msra.mxu0 0
        %568 = vmatprep.subr.bf16.mxu0 0
        %569 = vmatpush1.bf16.xpose.msra.mxu0 0
        %570 = vmatprep.subr.bf16.mxu0 0
        %571 = vmatpush1.bf16.xpose.msra.mxu0 0
        %572 = vmatprep.subr.bf16.mxu0 0
        %573 = vmatpush1.bf16.xpose.msra.mxu0 0
        %574 = vmatprep.subr.bf16.mxu0 0
        %575 = vmatpush1.bf16.xpose.msra.mxu0 0
        %576 = vmatprep.subr.bf16.mxu0 0
        %577 = vmatpush1.bf16.xpose.msra.mxu0 0
        %578 = vmatprep.subr.bf16.mxu0 0
        %579 = vmatpush1.bf16.xpose.msra.mxu0 0
        %580 = vmatprep.mubr.bf16.mxu0 0
        %581 = vmatmul.mubr.bf16.gmra.mrb[0].mxu0 %v525
        %v582 = vpop.f32.mrb[0].mxu0
        %v583 = vadd.f32 %v495, %v582
        %v584 = vpop.f32.mrb[0].mxu0
        %v585 = vpop.f32.mrb[0].mxu0
        %v586 = vadd.f32 %v496, %v585
        %v587 = vpop.f32.mrb[0].mxu0
        %588 = vmatprep.mubr.bf16.mxu0 0
        %589 = vmatmul.mubr.bf16.gmra.mrb[0].mxu0 %v528
        %v590 = vpop.f32.mrb[0].mxu0
        %v591 = vadd.f32 %v497, %v590
        %v592 = vpop.f32.mrb[0].mxu0
        %v593 = vpop.f32.mrb[0].mxu0
        %v594 = vadd.f32 %v498, %v593
        %v595 = vpop.f32.mrb[0].mxu0
        %596 = vmatprep.mubr.bf16.mxu0 0
        %597 = vmatmul.mubr.bf16.gmra.mrb[0].mxu0 %v531
        %v598 = vpop.f32.mrb[0].mxu0
        %v599 = vadd.f32 %v499, %v598
        %v600 = vpop.f32.mrb[0].mxu0
        %v601 = vpop.f32.mrb[0].mxu0
        %v602 = vadd.f32 %v500, %v601
        %v603 = vpop.f32.mrb[0].mxu0
        %604 = vmatprep.mubr.bf16.mxu0 0
        %605 = vmatmul.mubr.bf16.gmra.mrb[0].mxu0 %v534
        %v606 = vpop.f32.mrb[0].mxu0
        %v607 = vadd.f32 %v501, %v606
        %v608 = vpop.f32.mrb[0].mxu0
        %v609 = vpop.f32.mrb[0].mxu0
        %v610 = vadd.f32 %v502, %v609
        %v611 = vpop.f32.mrb[0].mxu0
        %612 = vdwg.mxu0
        %v613 = vsel %vm523, %v583, -inf
        %614 = vmax.xlane.f32.xlu0 %v613
        %v615 = vpop.xlane.xlu0 %614
        %v616 = vsel %vm523, %v586, -inf
        %617 = vmax.xlane.f32.xlu0 %v616
        %v618 = vpop.xlane.xlu0 %617
        %v619 = vsel %vm523, %v591, -inf
        %620 = vmax.xlane.f32.xlu0 %v619
        %v621 = vpop.xlane.xlu0 %620
        %v622 = vsel %vm523, %v594, -inf
        %623 = vmax.xlane.f32.xlu0 %v622
        %v624 = vpop.xlane.xlu0 %623
        %v625 = vsel %vm523, %v599, -inf
        %626 = vmax.xlane.f32.xlu0 %v625
        %v627 = vpop.xlane.xlu0 %626
        %v628 = vsel %vm523, %v602, -inf
        %629 = vmax.xlane.f32.xlu0 %v628
        %v630 = vpop.xlane.xlu0 %629
        %v631 = vsel %vm523, %v607, -inf
        %632 = vmax.xlane.f32.xlu0 %v631
        %v633 = vpop.xlane.xlu0 %632
        %v634 = vsel %vm523, %v610, -inf
        %635 = vmax.xlane.f32.xlu0 %v634
        %v636 = vpop.xlane.xlu0 %635
        %v637 = vsub.f32 %v583, %v615
        %v638 = vsub.f32 %v586, %v618
        %v639 = vsub.f32 %v591, %v621
        %v640 = vsub.f32 %v594, %v624
        %v641 = vsub.f32 %v599, %v627
        %v642 = vsub.f32 %v602, %v630
        %v643 = vsub.f32 %v607, %v633
        %v644 = vsub.f32 %v610, %v636
        %v645 = vmul.f32 %v637, 1.442695
        %v646 = vpow.pop %v645
        %v647 = vmul.f32 %v638, 1.442695
        %v648 = vpow.pop %v647
        %v649 = vmul.f32 %v639, 1.442695
        %v650 = vpow.pop %v649
        %v651 = vmul.f32 %v640, 1.442695
        %v652 = vpow.pop %v651
        %v653 = vmul.f32 %v641, 1.442695
        %v654 = vpow.pop %v653
        %v655 = vmul.f32 %v642, 1.442695
        %v656 = vpow.pop %v655
        %v657 = vmul.f32 %v643, 1.442695
        %v658 = vpow.pop %v657
        %v659 = vmul.f32 %v644, 1.442695
        %v660 = vpow.pop %v659
        %v661 = vsel %vm523, %v646, 0.0
        %662 = vadd.xlane.f32.xlu0 %v661
        %v663 = vpop.xlane.xlu0 %662
        %v664 = vsel %vm523, %v648, 0.0
        %665 = vadd.xlane.f32.xlu0 %v664
        %v666 = vpop.xlane.xlu0 %665
        %v667 = vsel %vm523, %v650, 0.0
        %668 = vadd.xlane.f32.xlu0 %v667
        %v669 = vpop.xlane.xlu0 %668
        %v670 = vsel %vm523, %v652, 0.0
        %671 = vadd.xlane.f32.xlu0 %v670
        %v672 = vpop.xlane.xlu0 %671
        %v673 = vsel %vm523, %v654, 0.0
        %674 = vadd.xlane.f32.xlu0 %v673
        %v675 = vpop.xlane.xlu0 %674
        %v676 = vsel %vm523, %v656, 0.0
        %677 = vadd.xlane.f32.xlu0 %v676
        %v678 = vpop.xlane.xlu0 %677
        %v679 = vsel %vm523, %v658, 0.0
        %680 = vadd.xlane.f32.xlu0 %v679
        %v681 = vpop.xlane.xlu0 %680
        %v682 = vsel %vm523, %v660, 0.0
        %683 = vadd.xlane.f32.xlu0 %v682
        %v684 = vpop.xlane.xlu0 %683
        %v685 = vrcp.pop %v663
        %v686 = vrcp.pop %v666
        %v687 = vrcp.pop %v669
        %v688 = vrcp.pop %v672
        %v689 = vrcp.pop %v675
        %v690 = vrcp.pop %v678
        %v691 = vrcp.pop %v681
        %v692 = vrcp.pop %v684
        %v693 = vmul.f32 %v646, %v685
        %v694 = vmul.f32 %v648, %v686
        %v695 = vmul.f32 %v650, %v687
        %v696 = vmul.f32 %v652, %v688
        %v697 = vmul.f32 %v654, %v689
        %v698 = vmul.f32 %v656, %v690
        %v699 = vmul.f32 %v658, %v691
        %v700 = vmul.f32 %v660, %v692
        %v701 = vpack.c.bf16 %v694, %v693
        %v702 = vpack.c.bf16 %v696, %v695
        %v703 = vpack.c.bf16 %v698, %v697
        %v704 = vpack.c.bf16 %v700, %v699
        %v713 = vunpack.c.l.b16 %v487
        %v714 = vunpack.c.l.b16 %v488
        %v715 = vunpack.c.l.b16 %v489
        %v716 = vunpack.c.l.b16 %v490
        %v717 = vunpack.c.l.b16 %v491
        %v718 = vunpack.c.l.b16 %v492
        %v719 = vunpack.c.l.b16 %v493
        %v720 = vunpack.c.l.b16 %v494
        %v721 = vpack.c.b16 %v714, %v713
        %v722 = vpack.c.b16 %v716, %v715
        %v723 = vpack.c.b16 %v718, %v717
        %v724 = vpack.c.b16 %v720, %v719
        %v730 = vsel %vm523, %v701, 0
        %v733 = vsel %vm523, %v702, 0
        %v736 = vsel %vm523, %v703, 0
        %v739 = vsel %vm523, %v704, 0
        %741 = vmatprep.subr.bf16.mxu0 0
        %742 = vmatpush1.bf16.msra.mxu0 %v721
        %743 = vmatprep.subr.bf16.mxu0 0
        %744 = vmatpush1.bf16.msra.mxu0 %v722
        %745 = vmatprep.subr.bf16.mxu0 0
        %746 = vmatpush1.bf16.msra.mxu0 %v723
        %747 = vmatprep.subr.bf16.mxu0 0
        %748 = vmatpush1.bf16.msra.mxu0 %v724
        %749 = vmatprep.subr.bf16.mxu0 0
        %750 = vmatpush1.bf16.msra.mxu0 0
        %751 = vmatprep.subr.bf16.mxu0 0
        %752 = vmatpush1.bf16.msra.mxu0 0
        %753 = vmatprep.subr.bf16.mxu0 0
        %754 = vmatpush1.bf16.msra.mxu0 0
        %755 = vmatprep.subr.bf16.mxu0 0
        %756 = vmatpush1.bf16.msra.mxu0 0
        %757 = vmatprep.subr.bf16.mxu0 0
        %758 = vmatpush1.bf16.msra.mxu0 0
        %759 = vmatprep.subr.bf16.mxu0 0
        %760 = vmatpush1.bf16.msra.mxu0 0
        %761 = vmatprep.subr.bf16.mxu0 0
        %762 = vmatpush1.bf16.msra.mxu0 0
        %763 = vmatprep.subr.bf16.mxu0 0
        %764 = vmatpush1.bf16.msra.mxu0 0
        %765 = vmatprep.subr.bf16.mxu0 0
        %766 = vmatpush1.bf16.msra.mxu0 0
        %767 = vmatprep.subr.bf16.mxu0 0
        %768 = vmatpush1.bf16.msra.mxu0 0
        %769 = vmatprep.subr.bf16.mxu0 0
        %770 = vmatpush1.bf16.msra.mxu0 0
        %771 = vmatprep.subr.bf16.mxu0 0
        %772 = vmatpush1.bf16.msra.mxu0 0
        %773 = vmatprep.mubr.bf16.mxu0 0
        %774 = vmatmul.mubr.bf16.gmra.mrb[0].mxu0 %v730
        %v775 = vpop.f32.mrb[0].mxu0
        %v776 = vadd.f32 0.0, %v775
        %v777 = vpop.f32.mrb[0].mxu0
        %v778 = vpop.f32.mrb[0].mxu0
        %v779 = vadd.f32 0.0, %v778
        %v780 = vpop.f32.mrb[0].mxu0
        %781 = vmatprep.mubr.bf16.mxu0 0
        %782 = vmatmul.mubr.bf16.gmra.mrb[0].mxu0 %v733
        %v783 = vpop.f32.mrb[0].mxu0
        %v784 = vadd.f32 0.0, %v783
        %v785 = vpop.f32.mrb[0].mxu0
        %v786 = vpop.f32.mrb[0].mxu0
        %v787 = vadd.f32 0.0, %v786
        %v788 = vpop.f32.mrb[0].mxu0
        %789 = vmatprep.mubr.bf16.mxu0 0
        %790 = vmatmul.mubr.bf16.gmra.mrb[0].mxu0 %v736
        %v791 = vpop.f32.mrb[0].mxu0
        %v792 = vadd.f32 0.0, %v791
        %v793 = vpop.f32.mrb[0].mxu0
        %v794 = vpop.f32.mrb[0].mxu0
        %v795 = vadd.f32 0.0, %v794
        %v796 = vpop.f32.mrb[0].mxu0
        %797 = vmatprep.mubr.bf16.mxu0 0
        %798 = vmatmul.mubr.bf16.gmra.mrb[0].mxu0 %v739
        %v799 = vpop.f32.mrb[0].mxu0
        %v800 = vadd.f32 0.0, %v799
        %v801 = vpop.f32.mrb[0].mxu0
        %v802 = vpop.f32.mrb[0].mxu0
        %v803 = vadd.f32 0.0, %v802
        %v804 = vpop.f32.mrb[0].mxu0
        %805 = vdwg.mxu0
        %810 = vrot.lane.b32.xlu0 %v475, 64
        %v811 = vpop.permute.xlu0 %810
        %812 = vrot.lane.b32.xlu0 %v476, 64
        %v813 = vpop.permute.xlu0 %812
        %814 = vrot.lane.b32.xlu0 %v477, 64
        %v815 = vpop.permute.xlu0 %814
        %816 = vrot.lane.b32.xlu0 %v478, 64
        %v817 = vpop.permute.xlu0 %816
        %818 = vrot.lane.b32.xlu0 %v519, 64
        %v819 = vpop.permute.xlu0 %818
        %820 = vrot.lane.b32.xlu0 %v520, 64
        %v821 = vpop.permute.xlu0 %820
        %822 = vrot.lane.b32.xlu0 %v521, 64
        %v823 = vpop.permute.xlu0 %822
        %824 = vrot.lane.b32.xlu0 %v522, 64
        %v825 = vpop.permute.xlu0 %824
        %v827 = vsel %vm523, %v811, 0
        %v830 = vsel %vm523, %v813, 0
        %v833 = vsel %vm523, %v815, 0
        %v836 = vsel %vm523, %v817, 0
        %v839 = vsel %vm523, %v819, 0
        %v842 = vsel %vm523, %v821, 0
        %v845 = vsel %vm523, %v823, 0
        %v848 = vsel %vm523, %v825, 0
        %850 = vmatprep.subr.bf16.mxu0 0
        %851 = vmatpush1.bf16.xpose.msra.mxu0 %v839
        %852 = vmatprep.subr.bf16.mxu0 0
        %853 = vmatpush1.bf16.xpose.msra.mxu0 %v842
        %854 = vmatprep.subr.bf16.mxu0 0
        %855 = vmatpush1.bf16.xpose.msra.mxu0 %v845
        %856 = vmatprep.subr.bf16.mxu0 0
        %857 = vmatpush1.bf16.xpose.msra.mxu0 %v848
        %858 = vmatprep.subr.bf16.mxu0 0
        %859 = vmatpush1.bf16.xpose.msra.mxu0 0
        %860 = vmatprep.subr.bf16.mxu0 0
        %861 = vmatpush1.bf16.xpose.msra.mxu0 0
        %862 = vmatprep.subr.bf16.mxu0 0
        %863 = vmatpush1.bf16.xpose.msra.mxu0 0
        %864 = vmatprep.subr.bf16.mxu0 0
        %865 = vmatpush1.bf16.xpose.msra.mxu0 0
        %866 = vmatprep.subr.bf16.mxu0 0
        %867 = vmatpush1.bf16.xpose.msra.mxu0 0
        %868 = vmatprep.subr.bf16.mxu0 0
        %869 = vmatpush1.bf16.xpose.msra.mxu0 0
        %870 = vmatprep.subr.bf16.mxu0 0
        %871 = vmatpush1.bf16.xpose.msra.mxu0 0
        %872 = vmatprep.subr.bf16.mxu0 0
        %873 = vmatpush1.bf16.xpose.msra.mxu0 0
        %874 = vmatprep.subr.bf16.mxu0 0
        %875 = vmatpush1.bf16.xpose.msra.mxu0 0
        %876 = vmatprep.subr.bf16.mxu0 0
        %877 = vmatpush1.bf16.xpose.msra.mxu0 0
        %878 = vmatprep.subr.bf16.mxu0 0
        %879 = vmatpush1.bf16.xpose.msra.mxu0 0
        %880 = vmatprep.subr.bf16.mxu0 0
        %881 = vmatpush1.bf16.xpose.msra.mxu0 0
        %882 = vmatprep.mubr.bf16.mxu0 0
        %883 = vmatmul.mubr.bf16.gmra.mrb[0].mxu0 %v827
        %v884 = vpop.f32.mrb[0].mxu0
        %v885 = vadd.f32 %v495, %v884
        %v886 = vpop.f32.mrb[0].mxu0
        %v887 = vpop.f32.mrb[0].mxu0
        %v888 = vadd.f32 %v496, %v887
        %v889 = vpop.f32.mrb[0].mxu0
        %890 = vmatprep.mubr.bf16.mxu0 0
        %891 = vmatmul.mubr.bf16.gmra.mrb[0].mxu0 %v830
        %v892 = vpop.f32.mrb[0].mxu0
        %v893 = vadd.f32 %v497, %v892
        %v894 = vpop.f32.mrb[0].mxu0
        %v895 = vpop.f32.mrb[0].mxu0
        %v896 = vadd.f32 %v498, %v895
        %v897 = vpop.f32.mrb[0].mxu0
        %898 = vmatprep.mubr.bf16.mxu0 0
        %899 = vmatmul.mubr.bf16.gmra.mrb[0].mxu0 %v833
        %v900 = vpop.f32.mrb[0].mxu0
        %v901 = vadd.f32 %v499, %v900
        %v902 = vpop.f32.mrb[0].mxu0
        %v903 = vpop.f32.mrb[0].mxu0
        %v904 = vadd.f32 %v500, %v903
        %v905 = vpop.f32.mrb[0].mxu0
        %906 = vmatprep.mubr.bf16.mxu0 0
        %907 = vmatmul.mubr.bf16.gmra.mrb[0].mxu0 %v836
        %v908 = vpop.f32.mrb[0].mxu0
        %v909 = vadd.f32 %v501, %v908
        %v910 = vpop.f32.mrb[0].mxu0
        %v911 = vpop.f32.mrb[0].mxu0
        %v912 = vadd.f32 %v502, %v911
        %v913 = vpop.f32.mrb[0].mxu0
        %914 = vdwg.mxu0
        %v915 = vsel %vm523, %v885, -inf
        %916 = vmax.xlane.f32.xlu0 %v915
        %v917 = vpop.xlane.xlu0 %916
        %v918 = vsel %vm523, %v888, -inf
        %919 = vmax.xlane.f32.xlu0 %v918
        %v920 = vpop.xlane.xlu0 %919
        %v921 = vsel %vm523, %v893, -inf
        %922 = vmax.xlane.f32.xlu0 %v921
        %v923 = vpop.xlane.xlu0 %922
        %v924 = vsel %vm523, %v896, -inf
        %925 = vmax.xlane.f32.xlu0 %v924
        %v926 = vpop.xlane.xlu0 %925
        %v927 = vsel %vm523, %v901, -inf
        %928 = vmax.xlane.f32.xlu0 %v927
        %v929 = vpop.xlane.xlu0 %928
        %v930 = vsel %vm523, %v904, -inf
        %931 = vmax.xlane.f32.xlu0 %v930
        %v932 = vpop.xlane.xlu0 %931
        %v933 = vsel %vm523, %v909, -inf
        %934 = vmax.xlane.f32.xlu0 %v933
        %v935 = vpop.xlane.xlu0 %934
        %v936 = vsel %vm523, %v912, -inf
        %937 = vmax.xlane.f32.xlu0 %v936
        %v938 = vpop.xlane.xlu0 %937
        %v939 = vsub.f32 %v885, %v917
        %v940 = vsub.f32 %v888, %v920
        %v941 = vsub.f32 %v893, %v923
        %v942 = vsub.f32 %v896, %v926
        %v943 = vsub.f32 %v901, %v929
        %v944 = vsub.f32 %v904, %v932
        %v945 = vsub.f32 %v909, %v935
        %v946 = vsub.f32 %v912, %v938
        %v947 = vmul.f32 %v939, 1.442695
        %v948 = vpow.pop %v947
        %v949 = vmul.f32 %v940, 1.442695
        %v950 = vpow.pop %v949
        %v951 = vmul.f32 %v941, 1.442695
        %v952 = vpow.pop %v951
        %v953 = vmul.f32 %v942, 1.442695
        %v954 = vpow.pop %v953
        %v955 = vmul.f32 %v943, 1.442695
        %v956 = vpow.pop %v955
        %v957 = vmul.f32 %v944, 1.442695
        %v958 = vpow.pop %v957
        %v959 = vmul.f32 %v945, 1.442695
        %v960 = vpow.pop %v959
        %v961 = vmul.f32 %v946, 1.442695
        %v962 = vpow.pop %v961
        %v963 = vsel %vm523, %v948, 0.0
        %964 = vadd.xlane.f32.xlu0 %v963
        %v965 = vpop.xlane.xlu0 %964
        %v966 = vsel %vm523, %v950, 0.0
        %967 = vadd.xlane.f32.xlu0 %v966
        %v968 = vpop.xlane.xlu0 %967
        %v969 = vsel %vm523, %v952, 0.0
        %970 = vadd.xlane.f32.xlu0 %v969
        %v971 = vpop.xlane.xlu0 %970
        %v972 = vsel %vm523, %v954, 0.0
        %973 = vadd.xlane.f32.xlu0 %v972
        %v974 = vpop.xlane.xlu0 %973
        %v975 = vsel %vm523, %v956, 0.0
        %976 = vadd.xlane.f32.xlu0 %v975
        %v977 = vpop.xlane.xlu0 %976
        %v978 = vsel %vm523, %v958, 0.0
        %979 = vadd.xlane.f32.xlu0 %v978
        %v980 = vpop.xlane.xlu0 %979
        %v981 = vsel %vm523, %v960, 0.0
        %982 = vadd.xlane.f32.xlu0 %v981
        %v983 = vpop.xlane.xlu0 %982
        %v984 = vsel %vm523, %v962, 0.0
        %985 = vadd.xlane.f32.xlu0 %v984
        %v986 = vpop.xlane.xlu0 %985
        %v987 = vrcp.pop %v965
        %v988 = vrcp.pop %v968
        %v989 = vrcp.pop %v971
        %v990 = vrcp.pop %v974
        %v991 = vrcp.pop %v977
        %v992 = vrcp.pop %v980
        %v993 = vrcp.pop %v983
        %v994 = vrcp.pop %v986
        %v995 = vmul.f32 %v948, %v987
        %v996 = vmul.f32 %v950, %v988
        %v997 = vmul.f32 %v952, %v989
        %v998 = vmul.f32 %v954, %v990
        %v999 = vmul.f32 %v956, %v991
        %v1000 = vmul.f32 %v958, %v992
        %v1001 = vmul.f32 %v960, %v993
        %v1002 = vmul.f32 %v962, %v994
        %v1003 = vpack.c.bf16 %v996, %v995
        %v1004 = vpack.c.bf16 %v998, %v997
        %v1005 = vpack.c.bf16 %v1000, %v999
        %v1006 = vpack.c.bf16 %v1002, %v1001
        %1007 = vrot.lane.b32.xlu0 %v721, 64
        %v1008 = vpop.permute.xlu0 %1007
        %1009 = vrot.lane.b32.xlu0 %v722, 64
        %v1010 = vpop.permute.xlu0 %1009
        %1011 = vrot.lane.b32.xlu0 %v723, 64
        %v1012 = vpop.permute.xlu0 %1011
        %1013 = vrot.lane.b32.xlu0 %v724, 64
        %v1014 = vpop.permute.xlu0 %1013
        %v1020 = vsel %vm523, %v1003, 0
        %v1023 = vsel %vm523, %v1004, 0
        %v1026 = vsel %vm523, %v1005, 0
        %v1029 = vsel %vm523, %v1006, 0
        %1031 = vmatprep.subr.bf16.mxu0 0
        %1032 = vmatpush1.bf16.msra.mxu0 %v1008
        %1033 = vmatprep.subr.bf16.mxu0 0
        %1034 = vmatpush1.bf16.msra.mxu0 %v1010
        %1035 = vmatprep.subr.bf16.mxu0 0
        %1036 = vmatpush1.bf16.msra.mxu0 %v1012
        %1037 = vmatprep.subr.bf16.mxu0 0
        %1038 = vmatpush1.bf16.msra.mxu0 %v1014
        %1039 = vmatprep.subr.bf16.mxu0 0
        %1040 = vmatpush1.bf16.msra.mxu0 0
        %1041 = vmatprep.subr.bf16.mxu0 0
        %1042 = vmatpush1.bf16.msra.mxu0 0
        %1043 = vmatprep.subr.bf16.mxu0 0
        %1044 = vmatpush1.bf16.msra.mxu0 0
        %1045 = vmatprep.subr.bf16.mxu0 0
        %1046 = vmatpush1.bf16.msra.mxu0 0
        %1047 = vmatprep.subr.bf16.mxu0 0
        %1048 = vmatpush1.bf16.msra.mxu0 0
        %1049 = vmatprep.subr.bf16.mxu0 0
        %1050 = vmatpush1.bf16.msra.mxu0 0
        %1051 = vmatprep.subr.bf16.mxu0 0
        %1052 = vmatpush1.bf16.msra.mxu0 0
        %1053 = vmatprep.subr.bf16.mxu0 0
        %1054 = vmatpush1.bf16.msra.mxu0 0
        %1055 = vmatprep.subr.bf16.mxu0 0
        %1056 = vmatpush1.bf16.msra.mxu0 0
        %1057 = vmatprep.subr.bf16.mxu0 0
        %1058 = vmatpush1.bf16.msra.mxu0 0
        %1059 = vmatprep.subr.bf16.mxu0 0
        %1060 = vmatpush1.bf16.msra.mxu0 0
        %1061 = vmatprep.subr.bf16.mxu0 0
        %1062 = vmatpush1.bf16.msra.mxu0 0
        %1063 = vmatprep.mubr.bf16.mxu0 0
        %1064 = vmatmul.mubr.bf16.gmra.mrb[0].mxu0 %v1020
        %v1065 = vpop.f32.mrb[0].mxu0
        %v1066 = vadd.f32 0.0, %v1065
        %v1067 = vpop.f32.mrb[0].mxu0
        %v1068 = vpop.f32.mrb[0].mxu0
        %v1069 = vadd.f32 0.0, %v1068
        %v1070 = vpop.f32.mrb[0].mxu0
        %1071 = vmatprep.mubr.bf16.mxu0 0
        %1072 = vmatmul.mubr.bf16.gmra.mrb[0].mxu0 %v1023
        %v1073 = vpop.f32.mrb[0].mxu0
        %v1074 = vadd.f32 0.0, %v1073
        %v1075 = vpop.f32.mrb[0].mxu0
        %v1076 = vpop.f32.mrb[0].mxu0
        %v1077 = vadd.f32 0.0, %v1076
        %v1078 = vpop.f32.mrb[0].mxu0
        %1079 = vmatprep.mubr.bf16.mxu0 0
        %1080 = vmatmul.mubr.bf16.gmra.mrb[0].mxu0 %v1026
        %v1081 = vpop.f32.mrb[0].mxu0
        %v1082 = vadd.f32 0.0, %v1081
        %v1083 = vpop.f32.mrb[0].mxu0
        %v1084 = vpop.f32.mrb[0].mxu0
        %v1085 = vadd.f32 0.0, %v1084
        %v1086 = vpop.f32.mrb[0].mxu0
        %1087 = vmatprep.mubr.bf16.mxu0 0
        %1088 = vmatmul.mubr.bf16.gmra.mrb[0].mxu0 %v1029
        %v1089 = vpop.f32.mrb[0].mxu0
        %v1090 = vadd.f32 0.0, %v1089
        %v1091 = vpop.f32.mrb[0].mxu0
        %v1092 = vpop.f32.mrb[0].mxu0
        %v1093 = vadd.f32 0.0, %v1092
        %v1094 = vpop.f32.mrb[0].mxu0
        %1095 = vdwg.mxu0
        %1104 = vrot.lane.b32.xlu0 %v1066, 64
        %v1105 = vpop.permute.xlu0 %1104
        %1106 = vrot.lane.b32.xlu0 %v1069, 64
        %v1107 = vpop.permute.xlu0 %1106
        %1108 = vrot.lane.b32.xlu0 %v1074, 64
        %v1109 = vpop.permute.xlu0 %1108
        %1110 = vrot.lane.b32.xlu0 %v1077, 64
        %v1111 = vpop.permute.xlu0 %1110
        %1112 = vrot.lane.b32.xlu0 %v1082, 64
        %v1113 = vpop.permute.xlu0 %1112
        %1114 = vrot.lane.b32.xlu0 %v1085, 64
        %v1115 = vpop.permute.xlu0 %1114
        %1116 = vrot.lane.b32.xlu0 %v1090, 64
        %v1117 = vpop.permute.xlu0 %1116
        %1118 = vrot.lane.b32.xlu0 %v1093, 64
        %v1119 = vpop.permute.xlu0 %1118
        %v1128 = vsel %vm523, %v776, %v1105
        %v1129 = vsel %vm523, %v779, %v1107
        %v1130 = vsel %vm523, %v784, %v1109
        %v1131 = vsel %vm523, %v787, %v1111
        %v1132 = vsel %vm523, %v792, %v1113
        %v1133 = vsel %vm523, %v795, %v1115
        %v1134 = vsel %vm523, %v800, %v1117
        %v1135 = vsel %vm523, %v803, %v1119
        %v1136 = vpack.c.bf16 %v1129, %v1128
        %v1137 = vpack.c.bf16 %v1131, %v1130
        %v1138 = vpack.c.bf16 %v1133, %v1132
        %v1139 = vpack.c.bf16 %v1135, %v1134
        %v1144 = vunpack.c.l.b16 %v1136
        %v1145 = vunpack.c.h.b16 %v1136
        %v1146 = vunpack.c.l.b16 %v1137
        %v1147 = vunpack.c.h.b16 %v1137
        %v1148 = vunpack.c.l.b16 %v1138
        %v1149 = vunpack.c.h.b16 %v1138
        %v1150 = vunpack.c.l.b16 %v1139
        %v1151 = vunpack.c.h.b16 %v1139
        %v1152 = vpack.c.b16 %v1144, %v1144
        %v1153 = vpack.c.b16 %v1145, %v1145
        %v1154 = vpack.c.b16 %v1146, %v1146
        %v1155 = vpack.c.b16 %v1147, %v1147
        %v1156 = vpack.c.b16 %v1148, %v1148
        %v1157 = vpack.c.b16 %v1149, %v1149
        %v1158 = vpack.c.b16 %v1150, %v1150
        %v1159 = vpack.c.b16 %v1151, %v1151
        %1168 = vst [vmem:[%s449] sm:$0xf] %v1152
        %1169 = vst [vmem:[%s449 + $0x4] sm:$0xf] %v1153
        %1170 = vst [vmem:[%s449 + $0x8] sm:$0xf] %v1154
        %1171 = vst [vmem:[%s449 + $0xc] sm:$0xf] %v1155
        %1172 = vst [vmem:[%s449 + $0x10] sm:$0xf] %v1156
        %1173 = vst [vmem:[%s449 + $0x14] sm:$0xf] %v1157
        %1174 = vst [vmem:[%s449 + $0x18] sm:$0xf] %v1158
        %1175 = vst [vmem:[%s449 + $0x1c] sm:$0xf] %v1159
        %p1176 = scmp.lt.s32.totalorder %s15, 1
        %s1177 = scalar_select %p1176, %s15, 1
        %s1178 = smul.addr %s1177, 8
        %s1179 = smul.addr %s1178, 4
        %s1180 = scalar_lea.vmem %s4, %s1179
        // Predicated region
        $region160: #{text_decoder_forward.18} parent=146 // pred_check
          %p1181 = pneg %p132
        $region161: #{text_decoder_forward.18} parent=146 // pred_check_branch
          %1183 = sbr.rel (%p1181) target = $region163
        $region162: #{text_decoder_forward.18} parent=146 // pred_region
          _
        $region163: #{text_decoder_forward.18} parent=146 // pred_fallthru
          _
      $region147: #{text_decoder_forward.18} parent=5 // pred_fallthru
        _
      %p1184 = scmp.le.s32.totalorder 2, %s10
      // Predicated region
      $region164: #{text_decoder_forward.18} parent=5 // pred_check
        %p1185 = pneg %p1184
      $region165: #{text_decoder_forward.18} parent=5 // pred_check_branch
        %1187 = sbr.rel (%p1185) target = $region167
      $region166: #{text_decoder_forward.18} parent=5 // pred_region
        %s1188 = ssub.s32 %s10, 2
        // Predicated region
        $region168: #{text_decoder_forward.18} parent=166 // pred_check
          %p1189 = pneg %p138
        $region169: #{text_decoder_forward.18} parent=166 // pred_check_branch
          %1191 = sbr.rel (%p1189) target = $region171
        $region170: #{text_decoder_forward.18} parent=166 // pred_region
          %p1192 = scmp.lt.s32.totalorder %s16, 1
          %s1193 = scalar_select %p1192, %s16, 1
          %s1194 = smul.addr %s1193, 8
          %s1195 = smul.addr %s1194, 4
          %s1196 = scalar_lea.vmem %s4, %s1195
        $region171: #{text_decoder_forward.18} parent=166 // pred_fallthru
          _
      $region167: #{text_decoder_forward.18} parent=5 // pred_fallthru
        _
    $region6: #{text_decoder_forward.18} parent=1 // loop_footer
      %s14 = sadd.s32 1, %s10
    $region7: #{text_decoder_forward.18} parent=1 // loop_footer_branch
      %9 = sbr.rel target = $region3
    $region8: #{text_decoder_forward.18} parent=1 // loop_exit
      _

// kernel: text_decoder_forward.21
$region0: #{text_decoder_forward.21}
  #allocation0 [shape = 'u32[]', space=smem, size = 0x4, offset = 0x4, fixed_abs, tag = 'smem constant byte address 0x4 - core index']
  #allocation1 [shape = 'u32[144,128]{1,0:T(1,128)}', space=vmem, size = 0x12000, scoped, tag = 'internal scratch']
  %s0 = inlined_call_operand.vmem [shape: bf16[256,128], index: 0, kind: input, shape index: {}]
  %s1 = inlined_call_operand.vmem [shape: bf16[128,256], index: 1, kind: input, shape index: {}]
  %s2 = inlined_call_operand.vmem [shape: f32[1,256], index: 2, kind: input, shape index: {}]
  %s3 = inlined_call_operand.vmem [shape: bf16[256,256], index: 3, kind: output, shape index: {}]
  %s4 = sld [smem:[#allocation0]]
  $region22: #{text_decoder_forward.21} parent=0
    _
  %s6 = ssub.s32 1, %s4
  %s7 = scalar_select 0, %s6, %s4
  // Predicated region
  $region2: #{text_decoder_forward.21} parent=0 // pred_check
    _
  $region3: #{text_decoder_forward.21} parent=0 // pred_check_branch
    %9 = sbr.rel (0) target = $region5
  $region4: #{text_decoder_forward.21} parent=0 // pred_region
    _
  $region5: #{text_decoder_forward.21} parent=0 // pred_fallthru
    _
  // Predicated region
  $region6: #{text_decoder_forward.21} parent=0 // pred_check
    _
  $region7: #{text_decoder_forward.21} parent=0 // pred_check_branch
    %11 = sbr.rel (0) target = $region9
  $region8: #{text_decoder_forward.21} parent=0 // pred_region
    _
  $region9: #{text_decoder_forward.21} parent=0 // pred_fallthru
    _
  // Predicated region
  $region10: #{text_decoder_forward.21} parent=0 // pred_check
    _
  $region11: #{text_decoder_forward.21} parent=0 // pred_check_branch
    %13 = sbr.rel (0) target = $region13
  $region12: #{text_decoder_forward.21} parent=0 // pred_region
    _
  $region13: #{text_decoder_forward.21} parent=0 // pred_fallthru
    _
  %v15 = vld [vmem:[%s0] sm:$0xf]
  %v16 = vld [vmem:[%s0 + $0x4] sm:$0xf]
  %v17 = vld [vmem:[%s0 + $0x8] sm:$0xf]
  %v18 = vld [vmem:[%s0 + $0xc] sm:$0xf]
  %v19 = vld [vmem:[%s0 + $0x10] sm:$0xf]
  %v20 = vld [vmem:[%s0 + $0x14] sm:$0xf]
  %v21 = vld [vmem:[%s0 + $0x18] sm:$0xf]
  %v22 = vld [vmem:[%s0 + $0x1c] sm:$0xf]
  %v23 = vld [vmem:[%s0 + $0x20] sm:$0xf]
  %v24 = vld [vmem:[%s0 + $0x24] sm:$0xf]
  %v25 = vld [vmem:[%s0 + $0x28] sm:$0xf]
  %v26 = vld [vmem:[%s0 + $0x2c] sm:$0xf]
  %v27 = vld [vmem:[%s0 + $0x30] sm:$0xf]
  %v28 = vld [vmem:[%s0 + $0x34] sm:$0xf]
  %v29 = vld [vmem:[%s0 + $0x38] sm:$0xf]
  %v30 = vld [vmem:[%s0 + $0x3c] sm:$0xf]
  %v31 = vld [vmem:[%s0 + $0x40] sm:$0xf]
  %v32 = vld [vmem:[%s0 + $0x44] sm:$0xf]
  %v33 = vld [vmem:[%s0 + $0x48] sm:$0xf]
  %v34 = vld [vmem:[%s0 + $0x4c] sm:$0xf]
  %v35 = vld [vmem:[%s0 + $0x50] sm:$0xf]
  %v36 = vld [vmem:[%s0 + $0x54] sm:$0xf]
  %v37 = vld [vmem:[%s0 + $0x58] sm:$0xf]
  %v38 = vld [vmem:[%s0 + $0x5c] sm:$0xf]
  %v39 = vld [vmem:[%s0 + $0x60] sm:$0xf]
  %v40 = vld [vmem:[%s0 + $0x64] sm:$0xf]
  %v41 = vld [vmem:[%s0 + $0x68] sm:$0xf]
  %v42 = vld [vmem:[%s0 + $0x6c] sm:$0xf]
  %v43 = vld [vmem:[%s0 + $0x70] sm:$0xf]
  %v44 = vld [vmem:[%s0 + $0x74] sm:$0xf]
  %v45 = vld [vmem:[%s0 + $0x78] sm:$0xf]
  %v46 = vld [vmem:[%s0 + $0x7c] sm:$0xf]
  %v47 = vld [vmem:[%s1] sm:$0xff]
  %v48 = vld [vmem:[%s1 + $0x8] sm:$0xff]
  %v49 = vld [vmem:[%s1 + $0x10] sm:$0xff]
  %v50 = vld [vmem:[%s1 + $0x18] sm:$0xff]
  %v51 = vld [vmem:[%s1 + $0x20] sm:$0xff]
  %v52 = vld [vmem:[%s1 + $0x28] sm:$0xff]
  %v53 = vld [vmem:[%s1 + $0x30] sm:$0xff]
  %v54 = vld [vmem:[%s1 + $0x38] sm:$0xff]
  %v55 = vld [vmem:[%s1 + $0x40] sm:$0xff]
  %v56 = vld [vmem:[%s1 + $0x48] sm:$0xff]
  %v57 = vld [vmem:[%s1 + $0x50] sm:$0xff]
  %v58 = vld [vmem:[%s1 + $0x58] sm:$0xff]
  %v59 = vld [vmem:[%s1 + $0x60] sm:$0xff]
  %v60 = vld [vmem:[%s1 + $0x68] sm:$0xff]
  %v61 = vld [vmem:[%s1 + $0x70] sm:$0xff]
  %v62 = vld [vmem:[%s1 + $0x78] sm:$0xff]
  %v63 = vld [vmem:[%s2] sm:$0x3]
  %v65 = vlaneseq
  %v66 = vshrl.u32 %v65, 7
  %v67 = vsub.s32 0, %v66
  %v68 = vrot.slane %v63, %v67
  %v69 = vlaneseq
  %v70 = vshrl.u32 %v69, 7
  %v71 = vsub.s32 1, %v70
  %v72 = vrot.slane %v63, %v71
  %v107 = vunpack.c.l.b16 %v15
  %v108 = vunpack.c.l.b16 %v16
  %v109 = vunpack.c.l.b16 %v17
  %v110 = vunpack.c.l.b16 %v18
  %v111 = vunpack.c.l.b16 %v19
  %v112 = vunpack.c.l.b16 %v20
  %v113 = vunpack.c.l.b16 %v21
  %v114 = vunpack.c.l.b16 %v22
  %v115 = vunpack.c.l.b16 %v23
  %v116 = vunpack.c.l.b16 %v24
  %v117 = vunpack.c.l.b16 %v25
  %v118 = vunpack.c.l.b16 %v26
  %v119 = vunpack.c.l.b16 %v27
  %v120 = vunpack.c.l.b16 %v28
  %v121 = vunpack.c.l.b16 %v29
  %v122 = vunpack.c.l.b16 %v30
  %v123 = vunpack.c.l.b16 %v31
  %v124 = vunpack.c.l.b16 %v32
  %v125 = vunpack.c.l.b16 %v33
  %v126 = vunpack.c.l.b16 %v34
  %v127 = vunpack.c.l.b16 %v35
  %v128 = vunpack.c.l.b16 %v36
  %v129 = vunpack.c.l.b16 %v37
  %v130 = vunpack.c.l.b16 %v38
  %v131 = vunpack.c.l.b16 %v39
  %v132 = vunpack.c.l.b16 %v40
  %v133 = vunpack.c.l.b16 %v41
  %v134 = vunpack.c.l.b16 %v42
  %v135 = vunpack.c.l.b16 %v43
  %v136 = vunpack.c.l.b16 %v44
  %v137 = vunpack.c.l.b16 %v45
  %v138 = vunpack.c.l.b16 %v46
  %v139 = vpack.c.b16 %v108, %v107
  %v140 = vpack.c.b16 %v110, %v109
  %v141 = vpack.c.b16 %v112, %v111
  %v142 = vpack.c.b16 %v114, %v113
  %v143 = vpack.c.b16 %v116, %v115
  %v144 = vpack.c.b16 %v118, %v117
  %v145 = vpack.c.b16 %v120, %v119
  %v146 = vpack.c.b16 %v122, %v121
  %v147 = vpack.c.b16 %v124, %v123
  %v148 = vpack.c.b16 %v126, %v125
  %v149 = vpack.c.b16 %v128, %v127
  %v150 = vpack.c.b16 %v130, %v129
  %v151 = vpack.c.b16 %v132, %v131
  %v152 = vpack.c.b16 %v134, %v133
  %v153 = vpack.c.b16 %v136, %v135
  %v154 = vpack.c.b16 %v138, %v137
  %v187 = vunpack.c.l.b16 %v47
  %v188 = vunpack.c.h.b16 %v47
  %v189 = vunpack.c.l.b16 %v48
  %v190 = vunpack.c.h.b16 %v48
  %v191 = vunpack.c.l.b16 %v49
  %v192 = vunpack.c.h.b16 %v49
  %v193 = vunpack.c.l.b16 %v50
  %v194 = vunpack.c.h.b16 %v50
  %v195 = vunpack.c.l.b16 %v51
  %v196 = vunpack.c.h.b16 %v51
  %v197 = vunpack.c.l.b16 %v52
  %v198 = vunpack.c.h.b16 %v52
  %v199 = vunpack.c.l.b16 %v53
  %v200 = vunpack.c.h.b16 %v53
  %v201 = vunpack.c.l.b16 %v54
  %v202 = vunpack.c.h.b16 %v54
  %v203 = vunpack.c.l.b16 %v55
  %v204 = vunpack.c.h.b16 %v55
  %v205 = vunpack.c.l.b16 %v56
  %v206 = vunpack.c.h.b16 %v56
  %v207 = vunpack.c.l.b16 %v57
  %v208 = vunpack.c.h.b16 %v57
  %v209 = vunpack.c.l.b16 %v58
  %v210 = vunpack.c.h.b16 %v58
  %v211 = vunpack.c.l.b16 %v59
  %v212 = vunpack.c.h.b16 %v59
  %v213 = vunpack.c.l.b16 %v60
  %v214 = vunpack.c.h.b16 %v60
  %v215 = vunpack.c.l.b16 %v61
  %v216 = vunpack.c.h.b16 %v61
  %v217 = vunpack.c.l.b16 %v62
  %v218 = vunpack.c.h.b16 %v62
  %v219 = vpack.c.b16 %v189, %v187
  %v220 = vpack.c.b16 %v190, %v188
  %v221 = vpack.c.b16 %v193, %v191
  %v222 = vpack.c.b16 %v194, %v192
  %v223 = vpack.c.b16 %v197, %v195
  %v224 = vpack.c.b16 %v198, %v196
  %v225 = vpack.c.b16 %v201, %v199
  %v226 = vpack.c.b16 %v202, %v200
  %v227 = vpack.c.b16 %v205, %v203
  %v228 = vpack.c.b16 %v206, %v204
  %v229 = vpack.c.b16 %v209, %v207
  %v230 = vpack.c.b16 %v210, %v208
  %v231 = vpack.c.b16 %v213, %v211
  %v232 = vpack.c.b16 %v214, %v212
  %v233 = vpack.c.b16 %v217, %v215
  %v234 = vpack.c.b16 %v218, %v216
  %251 = vmatprep.subr.bf16.mxu0 %v220
  %252 = vmatpush1.bf16.msra.mxu0 %v219
  %253 = vmatprep.subr.bf16.mxu0 %v222
  %254 = vmatpush1.bf16.msra.mxu0 %v221
  %255 = vmatprep.subr.bf16.mxu0 %v224
  %256 = vmatpush1.bf16.msra.mxu0 %v223
  %257 = vmatprep.subr.bf16.mxu0 %v226
  %258 = vmatpush1.bf16.msra.mxu0 %v225
  %259 = vmatprep.subr.bf16.mxu0 %v228
  %260 = vmatpush1.bf16.msra.mxu0 %v227
  %261 = vmatprep.subr.bf16.mxu0 %v230
  %262 = vmatpush1.bf16.msra.mxu0 %v229
  %263 = vmatprep.subr.bf16.mxu0 %v232
  %264 = vmatpush1.bf16.msra.mxu0 %v231
  %265 = vmatprep.subr.bf16.mxu0 %v234
  %266 = vmatpush1.bf16.msra.mxu0 %v233
  %267 = vmatprep.subr.bf16.mxu0 0
  %268 = vmatpush1.bf16.msra.mxu0 0
  %269 = vmatprep.subr.bf16.mxu0 0
  %270 = vmatpush1.bf16.msra.mxu0 0
  %271 = vmatprep.subr.bf16.mxu0 0
  %272 = vmatpush1.bf16.msra.mxu0 0
  %273 = vmatprep.subr.bf16.mxu0 0
  %274 = vmatpush1.bf16.msra.mxu0 0
  %275 = vmatprep.subr.bf16.mxu0 0
  %276 = vmatpush1.bf16.msra.mxu0 0
  %277 = vmatprep.subr.bf16.mxu0 0
  %278 = vmatpush1.bf16.msra.mxu0 0
  %279 = vmatprep.subr.bf16.mxu0 0
  %280 = vmatpush1.bf16.msra.mxu0 0
  %281 = vmatprep.subr.bf16.mxu0 0
  %282 = vmatpush1.bf16.msra.mxu0 0
  %283 = vmatprep.mubr.bf16.mxu0 0
  %284 = vmatmul.mubr.bf16.gmra.mrb[0].mxu0 %v139
  %v285 = vpop.f32.mrb[0].mxu0
  %v286 = vadd.f32 %v68, %v285
  %v287 = vpop.f32.mrb[0].mxu0
  %v288 = vadd.f32 %v72, %v287
  %v289 = vpop.f32.mrb[0].mxu0
  %v290 = vadd.f32 %v68, %v289
  %v291 = vpop.f32.mrb[0].mxu0
  %v292 = vadd.f32 %v72, %v291
  %293 = vmatprep.mubr.bf16.mxu0 0
  %294 = vmatmul.mubr.bf16.gmra.mrb[0].mxu0 %v140
  %v295 = vpop.f32.mrb[0].mxu0
  %v296 = vadd.f32 %v68, %v295
  %v297 = vpop.f32.mrb[0].mxu0
  %v298 = vadd.f32 %v72, %v297
  %v299 = vpop.f32.mrb[0].mxu0
  %v300 = vadd.f32 %v68, %v299
  %v301 = vpop.f32.mrb[0].mxu0
  %v302 = vadd.f32 %v72, %v301
  %303 = vmatprep.mubr.bf16.mxu0 0
  %304 = vmatmul.mubr.bf16.gmra.mrb[0].mxu0 %v141
  %v305 = vpop.f32.mrb[0].mxu0
  %v306 = vadd.f32 %v68, %v305
  %v307 = vpop.f32.mrb[0].mxu0
  %v308 = vadd.f32 %v72, %v307
  %v309 = vpop.f32.mrb[0].mxu0
  %v310 = vadd.f32 %v68, %v309
  %v311 = vpop.f32.mrb[0].mxu0
  %v312 = vadd.f32 %v72, %v311
  %313 = vmatprep.mubr.bf16.mxu0 0
  %314 = vmatmul.mubr.bf16.gmra.mrb[0].mxu0 %v142
  %v315 = vpop.f32.mrb[0].mxu0
  %v316 = vadd.f32 %v68, %v315
  %v317 = vpop.f32.mrb[0].mxu0
  %v318 = vadd.f32 %v72, %v317
  %v319 = vpop.f32.mrb[0].mxu0
  %v320 = vadd.f32 %v68, %v319
  %v321 = vpop.f32.mrb[0].mxu0
  %v322 = vadd.f32 %v72, %v321
  %323 = vmatprep.mubr.bf16.mxu0 0
  %324 = vmatmul.mubr.bf16.gmra.mrb[0].mxu0 %v143
  %v325 = vpop.f32.mrb[0].mxu0
  %v326 = vadd.f32 %v68, %v325
  %v327 = vpop.f32.mrb[0].mxu0
  %v328 = vadd.f32 %v72, %v327
  %v329 = vpop.f32.mrb[0].mxu0
  %v330 = vadd.f32 %v68, %v329
  %v331 = vpop.f32.mrb[0].mxu0
  %v332 = vadd.f32 %v72, %v331
  %333 = vmatprep.mubr.bf16.mxu0 0
  %334 = vmatmul.mubr.bf16.gmra.mrb[0].mxu0 %v144
  %v335 = vpop.f32.mrb[0].mxu0
  %v336 = vadd.f32 %v68, %v335
  %v337 = vpop.f32.mrb[0].mxu0
  %v338 = vadd.f32 %v72, %v337
  %v339 = vpop.f32.mrb[0].mxu0
  %v340 = vadd.f32 %v68, %v339
  %v341 = vpop.f32.mrb[0].mxu0
  %v342 = vadd.f32 %v72, %v341
  %343 = vmatprep.mubr.bf16.mxu0 0
  %344 = vmatmul.mubr.bf16.gmra.mrb[0].mxu0 %v145
  %v345 = vpop.f32.mrb[0].mxu0
  %v346 = vadd.f32 %v68, %v345
  %v347 = vpop.f32.mrb[0].mxu0
  %v348 = vadd.f32 %v72, %v347
  %v349 = vpop.f32.mrb[0].mxu0
  %v350 = vadd.f32 %v68, %v349
  %v351 = vpop.f32.mrb[0].mxu0
  %v352 = vadd.f32 %v72, %v351
  %353 = vmatprep.mubr.bf16.mxu0 0
  %354 = vmatmul.mubr.bf16.gmra.mrb[0].mxu0 %v146
  %v355 = vpop.f32.mrb[0].mxu0
  %v356 = vadd.f32 %v68, %v355
  %v357 = vpop.f32.mrb[0].mxu0
  %v358 = vadd.f32 %v72, %v357
  %v359 = vpop.f32.mrb[0].mxu0
  %v360 = vadd.f32 %v68, %v359
  %v361 = vpop.f32.mrb[0].mxu0
  %v362 = vadd.f32 %v72, %v361
  %363 = vmatprep.mubr.bf16.mxu0 0
  %364 = vmatmul.mubr.bf16.gmra.mrb[0].mxu0 %v147
  %v365 = vpop.f32.mrb[0].mxu0
  %v366 = vadd.f32 %v68, %v365
  %v367 = vpop.f32.mrb[0].mxu0
  %v368 = vadd.f32 %v72, %v367
  %v369 = vpop.f32.mrb[0].mxu0
  %v370 = vadd.f32 %v68, %v369
  %v371 = vpop.f32.mrb[0].mxu0
  %v372 = vadd.f32 %v72, %v371
  %373 = vmatprep.mubr.bf16.mxu0 0
  %374 = vmatmul.mubr.bf16.gmra.mrb[0].mxu0 %v148
  %v375 = vpop.f32.mrb[0].mxu0
  %v376 = vadd.f32 %v68, %v375
  %v377 = vpop.f32.mrb[0].mxu0
  %v378 = vadd.f32 %v72, %v377
  %v379 = vpop.f32.mrb[0].mxu0
  %v380 = vadd.f32 %v68, %v379
  %v381 = vpop.f32.mrb[0].mxu0
  %v382 = vadd.f32 %v72, %v381
  %383 = vmatprep.mubr.bf16.mxu0 0
  %384 = vmatmul.mubr.bf16.gmra.mrb[0].mxu0 %v149
  %v385 = vpop.f32.mrb[0].mxu0
  %v386 = vadd.f32 %v68, %v385
  %v387 = vpop.f32.mrb[0].mxu0
  %v388 = vadd.f32 %v72, %v387
  %v389 = vpop.f32.mrb[0].mxu0
  %v390 = vadd.f32 %v68, %v389
  %v391 = vpop.f32.mrb[0].mxu0
  %v392 = vadd.f32 %v72, %v391
  %393 = vmatprep.mubr.bf16.mxu0 0
  %394 = vmatmul.mubr.bf16.gmra.mrb[0].mxu0 %v150
  %v395 = vpop.f32.mrb[0].mxu0
  %v396 = vadd.f32 %v68, %v395
  %v397 = vpop.f32.mrb[0].mxu0
  %v398 = vadd.f32 %v72, %v397
  %v399 = vpop.f32.mrb[0].mxu0
  %v400 = vadd.f32 %v68, %v399
  %v401 = vpop.f32.mrb[0].mxu0
  %v402 = vadd.f32 %v72, %v401
  %403 = vmatprep.mubr.bf16.mxu0 0
  %404 = vmatmul.mubr.bf16.gmra.mrb[0].mxu0 %v151
  %v405 = vpop.f32.mrb[0].mxu0
  %v406 = vadd.f32 %v68, %v405
  %v407 = vpop.f32.mrb[0].mxu0
  %v408 = vadd.f32 %v72, %v407
  %v409 = vpop.f32.mrb[0].mxu0
  %v410 = vadd.f32 %v68, %v409
  %v411 = vpop.f32.mrb[0].mxu0
  %v412 = vadd.f32 %v72, %v411
  %413 = vmatprep.mubr.bf16.mxu0 0
  %414 = vmatmul.mubr.bf16.gmra.mrb[0].mxu0 %v152
  %v415 = vpop.f32.mrb[0].mxu0
  %v416 = vadd.f32 %v68, %v415
  %v417 = vpop.f32.mrb[0].mxu0
  %v418 = vadd.f32 %v72, %v417
  %v419 = vpop.f32.mrb[0].mxu0
  %v420 = vadd.f32 %v68, %v419
  %v421 = vpop.f32.mrb[0].mxu0
  %v422 = vadd.f32 %v72, %v421
  %423 = vmatprep.mubr.bf16.mxu0 0
  %424 = vmatmul.mubr.bf16.gmra.mrb[0].mxu0 %v153
  %v425 = vpop.f32.mrb[0].mxu0
  %v426 = vadd.f32 %v68, %v425
  %v427 = vpop.f32.mrb[0].mxu0
  %v428 = vadd.f32 %v72, %v427
  %v429 = vpop.f32.mrb[0].mxu0
  %v430 = vadd.f32 %v68, %v429
  %v431 = vpop.f32.mrb[0].mxu0
  %v432 = vadd.f32 %v72, %v431
  %433 = vmatprep.mubr.bf16.mxu0 0
  %434 = vmatmul.mubr.bf16.gmra.mrb[0].mxu0 %v154
  %v435 = vpop.f32.mrb[0].mxu0
  %v436 = vadd.f32 %v68, %v435
  %v437 = vpop.f32.mrb[0].mxu0
  %v438 = vadd.f32 %v72, %v437
  %v439 = vpop.f32.mrb[0].mxu0
  %v440 = vadd.f32 %v68, %v439
  %v441 = vpop.f32.mrb[0].mxu0
  %v442 = vadd.f32 %v72, %v441
  %443 = vdwg.mxu0
  %v444 = vpack.c.bf16 %v290, %v286
  %v445 = vpack.c.bf16 %v292, %v288
  %v446 = vpack.c.bf16 %v300, %v296
  %v447 = vpack.c.bf16 %v302, %v298
  %v448 = vpack.c.bf16 %v310, %v306
  %v449 = vpack.c.bf16 %v312, %v308
  %v450 = vpack.c.bf16 %v320, %v316
  %v451 = vpack.c.bf16 %v322, %v318
  %v452 = vpack.c.bf16 %v330, %v326
  %v453 = vpack.c.bf16 %v332, %v328
  %v454 = vpack.c.bf16 %v340, %v336
  %v455 = vpack.c.bf16 %v342, %v338
  %v456 = vpack.c.bf16 %v350, %v346
  %v457 = vpack.c.bf16 %v352, %v348
  %v458 = vpack.c.bf16 %v360, %v356
  %v459 = vpack.c.bf16 %v362, %v358
  %v460 = vpack.c.bf16 %v370, %v366
  %v461 = vpack.c.bf16 %v372, %v368
  %v462 = vpack.c.bf16 %v380, %v376
  %v463 = vpack.c.bf16 %v382, %v378
  %v464 = vpack.c.bf16 %v390, %v386
  %v465 = vpack.c.bf16 %v392, %v388
  %v466 = vpack.c.bf16 %v400, %v396
  %v467 = vpack.c.bf16 %v402, %v398
  %v468 = vpack.c.bf16 %v410, %v406
  %v469 = vpack.c.bf16 %v412, %v408
  %v470 = vpack.c.bf16 %v420, %v416
  %v471 = vpack.c.bf16 %v422, %v418
  %v472 = vpack.c.bf16 %v430, %v426
  %v473 = vpack.c.bf16 %v432, %v428
  %v474 = vpack.c.bf16 %v440, %v436
  %v475 = vpack.c.bf16 %v442, %v438
  %v508 = vunpack.c.l.b16 %v444
  %v509 = vunpack.c.l.b16 %v445
  %v510 = vunpack.c.h.b16 %v444
  %v511 = vunpack.c.h.b16 %v445
  %v512 = vunpack.c.l.b16 %v446
  %v513 = vunpack.c.l.b16 %v447
  %v514 = vunpack.c.h.b16 %v446
  %v515 = vunpack.c.h.b16 %v447
  %v516 = vunpack.c.l.b16 %v448
  %v517 = vunpack.c.l.b16 %v449
  %v518 = vunpack.c.h.b16 %v448
  %v519 = vunpack.c.h.b16 %v449
  %v520 = vunpack.c.l.b16 %v450
  %v521 = vunpack.c.l.b16 %v451
  %v522 = vunpack.c.h.b16 %v450
  %v523 = vunpack.c.h.b16 %v451
  %v524 = vunpack.c.l.b16 %v452
  %v525 = vunpack.c.l.b16 %v453
  %v526 = vunpack.c.h.b16 %v452
  %v527 = vunpack.c.h.b16 %v453
  %v528 = vunpack.c.l.b16 %v454
  %v529 = vunpack.c.l.b16 %v455
  %v530 = vunpack.c.h.b16 %v454
  %v531 = vunpack.c.h.b16 %v455
  %v532 = vunpack.c.l.b16 %v456
  %v533 = vunpack.c.l.b16 %v457
  %v534 = vunpack.c.h.b16 %v456
  %v535 = vunpack.c.h.b16 %v457
  %v536 = vunpack.c.l.b16 %v458
  %v537 = vunpack.c.l.b16 %v459
  %v538 = vunpack.c.h.b16 %v458
  %v539 = vunpack.c.h.b16 %v459
  %v540 = vunpack.c.l.b16 %v460
  %v541 = vunpack.c.l.b16 %v461
  %v542 = vunpack.c.h.b16 %v460
  %v543 = vunpack.c.h.b16 %v461
  %v544 = vunpack.c.l.b16 %v462
  %v545 = vunpack.c.l.b16 %v463
  %v546 = vunpack.c.h.b16 %v462
  %v547 = vunpack.c.h.b16 %v463
  %v548 = vunpack.c.l.b16 %v464
  %v549 = vunpack.c.l.b16 %v465
  %v550 = vunpack.c.h.b16 %v464
  %v551 = vunpack.c.h.b16 %v465
  %v552 = vunpack.c.l.b16 %v466
  %v553 = vunpack.c.l.b16 %v467
  %v554 = vunpack.c.h.b16 %v466
  %v555 = vunpack.c.h.b16 %v467
  %v556 = vunpack.c.l.b16 %v468
  %v557 = vunpack.c.l.b16 %v469
  %v558 = vunpack.c.h.b16 %v468
  %v559 = vunpack.c.h.b16 %v469
  %v560 = vunpack.c.l.b16 %v470
  %v561 = vunpack.c.l.b16 %v471
  %v562 = vunpack.c.h.b16 %v470
  %v563 = vunpack.c.h.b16 %v471
  %v564 = vunpack.c.l.b16 %v472
  %v565 = vunpack.c.l.b16 %v473
  %v566 = vunpack.c.h.b16 %v472
  %v567 = vunpack.c.h.b16 %v473
  %v568 = vunpack.c.l.b16 %v474
  %v569 = vunpack.c.l.b16 %v475
  %v570 = vunpack.c.h.b16 %v474
  %v571 = vunpack.c.h.b16 %v475
  %v572 = vpack.c.b16 %v509, %v508
  %v573 = vpack.c.b16 %v511, %v510
  %v574 = vpack.c.b16 %v513, %v512
  %v575 = vpack.c.b16 %v515, %v514
  %v576 = vpack.c.b16 %v517, %v516
  %v577 = vpack.c.b16 %v519, %v518
  %v578 = vpack.c.b16 %v521, %v520
  %v579 = vpack.c.b16 %v523, %v522
  %v580 = vpack.c.b16 %v525, %v524
  %v581 = vpack.c.b16 %v527, %v526
  %v582 = vpack.c.b16 %v529, %v528
  %v583 = vpack.c.b16 %v531, %v530
  %v584 = vpack.c.b16 %v533, %v532
  %v585 = vpack.c.b16 %v535, %v534
  %v586 = vpack.c.b16 %v537, %v536
  %v587 = vpack.c.b16 %v539, %v538
  %v588 = vpack.c.b16 %v541, %v540
  %v589 = vpack.c.b16 %v543, %v542
  %v590 = vpack.c.b16 %v545, %v544
  %v591 = vpack.c.b16 %v547, %v546
  %v592 = vpack.c.b16 %v549, %v548
  %v593 = vpack.c.b16 %v551, %v550
  %v594 = vpack.c.b16 %v553, %v552
  %v595 = vpack.c.b16 %v555, %v554
  %v596 = vpack.c.b16 %v557, %v556
  %v597 = vpack.c.b16 %v559, %v558
  %v598 = vpack.c.b16 %v561, %v560
  %v599 = vpack.c.b16 %v563, %v562
  %v600 = vpack.c.b16 %v565, %v564
  %v601 = vpack.c.b16 %v567, %v566
  %v602 = vpack.c.b16 %v569, %v568
  %v603 = vpack.c.b16 %v571, %v570
  %636 = vst [vmem:[%s3] sm:$0xff] %v572
  %637 = vst [vmem:[%s3 + $0x8] sm:$0xff] %v573
  %638 = vst [vmem:[%s3 + $0x10] sm:$0xff] %v574
  %639 = vst [vmem:[%s3 + $0x18] sm:$0xff] %v575
  %640 = vst [vmem:[%s3 + $0x20] sm:$0xff] %v576
  %641 = vst [vmem:[%s3 + $0x28] sm:$0xff] %v577
  %642 = vst [vmem:[%s3 + $0x30] sm:$0xff] %v578
  %643 = vst [vmem:[%s3 + $0x38] sm:$0xff] %v579
  %644 = vst [vmem:[%s3 + $0x40] sm:$0xff] %v580
  %645 = vst [vmem:[%s3 + $0x48] sm:$0xff] %v581
  %646 = vst [vmem:[%s3 + $0x50] sm:$0xff] %v582
  %647 = vst [vmem:[%s3 + $0x58] sm:$0xff] %v583
  %648 = vst [vmem:[%s3 + $0x60] sm:$0xff] %v584
  %649 = vst [vmem:[%s3 + $0x68] sm:$0xff] %v585
  %650 = vst [vmem:[%s3 + $0x70] sm:$0xff] %v586
  %651 = vst [vmem:[%s3 + $0x78] sm:$0xff] %v587
  %652 = vst [vmem:[%s3 + $0x80] sm:$0xff] %v588
  %653 = vst [vmem:[%s3 + $0x88] sm:$0xff] %v589
  %654 = vst [vmem:[%s3 + $0x90] sm:$0xff] %v590
  %655 = vst [vmem:[%s3 + $0x98] sm:$0xff] %v591
  %656 = vst [vmem:[%s3 + $0xa0] sm:$0xff] %v592
  %657 = vst [vmem:[%s3 + $0xa8] sm:$0xff] %v593
  %658 = vst [vmem:[%s3 + $0xb0] sm:$0xff] %v594
  %659 = vst [vmem:[%s3 + $0xb8] sm:$0xff] %v595
  %660 = vst [vmem:[%s3 + $0xc0] sm:$0xff] %v596
  %661 = vst [vmem:[%s3 + $0xc8] sm:$0xff] %v597
  %662 = vst [vmem:[%s3 + $0xd0] sm:$0xff] %v598
  %663 = vst [vmem:[%s3 + $0xd8] sm:$0xff] %v599
  %664 = vst [vmem:[%s3 + $0xe0] sm:$0xff] %v600
  %665 = vst [vmem:[%s3 + $0xe8] sm:$0xff] %v601
  %666 = vst [vmem:[%s3 + $0xf0] sm:$0xff] %v602
  %667 = vst [vmem:[%s3 + $0xf8] sm:$0xff] %v603
  // Predicated region
  $region14: #{text_decoder_forward.21} parent=0 // pred_check
    _
  $region15: #{text_decoder_forward.21} parent=0 // pred_check_branch
    %669 = sbr.rel (0) target = $region17
  $region16: #{text_decoder_forward.21} parent=0 // pred_region
    _
  $region17: #{text_decoder_forward.21} parent=0 // pred_fallthru
    _
  // Predicated region
  $region18: #{text_decoder_forward.21} parent=0 // pred_check
    _
  $region19: #{text_decoder_forward.21} parent=0 // pred_check_branch
    %671 = sbr.rel (0) target = $region21
  $region20: #{text_decoder_forward.21} parent=0 // pred_region
    _
  $region21: #{text_decoder_forward.21} parent=0 // pred_fallthru
    _

// kernel: text_decoder_forward.22
$region0: #{text_decoder_forward.22}
  #allocation0 [shape = 'u32[]', space=smem, size = 0x4, offset = 0x4, fixed_abs, tag = 'smem constant byte address 0x4 - core index']
  #allocation1 [shape = 'u32[144,128]{1,0:T(1,128)}', space=vmem, size = 0x12000, scoped, tag = 'internal scratch']
  %s0 = inlined_call_operand.vmem [shape: bf16[2,64,128], index: 0, kind: input, shape index: {}]
  %s1 = inlined_call_operand.vmem [shape: bf16[2,128,256], index: 1, kind: input, shape index: {}, may-alias: {1,2}]
  %s2 = inlined_call_operand.vmem [shape: bf16[2,128,256], index: 2, kind: input, shape index: {}, may-alias: {1,2}]
  %s3 = inlined_call_operand.vmem [shape: bf16[2,64,128], index: 3, kind: output, shape index: {}]
  %s4 = sld [smem:[#allocation0]]
  $region127: #{text_decoder_forward.22} parent=0
    _
  %s6 = ssub.s32 1, %s4
  %s7 = scalar_select 0, %s6, %s4
  $region1: #{text_decoder_forward.22} parent=0
    #allocation2 [shape = 'u8[65536]{0}', space=vmem, size = 0x10000, scoped, tag = 'input window, operand 1']
    #allocation3 [shape = 'u8[65536]{0}', space=vmem, size = 0x10000, scoped, tag = 'input window, operand 2']
    loop: start=0, step=1, limit=4
    $region2: #{text_decoder_forward.22} parent=1 // loop_pre_header
      _
    $region3: #{text_decoder_forward.22} parent=1 // loop_header
      %s9 = sphi 0, %s13
      %p10 = scmp.ge.s32.totalorder %s9, 4
      %s19 = sphi 0, %s21
      %s22 = sphi 0, %s19
      %s23 = sphi 0, %s22
      %s39 = sphi 0, %s23
      %s45 = sphi 0, %s47
      %s48 = sphi 0, %s45
      %s49 = sphi 0, %s48
      %s65 = sphi 0, %s49
      %s71 = sphi 0, %s73
      %s74 = sphi 0, %s71
      %s75 = sphi 0, %s74
      %s91 = sphi 0, %s75
      %s97 = sphi 0, %s99
      %s100 = sphi 0, %s97
      %s101 = sphi 0, %s100
      %s117 = sphi 0, %s101
    $region4: #{text_decoder_forward.22} parent=1 // loop_header_branch
      %12 = sbr.rel (%p10) target = $region8
    $region5: #{text_decoder_forward.22} parent=1 // loop_body
      %s14 = ssub.s32 %s9, 1
      %s15 = ssub.s32 %s9, 2
      %s16 = sadd.s32 %s9, 1
      %s17 = ssub.s32 %s9, %s16
      %p18 = scmp.eq.s32.totalorder %s17, 0
      %s20 = sadd.s32 %s19, 1
      %s21 = scalar_select %p18, %s19, %s20
      %p24 = pneg %p18
      %p25 = scmp.eq.s32.totalorder %s9, 1
      %p26 = por %p24, %p25
      %p27 = scmp.ne.s32.totalorder %s19, %s22
      %p28 = scmp.eq.s32.totalorder %s9, 0
      %p29 = por %p27, %p28
      %p30 = scmp.ne.s32.totalorder %s19, %s22
      %p31 = scmp.eq.s32.totalorder %s14, 1
      %p32 = por %p30, %p31
      %p33 = scmp.ne.s32.totalorder %s22, %s23
      %p34 = scmp.eq.s32.totalorder %s14, 0
      %p35 = por %p33, %p34
      %p36 = scmp.ne.s32.totalorder %s22, %s23
      %p37 = scmp.eq.s32.totalorder %s15, 1
      %p38 = por %p36, %p37
      %p40 = scmp.ne.s32.totalorder %s23, %s39
      %p41 = scmp.eq.s32.totalorder %s15, 0
      %p42 = por %p40, %p41
      %s43 = ssub.s32 %s9, %s16
      %p44 = scmp.eq.s32.totalorder %s43, 0
      %s46 = sadd.s32 %s45, 1
      %s47 = scalar_select %p44, %s45, %s46
      %p50 = pneg %p44
      %p51 = scmp.eq.s32.totalorder %s9, 1
      %p52 = por %p50, %p51
      %p53 = scmp.ne.s32.totalorder %s45, %s48
      %p54 = scmp.eq.s32.totalorder %s9, 0
      %p55 = por %p53, %p54
      %p56 = scmp.ne.s32.totalorder %s45, %s48
      %p57 = scmp.eq.s32.totalorder %s14, 1
      %p58 = por %p56, %p57
      %p59 = scmp.ne.s32.totalorder %s48, %s49
      %p60 = scmp.eq.s32.totalorder %s14, 0
      %p61 = por %p59, %p60
      %p62 = scmp.ne.s32.totalorder %s48, %s49
      %p63 = scmp.eq.s32.totalorder %s15, 1
      %p64 = por %p62, %p63
      %p66 = scmp.ne.s32.totalorder %s49, %s65
      %p67 = scmp.eq.s32.totalorder %s15, 0
      %p68 = por %p66, %p67
      %s69 = ssub.s32 %s9, %s16
      %p70 = scmp.eq.s32.totalorder %s69, 0
      %s72 = sadd.s32 %s71, 1
      %s73 = scalar_select %p70, %s71, %s72
      %p76 = pneg %p70
      %p77 = scmp.eq.s32.totalorder %s9, 1
      %p78 = por %p76, %p77
      %p79 = scmp.ne.s32.totalorder %s71, %s74
      %p80 = scmp.eq.s32.totalorder %s9, 0
      %p81 = por %p79, %p80
      %p82 = scmp.ne.s32.totalorder %s71, %s74
      %p83 = scmp.eq.s32.totalorder %s14, 1
      %p84 = por %p82, %p83
      %p85 = scmp.ne.s32.totalorder %s74, %s75
      %p86 = scmp.eq.s32.totalorder %s14, 0
      %p87 = por %p85, %p86
      %p88 = scmp.ne.s32.totalorder %s74, %s75
      %p89 = scmp.eq.s32.totalorder %s15, 1
      %p90 = por %p88, %p89
      %p92 = scmp.ne.s32.totalorder %s75, %s91
      %p93 = scmp.eq.s32.totalorder %s15, 0
      %p94 = por %p92, %p93
      %s95 = ssub.s32 %s9, %s16
      %p96 = scmp.eq.s32.totalorder %s95, 0
      %s98 = sadd.s32 %s97, 1
      %s99 = scalar_select %p96, %s97, %s98
      %p102 = pneg %p96
      %p103 = scmp.eq.s32.totalorder %s9, 1
      %p104 = por %p102, %p103
      %p105 = scmp.ne.s32.totalorder %s97, %s100
      %p106 = scmp.eq.s32.totalorder %s9, 0
      %p107 = por %p105, %p106
      %p108 = scmp.ne.s32.totalorder %s97, %s100
      %p109 = scmp.eq.s32.totalorder %s14, 1
      %p110 = por %p108, %p109
      %p111 = scmp.ne.s32.totalorder %s100, %s101
      %p112 = scmp.eq.s32.totalorder %s14, 0
      %p113 = por %p111, %p112
      %p114 = scmp.ne.s32.totalorder %s100, %s101
      %p115 = scmp.eq.s32.totalorder %s15, 1
      %p116 = por %p114, %p115
      %p118 = scmp.ne.s32.totalorder %s101, %s117
      %p119 = scmp.eq.s32.totalorder %s15, 0
      %p120 = por %p118, %p119
      %p121 = scmp.le.s32.totalorder 1, %s9
      %p122 = scmp.lt.s32.totalorder %s9, 3
      %p123 = pnand %p121, %p122
      %p124 = pneg %p123
      // Predicated region
      $region9: #{text_decoder_forward.22} parent=5 // pred_check
        _
      $region10: #{text_decoder_forward.22} parent=5 // pred_check_branch
        %126 = sbr.rel (%p123) target = $region12
      $region11: #{text_decoder_forward.22} parent=5 // pred_region
        %s127 = ssub.s32 %s9, 1
      $region12: #{text_decoder_forward.22} parent=5 // pred_fallthru
        _
      %p128 = scmp.lt.s32.totalorder %s9, 2
      // Predicated region
      $region13: #{text_decoder_forward.22} parent=5 // pred_check
        %p129 = pneg %p128
      $region14: #{text_decoder_forward.22} parent=5 // pred_check_branch
        %131 = sbr.rel (%p129) target = $region16
      $region15: #{text_decoder_forward.22} parent=5 // pred_region
        // Predicated region
        $region17: #{text_decoder_forward.22} parent=15 // pred_check
          %p132 = pneg %p29
        $region18: #{text_decoder_forward.22} parent=15 // pred_check_branch
          %134 = sbr.rel (%p132) target = $region20
        $region19: #{text_decoder_forward.22} parent=15 // pred_region
          %p135 = scmp.lt.s32.totalorder %s9, 1
          %s136 = scalar_select %p135, %s9, 1
          %s137 = smul.addr %s136, 8
          %s138 = smul.addr %s137, 4
          %s139 = scalar_lea.vmem %s0, %s138
        $region20: #{text_decoder_forward.22} parent=15 // pred_fallthru
          _
        // Predicated region
        $region21: #{text_decoder_forward.22} parent=15 // pred_check
          %p140 = pneg %p55
        $region22: #{text_decoder_forward.22} parent=15 // pred_check_branch
          %142 = sbr.rel (%p140) target = $region24
        $region23: #{text_decoder_forward.22} parent=15 // pred_region
          %s143 = sand.u32 %s45, 1
          %s144 = sand.u32 %s45, 1
          %s145 = smul.addr %s144, 64
          %s146 = scalar_lea.vmem [#allocation2], %s145
          %s147 = smul.addr %s9, 32
          %s148 = smul.addr %s147, 4
          %s149 = scalar_lea.vmem %s1, %s148
          // Predicated region
          $region25: #{text_decoder_forward.22} parent=23 // pred_check
            _
          $region26: #{text_decoder_forward.22} parent=23 // pred_check_branch
            %151 = sbr.rel (0) target = $region28
          $region27: #{text_decoder_forward.22} parent=23 // pred_region
            // Predicated region
            $region29: #{text_decoder_forward.22} parent=27 // pred_check
              _
            $region30: #{text_decoder_forward.22} parent=27 // pred_check_branch
              %153 = sbr.rel target = $region32
            $region31: #{text_decoder_forward.22} parent=27 // pred_region
              // Predicated region
              $region44: #{text_decoder_forward.22} parent=31 // pred_check
                _
              $region45: #{text_decoder_forward.22} parent=31 // pred_check_branch
                %198 = sbr.rel (0) target = $region47
              $region46: #{text_decoder_forward.22} parent=31 // pred_region
                loop: start=0, step=1, limit=1
                $region48: #{text_decoder_forward.22} parent=46 // loop_pre_header
                  _
                $region49: #{text_decoder_forward.22} parent=46 // loop_header
                  %s200 = sphi 0, %s204
                  %p201 = scmp.ge.s32.totalorder %s200, 1
                  %s205 = sphi %s149, %s149
                  %s206 = sphi %s146, %s146
                $region50: #{text_decoder_forward.22} parent=46 // loop_header_branch
                  %203 = sbr.rel (%p201) target = $region54
                $region51: #{text_decoder_forward.22} parent=46 // loop_body
                  _
                $region52: #{text_decoder_forward.22} parent=46 // loop_footer
                  %s204 = sadd.s32 1, %s200
                $region53: #{text_decoder_forward.22} parent=46 // loop_footer_branch
                  %199 = sbr.rel target = $region49
                $region54: #{text_decoder_forward.22} parent=46 // loop_exit
                  _
                loop: start=0, step=1, limit=1
                $region55: #{text_decoder_forward.22} parent=46 // loop_pre_header
                  _
                $region56: #{text_decoder_forward.22} parent=46 // loop_header
                  %s209 = sphi 0, %s213
                  %p210 = scmp.ge.s32.totalorder %s209, 1
                  %s214 = sphi %s149, %s149
                  %s215 = sphi %s146, %s146
                $region57: #{text_decoder_forward.22} parent=46 // loop_header_branch
                  %212 = sbr.rel (%p210) target = $region61
                $region58: #{text_decoder_forward.22} parent=46 // loop_body
                  %v216 = vld [vmem:[%s214] sm:$0xf]
                  %217 = vst [vmem:[%s215] sm:$0xf] %v216
                  %v218 = vld [vmem:[%s214 + $0x8] sm:$0xf]
                  %219 = vst [vmem:[%s215 + $0x4] sm:$0xf] %v218
                  %v220 = vld [vmem:[%s214 + $0x10] sm:$0xf]
                  %221 = vst [vmem:[%s215 + $0x8] sm:$0xf] %v220
                  %v222 = vld [vmem:[%s214 + $0x18] sm:$0xf]
                  %223 = vst [vmem:[%s215 + $0xc] sm:$0xf] %v222
                  %v224 = vld [vmem:[%s214 + $0x20] sm:$0xf]
                  %225 = vst [vmem:[%s215 + $0x10] sm:$0xf] %v224
                  %v226 = vld [vmem:[%s214 + $0x28] sm:$0xf]
                  %227 = vst [vmem:[%s215 + $0x14] sm:$0xf] %v226
                  %v228 = vld [vmem:[%s214 + $0x30] sm:$0xf]
                  %229 = vst [vmem:[%s215 + $0x18] sm:$0xf] %v228
                  %v230 = vld [vmem:[%s214 + $0x38] sm:$0xf]
                  %231 = vst [vmem:[%s215 + $0x1c] sm:$0xf] %v230
                  %v232 = vld [vmem:[%s214 + $0x40] sm:$0xf]
                  %233 = vst [vmem:[%s215 + $0x20] sm:$0xf] %v232
                  %v234 = vld [vmem:[%s214 + $0x48] sm:$0xf]
                  %235 = vst [vmem:[%s215 + $0x24] sm:$0xf] %v234
                  %v236 = vld [vmem:[%s214 + $0x50] sm:$0xf]
                  %237 = vst [vmem:[%s215 + $0x28] sm:$0xf] %v236
                  %v238 = vld [vmem:[%s214 + $0x58] sm:$0xf]
                  %239 = vst [vmem:[%s215 + $0x2c] sm:$0xf] %v238
                  %v240 = vld [vmem:[%s214 + $0x60] sm:$0xf]
                  %241 = vst [vmem:[%s215 + $0x30] sm:$0xf] %v240
                  %v242 = vld [vmem:[%s214 + $0x68] sm:$0xf]
                  %243 = vst [vmem:[%s215 + $0x34] sm:$0xf] %v242
                  %v244 = vld [vmem:[%s214 + $0x70] sm:$0xf]
                  %245 = vst [vmem:[%s215 + $0x38] sm:$0xf] %v244
                  %v246 = vld [vmem:[%s214 + $0x78] sm:$0xf]
                  %247 = vst [vmem:[%s215 + $0x3c] sm:$0xf] %v246
                $region59: #{text_decoder_forward.22} parent=46 // loop_footer
                  %s213 = sadd.s32 1, %s209
                $region60: #{text_decoder_forward.22} parent=46 // loop_footer_branch
                  %208 = sbr.rel target = $region56
                $region61: #{text_decoder_forward.22} parent=46 // loop_exit
                  _
              $region47: #{text_decoder_forward.22} parent=31 // pred_fallthru
                _
            $region32: #{text_decoder_forward.22} parent=27 // pred_fallthru
              _
            // Predicated region
            $region33: #{text_decoder_forward.22} parent=27 // pred_check
              _
            $region34: #{text_decoder_forward.22} parent=27 // pred_check_branch
              %155 = sbr.rel (0) target = $region36
            $region35: #{text_decoder_forward.22} parent=27 // pred_region
              loop: start=0, step=1, limit=1
              $region37: #{text_decoder_forward.22} parent=35 // loop_pre_header
                _
              $region38: #{text_decoder_forward.22} parent=35 // loop_header
                %s158 = sphi 0, %s162
                %p159 = scmp.ge.s32.totalorder %s158, 1
                %s163 = sphi %s149, %s149
                %s164 = sphi %s146, %s146
              $region39: #{text_decoder_forward.22} parent=35 // loop_header_branch
                %161 = sbr.rel (%p159) target = $region43
              $region40: #{text_decoder_forward.22} parent=35 // loop_body
                %v165 = vld [vmem:[%s163] sm:$0xf]
                %166 = vst [vmem:[%s164] sm:$0xf] %v165
                %v167 = vld [vmem:[%s163 + $0x8] sm:$0xf]
                %168 = vst [vmem:[%s164 + $0x4] sm:$0xf] %v167
                %v169 = vld [vmem:[%s163 + $0x10] sm:$0xf]
                %170 = vst [vmem:[%s164 + $0x8] sm:$0xf] %v169
                %v171 = vld [vmem:[%s163 + $0x18] sm:$0xf]
                %172 = vst [vmem:[%s164 + $0xc] sm:$0xf] %v171
                %v173 = vld [vmem:[%s163 + $0x20] sm:$0xf]
                %174 = vst [vmem:[%s164 + $0x10] sm:$0xf] %v173
                %v175 = vld [vmem:[%s163 + $0x28] sm:$0xf]
                %176 = vst [vmem:[%s164 + $0x14] sm:$0xf] %v175
                %v177 = vld [vmem:[%s163 + $0x30] sm:$0xf]
                %178 = vst [vmem:[%s164 + $0x18] sm:$0xf] %v177
                %v179 = vld [vmem:[%s163 + $0x38] sm:$0xf]
                %180 = vst [vmem:[%s164 + $0x1c] sm:$0xf] %v179
                %v181 = vld [vmem:[%s163 + $0x40] sm:$0xf]
                %182 = vst [vmem:[%s164 + $0x20] sm:$0xf] %v181
                %v183 = vld [vmem:[%s163 + $0x48] sm:$0xf]
                %184 = vst [vmem:[%s164 + $0x24] sm:$0xf] %v183
                %v185 = vld [vmem:[%s163 + $0x50] sm:$0xf]
                %186 = vst [vmem:[%s164 + $0x28] sm:$0xf] %v185
                %v187 = vld [vmem:[%s163 + $0x58] sm:$0xf]
                %188 = vst [vmem:[%s164 + $0x2c] sm:$0xf] %v187
                %v189 = vld [vmem:[%s163 + $0x60] sm:$0xf]
                %190 = vst [vmem:[%s164 + $0x30] sm:$0xf] %v189
                %v191 = vld [vmem:[%s163 + $0x68] sm:$0xf]
                %192 = vst [vmem:[%s164 + $0x34] sm:$0xf] %v191
                %v193 = vld [vmem:[%s163 + $0x70] sm:$0xf]
                %194 = vst [vmem:[%s164 + $0x38] sm:$0xf] %v193
                %v195 = vld [vmem:[%s163 + $0x78] sm:$0xf]
                %196 = vst [vmem:[%s164 + $0x3c] sm:$0xf] %v195
              $region41: #{text_decoder_forward.22} parent=35 // loop_footer
                %s162 = sadd.s32 1, %s158
              $region42: #{text_decoder_forward.22} parent=35 // loop_footer_branch
                %157 = sbr.rel target = $region38
              $region43: #{text_decoder_forward.22} parent=35 // loop_exit
                _
            $region36: #{text_decoder_forward.22} parent=27 // pred_fallthru
              _
          $region28: #{text_decoder_forward.22} parent=23 // pred_fallthru
            _
          %248 = vnop
        $region24: #{text_decoder_forward.22} parent=15 // pred_fallthru
          _
        // Predicated region
        $region62: #{text_decoder_forward.22} parent=15 // pred_check
          %p249 = pneg %p81
        $region63: #{text_decoder_forward.22} parent=15 // pred_check_branch
          %251 = sbr.rel (%p249) target = $region65
        $region64: #{text_decoder_forward.22} parent=15 // pred_region
          %s252 = sand.u32 %s71, 1
          %s253 = sand.u32 %s71, 1
          %s254 = smul.addr %s253, 64
          %s255 = scalar_lea.vmem [#allocation3], %s254
          %s256 = smul.addr %s9, 32
          %s257 = sadd.s32 1, %s256
          %s258 = smul.addr %s257, 4
          %s259 = scalar_lea.vmem %s2, %s258
          // Predicated region
          $region66: #{text_decoder_forward.22} parent=64 // pred_check
            _
          $region67: #{text_decoder_forward.22} parent=64 // pred_check_branch
            %261 = sbr.rel (0) target = $region69
          $region68: #{text_decoder_forward.22} parent=64 // pred_region
            // Predicated region
            $region70: #{text_decoder_forward.22} parent=68 // pred_check
              _
            $region71: #{text_decoder_forward.22} parent=68 // pred_check_branch
              %263 = sbr.rel target = $region73
            $region72: #{text_decoder_forward.22} parent=68 // pred_region
              // Predicated region
              $region85: #{text_decoder_forward.22} parent=72 // pred_check
                _
              $region86: #{text_decoder_forward.22} parent=72 // pred_check_branch
                %308 = sbr.rel (0) target = $region88
              $region87: #{text_decoder_forward.22} parent=72 // pred_region
                loop: start=0, step=1, limit=1
                $region89: #{text_decoder_forward.22} parent=87 // loop_pre_header
                  _
                $region90: #{text_decoder_forward.22} parent=87 // loop_header
                  %s310 = sphi 0, %s314
                  %p311 = scmp.ge.s32.totalorder %s310, 1
                  %s315 = sphi %s259, %s259
                  %s316 = sphi %s255, %s255
                $region91: #{text_decoder_forward.22} parent=87 // loop_header_branch
                  %313 = sbr.rel (%p311) target = $region95
                $region92: #{text_decoder_forward.22} parent=87 // loop_body
                  _
                $region93: #{text_decoder_forward.22} parent=87 // loop_footer
                  %s314 = sadd.s32 1, %s310
                $region94: #{text_decoder_forward.22} parent=87 // loop_footer_branch
                  %309 = sbr.rel target = $region90
                $region95: #{text_decoder_forward.22} parent=87 // loop_exit
                  _
                loop: start=0, step=1, limit=1
                $region96: #{text_decoder_forward.22} parent=87 // loop_pre_header
                  _
                $region97: #{text_decoder_forward.22} parent=87 // loop_header
                  %s319 = sphi 0, %s323
                  %p320 = scmp.ge.s32.totalorder %s319, 1
                  %s324 = sphi %s259, %s259
                  %s325 = sphi %s255, %s255
                $region98: #{text_decoder_forward.22} parent=87 // loop_header_branch
                  %322 = sbr.rel (%p320) target = $region102
                $region99: #{text_decoder_forward.22} parent=87 // loop_body
                  %v326 = vld [vmem:[%s324] sm:$0xf]
                  %327 = vst [vmem:[%s325] sm:$0xf] %v326
                  %v328 = vld [vmem:[%s324 + $0x8] sm:$0xf]
                  %329 = vst [vmem:[%s325 + $0x4] sm:$0xf] %v328
                  %v330 = vld [vmem:[%s324 + $0x10] sm:$0xf]
                  %331 = vst [vmem:[%s325 + $0x8] sm:$0xf] %v330
                  %v332 = vld [vmem:[%s324 + $0x18] sm:$0xf]
                  %333 = vst [vmem:[%s325 + $0xc] sm:$0xf] %v332
                  %v334 = vld [vmem:[%s324 + $0x20] sm:$0xf]
                  %335 = vst [vmem:[%s325 + $0x10] sm:$0xf] %v334
                  %v336 = vld [vmem:[%s324 + $0x28] sm:$0xf]
                  %337 = vst [vmem:[%s325 + $0x14] sm:$0xf] %v336
                  %v338 = vld [vmem:[%s324 + $0x30] sm:$0xf]
                  %339 = vst [vmem:[%s325 + $0x18] sm:$0xf] %v338
                  %v340 = vld [vmem:[%s324 + $0x38] sm:$0xf]
                  %341 = vst [vmem:[%s325 + $0x1c] sm:$0xf] %v340
                  %v342 = vld [vmem:[%s324 + $0x40] sm:$0xf]
                  %343 = vst [vmem:[%s325 + $0x20] sm:$0xf] %v342
                  %v344 = vld [vmem:[%s324 + $0x48] sm:$0xf]
                  %345 = vst [vmem:[%s325 + $0x24] sm:$0xf] %v344
                  %v346 = vld [vmem:[%s324 + $0x50] sm:$0xf]
                  %347 = vst [vmem:[%s325 + $0x28] sm:$0xf] %v346
                  %v348 = vld [vmem:[%s324 + $0x58] sm:$0xf]
                  %349 = vst [vmem:[%s325 + $0x2c] sm:$0xf] %v348
                  %v350 = vld [vmem:[%s324 + $0x60] sm:$0xf]
                  %351 = vst [vmem:[%s325 + $0x30] sm:$0xf] %v350
                  %v352 = vld [vmem:[%s324 + $0x68] sm:$0xf]
                  %353 = vst [vmem:[%s325 + $0x34] sm:$0xf] %v352
                  %v354 = vld [vmem:[%s324 + $0x70] sm:$0xf]
                  %355 = vst [vmem:[%s325 + $0x38] sm:$0xf] %v354
                  %v356 = vld [vmem:[%s324 + $0x78] sm:$0xf]
                  %357 = vst [vmem:[%s325 + $0x3c] sm:$0xf] %v356
                $region100: #{text_decoder_forward.22} parent=87 // loop_footer
                  %s323 = sadd.s32 1, %s319
                $region101: #{text_decoder_forward.22} parent=87 // loop_footer_branch
                  %318 = sbr.rel target = $region97
                $region102: #{text_decoder_forward.22} parent=87 // loop_exit
                  _
              $region88: #{text_decoder_forward.22} parent=72 // pred_fallthru
                _
            $region73: #{text_decoder_forward.22} parent=68 // pred_fallthru
              _
            // Predicated region
            $region74: #{text_decoder_forward.22} parent=68 // pred_check
              _
            $region75: #{text_decoder_forward.22} parent=68 // pred_check_branch
              %265 = sbr.rel (0) target = $region77
            $region76: #{text_decoder_forward.22} parent=68 // pred_region
              loop: start=0, step=1, limit=1
              $region78: #{text_decoder_forward.22} parent=76 // loop_pre_header
                _
              $region79: #{text_decoder_forward.22} parent=76 // loop_header
                %s268 = sphi 0, %s272
                %p269 = scmp.ge.s32.totalorder %s268, 1
                %s273 = sphi %s259, %s259
                %s274 = sphi %s255, %s255
              $region80: #{text_decoder_forward.22} parent=76 // loop_header_branch
                %271 = sbr.rel (%p269) target = $region84
              $region81: #{text_decoder_forward.22} parent=76 // loop_body
                %v275 = vld [vmem:[%s273] sm:$0xf]
                %276 = vst [vmem:[%s274] sm:$0xf] %v275
                %v277 = vld [vmem:[%s273 + $0x8] sm:$0xf]
                %278 = vst [vmem:[%s274 + $0x4] sm:$0xf] %v277
                %v279 = vld [vmem:[%s273 + $0x10] sm:$0xf]
                %280 = vst [vmem:[%s274 + $0x8] sm:$0xf] %v279
                %v281 = vld [vmem:[%s273 + $0x18] sm:$0xf]
                %282 = vst [vmem:[%s274 + $0xc] sm:$0xf] %v281
                %v283 = vld [vmem:[%s273 + $0x20] sm:$0xf]
                %284 = vst [vmem:[%s274 + $0x10] sm:$0xf] %v283
                %v285 = vld [vmem:[%s273 + $0x28] sm:$0xf]
                %286 = vst [vmem:[%s274 + $0x14] sm:$0xf] %v285
                %v287 = vld [vmem:[%s273 + $0x30] sm:$0xf]
                %288 = vst [vmem:[%s274 + $0x18] sm:$0xf] %v287
                %v289 = vld [vmem:[%s273 + $0x38] sm:$0xf]
                %290 = vst [vmem:[%s274 + $0x1c] sm:$0xf] %v289
                %v291 = vld [vmem:[%s273 + $0x40] sm:$0xf]
                %292 = vst [vmem:[%s274 + $0x20] sm:$0xf] %v291
                %v293 = vld [vmem:[%s273 + $0x48] sm:$0xf]
                %294 = vst [vmem:[%s274 + $0x24] sm:$0xf] %v293
                %v295 = vld [vmem:[%s273 + $0x50] sm:$0xf]
                %296 = vst [vmem:[%s274 + $0x28] sm:$0xf] %v295
                %v297 = vld [vmem:[%s273 + $0x58] sm:$0xf]
                %298 = vst [vmem:[%s274 + $0x2c] sm:$0xf] %v297
                %v299 = vld [vmem:[%s273 + $0x60] sm:$0xf]
                %300 = vst [vmem:[%s274 + $0x30] sm:$0xf] %v299
                %v301 = vld [vmem:[%s273 + $0x68] sm:$0xf]
                %302 = vst [vmem:[%s274 + $0x34] sm:$0xf] %v301
                %v303 = vld [vmem:[%s273 + $0x70] sm:$0xf]
                %304 = vst [vmem:[%s274 + $0x38] sm:$0xf] %v303
                %v305 = vld [vmem:[%s273 + $0x78] sm:$0xf]
                %306 = vst [vmem:[%s274 + $0x3c] sm:$0xf] %v305
              $region82: #{text_decoder_forward.22} parent=76 // loop_footer
                %s272 = sadd.s32 1, %s268
              $region83: #{text_decoder_forward.22} parent=76 // loop_footer_branch
                %267 = sbr.rel target = $region79
              $region84: #{text_decoder_forward.22} parent=76 // loop_exit
                _
            $region77: #{text_decoder_forward.22} parent=68 // pred_fallthru
              _
          $region69: #{text_decoder_forward.22} parent=64 // pred_fallthru
            _
          %358 = vnop
        $region65: #{text_decoder_forward.22} parent=15 // pred_fallthru
          _
      $region16: #{text_decoder_forward.22} parent=5 // pred_fallthru
        _
      %p359 = scmp.le.s32.totalorder 1, %s9
      %p360 = scmp.lt.s32.totalorder %s9, 3
      %p361 = pnand %p359, %p360
      %p362 = pneg %p361
      // Predicated region
      $region103: #{text_decoder_forward.22} parent=5 // pred_check
        _
      $region104: #{text_decoder_forward.22} parent=5 // pred_check_branch
        %364 = sbr.rel (%p361) target = $region106
      $region105: #{text_decoder_forward.22} parent=5 // pred_region
        %s365 = ssub.s32 %s9, 1
        %s366 = sand.u32 %s48, 1
        %s367 = sand.u32 %s48, 1
        %s368 = smul.addr %s367, 64
        %s369 = scalar_lea.vmem [#allocation2], %s368
        // Predicated region
        $region107: #{text_decoder_forward.22} parent=105 // pred_check
          %p370 = pneg %p61
        $region108: #{text_decoder_forward.22} parent=105 // pred_check_branch
          %372 = sbr.rel (%p370) target = $region110
        $region109: #{text_decoder_forward.22} parent=105 // pred_region
          _
        $region110: #{text_decoder_forward.22} parent=105 // pred_fallthru
          _
        %s373 = sand.u32 %s74, 1
        %s374 = sand.u32 %s74, 1
        %s375 = smul.addr %s374, 64
        %s376 = scalar_lea.vmem [#allocation3], %s375
        // Predicated region
        $region111: #{text_decoder_forward.22} parent=105 // pred_check
          %p377 = pneg %p87
        $region112: #{text_decoder_forward.22} parent=105 // pred_check_branch
          %379 = sbr.rel (%p377) target = $region114
        $region113: #{text_decoder_forward.22} parent=105 // pred_region
          _
        $region114: #{text_decoder_forward.22} parent=105 // pred_fallthru
          _
        %p380 = scmp.lt.s32.totalorder %s14, 1
        %s381 = scalar_select %p380, %s14, 1
        %s382 = smul.addr %s381, 8
        %s383 = smul.addr %s382, 4
        %s384 = scalar_lea.vmem %s0, %s383
        %p385 = pneg %p35
        %p386 = pneg %p32
        %s387 = sand.u32 %s48, 1
        %s388 = sand.u32 %s48, 1
        %s389 = smul.addr %s388, 64
        %s390 = scalar_lea.vmem [#allocation2], %s389
        %p391 = pneg %p61
        %p392 = pneg %p58
        %s393 = sand.u32 %s74, 1
        %s394 = sand.u32 %s74, 1
        %s395 = smul.addr %s394, 64
        %s396 = scalar_lea.vmem [#allocation3], %s395
        %p397 = pneg %p87
        %p398 = pneg %p84
        %p399 = pneg %p113
        %p400 = pneg %p110
        %p401 = scmp.lt.s32.totalorder %s14, 1
        %s402 = scalar_select %p401, %s14, 1
        %s403 = smul.addr %s402, 8
        %s404 = smul.addr %s403, 4
        %s405 = scalar_lea.vmem %s3, %s404
        %p406 = scmp.lt.s32.totalorder %s14, 1
        %s407 = scalar_select %p406, %s14, 1
        %s408 = smul.addr %s407, 8
        %s409 = smul.addr %s408, 4
        %s410 = scalar_lea.vmem %s0, %s409
        %p411 = scmp.lt.s32.totalorder %s14, 1
        %s412 = scalar_select %p411, %s14, 1
        %s413 = smul.addr %s412, 8
        %s414 = smul.addr %s413, 4
        %s415 = scalar_lea.vmem %s3, %s414
        %v417 = vld [vmem:[%s410] sm:$0xf]
        %v418 = vld [vmem:[%s410 + $0x4] sm:$0xf]
        %v419 = vld [vmem:[%s410 + $0x8] sm:$0xf]
        %v420 = vld [vmem:[%s410 + $0xc] sm:$0xf]
        %v421 = vld [vmem:[%s410 + $0x10] sm:$0xf]
        %v422 = vld [vmem:[%s410 + $0x14] sm:$0xf]
        %v423 = vld [vmem:[%s410 + $0x18] sm:$0xf]
        %v424 = vld [vmem:[%s410 + $0x1c] sm:$0xf]
        %v425 = vunpack.c.l.bf16 %v417
        %v426 = vunpack.c.l.bf16 %v418
        %v427 = vunpack.c.l.bf16 %v419
        %v428 = vunpack.c.l.bf16 %v420
        %v429 = vunpack.c.l.bf16 %v421
        %v430 = vunpack.c.l.bf16 %v422
        %v431 = vunpack.c.l.bf16 %v423
        %v432 = vunpack.c.l.bf16 %v424
        %v433 = vmul.f32 %v425, 0.125
        %v434 = vmul.f32 %v426, 0.125
        %v435 = vmul.f32 %v427, 0.125
        %v436 = vmul.f32 %v428, 0.125
        %v437 = vmul.f32 %v429, 0.125
        %v438 = vmul.f32 %v430, 0.125
        %v439 = vmul.f32 %v431, 0.125
        %v440 = vmul.f32 %v432, 0.125
        %v441 = vpack.c.bf16 %v434, %v433
        %v442 = vpack.c.bf16 %v436, %v435
        %v443 = vpack.c.bf16 %v438, %v437
        %v444 = vpack.c.bf16 %v440, %v439
        %v445 = vld [vmem:[%s369] sm:$0xf]
        %v446 = vld [vmem:[%s369 + $0x4] sm:$0xf]
        %v447 = vld [vmem:[%s369 + $0x8] sm:$0xf]
        %v448 = vld [vmem:[%s369 + $0xc] sm:$0xf]
        %v449 = vld [vmem:[%s369 + $0x10] sm:$0xf]
        %v450 = vld [vmem:[%s369 + $0x14] sm:$0xf]
        %v451 = vld [vmem:[%s369 + $0x18] sm:$0xf]
        %v452 = vld [vmem:[%s369 + $0x1c] sm:$0xf]
        %v453 = vld [vmem:[%s369 + $0x20] sm:$0xf]
        %v454 = vld [vmem:[%s369 + $0x24] sm:$0xf]
        %v455 = vld [vmem:[%s369 + $0x28] sm:$0xf]
        %v456 = vld [vmem:[%s369 + $0x2c] sm:$0xf]
        %v457 = vld [vmem:[%s369 + $0x30] sm:$0xf]
        %v458 = vld [vmem:[%s369 + $0x34] sm:$0xf]
        %v459 = vld [vmem:[%s369 + $0x38] sm:$0xf]
        %v460 = vld [vmem:[%s369 + $0x3c] sm:$0xf]
        %v461 = vld [vmem:[%s376] sm:$0xf]
        %v462 = vld [vmem:[%s376 + $0x4] sm:$0xf]
        %v463 = vld [vmem:[%s376 + $0x8] sm:$0xf]
        %v464 = vld [vmem:[%s376 + $0xc] sm:$0xf]
        %v465 = vld [vmem:[%s376 + $0x10] sm:$0xf]
        %v466 = vld [vmem:[%s376 + $0x14] sm:$0xf]
        %v467 = vld [vmem:[%s376 + $0x18] sm:$0xf]
        %v468 = vld [vmem:[%s376 + $0x1c] sm:$0xf]
        %v469 = vld [vmem:[%s376 + $0x20] sm:$0xf]
        %v470 = vld [vmem:[%s376 + $0x24] sm:$0xf]
        %v471 = vld [vmem:[%s376 + $0x28] sm:$0xf]
        %v472 = vld [vmem:[%s376 + $0x2c] sm:$0xf]
        %v473 = vld [vmem:[%s376 + $0x30] sm:$0xf]
        %v474 = vld [vmem:[%s376 + $0x34] sm:$0xf]
        %v475 = vld [vmem:[%s376 + $0x38] sm:$0xf]
        %v476 = vld [vmem:[%s376 + $0x3c] sm:$0xf]
        %v493 = vunpack.c.l.b16 %v445
        %v494 = vunpack.c.l.b16 %v446
        %v495 = vunpack.c.l.b16 %v447
        %v496 = vunpack.c.l.b16 %v448
        %v497 = vunpack.c.l.b16 %v449
        %v498 = vunpack.c.l.b16 %v450
        %v499 = vunpack.c.l.b16 %v451
        %v500 = vunpack.c.l.b16 %v452
        %v501 = vunpack.c.l.b16 %v453
        %v502 = vunpack.c.l.b16 %v454
        %v503 = vunpack.c.l.b16 %v455
        %v504 = vunpack.c.l.b16 %v456
        %v505 = vunpack.c.l.b16 %v457
        %v506 = vunpack.c.l.b16 %v458
        %v507 = vunpack.c.l.b16 %v459
        %v508 = vunpack.c.l.b16 %v460
        %v509 = vpack.c.b16 %v494, %v493
        %v510 = vpack.c.b16 %v496, %v495
        %v511 = vpack.c.b16 %v498, %v497
        %v512 = vpack.c.b16 %v500, %v499
        %v513 = vpack.c.b16 %v502, %v501
        %v514 = vpack.c.b16 %v504, %v503
        %v515 = vpack.c.b16 %v506, %v505
        %v516 = vpack.c.b16 %v508, %v507
        %vm517 = vcmask 523264
        %v519 = vsel %vm517, %v441, 0
        %v522 = vsel %vm517, %v442, 0
        %v525 = vsel %vm517, %v443, 0
        %v528 = vsel %vm517, %v444, 0
        %v531 = vsel %vm517, %v509, 0
        %v534 = vsel %vm517, %v510, 0
        %v537 = vsel %vm517, %v511, 0
        %v540 = vsel %vm517, %v512, 0
        %v543 = vsel %vm517, %v513, 0
        %v546 = vsel %vm517, %v514, 0
        %v549 = vsel %vm517, %v515, 0
        %v552 = vsel %vm517, %v516, 0
        %554 = vmatprep.subr.bf16.mxu0 0
        %555 = vmatpush1.bf16.xpose.msra.mxu0 %v531
        %556 = vmatprep.subr.bf16.mxu0 0
        %557 = vmatpush1.bf16.xpose.msra.mxu0 %v534
        %558 = vmatprep.subr.bf16.mxu0 0
        %559 = vmatpush1.bf16.xpose.msra.mxu0 %v537
        %560 = vmatprep.subr.bf16.mxu0 0
        %561 = vmatpush1.bf16.xpose.msra.mxu0 %v540
        %562 = vmatprep.subr.bf16.mxu0 0
        %563 = vmatpush1.bf16.xpose.msra.mxu0 %v543
        %564 = vmatprep.subr.bf16.mxu0 0
        %565 = vmatpush1.bf16.xpose.msra.mxu0 %v546
        %566 = vmatprep.subr.bf16.mxu0 0
        %567 = vmatpush1.bf16.xpose.msra.mxu0 %v549
        %568 = vmatprep.subr.bf16.mxu0 0
        %569 = vmatpush1.bf16.xpose.msra.mxu0 %v552
        %570 = vmatprep.subr.bf16.mxu0 0
        %571 = vmatpush1.bf16.xpose.msra.mxu0 0
        %572 = vmatprep.subr.bf16.mxu0 0
        %573 = vmatpush1.bf16.xpose.msra.mxu0 0
        %574 = vmatprep.subr.bf16.mxu0 0
        %575 = vmatpush1.bf16.xpose.msra.mxu0 0
        %576 = vmatprep.subr.bf16.mxu0 0
        %577 = vmatpush1.bf16.xpose.msra.mxu0 0
        %578 = vmatprep.subr.bf16.mxu0 0
        %579 = vmatpush1.bf16.xpose.msra.mxu0 0
        %580 = vmatprep.subr.bf16.mxu0 0
        %581 = vmatpush1.bf16.xpose.msra.mxu0 0
        %582 = vmatprep.subr.bf16.mxu0 0
        %583 = vmatpush1.bf16.xpose.msra.mxu0 0
        %584 = vmatprep.subr.bf16.mxu0 0
        %585 = vmatpush1.bf16.xpose.msra.mxu0 0
        %586 = vmatprep.mubr.bf16.mxu0 0
        %587 = vmatmul.mubr.bf16.gmra.mrb[0].mxu0 %v519
        %v588 = vpop.f32.mrb[0].mxu0
        %v589 = vadd.f32 0.0, %v588
        %v590 = vpop.f32.mrb[0].mxu0
        %v591 = vpop.f32.mrb[0].mxu0
        %v592 = vadd.f32 0.0, %v591
        %v593 = vpop.f32.mrb[0].mxu0
        %594 = vmatprep.mubr.bf16.mxu0 0
        %595 = vmatmul.mubr.bf16.gmra.mrb[0].mxu0 %v522
        %v596 = vpop.f32.mrb[0].mxu0
        %v597 = vadd.f32 0.0, %v596
        %v598 = vpop.f32.mrb[0].mxu0
        %v599 = vpop.f32.mrb[0].mxu0
        %v600 = vadd.f32 0.0, %v599
        %v601 = vpop.f32.mrb[0].mxu0
        %602 = vmatprep.mubr.bf16.mxu0 0
        %603 = vmatmul.mubr.bf16.gmra.mrb[0].mxu0 %v525
        %v604 = vpop.f32.mrb[0].mxu0
        %v605 = vadd.f32 0.0, %v604
        %v606 = vpop.f32.mrb[0].mxu0
        %v607 = vpop.f32.mrb[0].mxu0
        %v608 = vadd.f32 0.0, %v607
        %v609 = vpop.f32.mrb[0].mxu0
        %610 = vmatprep.mubr.bf16.mxu0 0
        %611 = vmatmul.mubr.bf16.gmra.mrb[0].mxu0 %v528
        %v612 = vpop.f32.mrb[0].mxu0
        %v613 = vadd.f32 0.0, %v612
        %v614 = vpop.f32.mrb[0].mxu0
        %v615 = vpop.f32.mrb[0].mxu0
        %v616 = vadd.f32 0.0, %v615
        %v617 = vpop.f32.mrb[0].mxu0
        %618 = vdwg.mxu0
        %619 = vmax.xlane.f32.xlu0 %v589
        %v620 = vpop.xlane.xlu0 %619
        %621 = vmax.xlane.f32.xlu0 %v592
        %v622 = vpop.xlane.xlu0 %621
        %623 = vmax.xlane.f32.xlu0 %v597
        %v624 = vpop.xlane.xlu0 %623
        %625 = vmax.xlane.f32.xlu0 %v600
        %v626 = vpop.xlane.xlu0 %625
        %627 = vmax.xlane.f32.xlu0 %v605
        %v628 = vpop.xlane.xlu0 %627
        %629 = vmax.xlane.f32.xlu0 %v608
        %v630 = vpop.xlane.xlu0 %629
        %631 = vmax.xlane.f32.xlu0 %v613
        %v632 = vpop.xlane.xlu0 %631
        %633 = vmax.xlane.f32.xlu0 %v616
        %v634 = vpop.xlane.xlu0 %633
        %v635 = vsub.f32 %v589, %v620
        %v636 = vsub.f32 %v592, %v622
        %v637 = vsub.f32 %v597, %v624
        %v638 = vsub.f32 %v600, %v626
        %v639 = vsub.f32 %v605, %v628
        %v640 = vsub.f32 %v608, %v630
        %v641 = vsub.f32 %v613, %v632
        %v642 = vsub.f32 %v616, %v634
        %v643 = vmul.f32 %v635, 1.442695
        %v644 = vpow.pop %v643
        %v645 = vmul.f32 %v636, 1.442695
        %v646 = vpow.pop %v645
        %v647 = vmul.f32 %v637, 1.442695
        %v648 = vpow.pop %v647
        %v649 = vmul.f32 %v638, 1.442695
        %v650 = vpow.pop %v649
        %v651 = vmul.f32 %v639, 1.442695
        %v652 = vpow.pop %v651
        %v653 = vmul.f32 %v640, 1.442695
        %v654 = vpow.pop %v653
        %v655 = vmul.f32 %v641, 1.442695
        %v656 = vpow.pop %v655
        %v657 = vmul.f32 %v642, 1.442695
        %v658 = vpow.pop %v657
        %659 = vadd.xlane.f32.xlu0 %v644
        %v660 = vpop.xlane.xlu0 %659
        %661 = vadd.xlane.f32.xlu0 %v646
        %v662 = vpop.xlane.xlu0 %661
        %663 = vadd.xlane.f32.xlu0 %v648
        %v664 = vpop.xlane.xlu0 %663
        %665 = vadd.xlane.f32.xlu0 %v650
        %v666 = vpop.xlane.xlu0 %665
        %667 = vadd.xlane.f32.xlu0 %v652
        %v668 = vpop.xlane.xlu0 %667
        %669 = vadd.xlane.f32.xlu0 %v654
        %v670 = vpop.xlane.xlu0 %669
        %671 = vadd.xlane.f32.xlu0 %v656
        %v672 = vpop.xlane.xlu0 %671
        %673 = vadd.xlane.f32.xlu0 %v658
        %v674 = vpop.xlane.xlu0 %673
        %v675 = vrcp.pop %v660
        %v676 = vrcp.pop %v662
        %v677 = vrcp.pop %v664
        %v678 = vrcp.pop %v666
        %v679 = vrcp.pop %v668
        %v680 = vrcp.pop %v670
        %v681 = vrcp.pop %v672
        %v682 = vrcp.pop %v674
        %v683 = vmul.f32 %v644, %v675
        %v684 = vmul.f32 %v646, %v676
        %v685 = vmul.f32 %v648, %v677
        %v686 = vmul.f32 %v650, %v678
        %v687 = vmul.f32 %v652, %v679
        %v688 = vmul.f32 %v654, %v680
        %v689 = vmul.f32 %v656, %v681
        %v690 = vmul.f32 %v658, %v682
        %v691 = vpack.c.bf16 %v684, %v683
        %v692 = vpack.c.bf16 %v686, %v685
        %v693 = vpack.c.bf16 %v688, %v687
        %v694 = vpack.c.bf16 %v690, %v689
        %v711 = vunpack.c.l.b16 %v461
        %v712 = vunpack.c.l.b16 %v462
        %v713 = vunpack.c.l.b16 %v463
        %v714 = vunpack.c.l.b16 %v464
        %v715 = vunpack.c.l.b16 %v465
        %v716 = vunpack.c.l.b16 %v466
        %v717 = vunpack.c.l.b16 %v467
        %v718 = vunpack.c.l.b16 %v468
        %v719 = vunpack.c.l.b16 %v469
        %v720 = vunpack.c.l.b16 %v470
        %v721 = vunpack.c.l.b16 %v471
        %v722 = vunpack.c.l.b16 %v472
        %v723 = vunpack.c.l.b16 %v473
        %v724 = vunpack.c.l.b16 %v474
        %v725 = vunpack.c.l.b16 %v475
        %v726 = vunpack.c.l.b16 %v476
        %v727 = vpack.c.b16 %v712, %v711
        %v728 = vpack.c.b16 %v714, %v713
        %v729 = vpack.c.b16 %v716, %v715
        %v730 = vpack.c.b16 %v718, %v717
        %v731 = vpack.c.b16 %v720, %v719
        %v732 = vpack.c.b16 %v722, %v721
        %v733 = vpack.c.b16 %v724, %v723
        %v734 = vpack.c.b16 %v726, %v725
        %743 = vmatprep.subr.bf16.mxu0 0
        %744 = vmatpush1.bf16.msra.mxu0 %v727
        %745 = vmatprep.subr.bf16.mxu0 0
        %746 = vmatpush1.bf16.msra.mxu0 %v728
        %747 = vmatprep.subr.bf16.mxu0 0
        %748 = vmatpush1.bf16.msra.mxu0 %v729
        %749 = vmatprep.subr.bf16.mxu0 0
        %750 = vmatpush1.bf16.msra.mxu0 %v730
        %751 = vmatprep.subr.bf16.mxu0 0
        %752 = vmatpush1.bf16.msra.mxu0 %v731
        %753 = vmatprep.subr.bf16.mxu0 0
        %754 = vmatpush1.bf16.msra.mxu0 %v732
        %755 = vmatprep.subr.bf16.mxu0 0
        %756 = vmatpush1.bf16.msra.mxu0 %v733
        %757 = vmatprep.subr.bf16.mxu0 0
        %758 = vmatpush1.bf16.msra.mxu0 %v734
        %759 = vmatprep.subr.bf16.mxu0 0
        %760 = vmatpush1.bf16.msra.mxu0 0
        %761 = vmatprep.subr.bf16.mxu0 0
        %762 = vmatpush1.bf16.msra.mxu0 0
        %763 = vmatprep.subr.bf16.mxu0 0
        %764 = vmatpush1.bf16.msra.mxu0 0
        %765 = vmatprep.subr.bf16.mxu0 0
        %766 = vmatpush1.bf16.msra.mxu0 0
        %767 = vmatprep.subr.bf16.mxu0 0
        %768 = vmatpush1.bf16.msra.mxu0 0
        %769 = vmatprep.subr.bf16.mxu0 0
        %770 = vmatpush1.bf16.msra.mxu0 0
        %771 = vmatprep.subr.bf16.mxu0 0
        %772 = vmatpush1.bf16.msra.mxu0 0
        %773 = vmatprep.subr.bf16.mxu0 0
        %774 = vmatpush1.bf16.msra.mxu0 0
        %775 = vmatprep.mubr.bf16.mxu0 0
        %776 = vmatmul.mubr.bf16.gmra.mrb[0].mxu0 %v691
        %v777 = vpop.f32.mrb[0].mxu0
        %v778 = vadd.f32 0.0, %v777
        %v779 = vpop.f32.mrb[0].mxu0
        %v780 = vpop.f32.mrb[0].mxu0
        %v781 = vadd.f32 0.0, %v780
        %v782 = vpop.f32.mrb[0].mxu0
        %783 = vmatprep.mubr.bf16.mxu0 0
        %784 = vmatmul.mubr.bf16.gmra.mrb[0].mxu0 %v692
        %v785 = vpop.f32.mrb[0].mxu0
        %v786 = vadd.f32 0.0, %v785
        %v787 = vpop.f32.mrb[0].mxu0
        %v788 = vpop.f32.mrb[0].mxu0
        %v789 = vadd.f32 0.0, %v788
        %v790 = vpop.f32.mrb[0].mxu0
        %791 = vmatprep.mubr.bf16.mxu0 0
        %792 = vmatmul.mubr.bf16.gmra.mrb[0].mxu0 %v693
        %v793 = vpop.f32.mrb[0].mxu0
        %v794 = vadd.f32 0.0, %v793
        %v795 = vpop.f32.mrb[0].mxu0
        %v796 = vpop.f32.mrb[0].mxu0
        %v797 = vadd.f32 0.0, %v796
        %v798 = vpop.f32.mrb[0].mxu0
        %799 = vmatprep.mubr.bf16.mxu0 0
        %800 = vmatmul.mubr.bf16.gmra.mrb[0].mxu0 %v694
        %v801 = vpop.f32.mrb[0].mxu0
        %v802 = vadd.f32 0.0, %v801
        %v803 = vpop.f32.mrb[0].mxu0
        %v804 = vpop.f32.mrb[0].mxu0
        %v805 = vadd.f32 0.0, %v804
        %v806 = vpop.f32.mrb[0].mxu0
        %807 = vdwg.mxu0
        %812 = vrot.lane.b32.xlu0 %v441, 64
        %v813 = vpop.permute.xlu0 %812
        %814 = vrot.lane.b32.xlu0 %v442, 64
        %v815 = vpop.permute.xlu0 %814
        %816 = vrot.lane.b32.xlu0 %v443, 64
        %v817 = vpop.permute.xlu0 %816
        %818 = vrot.lane.b32.xlu0 %v444, 64
        %v819 = vpop.permute.xlu0 %818
        %820 = vrot.lane.b32.xlu0 %v509, 64
        %v821 = vpop.permute.xlu0 %820
        %822 = vrot.lane.b32.xlu0 %v510, 64
        %v823 = vpop.permute.xlu0 %822
        %824 = vrot.lane.b32.xlu0 %v511, 64
        %v825 = vpop.permute.xlu0 %824
        %826 = vrot.lane.b32.xlu0 %v512, 64
        %v827 = vpop.permute.xlu0 %826
        %828 = vrot.lane.b32.xlu0 %v513, 64
        %v829 = vpop.permute.xlu0 %828
        %830 = vrot.lane.b32.xlu0 %v514, 64
        %v831 = vpop.permute.xlu0 %830
        %832 = vrot.lane.b32.xlu0 %v515, 64
        %v833 = vpop.permute.xlu0 %832
        %834 = vrot.lane.b32.xlu0 %v516, 64
        %v835 = vpop.permute.xlu0 %834
        %v837 = vsel %vm517, %v813, 0
        %v840 = vsel %vm517, %v815, 0
        %v843 = vsel %vm517, %v817, 0
        %v846 = vsel %vm517, %v819, 0
        %v849 = vsel %vm517, %v821, 0
        %v852 = vsel %vm517, %v823, 0
        %v855 = vsel %vm517, %v825, 0
        %v858 = vsel %vm517, %v827, 0
        %v861 = vsel %vm517, %v829, 0
        %v864 = vsel %vm517, %v831, 0
        %v867 = vsel %vm517, %v833, 0
        %v870 = vsel %vm517, %v835, 0
        %872 = vmatprep.subr.bf16.mxu0 0
        %873 = vmatpush1.bf16.xpose.msra.mxu0 %v849
        %874 = vmatprep.subr.bf16.mxu0 0
        %875 = vmatpush1.bf16.xpose.msra.mxu0 %v852
        %876 = vmatprep.subr.bf16.mxu0 0
        %877 = vmatpush1.bf16.xpose.msra.mxu0 %v855
        %878 = vmatprep.subr.bf16.mxu0 0
        %879 = vmatpush1.bf16.xpose.msra.mxu0 %v858
        %880 = vmatprep.subr.bf16.mxu0 0
        %881 = vmatpush1.bf16.xpose.msra.mxu0 %v861
        %882 = vmatprep.subr.bf16.mxu0 0
        %883 = vmatpush1.bf16.xpose.msra.mxu0 %v864
        %884 = vmatprep.subr.bf16.mxu0 0
        %885 = vmatpush1.bf16.xpose.msra.mxu0 %v867
        %886 = vmatprep.subr.bf16.mxu0 0
        %887 = vmatpush1.bf16.xpose.msra.mxu0 %v870
        %888 = vmatprep.subr.bf16.mxu0 0
        %889 = vmatpush1.bf16.xpose.msra.mxu0 0
        %890 = vmatprep.subr.bf16.mxu0 0
        %891 = vmatpush1.bf16.xpose.msra.mxu0 0
        %892 = vmatprep.subr.bf16.mxu0 0
        %893 = vmatpush1.bf16.xpose.msra.mxu0 0
        %894 = vmatprep.subr.bf16.mxu0 0
        %895 = vmatpush1.bf16.xpose.msra.mxu0 0
        %896 = vmatprep.subr.bf16.mxu0 0
        %897 = vmatpush1.bf16.xpose.msra.mxu0 0
        %898 = vmatprep.subr.bf16.mxu0 0
        %899 = vmatpush1.bf16.xpose.msra.mxu0 0
        %900 = vmatprep.subr.bf16.mxu0 0
        %901 = vmatpush1.bf16.xpose.msra.mxu0 0
        %902 = vmatprep.subr.bf16.mxu0 0
        %903 = vmatpush1.bf16.xpose.msra.mxu0 0
        %904 = vmatprep.mubr.bf16.mxu0 0
        %905 = vmatmul.mubr.bf16.gmra.mrb[0].mxu0 %v837
        %v906 = vpop.f32.mrb[0].mxu0
        %v907 = vadd.f32 0.0, %v906
        %v908 = vpop.f32.mrb[0].mxu0
        %v909 = vpop.f32.mrb[0].mxu0
        %v910 = vadd.f32 0.0, %v909
        %v911 = vpop.f32.mrb[0].mxu0
        %912 = vmatprep.mubr.bf16.mxu0 0
        %913 = vmatmul.mubr.bf16.gmra.mrb[0].mxu0 %v840
        %v914 = vpop.f32.mrb[0].mxu0
        %v915 = vadd.f32 0.0, %v914
        %v916 = vpop.f32.mrb[0].mxu0
        %v917 = vpop.f32.mrb[0].mxu0
        %v918 = vadd.f32 0.0, %v917
        %v919 = vpop.f32.mrb[0].mxu0
        %920 = vmatprep.mubr.bf16.mxu0 0
        %921 = vmatmul.mubr.bf16.gmra.mrb[0].mxu0 %v843
        %v922 = vpop.f32.mrb[0].mxu0
        %v923 = vadd.f32 0.0, %v922
        %v924 = vpop.f32.mrb[0].mxu0
        %v925 = vpop.f32.mrb[0].mxu0
        %v926 = vadd.f32 0.0, %v925
        %v927 = vpop.f32.mrb[0].mxu0
        %928 = vmatprep.mubr.bf16.mxu0 0
        %929 = vmatmul.mubr.bf16.gmra.mrb[0].mxu0 %v846
        %v930 = vpop.f32.mrb[0].mxu0
        %v931 = vadd.f32 0.0, %v930
        %v932 = vpop.f32.mrb[0].mxu0
        %v933 = vpop.f32.mrb[0].mxu0
        %v934 = vadd.f32 0.0, %v933
        %v935 = vpop.f32.mrb[0].mxu0
        %936 = vdwg.mxu0
        %937 = vmax.xlane.f32.xlu0 %v907
        %v938 = vpop.xlane.xlu0 %937
        %939 = vmax.xlane.f32.xlu0 %v910
        %v940 = vpop.xlane.xlu0 %939
        %941 = vmax.xlane.f32.xlu0 %v915
        %v942 = vpop.xlane.xlu0 %941
        %943 = vmax.xlane.f32.xlu0 %v918
        %v944 = vpop.xlane.xlu0 %943
        %945 = vmax.xlane.f32.xlu0 %v923
        %v946 = vpop.xlane.xlu0 %945
        %947 = vmax.xlane.f32.xlu0 %v926
        %v948 = vpop.xlane.xlu0 %947
        %949 = vmax.xlane.f32.xlu0 %v931
        %v950 = vpop.xlane.xlu0 %949
        %951 = vmax.xlane.f32.xlu0 %v934
        %v952 = vpop.xlane.xlu0 %951
        %v953 = vsub.f32 %v907, %v938
        %v954 = vsub.f32 %v910, %v940
        %v955 = vsub.f32 %v915, %v942
        %v956 = vsub.f32 %v918, %v944
        %v957 = vsub.f32 %v923, %v946
        %v958 = vsub.f32 %v926, %v948
        %v959 = vsub.f32 %v931, %v950
        %v960 = vsub.f32 %v934, %v952
        %v961 = vmul.f32 %v953, 1.442695
        %v962 = vpow.pop %v961
        %v963 = vmul.f32 %v954, 1.442695
        %v964 = vpow.pop %v963
        %v965 = vmul.f32 %v955, 1.442695
        %v966 = vpow.pop %v965
        %v967 = vmul.f32 %v956, 1.442695
        %v968 = vpow.pop %v967
        %v969 = vmul.f32 %v957, 1.442695
        %v970 = vpow.pop %v969
        %v971 = vmul.f32 %v958, 1.442695
        %v972 = vpow.pop %v971
        %v973 = vmul.f32 %v959, 1.442695
        %v974 = vpow.pop %v973
        %v975 = vmul.f32 %v960, 1.442695
        %v976 = vpow.pop %v975
        %977 = vadd.xlane.f32.xlu0 %v962
        %v978 = vpop.xlane.xlu0 %977
        %979 = vadd.xlane.f32.xlu0 %v964
        %v980 = vpop.xlane.xlu0 %979
        %981 = vadd.xlane.f32.xlu0 %v966
        %v982 = vpop.xlane.xlu0 %981
        %983 = vadd.xlane.f32.xlu0 %v968
        %v984 = vpop.xlane.xlu0 %983
        %985 = vadd.xlane.f32.xlu0 %v970
        %v986 = vpop.xlane.xlu0 %985
        %987 = vadd.xlane.f32.xlu0 %v972
        %v988 = vpop.xlane.xlu0 %987
        %989 = vadd.xlane.f32.xlu0 %v974
        %v990 = vpop.xlane.xlu0 %989
        %991 = vadd.xlane.f32.xlu0 %v976
        %v992 = vpop.xlane.xlu0 %991
        %v993 = vrcp.pop %v978
        %v994 = vrcp.pop %v980
        %v995 = vrcp.pop %v982
        %v996 = vrcp.pop %v984
        %v997 = vrcp.pop %v986
        %v998 = vrcp.pop %v988
        %v999 = vrcp.pop %v990
        %v1000 = vrcp.pop %v992
        %v1001 = vmul.f32 %v962, %v993
        %v1002 = vmul.f32 %v964, %v994
        %v1003 = vmul.f32 %v966, %v995
        %v1004 = vmul.f32 %v968, %v996
        %v1005 = vmul.f32 %v970, %v997
        %v1006 = vmul.f32 %v972, %v998
        %v1007 = vmul.f32 %v974, %v999
        %v1008 = vmul.f32 %v976, %v1000
        %v1009 = vpack.c.bf16 %v1002, %v1001
        %v1010 = vpack.c.bf16 %v1004, %v1003
        %v1011 = vpack.c.bf16 %v1006, %v1005
        %v1012 = vpack.c.bf16 %v1008, %v1007
        %1013 = vrot.lane.b32.xlu0 %v727, 64
        %v1014 = vpop.permute.xlu0 %1013
        %1015 = vrot.lane.b32.xlu0 %v728, 64
        %v1016 = vpop.permute.xlu0 %1015
        %1017 = vrot.lane.b32.xlu0 %v729, 64
        %v1018 = vpop.permute.xlu0 %1017
        %1019 = vrot.lane.b32.xlu0 %v730, 64
        %v1020 = vpop.permute.xlu0 %1019
        %1021 = vrot.lane.b32.xlu0 %v731, 64
        %v1022 = vpop.permute.xlu0 %1021
        %1023 = vrot.lane.b32.xlu0 %v732, 64
        %v1024 = vpop.permute.xlu0 %1023
        %1025 = vrot.lane.b32.xlu0 %v733, 64
        %v1026 = vpop.permute.xlu0 %1025
        %1027 = vrot.lane.b32.xlu0 %v734, 64
        %v1028 = vpop.permute.xlu0 %1027
        %1037 = vmatprep.subr.bf16.mxu0 0
        %1038 = vmatpush1.bf16.msra.mxu0 %v1014
        %1039 = vmatprep.subr.bf16.mxu0 0
        %1040 = vmatpush1.bf16.msra.mxu0 %v1016
        %1041 = vmatprep.subr.bf16.mxu0 0
        %1042 = vmatpush1.bf16.msra.mxu0 %v1018
        %1043 = vmatprep.subr.bf16.mxu0 0
        %1044 = vmatpush1.bf16.msra.mxu0 %v1020
        %1045 = vmatprep.subr.bf16.mxu0 0
        %1046 = vmatpush1.bf16.msra.mxu0 %v1022
        %1047 = vmatprep.subr.bf16.mxu0 0
        %1048 = vmatpush1.bf16.msra.mxu0 %v1024
        %1049 = vmatprep.subr.bf16.mxu0 0
        %1050 = vmatpush1.bf16.msra.mxu0 %v1026
        %1051 = vmatprep.subr.bf16.mxu0 0
        %1052 = vmatpush1.bf16.msra.mxu0 %v1028
        %1053 = vmatprep.subr.bf16.mxu0 0
        %1054 = vmatpush1.bf16.msra.mxu0 0
        %1055 = vmatprep.subr.bf16.mxu0 0
        %1056 = vmatpush1.bf16.msra.mxu0 0
        %1057 = vmatprep.subr.bf16.mxu0 0
        %1058 = vmatpush1.bf16.msra.mxu0 0
        %1059 = vmatprep.subr.bf16.mxu0 0
        %1060 = vmatpush1.bf16.msra.mxu0 0
        %1061 = vmatprep.subr.bf16.mxu0 0
        %1062 = vmatpush1.bf16.msra.mxu0 0
        %1063 = vmatprep.subr.bf16.mxu0 0
        %1064 = vmatpush1.bf16.msra.mxu0 0
        %1065 = vmatprep.subr.bf16.mxu0 0
        %1066 = vmatpush1.bf16.msra.mxu0 0
        %1067 = vmatprep.subr.bf16.mxu0 0
        %1068 = vmatpush1.bf16.msra.mxu0 0
        %1069 = vmatprep.mubr.bf16.mxu0 0
        %1070 = vmatmul.mubr.bf16.gmra.mrb[0].mxu0 %v1009
        %v1071 = vpop.f32.mrb[0].mxu0
        %v1072 = vadd.f32 0.0, %v1071
        %v1073 = vpop.f32.mrb[0].mxu0
        %v1074 = vpop.f32.mrb[0].mxu0
        %v1075 = vadd.f32 0.0, %v1074
        %v1076 = vpop.f32.mrb[0].mxu0
        %1077 = vmatprep.mubr.bf16.mxu0 0
        %1078 = vmatmul.mubr.bf16.gmra.mrb[0].mxu0 %v1010
        %v1079 = vpop.f32.mrb[0].mxu0
        %v1080 = vadd.f32 0.0, %v1079
        %v1081 = vpop.f32.mrb[0].mxu0
        %v1082 = vpop.f32.mrb[0].mxu0
        %v1083 = vadd.f32 0.0, %v1082
        %v1084 = vpop.f32.mrb[0].mxu0
        %1085 = vmatprep.mubr.bf16.mxu0 0
        %1086 = vmatmul.mubr.bf16.gmra.mrb[0].mxu0 %v1011
        %v1087 = vpop.f32.mrb[0].mxu0
        %v1088 = vadd.f32 0.0, %v1087
        %v1089 = vpop.f32.mrb[0].mxu0
        %v1090 = vpop.f32.mrb[0].mxu0
        %v1091 = vadd.f32 0.0, %v1090
        %v1092 = vpop.f32.mrb[0].mxu0
        %1093 = vmatprep.mubr.bf16.mxu0 0
        %1094 = vmatmul.mubr.bf16.gmra.mrb[0].mxu0 %v1012
        %v1095 = vpop.f32.mrb[0].mxu0
        %v1096 = vadd.f32 0.0, %v1095
        %v1097 = vpop.f32.mrb[0].mxu0
        %v1098 = vpop.f32.mrb[0].mxu0
        %v1099 = vadd.f32 0.0, %v1098
        %v1100 = vpop.f32.mrb[0].mxu0
        %1101 = vdwg.mxu0
        %1110 = vrot.lane.b32.xlu0 %v1072, 64
        %v1111 = vpop.permute.xlu0 %1110
        %1112 = vrot.lane.b32.xlu0 %v1075, 64
        %v1113 = vpop.permute.xlu0 %1112
        %1114 = vrot.lane.b32.xlu0 %v1080, 64
        %v1115 = vpop.permute.xlu0 %1114
        %1116 = vrot.lane.b32.xlu0 %v1083, 64
        %v1117 = vpop.permute.xlu0 %1116
        %1118 = vrot.lane.b32.xlu0 %v1088, 64
        %v1119 = vpop.permute.xlu0 %1118
        %1120 = vrot.lane.b32.xlu0 %v1091, 64
        %v1121 = vpop.permute.xlu0 %1120
        %1122 = vrot.lane.b32.xlu0 %v1096, 64
        %v1123 = vpop.permute.xlu0 %1122
        %1124 = vrot.lane.b32.xlu0 %v1099, 64
        %v1125 = vpop.permute.xlu0 %1124
        %v1134 = vsel %vm517, %v778, %v1111
        %v1135 = vsel %vm517, %v781, %v1113
        %v1136 = vsel %vm517, %v786, %v1115
        %v1137 = vsel %vm517, %v789, %v1117
        %v1138 = vsel %vm517, %v794, %v1119
        %v1139 = vsel %vm517, %v797, %v1121
        %v1140 = vsel %vm517, %v802, %v1123
        %v1141 = vsel %vm517, %v805, %v1125
        %v1142 = vpack.c.bf16 %v1135, %v1134
        %v1143 = vpack.c.bf16 %v1137, %v1136
        %v1144 = vpack.c.bf16 %v1139, %v1138
        %v1145 = vpack.c.bf16 %v1141, %v1140
        %v1150 = vunpack.c.l.b16 %v1142
        %v1151 = vunpack.c.h.b16 %v1142
        %v1152 = vunpack.c.l.b16 %v1143
        %v1153 = vunpack.c.h.b16 %v1143
        %v1154 = vunpack.c.l.b16 %v1144
        %v1155 = vunpack.c.h.b16 %v1144
        %v1156 = vunpack.c.l.b16 %v1145
        %v1157 = vunpack.c.h.b16 %v1145
        %v1158 = vpack.c.b16 %v1150, %v1150
        %v1159 = vpack.c.b16 %v1151, %v1151
        %v1160 = vpack.c.b16 %v1152, %v1152
        %v1161 = vpack.c.b16 %v1153, %v1153
        %v1162 = vpack.c.b16 %v1154, %v1154
        %v1163 = vpack.c.b16 %v1155, %v1155
        %v1164 = vpack.c.b16 %v1156, %v1156
        %v1165 = vpack.c.b16 %v1157, %v1157
        %1174 = vst [vmem:[%s415] sm:$0xf] %v1158
        %1175 = vst [vmem:[%s415 + $0x4] sm:$0xf] %v1159
        %1176 = vst [vmem:[%s415 + $0x8] sm:$0xf] %v1160
        %1177 = vst [vmem:[%s415 + $0xc] sm:$0xf] %v1161
        %1178 = vst [vmem:[%s415 + $0x10] sm:$0xf] %v1162
        %1179 = vst [vmem:[%s415 + $0x14] sm:$0xf] %v1163
        %1180 = vst [vmem:[%s415 + $0x18] sm:$0xf] %v1164
        %1181 = vst [vmem:[%s415 + $0x1c] sm:$0xf] %v1165
        %p1182 = scmp.lt.s32.totalorder %s14, 1
        %s1183 = scalar_select %p1182, %s14, 1
        %s1184 = smul.addr %s1183, 8
        %s1185 = smul.addr %s1184, 4
        %s1186 = scalar_lea.vmem %s3, %s1185
        // Predicated region
        $region115: #{text_decoder_forward.22} parent=105 // pred_check
          %p1187 = pneg %p110
        $region116: #{text_decoder_forward.22} parent=105 // pred_check_branch
          %1189 = sbr.rel (%p1187) target = $region118
        $region117: #{text_decoder_forward.22} parent=105 // pred_region
          _
        $region118: #{text_decoder_forward.22} parent=105 // pred_fallthru
          _
      $region106: #{text_decoder_forward.22} parent=5 // pred_fallthru
        _
      %p1190 = scmp.le.s32.totalorder 2, %s9
      // Predicated region
      $region119: #{text_decoder_forward.22} parent=5 // pred_check
        %p1191 = pneg %p1190
      $region120: #{text_decoder_forward.22} parent=5 // pred_check_branch
        %1193 = sbr.rel (%p1191) target = $region122
      $region121: #{text_decoder_forward.22} parent=5 // pred_region
        %s1194 = ssub.s32 %s9, 2
        // Predicated region
        $region123: #{text_decoder_forward.22} parent=121 // pred_check
          %p1195 = pneg %p116
        $region124: #{text_decoder_forward.22} parent=121 // pred_check_branch
          %1197 = sbr.rel (%p1195) target = $region126
        $region125: #{text_decoder_forward.22} parent=121 // pred_region
          %p1198 = scmp.lt.s32.totalorder %s15, 1
          %s1199 = scalar_select %p1198, %s15, 1
          %s1200 = smul.addr %s1199, 8
          %s1201 = smul.addr %s1200, 4
          %s1202 = scalar_lea.vmem %s3, %s1201
        $region126: #{text_decoder_forward.22} parent=121 // pred_fallthru
          _
      $region122: #{text_decoder_forward.22} parent=5 // pred_fallthru
        _
    $region6: #{text_decoder_forward.22} parent=1 // loop_footer
      %s13 = sadd.s32 1, %s9
    $region7: #{text_decoder_forward.22} parent=1 // loop_footer_branch
      %8 = sbr.rel target = $region3
    $region8: #{text_decoder_forward.22} parent=1 // loop_exit
      _

// kernel: text_decoder_forward.33
$region0: #{text_decoder_forward.33}
  #allocation0 [shape = 'u32[]', space=smem, size = 0x4, offset = 0x4, fixed_abs, tag = 'smem constant byte address 0x4 - core index']
  #allocation1 [shape = 'u32[144,128]{1,0:T(1,128)}', space=vmem, size = 0x12000, scoped, tag = 'internal scratch']
  %s0 = inlined_call_operand.vmem [shape: bf16[128,128], index: 0, kind: input, shape index: {}]
  %s1 = inlined_call_operand.vmem [shape: f32[1,128], index: 1, kind: input, shape index: {}]
  %s2 = inlined_call_operand.vmem [shape: f32[1,128], index: 2, kind: input, shape index: {}]
  %s3 = inlined_call_operand.vmem [shape: bf16[512,128], index: 3, kind: input, shape index: {}]
  %s4 = inlined_call_operand.hbm [shape: f32[128,512], index: 4, kind: output, shape index: {}]
  %s5 = sld [smem:[#allocation0]]
  $region26: #{text_decoder_forward.33} parent=0
    _
  %s7 = ssub.s32 1, %s5
  %s8 = scalar_select 0, %s7, %s5
  $region1: #{text_decoder_forward.33} parent=0
    #allocation2 [shape = 'u8[262144]{0}', space=vmem, size = 0x40000, scoped, tag = 'output window, operand 0, single buffered']
    #allocation3 [shape = 's32[1]{0}', space=sflag, size = 0x4, scoped, tag = 'scoped memory for text_decoder_forward.33']
    %9 = vsyncpa [#allocation3], 0
    // Predicated region
    $region2: #{text_decoder_forward.33} parent=1 // pred_check
      _
    $region3: #{text_decoder_forward.33} parent=1 // pred_check_branch
      %11 = sbr.rel (0) target = $region5
    $region4: #{text_decoder_forward.33} parent=1 // pred_region
      _
    $region5: #{text_decoder_forward.33} parent=1 // pred_fallthru
      _
    // Predicated region
    $region6: #{text_decoder_forward.33} parent=1 // pred_check
      _
    $region7: #{text_decoder_forward.33} parent=1 // pred_check_branch
      %13 = sbr.rel (0) target = $region9
    $region8: #{text_decoder_forward.33} parent=1 // pred_region
      _
    $region9: #{text_decoder_forward.33} parent=1 // pred_fallthru
      _
    // Predicated region
    $region10: #{text_decoder_forward.33} parent=1 // pred_check
      _
    $region11: #{text_decoder_forward.33} parent=1 // pred_check_branch
      %15 = sbr.rel (0) target = $region13
    $region12: #{text_decoder_forward.33} parent=1 // pred_region
      _
    $region13: #{text_decoder_forward.33} parent=1 // pred_fallthru
      _
    // Predicated region
    $region14: #{text_decoder_forward.33} parent=1 // pred_check
      _
    $region15: #{text_decoder_forward.33} parent=1 // pred_check_branch
      %17 = sbr.rel (0) target = $region17
    $region16: #{text_decoder_forward.33} parent=1 // pred_region
      _
    $region17: #{text_decoder_forward.33} parent=1 // pred_fallthru
      _
    %v19 = vld [vmem:[%s0] sm:$0xf]
    %v20 = vld [vmem:[%s0 + $0x4] sm:$0xf]
    %v21 = vld [vmem:[%s0 + $0x8] sm:$0xf]
    %v22 = vld [vmem:[%s0 + $0xc] sm:$0xf]
    %v23 = vld [vmem:[%s0 + $0x10] sm:$0xf]
    %v24 = vld [vmem:[%s0 + $0x14] sm:$0xf]
    %v25 = vld [vmem:[%s0 + $0x18] sm:$0xf]
    %v26 = vld [vmem:[%s0 + $0x1c] sm:$0xf]
    %v27 = vld [vmem:[%s0 + $0x20] sm:$0xf]
    %v28 = vld [vmem:[%s0 + $0x24] sm:$0xf]
    %v29 = vld [vmem:[%s0 + $0x28] sm:$0xf]
    %v30 = vld [vmem:[%s0 + $0x2c] sm:$0xf]
    %v31 = vld [vmem:[%s0 + $0x30] sm:$0xf]
    %v32 = vld [vmem:[%s0 + $0x34] sm:$0xf]
    %v33 = vld [vmem:[%s0 + $0x38] sm:$0xf]
    %v34 = vld [vmem:[%s0 + $0x3c] sm:$0xf]
    %v35 = vunpack.c.l.bf16 %v19
    %v36 = vunpack.c.l.bf16 %v20
    %v37 = vunpack.c.l.bf16 %v21
    %v38 = vunpack.c.l.bf16 %v22
    %v39 = vunpack.c.l.bf16 %v23
    %v40 = vunpack.c.l.bf16 %v24
    %v41 = vunpack.c.l.bf16 %v25
    %v42 = vunpack.c.l.bf16 %v26
    %v43 = vunpack.c.l.bf16 %v27
    %v44 = vunpack.c.l.bf16 %v28
    %v45 = vunpack.c.l.bf16 %v29
    %v46 = vunpack.c.l.bf16 %v30
    %v47 = vunpack.c.l.bf16 %v31
    %v48 = vunpack.c.l.bf16 %v32
    %v49 = vunpack.c.l.bf16 %v33
    %v50 = vunpack.c.l.bf16 %v34
    %v51 = vld [vmem:[%s1] sm:$0x1]
    %v52 = vld [vmem:[%s2] sm:$0x1]
    %53 = vadd.xlane.f32.xlu0 %v35
    %v54 = vpop.xlane.xlu0 %53
    %55 = vadd.xlane.f32.xlu0 %v36
    %v56 = vpop.xlane.xlu0 %55
    %57 = vadd.xlane.f32.xlu0 %v37
    %v58 = vpop.xlane.xlu0 %57
    %59 = vadd.xlane.f32.xlu0 %v38
    %v60 = vpop.xlane.xlu0 %59
    %61 = vadd.xlane.f32.xlu0 %v39
    %v62 = vpop.xlane.xlu0 %61
    %63 = vadd.xlane.f32.xlu0 %v40
    %v64 = vpop.xlane.xlu0 %63
    %65 = vadd.xlane.f32.xlu0 %v41
    %v66 = vpop.xlane.xlu0 %65
    %67 = vadd.xlane.f32.xlu0 %v42
    %v68 = vpop.xlane.xlu0 %67
    %69 = vadd.xlane.f32.xlu0 %v43
    %v70 = vpop.xlane.xlu0 %69
    %71 = vadd.xlane.f32.xlu0 %v44
    %v72 = vpop.xlane.xlu0 %71
    %73 = vadd.xlane.f32.xlu0 %v45
    %v74 = vpop.xlane.xlu0 %73
    %75 = vadd.xlane.f32.xlu0 %v46
    %v76 = vpop.xlane.xlu0 %75
    %77 = vadd.xlane.f32.xlu0 %v47
    %v78 = vpop.xlane.xlu0 %77
    %79 = vadd.xlane.f32.xlu0 %v48
    %v80 = vpop.xlane.xlu0 %79
    %81 = vadd.xlane.f32.xlu0 %v49
    %v82 = vpop.xlane.xlu0 %81
    %83 = vadd.xlane.f32.xlu0 %v50
    %v84 = vpop.xlane.xlu0 %83
    %v85 = vrcp.pop 128.0
    %v86 = vmul.f32 %v54, %v85
    %v87 = vmul.f32 %v56, %v85
    %v88 = vmul.f32 %v58, %v85
    %v89 = vmul.f32 %v60, %v85
    %v90 = vmul.f32 %v62, %v85
    %v91 = vmul.f32 %v64, %v85
    %v92 = vmul.f32 %v66, %v85
    %v93 = vmul.f32 %v68, %v85
    %v94 = vmul.f32 %v70, %v85
    %v95 = vmul.f32 %v72, %v85
    %v96 = vmul.f32 %v74, %v85
    %v97 = vmul.f32 %v76, %v85
    %v98 = vmul.f32 %v78, %v85
    %v99 = vmul.f32 %v80, %v85
    %v100 = vmul.f32 %v82, %v85
    %v101 = vmul.f32 %v84, %v85
    %v102 = vsub.f32 %v35, %v86
    %v103 = vsub.f32 %v36, %v87
    %v104 = vsub.f32 %v37, %v88
    %v105 = vsub.f32 %v38, %v89
    %v106 = vsub.f32 %v39, %v90
    %v107 = vsub.f32 %v40, %v91
    %v108 = vsub.f32 %v41, %v92
    %v109 = vsub.f32 %v42, %v93
    %v110 = vsub.f32 %v43, %v94
    %v111 = vsub.f32 %v44, %v95
    %v112 = vsub.f32 %v45, %v96
    %v113 = vsub.f32 %v46, %v97
    %v114 = vsub.f32 %v47, %v98
    %v115 = vsub.f32 %v48, %v99
    %v116 = vsub.f32 %v49, %v100
    %v117 = vsub.f32 %v50, %v101
    %v118 = vmul.f32 %v102, %v102
    %v119 = vmul.f32 %v103, %v103
    %v120 = vmul.f32 %v104, %v104
    %v121 = vmul.f32 %v105, %v105
    %v122 = vmul.f32 %v106, %v106
    %v123 = vmul.f32 %v107, %v107
    %v124 = vmul.f32 %v108, %v108
    %v125 = vmul.f32 %v109, %v109
    %v126 = vmul.f32 %v110, %v110
    %v127 = vmul.f32 %v111, %v111
    %v128 = vmul.f32 %v112, %v112
    %v129 = vmul.f32 %v113, %v113
    %v130 = vmul.f32 %v114, %v114
    %v131 = vmul.f32 %v115, %v115
    %v132 = vmul.f32 %v116, %v116
    %v133 = vmul.f32 %v117, %v117
    %134 = vadd.xlane.f32.xlu0 %v118
    %v135 = vpop.xlane.xlu0 %134
    %136 = vadd.xlane.f32.xlu0 %v119
    %v137 = vpop.xlane.xlu0 %136
    %138 = vadd.xlane.f32.xlu0 %v120
    %v139 = vpop.xlane.xlu0 %138
    %140 = vadd.xlane.f32.xlu0 %v121
    %v141 = vpop.xlane.xlu0 %140
    %142 = vadd.xlane.f32.xlu0 %v122
    %v143 = vpop.xlane.xlu0 %142
    %144 = vadd.xlane.f32.xlu0 %v123
    %v145 = vpop.xlane.xlu0 %144
    %146 = vadd.xlane.f32.xlu0 %v124
    %v147 = vpop.xlane.xlu0 %146
    %148 = vadd.xlane.f32.xlu0 %v125
    %v149 = vpop.xlane.xlu0 %148
    %150 = vadd.xlane.f32.xlu0 %v126
    %v151 = vpop.xlane.xlu0 %150
    %152 = vadd.xlane.f32.xlu0 %v127
    %v153 = vpop.xlane.xlu0 %152
    %154 = vadd.xlane.f32.xlu0 %v128
    %v155 = vpop.xlane.xlu0 %154
    %156 = vadd.xlane.f32.xlu0 %v129
    %v157 = vpop.xlane.xlu0 %156
    %158 = vadd.xlane.f32.xlu0 %v130
    %v159 = vpop.xlane.xlu0 %158
    %160 = vadd.xlane.f32.xlu0 %v131
    %v161 = vpop.xlane.xlu0 %160
    %162 = vadd.xlane.f32.xlu0 %v132
    %v163 = vpop.xlane.xlu0 %162
    %164 = vadd.xlane.f32.xlu0 %v133
    %v165 = vpop.xlane.xlu0 %164
    %v166 = vmul.f32 %v135, %v85
    %v167 = vmul.f32 %v137, %v85
    %v168 = vmul.f32 %v139, %v85
    %v169 = vmul.f32 %v141, %v85
    %v170 = vmul.f32 %v143, %v85
    %v171 = vmul.f32 %v145, %v85
    %v172 = vmul.f32 %v147, %v85
    %v173 = vmul.f32 %v149, %v85
    %v174 = vmul.f32 %v151, %v85
    %v175 = vmul.f32 %v153, %v85
    %v176 = vmul.f32 %v155, %v85
    %v177 = vmul.f32 %v157, %v85
    %v178 = vmul.f32 %v159, %v85
    %v179 = vmul.f32 %v161, %v85
    %v180 = vmul.f32 %v163, %v85
    %v181 = vmul.f32 %v165, %v85
    %v182 = vadd.f32 %v166, 1e-05
    %v183 = vadd.f32 %v167, 1e-05
    %v184 = vadd.f32 %v168, 1e-05
    %v185 = vadd.f32 %v169, 1e-05
    %v186 = vadd.f32 %v170, 1e-05
    %v187 = vadd.f32 %v171, 1e-05
    %v188 = vadd.f32 %v172, 1e-05
    %v189 = vadd.f32 %v173, 1e-05
    %v190 = vadd.f32 %v174, 1e-05
    %v191 = vadd.f32 %v175, 1e-05
    %v192 = vadd.f32 %v176, 1e-05
    %v193 = vadd.f32 %v177, 1e-05
    %v194 = vadd.f32 %v178, 1e-05
    %v195 = vadd.f32 %v179, 1e-05
    %v196 = vadd.f32 %v180, 1e-05
    %v197 = vadd.f32 %v181, 1e-05
    %v198 = vrsqrt.pop %v182
    %v199 = vrsqrt.pop %v183
    %v200 = vrsqrt.pop %v184
    %v201 = vrsqrt.pop %v185
    %v202 = vrsqrt.pop %v186
    %v203 = vrsqrt.pop %v187
    %v204 = vrsqrt.pop %v188
    %v205 = vrsqrt.pop %v189
    %v206 = vrsqrt.pop %v190
    %v207 = vrsqrt.pop %v191
    %v208 = vrsqrt.pop %v192
    %v209 = vrsqrt.pop %v193
    %v210 = vrsqrt.pop %v194
    %v211 = vrsqrt.pop %v195
    %v212 = vrsqrt.pop %v196
    %v213 = vrsqrt.pop %v197
    %v214 = vmul.f32 %v102, %v198
    %v215 = vmul.f32 %v103, %v199
    %v216 = vmul.f32 %v104, %v200
    %v217 = vmul.f32 %v105, %v201
    %v218 = vmul.f32 %v106, %v202
    %v219 = vmul.f32 %v107, %v203
    %v220 = vmul.f32 %v108, %v204
    %v221 = vmul.f32 %v109, %v205
    %v222 = vmul.f32 %v110, %v206
    %v223 = vmul.f32 %v111, %v207
    %v224 = vmul.f32 %v112, %v208
    %v225 = vmul.f32 %v113, %v209
    %v226 = vmul.f32 %v114, %v210
    %v227 = vmul.f32 %v115, %v211
    %v228 = vmul.f32 %v116, %v212
    %v229 = vmul.f32 %v117, %v213
    %v231 = vlaneseq
    %v232 = vshrl.u32 %v231, 7
    %v233 = vsub.s32 0, %v232
    %v234 = vrot.slane %v51, %v233
    %v236 = vmul.f32 %v214, %v234
    %v237 = vmul.f32 %v215, %v234
    %v238 = vmul.f32 %v216, %v234
    %v239 = vmul.f32 %v217, %v234
    %v240 = vmul.f32 %v218, %v234
    %v241 = vmul.f32 %v219, %v234
    %v242 = vmul.f32 %v220, %v234
    %v243 = vmul.f32 %v221, %v234
    %v244 = vmul.f32 %v222, %v234
    %v245 = vmul.f32 %v223, %v234
    %v246 = vmul.f32 %v224, %v234
    %v247 = vmul.f32 %v225, %v234
    %v248 = vmul.f32 %v226, %v234
    %v249 = vmul.f32 %v227, %v234
    %v250 = vmul.f32 %v228, %v234
    %v251 = vmul.f32 %v229, %v234
    %v253 = vlaneseq
    %v254 = vshrl.u32 %v253, 7
    %v255 = vsub.s32 0, %v254
    %v256 = vrot.slane %v52, %v255
    %v258 = vadd.f32 %v236, %v256
    %v259 = vadd.f32 %v237, %v256
    %v260 = vadd.f32 %v238, %v256
    %v261 = vadd.f32 %v239, %v256
    %v262 = vadd.f32 %v240, %v256
    %v263 = vadd.f32 %v241, %v256
    %v264 = vadd.f32 %v242, %v256
    %v265 = vadd.f32 %v243, %v256
    %v266 = vadd.f32 %v244, %v256
    %v267 = vadd.f32 %v245, %v256
    %v268 = vadd.f32 %v246, %v256
    %v269 = vadd.f32 %v247, %v256
    %v270 = vadd.f32 %v248, %v256
    %v271 = vadd.f32 %v249, %v256
    %v272 = vadd.f32 %v250, %v256
    %v273 = vadd.f32 %v251, %v256
    %v274 = vpack.c.bf16 %v259, %v258
    %v275 = vpack.c.bf16 %v261, %v260
    %v276 = vpack.c.bf16 %v263, %v262
    %v277 = vpack.c.bf16 %v265, %v264
    %v278 = vpack.c.bf16 %v267, %v266
    %v279 = vpack.c.bf16 %v269, %v268
    %v280 = vpack.c.bf16 %v271, %v270
    %v281 = vpack.c.bf16 %v273, %v272
    %v282 = vld [vmem:[%s3] sm:$0xf]
    %v283 = vld [vmem:[%s3 + $0x4] sm:$0xf]
    %v284 = vld [vmem:[%s3 + $0x8] sm:$0xf]
    %v285 = vld [vmem:[%s3 + $0xc] sm:$0xf]
    %v286 = vld [vmem:[%s3 + $0x10] sm:$0xf]
    %v287 = vld [vmem:[%s3 + $0x14] sm:$0xf]
    %v288 = vld [vmem:[%s3 + $0x18] sm:$0xf]
    %v289 = vld [vmem:[%s3 + $0x1c] sm:$0xf]
    %v290 = vld [vmem:[%s3 + $0x20] sm:$0xf]
    %v291 = vld [vmem:[%s3 + $0x24] sm:$0xf]
    %v292 = vld [vmem:[%s3 + $0x28] sm:$0xf]
    %v293 = vld [vmem:[%s3 + $0x2c] sm:$0xf]
    %v294 = vld [vmem:[%s3 + $0x30] sm:$0xf]
    %v295 = vld [vmem:[%s3 + $0x34] sm:$0xf]
    %v296 = vld [vmem:[%s3 + $0x38] sm:$0xf]
    %v297 = vld [vmem:[%s3 + $0x3c] sm:$0xf]
    %v298 = vld [vmem:[%s3 + $0x40] sm:$0xf]
    %v299 = vld [vmem:[%s3 + $0x44] sm:$0xf]
    %v300 = vld [vmem:[%s3 + $0x48] sm:$0xf]
    %v301 = vld [vmem:[%s3 + $0x4c] sm:$0xf]
    %v302 = vld [vmem:[%s3 + $0x50] sm:$0xf]
    %v303 = vld [vmem:[%s3 + $0x54] sm:$0xf]
    %v304 = vld [vmem:[%s3 + $0x58] sm:$0xf]
    %v305 = vld [vmem:[%s3 + $0x5c] sm:$0xf]
    %v306 = vld [vmem:[%s3 + $0x60] sm:$0xf]
    %v307 = vld [vmem:[%s3 + $0x64] sm:$0xf]
    %v308 = vld [vmem:[%s3 + $0x68] sm:$0xf]
    %v309 = vld [vmem:[%s3 + $0x6c] sm:$0xf]
    %v310 = vld [vmem:[%s3 + $0x70] sm:$0xf]
    %v311 = vld [vmem:[%s3 + $0x74] sm:$0xf]
    %v312 = vld [vmem:[%s3 + $0x78] sm:$0xf]
    %v313 = vld [vmem:[%s3 + $0x7c] sm:$0xf]
    %v314 = vld [vmem:[%s3 + $0x80] sm:$0xf]
    %v315 = vld [vmem:[%s3 + $0x84] sm:$0xf]
    %v316 = vld [vmem:[%s3 + $0x88] sm:$0xf]
    %v317 = vld [vmem:[%s3 + $0x8c] sm:$0xf]
    %v318 = vld [vmem:[%s3 + $0x90] sm:$0xf]
    %v319 = vld [vmem:[%s3 + $0x94] sm:$0xf]
    %v320 = vld [vmem:[%s3 + $0x98] sm:$0xf]
    %v321 = vld [vmem:[%s3 + $0x9c] sm:$0xf]
    %v322 = vld [vmem:[%s3 + $0xa0] sm:$0xf]
    %v323 = vld [vmem:[%s3 + $0xa4] sm:$0xf]
    %v324 = vld [vmem:[%s3 + $0xa8] sm:$0xf]
    %v325 = vld [vmem:[%s3 + $0xac] sm:$0xf]
    %v326 = vld [vmem:[%s3 + $0xb0] sm:$0xf]
    %v327 = vld [vmem:[%s3 + $0xb4] sm:$0xf]
    %v328 = vld [vmem:[%s3 + $0xb8] sm:$0xf]
    %v329 = vld [vmem:[%s3 + $0xbc] sm:$0xf]
    %v330 = vld [vmem:[%s3 + $0xc0] sm:$0xf]
    %v331 = vld [vmem:[%s3 + $0xc4] sm:$0xf]
    %v332 = vld [vmem:[%s3 + $0xc8] sm:$0xf]
    %v333 = vld [vmem:[%s3 + $0xcc] sm:$0xf]
    %v334 = vld [vmem:[%s3 + $0xd0] sm:$0xf]
    %v335 = vld [vmem:[%s3 + $0xd4] sm:$0xf]
    %v336 = vld [vmem:[%s3 + $0xd8] sm:$0xf]
    %v337 = vld [vmem:[%s3 + $0xdc] sm:$0xf]
    %v338 = vld [vmem:[%s3 + $0xe0] sm:$0xf]
    %v339 = vld [vmem:[%s3 + $0xe4] sm:$0xf]
    %v340 = vld [vmem:[%s3 + $0xe8] sm:$0xf]
    %v341 = vld [vmem:[%s3 + $0xec] sm:$0xf]
    %v342 = vld [vmem:[%s3 + $0xf0] sm:$0xf]
    %v343 = vld [vmem:[%s3 + $0xf4] sm:$0xf]
    %v344 = vld [vmem:[%s3 + $0xf8] sm:$0xf]
    %v345 = vld [vmem:[%s3 + $0xfc] sm:$0xf]
    %v410 = vunpack.c.l.b16 %v282
    %v411 = vunpack.c.l.b16 %v283
    %v412 = vunpack.c.l.b16 %v284
    %v413 = vunpack.c.l.b16 %v285
    %v414 = vunpack.c.l.b16 %v286
    %v415 = vunpack.c.l.b16 %v287
    %v416 = vunpack.c.l.b16 %v288
    %v417 = vunpack.c.l.b16 %v289
    %v418 = vunpack.c.l.b16 %v290
    %v419 = vunpack.c.l.b16 %v291
    %v420 = vunpack.c.l.b16 %v292
    %v421 = vunpack.c.l.b16 %v293
    %v422 = vunpack.c.l.b16 %v294
    %v423 = vunpack.c.l.b16 %v295
    %v424 = vunpack.c.l.b16 %v296
    %v425 = vunpack.c.l.b16 %v297
    %v426 = vunpack.c.l.b16 %v298
    %v427 = vunpack.c.l.b16 %v299
    %v428 = vunpack.c.l.b16 %v300
    %v429 = vunpack.c.l.b16 %v301
    %v430 = vunpack.c.l.b16 %v302
    %v431 = vunpack.c.l.b16 %v303
    %v432 = vunpack.c.l.b16 %v304
    %v433 = vunpack.c.l.b16 %v305
    %v434 = vunpack.c.l.b16 %v306
    %v435 = vunpack.c.l.b16 %v307
    %v436 = vunpack.c.l.b16 %v308
    %v437 = vunpack.c.l.b16 %v309
    %v438 = vunpack.c.l.b16 %v310
    %v439 = vunpack.c.l.b16 %v311
    %v440 = vunpack.c.l.b16 %v312
    %v441 = vunpack.c.l.b16 %v313
    %v442 = vunpack.c.l.b16 %v314
    %v443 = vunpack.c.l.b16 %v315
    %v444 = vunpack.c.l.b16 %v316
    %v445 = vunpack.c.l.b16 %v317
    %v446 = vunpack.c.l.b16 %v318
    %v447 = vunpack.c.l.b16 %v319
    %v448 = vunpack.c.l.b16 %v320
    %v449 = vunpack.c.l.b16 %v321
    %v450 = vunpack.c.l.b16 %v322
    %v451 = vunpack.c.l.b16 %v323
    %v452 = vunpack.c.l.b16 %v324
    %v453 = vunpack.c.l.b16 %v325
    %v454 = vunpack.c.l.b16 %v326
    %v455 = vunpack.c.l.b16 %v327
    %v456 = vunpack.c.l.b16 %v328
    %v457 = vunpack.c.l.b16 %v329
    %v458 = vunpack.c.l.b16 %v330
    %v459 = vunpack.c.l.b16 %v331
    %v460 = vunpack.c.l.b16 %v332
    %v461 = vunpack.c.l.b16 %v333
    %v462 = vunpack.c.l.b16 %v334
    %v463 = vunpack.c.l.b16 %v335
    %v464 = vunpack.c.l.b16 %v336
    %v465 = vunpack.c.l.b16 %v337
    %v466 = vunpack.c.l.b16 %v338
    %v467 = vunpack.c.l.b16 %v339
    %v468 = vunpack.c.l.b16 %v340
    %v469 = vunpack.c.l.b16 %v341
    %v470 = vunpack.c.l.b16 %v342
    %v471 = vunpack.c.l.b16 %v343
    %v472 = vunpack.c.l.b16 %v344
    %v473 = vunpack.c.l.b16 %v345
    %v474 = vpack.c.b16 %v411, %v410
    %v475 = vpack.c.b16 %v413, %v412
    %v476 = vpack.c.b16 %v415, %v414
    %v477 = vpack.c.b16 %v417, %v416
    %v478 = vpack.c.b16 %v419, %v418
    %v479 = vpack.c.b16 %v421, %v420
    %v480 = vpack.c.b16 %v423, %v422
    %v481 = vpack.c.b16 %v425, %v424
    %v482 = vpack.c.b16 %v427, %v426
    %v483 = vpack.c.b16 %v429, %v428
    %v484 = vpack.c.b16 %v431, %v430
    %v485 = vpack.c.b16 %v433, %v432
    %v486 = vpack.c.b16 %v435, %v434
    %v487 = vpack.c.b16 %v437, %v436
    %v488 = vpack.c.b16 %v439, %v438
    %v489 = vpack.c.b16 %v441, %v440
    %v490 = vpack.c.b16 %v443, %v442
    %v491 = vpack.c.b16 %v445, %v444
    %v492 = vpack.c.b16 %v447, %v446
    %v493 = vpack.c.b16 %v449, %v448
    %v494 = vpack.c.b16 %v451, %v450
    %v495 = vpack.c.b16 %v453, %v452
    %v496 = vpack.c.b16 %v455, %v454
    %v497 = vpack.c.b16 %v457, %v456
    %v498 = vpack.c.b16 %v459, %v458
    %v499 = vpack.c.b16 %v461, %v460
    %v500 = vpack.c.b16 %v463, %v462
    %v501 = vpack.c.b16 %v465, %v464
    %v502 = vpack.c.b16 %v467, %v466
    %v503 = vpack.c.b16 %v469, %v468
    %v504 = vpack.c.b16 %v471, %v470
    %v505 = vpack.c.b16 %v473, %v472
    %538 = vmatprep.subr.bf16.mxu0 0
    %539 = vmatpush1.bf16.xpose.msra.mxu0 %v474
    %540 = vmatprep.subr.bf16.mxu0 0
    %541 = vmatpush1.bf16.xpose.msra.mxu0 %v475
    %542 = vmatprep.subr.bf16.mxu0 0
    %543 = vmatpush1.bf16.xpose.msra.mxu0 %v476
    %544 = vmatprep.subr.bf16.mxu0 0
    %545 = vmatpush1.bf16.xpose.msra.mxu0 %v477
    %546 = vmatprep.subr.bf16.mxu0 0
    %547 = vmatpush1.bf16.xpose.msra.mxu0 %v478
    %548 = vmatprep.subr.bf16.mxu0 0
    %549 = vmatpush1.bf16.xpose.msra.mxu0 %v479
    %550 = vmatprep.subr.bf16.mxu0 0
    %551 = vmatpush1.bf16.xpose.msra.mxu0 %v480
    %552 = vmatprep.subr.bf16.mxu0 0
    %553 = vmatpush1.bf16.xpose.msra.mxu0 %v481
    %554 = vmatprep.subr.bf16.mxu0 0
    %555 = vmatpush1.bf16.xpose.msra.mxu0 %v482
    %556 = vmatprep.subr.bf16.mxu0 0
    %557 = vmatpush1.bf16.xpose.msra.mxu0 %v483
    %558 = vmatprep.subr.bf16.mxu0 0
    %559 = vmatpush1.bf16.xpose.msra.mxu0 %v484
    %560 = vmatprep.subr.bf16.mxu0 0
    %561 = vmatpush1.bf16.xpose.msra.mxu0 %v485
    %562 = vmatprep.subr.bf16.mxu0 0
    %563 = vmatpush1.bf16.xpose.msra.mxu0 %v486
    %564 = vmatprep.subr.bf16.mxu0 0
    %565 = vmatpush1.bf16.xpose.msra.mxu0 %v487
    %566 = vmatprep.subr.bf16.mxu0 0
    %567 = vmatpush1.bf16.xpose.msra.mxu0 %v488
    %568 = vmatprep.subr.bf16.mxu0 0
    %569 = vmatpush1.bf16.xpose.msra.mxu0 %v489
    %570 = vmatprep.mubr.bf16.mxu0 0
    %571 = vmatmul.mubr.bf16.gmra.mrb[0].mxu0 %v274
    %v572 = vpop.f32.mrb[0].mxu0
    %v573 = vadd.f32 0.0, %v572
    %v574 = vpop.f32.mrb[0].mxu0
    %v575 = vadd.f32 0.0, %v574
    %v576 = vpop.f32.mrb[0].mxu0
    %v577 = vadd.f32 0.0, %v576
    %v578 = vpop.f32.mrb[0].mxu0
    %v579 = vadd.f32 0.0, %v578
    %580 = vmatprep.mubr.bf16.mxu0 0
    %581 = vmatmul.mubr.bf16.gmra.mrb[0].mxu0 %v275
    %v582 = vpop.f32.mrb[0].mxu0
    %v583 = vadd.f32 0.0, %v582
    %v584 = vpop.f32.mrb[0].mxu0
    %v585 = vadd.f32 0.0, %v584
    %v586 = vpop.f32.mrb[0].mxu0
    %v587 = vadd.f32 0.0, %v586
    %v588 = vpop.f32.mrb[0].mxu0
    %v589 = vadd.f32 0.0, %v588
    %590 = vmatprep.mubr.bf16.mxu0 0
    %591 = vmatmul.mubr.bf16.gmra.mrb[0].mxu0 %v276
    %v592 = vpop.f32.mrb[0].mxu0
    %v593 = vadd.f32 0.0, %v592
    %v594 = vpop.f32.mrb[0].mxu0
    %v595 = vadd.f32 0.0, %v594
    %v596 = vpop.f32.mrb[0].mxu0
    %v597 = vadd.f32 0.0, %v596
    %v598 = vpop.f32.mrb[0].mxu0
    %v599 = vadd.f32 0.0, %v598
    %600 = vmatprep.mubr.bf16.mxu0 0
    %601 = vmatmul.mubr.bf16.gmra.mrb[0].mxu0 %v277
    %v602 = vpop.f32.mrb[0].mxu0
    %v603 = vadd.f32 0.0, %v602
    %v604 = vpop.f32.mrb[0].mxu0
    %v605 = vadd.f32 0.0, %v604
    %v606 = vpop.f32.mrb[0].mxu0
    %v607 = vadd.f32 0.0, %v606
    %v608 = vpop.f32.mrb[0].mxu0
    %v609 = vadd.f32 0.0, %v608
    %610 = vmatprep.mubr.bf16.mxu0 0
    %611 = vmatmul.mubr.bf16.gmra.mrb[0].mxu0 %v278
    %v612 = vpop.f32.mrb[0].mxu0
    %v613 = vadd.f32 0.0, %v612
    %v614 = vpop.f32.mrb[0].mxu0
    %v615 = vadd.f32 0.0, %v614
    %v616 = vpop.f32.mrb[0].mxu0
    %v617 = vadd.f32 0.0, %v616
    %v618 = vpop.f32.mrb[0].mxu0
    %v619 = vadd.f32 0.0, %v618
    %620 = vmatprep.mubr.bf16.mxu0 0
    %621 = vmatmul.mubr.bf16.gmra.mrb[0].mxu0 %v279
    %v622 = vpop.f32.mrb[0].mxu0
    %v623 = vadd.f32 0.0, %v622
    %v624 = vpop.f32.mrb[0].mxu0
    %v625 = vadd.f32 0.0, %v624
    %v626 = vpop.f32.mrb[0].mxu0
    %v627 = vadd.f32 0.0, %v626
    %v628 = vpop.f32.mrb[0].mxu0
    %v629 = vadd.f32 0.0, %v628
    %630 = vmatprep.mubr.bf16.mxu0 0
    %631 = vmatmul.mubr.bf16.gmra.mrb[0].mxu0 %v280
    %v632 = vpop.f32.mrb[0].mxu0
    %v633 = vadd.f32 0.0, %v632
    %v634 = vpop.f32.mrb[0].mxu0
    %v635 = vadd.f32 0.0, %v634
    %v636 = vpop.f32.mrb[0].mxu0
    %v637 = vadd.f32 0.0, %v636
    %v638 = vpop.f32.mrb[0].mxu0
    %v639 = vadd.f32 0.0, %v638
    %640 = vmatprep.mubr.bf16.mxu0 0
    %641 = vmatmul.mubr.bf16.gmra.mrb[0].mxu0 %v281
    %v642 = vpop.f32.mrb[0].mxu0
    %v643 = vadd.f32 0.0, %v642
    %v644 = vpop.f32.mrb[0].mxu0
    %v645 = vadd.f32 0.0, %v644
    %v646 = vpop.f32.mrb[0].mxu0
    %v647 = vadd.f32 0.0, %v646
    %v648 = vpop.f32.mrb[0].mxu0
    %v649 = vadd.f32 0.0, %v648
    %650 = vdwg.mxu0
    %651 = vmatprep.subr.bf16.mxu0 0
    %652 = vmatpush1.bf16.xpose.msra.mxu0 %v490
    %653 = vmatprep.subr.bf16.mxu0 0
    %654 = vmatpush1.bf16.xpose.msra.mxu0 %v491
    %655 = vmatprep.subr.bf16.mxu0 0
    %656 = vmatpush1.bf16.xpose.msra.mxu0 %v492
    %657 = vmatprep.subr.bf16.mxu0 0
    %658 = vmatpush1.bf16.xpose.msra.mxu0 %v493
    %659 = vmatprep.subr.bf16.mxu0 0
    %660 = vmatpush1.bf16.xpose.msra.mxu0 %v494
    %661 = vmatprep.subr.bf16.mxu0 0
    %662 = vmatpush1.bf16.xpose.msra.mxu0 %v495
    %663 = vmatprep.subr.bf16.mxu0 0
    %664 = vmatpush1.bf16.xpose.msra.mxu0 %v496
    %665 = vmatprep.subr.bf16.mxu0 0
    %666 = vmatpush1.bf16.xpose.msra.mxu0 %v497
    %667 = vmatprep.subr.bf16.mxu0 0
    %668 = vmatpush1.bf16.xpose.msra.mxu0 %v498
    %669 = vmatprep.subr.bf16.mxu0 0
    %670 = vmatpush1.bf16.xpose.msra.mxu0 %v499
    %671 = vmatprep.subr.bf16.mxu0 0
    %672 = vmatpush1.bf16.xpose.msra.mxu0 %v500
    %673 = vmatprep.subr.bf16.mxu0 0
    %674 = vmatpush1.bf16.xpose.msra.mxu0 %v501
    %675 = vmatprep.subr.bf16.mxu0 0
    %676 = vmatpush1.bf16.xpose.msra.mxu0 %v502
    %677 = vmatprep.subr.bf16.mxu0 0
    %678 = vmatpush1.bf16.xpose.msra.mxu0 %v503
    %679 = vmatprep.subr.bf16.mxu0 0
    %680 = vmatpush1.bf16.xpose.msra.mxu0 %v504
    %681 = vmatprep.subr.bf16.mxu0 0
    %682 = vmatpush1.bf16.xpose.msra.mxu0 %v505
    %683 = vmatprep.mubr.bf16.mxu0 0
    %684 = vmatmul.mubr.bf16.gmra.mrb[0].mxu0 %v274
    %v685 = vpop.f32.mrb[0].mxu0
    %v686 = vadd.f32 0.0, %v685
    %v687 = vpop.f32.mrb[0].mxu0
    %v688 = vadd.f32 0.0, %v687
    %v689 = vpop.f32.mrb[0].mxu0
    %v690 = vadd.f32 0.0, %v689
    %v691 = vpop.f32.mrb[0].mxu0
    %v692 = vadd.f32 0.0, %v691
    %693 = vmatprep.mubr.bf16.mxu0 0
    %694 = vmatmul.mubr.bf16.gmra.mrb[0].mxu0 %v275
    %v695 = vpop.f32.mrb[0].mxu0
    %v696 = vadd.f32 0.0, %v695
    %v697 = vpop.f32.mrb[0].mxu0
    %v698 = vadd.f32 0.0, %v697
    %v699 = vpop.f32.mrb[0].mxu0
    %v700 = vadd.f32 0.0, %v699
    %v701 = vpop.f32.mrb[0].mxu0
    %v702 = vadd.f32 0.0, %v701
    %703 = vmatprep.mubr.bf16.mxu0 0
    %704 = vmatmul.mubr.bf16.gmra.mrb[0].mxu0 %v276
    %v705 = vpop.f32.mrb[0].mxu0
    %v706 = vadd.f32 0.0, %v705
    %v707 = vpop.f32.mrb[0].mxu0
    %v708 = vadd.f32 0.0, %v707
    %v709 = vpop.f32.mrb[0].mxu0
    %v710 = vadd.f32 0.0, %v709
    %v711 = vpop.f32.mrb[0].mxu0
    %v712 = vadd.f32 0.0, %v711
    %713 = vmatprep.mubr.bf16.mxu0 0
    %714 = vmatmul.mubr.bf16.gmra.mrb[0].mxu0 %v277
    %v715 = vpop.f32.mrb[0].mxu0
    %v716 = vadd.f32 0.0, %v715
    %v717 = vpop.f32.mrb[0].mxu0
    %v718 = vadd.f32 0.0, %v717
    %v719 = vpop.f32.mrb[0].mxu0
    %v720 = vadd.f32 0.0, %v719
    %v721 = vpop.f32.mrb[0].mxu0
    %v722 = vadd.f32 0.0, %v721
    %723 = vmatprep.mubr.bf16.mxu0 0
    %724 = vmatmul.mubr.bf16.gmra.mrb[0].mxu0 %v278
    %v725 = vpop.f32.mrb[0].mxu0
    %v726 = vadd.f32 0.0, %v725
    %v727 = vpop.f32.mrb[0].mxu0
    %v728 = vadd.f32 0.0, %v727
    %v729 = vpop.f32.mrb[0].mxu0
    %v730 = vadd.f32 0.0, %v729
    %v731 = vpop.f32.mrb[0].mxu0
    %v732 = vadd.f32 0.0, %v731
    %733 = vmatprep.mubr.bf16.mxu0 0
    %734 = vmatmul.mubr.bf16.gmra.mrb[0].mxu0 %v279
    %v735 = vpop.f32.mrb[0].mxu0
    %v736 = vadd.f32 0.0, %v735
    %v737 = vpop.f32.mrb[0].mxu0
    %v738 = vadd.f32 0.0, %v737
    %v739 = vpop.f32.mrb[0].mxu0
    %v740 = vadd.f32 0.0, %v739
    %v741 = vpop.f32.mrb[0].mxu0
    %v742 = vadd.f32 0.0, %v741
    %743 = vmatprep.mubr.bf16.mxu0 0
    %744 = vmatmul.mubr.bf16.gmra.mrb[0].mxu0 %v280
    %v745 = vpop.f32.mrb[0].mxu0
    %v746 = vadd.f32 0.0, %v745
    %v747 = vpop.f32.mrb[0].mxu0
    %v748 = vadd.f32 0.0, %v747
    %v749 = vpop.f32.mrb[0].mxu0
    %v750 = vadd.f32 0.0, %v749
    %v751 = vpop.f32.mrb[0].mxu0
    %v752 = vadd.f32 0.0, %v751
    %753 = vmatprep.mubr.bf16.mxu0 0
    %754 = vmatmul.mubr.bf16.gmra.mrb[0].mxu0 %v281
    %v755 = vpop.f32.mrb[0].mxu0
    %v756 = vadd.f32 0.0, %v755
    %v757 = vpop.f32.mrb[0].mxu0
    %v758 = vadd.f32 0.0, %v757
    %v759 = vpop.f32.mrb[0].mxu0
    %v760 = vadd.f32 0.0, %v759
    %v761 = vpop.f32.mrb[0].mxu0
    %v762 = vadd.f32 0.0, %v761
    %763 = vdwg.mxu0
    %764 = vst [vmem:[#allocation2] sm:$0xff] %v573
    %765 = vst [vmem:[#allocation2 + $0x8] sm:$0xff] %v575
    %766 = vst [vmem:[#allocation2 + $0x10] sm:$0xff] %v686
    %767 = vst [vmem:[#allocation2 + $0x18] sm:$0xff] %v688
    %768 = vst [vmem:[#allocation2 + $0x20] sm:$0xff] %v577
    %769 = vst [vmem:[#allocation2 + $0x28] sm:$0xff] %v579
    %770 = vst [vmem:[#allocation2 + $0x30] sm:$0xff] %v690
    %771 = vst [vmem:[#allocation2 + $0x38] sm:$0xff] %v692
    %772 = vst [vmem:[#allocation2 + $0x40] sm:$0xff] %v583
    %773 = vst [vmem:[#allocation2 + $0x48] sm:$0xff] %v585
    %774 = vst [vmem:[#allocation2 + $0x50] sm:$0xff] %v696
    %775 = vst [vmem:[#allocation2 + $0x58] sm:$0xff] %v698
    %776 = vst [vmem:[#allocation2 + $0x60] sm:$0xff] %v587
    %777 = vst [vmem:[#allocation2 + $0x68] sm:$0xff] %v589
    %778 = vst [vmem:[#allocation2 + $0x70] sm:$0xff] %v700
    %779 = vst [vmem:[#allocation2 + $0x78] sm:$0xff] %v702
    %780 = vst [vmem:[#allocation2 + $0x80] sm:$0xff] %v593
    %781 = vst [vmem:[#allocation2 + $0x88] sm:$0xff] %v595
    %782 = vst [vmem:[#allocation2 + $0x90] sm:$0xff] %v706
    %783 = vst [vmem:[#allocation2 + $0x98] sm:$0xff] %v708
    %784 = vst [vmem:[#allocation2 + $0xa0] sm:$0xff] %v597
    %785 = vst [vmem:[#allocation2 + $0xa8] sm:$0xff] %v599
    %786 = vst [vmem:[#allocation2 + $0xb0] sm:$0xff] %v710
    %787 = vst [vmem:[#allocation2 + $0xb8] sm:$0xff] %v712
    %788 = vst [vmem:[#allocation2 + $0xc0] sm:$0xff] %v603
    %789 = vst [vmem:[#allocation2 + $0xc8] sm:$0xff] %v605
    %790 = vst [vmem:[#allocation2 + $0xd0] sm:$0xff] %v716
    %791 = vst [vmem:[#allocation2 + $0xd8] sm:$0xff] %v718
    %792 = vst [vmem:[#allocation2 + $0xe0] sm:$0xff] %v607
    %793 = vst [vmem:[#allocation2 + $0xe8] sm:$0xff] %v609
    %794 = vst [vmem:[#allocation2 + $0xf0] sm:$0xff] %v720
    %795 = vst [vmem:[#allocation2 + $0xf8] sm:$0xff] %v722
    %796 = vst [vmem:[#allocation2 + $0x100] sm:$0xff] %v613
    %797 = vst [vmem:[#allocation2 + $0x108] sm:$0xff] %v615
    %798 = vst [vmem:[#allocation2 + $0x110] sm:$0xff] %v726
    %799 = vst [vmem:[#allocation2 + $0x118] sm:$0xff] %v728
    %800 = vst [vmem:[#allocation2 + $0x120] sm:$0xff] %v617
    %801 = vst [vmem:[#allocation2 + $0x128] sm:$0xff] %v619
    %802 = vst [vmem:[#allocation2 + $0x130] sm:$0xff] %v730
    %803 = vst [vmem:[#allocation2 + $0x138] sm:$0xff] %v732
    %804 = vst [vmem:[#allocation2 + $0x140] sm:$0xff] %v623
    %805 = vst [vmem:[#allocation2 + $0x148] sm:$0xff] %v625
    %806 = vst [vmem:[#allocation2 + $0x150] sm:$0xff] %v736
    %807 = vst [vmem:[#allocation2 + $0x158] sm:$0xff] %v738
    %808 = vst [vmem:[#allocation2 + $0x160] sm:$0xff] %v627
    %809 = vst [vmem:[#allocation2 + $0x168] sm:$0xff] %v629
    %810 = vst [vmem:[#allocation2 + $0x170] sm:$0xff] %v740
    %811 = vst [vmem:[#allocation2 + $0x178] sm:$0xff] %v742
    %812 = vst [vmem:[#allocation2 + $0x180] sm:$0xff] %v633
    %813 = vst [vmem:[#allocation2 + $0x188] sm:$0xff] %v635
    %814 = vst [vmem:[#allocation2 + $0x190] sm:$0xff] %v746
    %815 = vst [vmem:[#allocation2 + $0x198] sm:$0xff] %v748
    %816 = vst [vmem:[#allocation2 + $0x1a0] sm:$0xff] %v637
    %817 = vst [vmem:[#allocation2 + $0x1a8] sm:$0xff] %v639
    %818 = vst [vmem:[#allocation2 + $0x1b0] sm:$0xff] %v750
    %819 = vst [vmem:[#allocation2 + $0x1b8] sm:$0xff] %v752
    %820 = vst [vmem:[#allocation2 + $0x1c0] sm:$0xff] %v643
    %821 = vst [vmem:[#allocation2 + $0x1c8] sm:$0xff] %v645
    %822 = vst [vmem:[#allocation2 + $0x1d0] sm:$0xff] %v756
    %823 = vst [vmem:[#allocation2 + $0x1d8] sm:$0xff] %v758
    %824 = vst [vmem:[#allocation2 + $0x1e0] sm:$0xff] %v647
    %825 = vst [vmem:[#allocation2 + $0x1e8] sm:$0xff] %v649
    %826 = vst [vmem:[#allocation2 + $0x1f0] sm:$0xff] %v760
    %827 = vst [vmem:[#allocation2 + $0x1f8] sm:$0xff] %v762
    // Predicated region
    $region18: #{text_decoder_forward.33} parent=1 // pred_check
      _
    $region19: #{text_decoder_forward.33} parent=1 // pred_check_branch
      %829 = sbr.rel (0) target = $region21
    $region20: #{text_decoder_forward.33} parent=1 // pred_region
      %s831 = ssub.s32 8192, 8192
      %832 = vsyncadd [#allocation3], %s831
      %s833 = sshll.u32 [#allocation2], 4
      %s834 = int_to_ptr.vmem [resolvable:$true] %s833
      %839 = dma.vmem_to_hbm [thread:$0]  %s834, 8192, %s4, [#allocation3], 512, 512, 32
    $region21: #{text_decoder_forward.33} parent=1 // pred_fallthru
      _
    // Predicated region
    $region22: #{text_decoder_forward.33} parent=1 // pred_check
      _
    $region23: #{text_decoder_forward.33} parent=1 // pred_check_branch
      %841 = sbr.rel (0) target = $region25
    $region24: #{text_decoder_forward.33} parent=1 // pred_region
      %842 = dma.done [#allocation3], 8192
    $region25: #{text_decoder_forward.33} parent=1 // pred_fallthru
      _
    %843 = vsyncpa [#allocation3], 1

// kernel: text_decoder_forward.24
$region0: #{text_decoder_forward.24}
  #allocation0 [shape = 'u32[]', space=smem, size = 0x4, offset = 0x4, fixed_abs, tag = 'smem constant byte address 0x4 - core index']
  #allocation1 [shape = 'u32[144,128]{1,0:T(1,128)}', space=vmem, size = 0x12000, scoped, tag = 'internal scratch']
  #allocation2 [shape = 'f32[128,128]{1,0:T(8,128)}', space=vmem, size = 0x10000, scoped, tag = 'scratch operand']
  %s0 = inlined_call_operand.vmem [shape: bf16[128,128], index: 0, kind: input, shape index: {}]
  %s1 = inlined_call_operand.vmem [shape: f32[1,128], index: 1, kind: input, shape index: {}]
  %s2 = inlined_call_operand.vmem [shape: f32[1,128], index: 2, kind: input, shape index: {}]
  %s3 = inlined_call_operand.vmem [shape: bf16[128,512], index: 3, kind: input, shape index: {}]
  %s4 = inlined_call_operand.vmem [shape: f32[1,512], index: 4, kind: input, shape index: {}]
  %s5 = inlined_call_operand.vmem [shape: bf16[512,128], index: 5, kind: input, shape index: {}]
  %s6 = inlined_call_operand.vmem [shape: f32[1,128], index: 6, kind: input, shape index: {}]
  %s7 = inlined_call_operand.vmem [shape: bf16[128,128], index: 7, kind: output, shape index: {}]
  %s8 = sld [smem:[#allocation0]]
  $region46: #{text_decoder_forward.24} parent=0
    _
  %s10 = ssub.s32 1, %s8
  %s11 = scalar_select 0, %s10, %s8
  // Predicated region
  $region2: #{text_decoder_forward.24} parent=0 // pred_check
    _
  $region3: #{text_decoder_forward.24} parent=0 // pred_check_branch
    %13 = sbr.rel (0) target = $region5
  $region4: #{text_decoder_forward.24} parent=0 // pred_region
    _
  $region5: #{text_decoder_forward.24} parent=0 // pred_fallthru
    _
  // Predicated region
  $region6: #{text_decoder_forward.24} parent=0 // pred_check
    _
  $region7: #{text_decoder_forward.24} parent=0 // pred_check_branch
    %15 = sbr.rel (0) target = $region9
  $region8: #{text_decoder_forward.24} parent=0 // pred_region
    _
  $region9: #{text_decoder_forward.24} parent=0 // pred_fallthru
    _
  // Predicated region
  $region10: #{text_decoder_forward.24} parent=0 // pred_check
    _
  $region11: #{text_decoder_forward.24} parent=0 // pred_check_branch
    %17 = sbr.rel (0) target = $region13
  $region12: #{text_decoder_forward.24} parent=0 // pred_region
    _
  $region13: #{text_decoder_forward.24} parent=0 // pred_fallthru
    _
  // Predicated region
  $region14: #{text_decoder_forward.24} parent=0 // pred_check
    _
  $region15: #{text_decoder_forward.24} parent=0 // pred_check_branch
    %19 = sbr.rel (0) target = $region17
  $region16: #{text_decoder_forward.24} parent=0 // pred_region
    _
  $region17: #{text_decoder_forward.24} parent=0 // pred_fallthru
    _
  // Predicated region
  $region18: #{text_decoder_forward.24} parent=0 // pred_check
    _
  $region19: #{text_decoder_forward.24} parent=0 // pred_check_branch
    %21 = sbr.rel (0) target = $region21
  $region20: #{text_decoder_forward.24} parent=0 // pred_region
    _
  $region21: #{text_decoder_forward.24} parent=0 // pred_fallthru
    _
  // Predicated region
  $region22: #{text_decoder_forward.24} parent=0 // pred_check
    _
  $region23: #{text_decoder_forward.24} parent=0 // pred_check_branch
    %23 = sbr.rel (0) target = $region25
  $region24: #{text_decoder_forward.24} parent=0 // pred_region
    _
  $region25: #{text_decoder_forward.24} parent=0 // pred_fallthru
    _
  // Predicated region
  $region26: #{text_decoder_forward.24} parent=0 // pred_check
    _
  $region27: #{text_decoder_forward.24} parent=0 // pred_check_branch
    %25 = sbr.rel (0) target = $region29
  $region28: #{text_decoder_forward.24} parent=0 // pred_region
    _
  $region29: #{text_decoder_forward.24} parent=0 // pred_fallthru
    _
  %p27 = scmp.eq.s32.totalorder 0, 0
  // Predicated region
  $region30: #{text_decoder_forward.24} parent=0 // pred_check
    %p28 = pneg %p27
  $region31: #{text_decoder_forward.24} parent=0 // pred_check_branch
    %30 = sbr.rel (%p28) target = $region33
  $region32: #{text_decoder_forward.24} parent=0 // pred_region
    %31 = vst [vmem:[#allocation2] sm:$0xff] 0.0
    %32 = vst [vmem:[#allocation2 + $0x8] sm:$0xff] 0.0
    %33 = vst [vmem:[#allocation2 + $0x10] sm:$0xff] 0.0
    %34 = vst [vmem:[#allocation2 + $0x18] sm:$0xff] 0.0
    %35 = vst [vmem:[#allocation2 + $0x20] sm:$0xff] 0.0
    %36 = vst [vmem:[#allocation2 + $0x28] sm:$0xff] 0.0
    %37 = vst [vmem:[#allocation2 + $0x30] sm:$0xff] 0.0
    %38 = vst [vmem:[#allocation2 + $0x38] sm:$0xff] 0.0
    %39 = vst [vmem:[#allocation2 + $0x40] sm:$0xff] 0.0
    %40 = vst [vmem:[#allocation2 + $0x48] sm:$0xff] 0.0
    %41 = vst [vmem:[#allocation2 + $0x50] sm:$0xff] 0.0
    %42 = vst [vmem:[#allocation2 + $0x58] sm:$0xff] 0.0
    %43 = vst [vmem:[#allocation2 + $0x60] sm:$0xff] 0.0
    %44 = vst [vmem:[#allocation2 + $0x68] sm:$0xff] 0.0
    %45 = vst [vmem:[#allocation2 + $0x70] sm:$0xff] 0.0
    %46 = vst [vmem:[#allocation2 + $0x78] sm:$0xff] 0.0
  $region33: #{text_decoder_forward.24} parent=0 // pred_fallthru
    _
  %v47 = vld [vmem:[%s0] sm:$0xf]
  %v48 = vld [vmem:[%s0 + $0x4] sm:$0xf]
  %v49 = vld [vmem:[%s0 + $0x8] sm:$0xf]
  %v50 = vld [vmem:[%s0 + $0xc] sm:$0xf]
  %v51 = vld [vmem:[%s0 + $0x10] sm:$0xf]
  %v52 = vld [vmem:[%s0 + $0x14] sm:$0xf]
  %v53 = vld [vmem:[%s0 + $0x18] sm:$0xf]
  %v54 = vld [vmem:[%s0 + $0x1c] sm:$0xf]
  %v55 = vld [vmem:[%s0 + $0x20] sm:$0xf]
  %v56 = vld [vmem:[%s0 + $0x24] sm:$0xf]
  %v57 = vld [vmem:[%s0 + $0x28] sm:$0xf]
  %v58 = vld [vmem:[%s0 + $0x2c] sm:$0xf]
  %v59 = vld [vmem:[%s0 + $0x30] sm:$0xf]
  %v60 = vld [vmem:[%s0 + $0x34] sm:$0xf]
  %v61 = vld [vmem:[%s0 + $0x38] sm:$0xf]
  %v62 = vld [vmem:[%s0 + $0x3c] sm:$0xf]
  %v63 = vunpack.c.l.bf16 %v47
  %v64 = vunpack.c.l.bf16 %v48
  %v65 = vunpack.c.l.bf16 %v49
  %v66 = vunpack.c.l.bf16 %v50
  %v67 = vunpack.c.l.bf16 %v51
  %v68 = vunpack.c.l.bf16 %v52
  %v69 = vunpack.c.l.bf16 %v53
  %v70 = vunpack.c.l.bf16 %v54
  %v71 = vunpack.c.l.bf16 %v55
  %v72 = vunpack.c.l.bf16 %v56
  %v73 = vunpack.c.l.bf16 %v57
  %v74 = vunpack.c.l.bf16 %v58
  %v75 = vunpack.c.l.bf16 %v59
  %v76 = vunpack.c.l.bf16 %v60
  %v77 = vunpack.c.l.bf16 %v61
  %v78 = vunpack.c.l.bf16 %v62
  %v79 = vld [vmem:[%s1] sm:$0x1]
  %v80 = vld [vmem:[%s2] sm:$0x1]
  %81 = vadd.xlane.f32.xlu0 %v63
  %v82 = vpop.xlane.xlu0 %81
  %83 = vadd.xlane.f32.xlu0 %v64
  %v84 = vpop.xlane.xlu0 %83
  %85 = vadd.xlane.f32.xlu0 %v65
  %v86 = vpop.xlane.xlu0 %85
  %87 = vadd.xlane.f32.xlu0 %v66
  %v88 = vpop.xlane.xlu0 %87
  %89 = vadd.xlane.f32.xlu0 %v67
  %v90 = vpop.xlane.xlu0 %89
  %91 = vadd.xlane.f32.xlu0 %v68
  %v92 = vpop.xlane.xlu0 %91
  %93 = vadd.xlane.f32.xlu0 %v69
  %v94 = vpop.xlane.xlu0 %93
  %95 = vadd.xlane.f32.xlu0 %v70
  %v96 = vpop.xlane.xlu0 %95
  %97 = vadd.xlane.f32.xlu0 %v71
  %v98 = vpop.xlane.xlu0 %97
  %99 = vadd.xlane.f32.xlu0 %v72
  %v100 = vpop.xlane.xlu0 %99
  %101 = vadd.xlane.f32.xlu0 %v73
  %v102 = vpop.xlane.xlu0 %101
  %103 = vadd.xlane.f32.xlu0 %v74
  %v104 = vpop.xlane.xlu0 %103
  %105 = vadd.xlane.f32.xlu0 %v75
  %v106 = vpop.xlane.xlu0 %105
  %107 = vadd.xlane.f32.xlu0 %v76
  %v108 = vpop.xlane.xlu0 %107
  %109 = vadd.xlane.f32.xlu0 %v77
  %v110 = vpop.xlane.xlu0 %109
  %111 = vadd.xlane.f32.xlu0 %v78
  %v112 = vpop.xlane.xlu0 %111
  %v113 = vrcp.pop 128.0
  %v114 = vmul.f32 %v82, %v113
  %v115 = vmul.f32 %v84, %v113
  %v116 = vmul.f32 %v86, %v113
  %v117 = vmul.f32 %v88, %v113
  %v118 = vmul.f32 %v90, %v113
  %v119 = vmul.f32 %v92, %v113
  %v120 = vmul.f32 %v94, %v113
  %v121 = vmul.f32 %v96, %v113
  %v122 = vmul.f32 %v98, %v113
  %v123 = vmul.f32 %v100, %v113
  %v124 = vmul.f32 %v102, %v113
  %v125 = vmul.f32 %v104, %v113
  %v126 = vmul.f32 %v106, %v113
  %v127 = vmul.f32 %v108, %v113
  %v128 = vmul.f32 %v110, %v113
  %v129 = vmul.f32 %v112, %v113
  %v130 = vsub.f32 %v63, %v114
  %v131 = vsub.f32 %v64, %v115
  %v132 = vsub.f32 %v65, %v116
  %v133 = vsub.f32 %v66, %v117
  %v134 = vsub.f32 %v67, %v118
  %v135 = vsub.f32 %v68, %v119
  %v136 = vsub.f32 %v69, %v120
  %v137 = vsub.f32 %v70, %v121
  %v138 = vsub.f32 %v71, %v122
  %v139 = vsub.f32 %v72, %v123
  %v140 = vsub.f32 %v73, %v124
  %v141 = vsub.f32 %v74, %v125
  %v142 = vsub.f32 %v75, %v126
  %v143 = vsub.f32 %v76, %v127
  %v144 = vsub.f32 %v77, %v128
  %v145 = vsub.f32 %v78, %v129
  %v146 = vmul.f32 %v130, %v130
  %v147 = vmul.f32 %v131, %v131
  %v148 = vmul.f32 %v132, %v132
  %v149 = vmul.f32 %v133, %v133
  %v150 = vmul.f32 %v134, %v134
  %v151 = vmul.f32 %v135, %v135
  %v152 = vmul.f32 %v136, %v136
  %v153 = vmul.f32 %v137, %v137
  %v154 = vmul.f32 %v138, %v138
  %v155 = vmul.f32 %v139, %v139
  %v156 = vmul.f32 %v140, %v140
  %v157 = vmul.f32 %v141, %v141
  %v158 = vmul.f32 %v142, %v142
  %v159 = vmul.f32 %v143, %v143
  %v160 = vmul.f32 %v144, %v144
  %v161 = vmul.f32 %v145, %v145
  %162 = vadd.xlane.f32.xlu0 %v146
  %v163 = vpop.xlane.xlu0 %162
  %164 = vadd.xlane.f32.xlu0 %v147
  %v165 = vpop.xlane.xlu0 %164
  %166 = vadd.xlane.f32.xlu0 %v148
  %v167 = vpop.xlane.xlu0 %166
  %168 = vadd.xlane.f32.xlu0 %v149
  %v169 = vpop.xlane.xlu0 %168
  %170 = vadd.xlane.f32.xlu0 %v150
  %v171 = vpop.xlane.xlu0 %170
  %172 = vadd.xlane.f32.xlu0 %v151
  %v173 = vpop.xlane.xlu0 %172
  %174 = vadd.xlane.f32.xlu0 %v152
  %v175 = vpop.xlane.xlu0 %174
  %176 = vadd.xlane.f32.xlu0 %v153
  %v177 = vpop.xlane.xlu0 %176
  %178 = vadd.xlane.f32.xlu0 %v154
  %v179 = vpop.xlane.xlu0 %178
  %180 = vadd.xlane.f32.xlu0 %v155
  %v181 = vpop.xlane.xlu0 %180
  %182 = vadd.xlane.f32.xlu0 %v156
  %v183 = vpop.xlane.xlu0 %182
  %184 = vadd.xlane.f32.xlu0 %v157
  %v185 = vpop.xlane.xlu0 %184
  %186 = vadd.xlane.f32.xlu0 %v158
  %v187 = vpop.xlane.xlu0 %186
  %188 = vadd.xlane.f32.xlu0 %v159
  %v189 = vpop.xlane.xlu0 %188
  %190 = vadd.xlane.f32.xlu0 %v160
  %v191 = vpop.xlane.xlu0 %190
  %192 = vadd.xlane.f32.xlu0 %v161
  %v193 = vpop.xlane.xlu0 %192
  %v194 = vmul.f32 %v163, %v113
  %v195 = vmul.f32 %v165, %v113
  %v196 = vmul.f32 %v167, %v113
  %v197 = vmul.f32 %v169, %v113
  %v198 = vmul.f32 %v171, %v113
  %v199 = vmul.f32 %v173, %v113
  %v200 = vmul.f32 %v175, %v113
  %v201 = vmul.f32 %v177, %v113
  %v202 = vmul.f32 %v179, %v113
  %v203 = vmul.f32 %v181, %v113
  %v204 = vmul.f32 %v183, %v113
  %v205 = vmul.f32 %v185, %v113
  %v206 = vmul.f32 %v187, %v113
  %v207 = vmul.f32 %v189, %v113
  %v208 = vmul.f32 %v191, %v113
  %v209 = vmul.f32 %v193, %v113
  %v210 = vadd.f32 %v194, 1e-05
  %v211 = vadd.f32 %v195, 1e-05
  %v212 = vadd.f32 %v196, 1e-05
  %v213 = vadd.f32 %v197, 1e-05
  %v214 = vadd.f32 %v198, 1e-05
  %v215 = vadd.f32 %v199, 1e-05
  %v216 = vadd.f32 %v200, 1e-05
  %v217 = vadd.f32 %v201, 1e-05
  %v218 = vadd.f32 %v202, 1e-05
  %v219 = vadd.f32 %v203, 1e-05
  %v220 = vadd.f32 %v204, 1e-05
  %v221 = vadd.f32 %v205, 1e-05
  %v222 = vadd.f32 %v206, 1e-05
  %v223 = vadd.f32 %v207, 1e-05
  %v224 = vadd.f32 %v208, 1e-05
  %v225 = vadd.f32 %v209, 1e-05
  %v226 = vrsqrt.pop %v210
  %v227 = vrsqrt.pop %v211
  %v228 = vrsqrt.pop %v212
  %v229 = vrsqrt.pop %v213
  %v230 = vrsqrt.pop %v214
  %v231 = vrsqrt.pop %v215
  %v232 = vrsqrt.pop %v216
  %v233 = vrsqrt.pop %v217
  %v234 = vrsqrt.pop %v218
  %v235 = vrsqrt.pop %v219
  %v236 = vrsqrt.pop %v220
  %v237 = vrsqrt.pop %v221
  %v238 = vrsqrt.pop %v222
  %v239 = vrsqrt.pop %v223
  %v240 = vrsqrt.pop %v224
  %v241 = vrsqrt.pop %v225
  %v242 = vmul.f32 %v130, %v226
  %v243 = vmul.f32 %v131, %v227
  %v244 = vmul.f32 %v132, %v228
  %v245 = vmul.f32 %v133, %v229
  %v246 = vmul.f32 %v134, %v230
  %v247 = vmul.f32 %v135, %v231
  %v248 = vmul.f32 %v136, %v232
  %v249 = vmul.f32 %v137, %v233
  %v250 = vmul.f32 %v138, %v234
  %v251 = vmul.f32 %v139, %v235
  %v252 = vmul.f32 %v140, %v236
  %v253 = vmul.f32 %v141, %v237
  %v254 = vmul.f32 %v142, %v238
  %v255 = vmul.f32 %v143, %v239
  %v256 = vmul.f32 %v144, %v240
  %v257 = vmul.f32 %v145, %v241
  %v259 = vlaneseq
  %v260 = vshrl.u32 %v259, 7
  %v261 = vsub.s32 0, %v260
  %v262 = vrot.slane %v79, %v261
  %v264 = vmul.f32 %v242, %v262
  %v265 = vmul.f32 %v243, %v262
  %v266 = vmul.f32 %v244, %v262
  %v267 = vmul.f32 %v245, %v262
  %v268 = vmul.f32 %v246, %v262
  %v269 = vmul.f32 %v247, %v262
  %v270 = vmul.f32 %v248, %v262
  %v271 = vmul.f32 %v249, %v262
  %v272 = vmul.f32 %v250, %v262
  %v273 = vmul.f32 %v251, %v262
  %v274 = vmul.f32 %v252, %v262
  %v275 = vmul.f32 %v253, %v262
  %v276 = vmul.f32 %v254, %v262
  %v277 = vmul.f32 %v255, %v262
  %v278 = vmul.f32 %v256, %v262
  %v279 = vmul.f32 %v257, %v262
  %v281 = vlaneseq
  %v282 = vshrl.u32 %v281, 7
  %v283 = vsub.s32 0, %v282
  %v284 = vrot.slane %v80, %v283
  %v286 = vadd.f32 %v264, %v284
  %v287 = vadd.f32 %v265, %v284
  %v288 = vadd.f32 %v266, %v284
  %v289 = vadd.f32 %v267, %v284
  %v290 = vadd.f32 %v268, %v284
  %v291 = vadd.f32 %v269, %v284
  %v292 = vadd.f32 %v270, %v284
  %v293 = vadd.f32 %v271, %v284
  %v294 = vadd.f32 %v272, %v284
  %v295 = vadd.f32 %v273, %v284
  %v296 = vadd.f32 %v274, %v284
  %v297 = vadd.f32 %v275, %v284
  %v298 = vadd.f32 %v276, %v284
  %v299 = vadd.f32 %v277, %v284
  %v300 = vadd.f32 %v278, %v284
  %v301 = vadd.f32 %v279, %v284
  %v302 = vpack.c.bf16 %v287, %v286
  %v303 = vpack.c.bf16 %v289, %v288
  %v304 = vpack.c.bf16 %v291, %v290
  %v305 = vpack.c.bf16 %v293, %v292
  %v306 = vpack.c.bf16 %v295, %v294
  %v307 = vpack.c.bf16 %v297, %v296
  %v308 = vpack.c.bf16 %v299, %v298
  %v309 = vpack.c.bf16 %v301, %v300
  %v310 = vld [vmem:[%s3] sm:$0xff]
  %v311 = vld [vmem:[%s3 + $0x8] sm:$0xff]
  %v312 = vld [vmem:[%s3 + $0x10] sm:$0xff]
  %v313 = vld [vmem:[%s3 + $0x18] sm:$0xff]
  %v314 = vld [vmem:[%s3 + $0x20] sm:$0xff]
  %v315 = vld [vmem:[%s3 + $0x28] sm:$0xff]
  %v316 = vld [vmem:[%s3 + $0x30] sm:$0xff]
  %v317 = vld [vmem:[%s3 + $0x38] sm:$0xff]
  %v318 = vld [vmem:[%s3 + $0x40] sm:$0xff]
  %v319 = vld [vmem:[%s3 + $0x48] sm:$0xff]
  %v320 = vld [vmem:[%s3 + $0x50] sm:$0xff]
  %v321 = vld [vmem:[%s3 + $0x58] sm:$0xff]
  %v322 = vld [vmem:[%s3 + $0x60] sm:$0xff]
  %v323 = vld [vmem:[%s3 + $0x68] sm:$0xff]
  %v324 = vld [vmem:[%s3 + $0x70] sm:$0xff]
  %v325 = vld [vmem:[%s3 + $0x78] sm:$0xff]
  %v326 = vld [vmem:[%s3 + $0x80] sm:$0xff]
  %v327 = vld [vmem:[%s3 + $0x88] sm:$0xff]
  %v328 = vld [vmem:[%s3 + $0x90] sm:$0xff]
  %v329 = vld [vmem:[%s3 + $0x98] sm:$0xff]
  %v330 = vld [vmem:[%s3 + $0xa0] sm:$0xff]
  %v331 = vld [vmem:[%s3 + $0xa8] sm:$0xff]
  %v332 = vld [vmem:[%s3 + $0xb0] sm:$0xff]
  %v333 = vld [vmem:[%s3 + $0xb8] sm:$0xff]
  %v334 = vld [vmem:[%s3 + $0xc0] sm:$0xff]
  %v335 = vld [vmem:[%s3 + $0xc8] sm:$0xff]
  %v336 = vld [vmem:[%s3 + $0xd0] sm:$0xff]
  %v337 = vld [vmem:[%s3 + $0xd8] sm:$0xff]
  %v338 = vld [vmem:[%s3 + $0xe0] sm:$0xff]
  %v339 = vld [vmem:[%s3 + $0xe8] sm:$0xff]
  %v340 = vld [vmem:[%s3 + $0xf0] sm:$0xff]
  %v341 = vld [vmem:[%s3 + $0xf8] sm:$0xff]
  %v342 = vld [vmem:[%s4] sm:$0xf]
  %v344 = vlaneseq
  %v345 = vshrl.u32 %v344, 7
  %v346 = vsub.s32 0, %v345
  %v347 = vrot.slane %v342, %v346
  %v348 = vlaneseq
  %v349 = vshrl.u32 %v348, 7
  %v350 = vsub.s32 1, %v349
  %v351 = vrot.slane %v342, %v350
  %v352 = vlaneseq
  %v353 = vshrl.u32 %v352, 7
  %v354 = vsub.s32 2, %v353
  %v355 = vrot.slane %v342, %v354
  %v356 = vlaneseq
  %v357 = vshrl.u32 %v356, 7
  %v358 = vsub.s32 3, %v357
  %v359 = vrot.slane %v342, %v358
  %v396 = vunpack.c.l.b16 %v310
  %v397 = vunpack.c.h.b16 %v310
  %v398 = vunpack.c.l.b16 %v311
  %v399 = vunpack.c.h.b16 %v311
  %v400 = vunpack.c.l.b16 %v312
  %v401 = vunpack.c.h.b16 %v312
  %v402 = vunpack.c.l.b16 %v313
  %v403 = vunpack.c.h.b16 %v313
  %v404 = vunpack.c.l.b16 %v314
  %v405 = vunpack.c.h.b16 %v314
  %v406 = vunpack.c.l.b16 %v315
  %v407 = vunpack.c.h.b16 %v315
  %v408 = vunpack.c.l.b16 %v316
  %v409 = vunpack.c.h.b16 %v316
  %v410 = vunpack.c.l.b16 %v317
  %v411 = vunpack.c.h.b16 %v317
  %v412 = vunpack.c.l.b16 %v318
  %v413 = vunpack.c.h.b16 %v318
  %v414 = vunpack.c.l.b16 %v319
  %v415 = vunpack.c.h.b16 %v319
  %v416 = vunpack.c.l.b16 %v320
  %v417 = vunpack.c.h.b16 %v320
  %v418 = vunpack.c.l.b16 %v321
  %v419 = vunpack.c.h.b16 %v321
  %v420 = vunpack.c.l.b16 %v322
  %v421 = vunpack.c.h.b16 %v322
  %v422 = vunpack.c.l.b16 %v323
  %v423 = vunpack.c.h.b16 %v323
  %v424 = vunpack.c.l.b16 %v324
  %v425 = vunpack.c.h.b16 %v324
  %v426 = vunpack.c.l.b16 %v325
  %v427 = vunpack.c.h.b16 %v325
  %v428 = vunpack.c.l.b16 %v326
  %v429 = vunpack.c.h.b16 %v326
  %v430 = vunpack.c.l.b16 %v327
  %v431 = vunpack.c.h.b16 %v327
  %v432 = vunpack.c.l.b16 %v328
  %v433 = vunpack.c.h.b16 %v328
  %v434 = vunpack.c.l.b16 %v329
  %v435 = vunpack.c.h.b16 %v329
  %v436 = vunpack.c.l.b16 %v330
  %v437 = vunpack.c.h.b16 %v330
  %v438 = vunpack.c.l.b16 %v331
  %v439 = vunpack.c.h.b16 %v331
  %v440 = vunpack.c.l.b16 %v332
  %v441 = vunpack.c.h.b16 %v332
  %v442 = vunpack.c.l.b16 %v333
  %v443 = vunpack.c.h.b16 %v333
  %v444 = vunpack.c.l.b16 %v334
  %v445 = vunpack.c.h.b16 %v334
  %v446 = vunpack.c.l.b16 %v335
  %v447 = vunpack.c.h.b16 %v335
  %v448 = vunpack.c.l.b16 %v336
  %v449 = vunpack.c.h.b16 %v336
  %v450 = vunpack.c.l.b16 %v337
  %v451 = vunpack.c.h.b16 %v337
  %v452 = vunpack.c.l.b16 %v338
  %v453 = vunpack.c.h.b16 %v338
  %v454 = vunpack.c.l.b16 %v339
  %v455 = vunpack.c.h.b16 %v339
  %v456 = vunpack.c.l.b16 %v340
  %v457 = vunpack.c.h.b16 %v340
  %v458 = vunpack.c.l.b16 %v341
  %v459 = vunpack.c.h.b16 %v341
  %v460 = vpack.c.b16 %v400, %v396
  %v461 = vpack.c.b16 %v401, %v397
  %v462 = vpack.c.b16 %v402, %v398
  %v463 = vpack.c.b16 %v403, %v399
  %v464 = vpack.c.b16 %v408, %v404
  %v465 = vpack.c.b16 %v409, %v405
  %v466 = vpack.c.b16 %v410, %v406
  %v467 = vpack.c.b16 %v411, %v407
  %v468 = vpack.c.b16 %v416, %v412
  %v469 = vpack.c.b16 %v417, %v413
  %v470 = vpack.c.b16 %v418, %v414
  %v471 = vpack.c.b16 %v419, %v415
  %v472 = vpack.c.b16 %v424, %v420
  %v473 = vpack.c.b16 %v425, %v421
  %v474 = vpack.c.b16 %v426, %v422
  %v475 = vpack.c.b16 %v427, %v423
  %v476 = vpack.c.b16 %v432, %v428
  %v477 = vpack.c.b16 %v433, %v429
  %v478 = vpack.c.b16 %v434, %v430
  %v479 = vpack.c.b16 %v435, %v431
  %v480 = vpack.c.b16 %v440, %v436
  %v481 = vpack.c.b16 %v441, %v437
  %v482 = vpack.c.b16 %v442, %v438
  %v483 = vpack.c.b16 %v443, %v439
  %v484 = vpack.c.b16 %v448, %v444
  %v485 = vpack.c.b16 %v449, %v445
  %v486 = vpack.c.b16 %v450, %v446
  %v487 = vpack.c.b16 %v451, %v447
  %v488 = vpack.c.b16 %v456, %v452
  %v489 = vpack.c.b16 %v457, %v453
  %v490 = vpack.c.b16 %v458, %v454
  %v491 = vpack.c.b16 %v459, %v455
  %524 = vmatprep.subr.bf16.mxu0 %v461
  %525 = vmatpush1.bf16.msra.mxu0 %v460
  %526 = vmatprep.subr.bf16.mxu0 %v465
  %527 = vmatpush1.bf16.msra.mxu0 %v464
  %528 = vmatprep.subr.bf16.mxu0 %v469
  %529 = vmatpush1.bf16.msra.mxu0 %v468
  %530 = vmatprep.subr.bf16.mxu0 %v473
  %531 = vmatpush1.bf16.msra.mxu0 %v472
  %532 = vmatprep.subr.bf16.mxu0 %v477
  %533 = vmatpush1.bf16.msra.mxu0 %v476
  %534 = vmatprep.subr.bf16.mxu0 %v481
  %535 = vmatpush1.bf16.msra.mxu0 %v480
  %536 = vmatprep.subr.bf16.mxu0 %v485
  %537 = vmatpush1.bf16.msra.mxu0 %v484
  %538 = vmatprep.subr.bf16.mxu0 %v489
  %539 = vmatpush1.bf16.msra.mxu0 %v488
  %540 = vmatprep.subr.bf16.mxu0 0
  %541 = vmatpush1.bf16.msra.mxu0 0
  %542 = vmatprep.subr.bf16.mxu0 0
  %543 = vmatpush1.bf16.msra.mxu0 0
  %544 = vmatprep.subr.bf16.mxu0 0
  %545 = vmatpush1.bf16.msra.mxu0 0
  %546 = vmatprep.subr.bf16.mxu0 0
  %547 = vmatpush1.bf16.msra.mxu0 0
  %548 = vmatprep.subr.bf16.mxu0 0
  %549 = vmatpush1.bf16.msra.mxu0 0
  %550 = vmatprep.subr.bf16.mxu0 0
  %551 = vmatpush1.bf16.msra.mxu0 0
  %552 = vmatprep.subr.bf16.mxu0 0
  %553 = vmatpush1.bf16.msra.mxu0 0
  %554 = vmatprep.subr.bf16.mxu0 0
  %555 = vmatpush1.bf16.msra.mxu0 0
  %556 = vmatprep.mubr.bf16.mxu0 0
  %557 = vmatmul.mubr.bf16.gmra.mrb[0].mxu0 %v302
  %v558 = vpop.f32.mrb[0].mxu0
  %v559 = vadd.f32 %v347, %v558
  %v560 = vpop.f32.mrb[0].mxu0
  %v561 = vadd.f32 %v351, %v560
  %v562 = vpop.f32.mrb[0].mxu0
  %v563 = vadd.f32 %v347, %v562
  %v564 = vpop.f32.mrb[0].mxu0
  %v565 = vadd.f32 %v351, %v564
  %566 = vmatprep.mubr.bf16.mxu0 0
  %567 = vmatmul.mubr.bf16.gmra.mrb[0].mxu0 %v303
  %v568 = vpop.f32.mrb[0].mxu0
  %v569 = vadd.f32 %v347, %v568
  %v570 = vpop.f32.mrb[0].mxu0
  %v571 = vadd.f32 %v351, %v570
  %v572 = vpop.f32.mrb[0].mxu0
  %v573 = vadd.f32 %v347, %v572
  %v574 = vpop.f32.mrb[0].mxu0
  %v575 = vadd.f32 %v351, %v574
  %576 = vmatprep.mubr.bf16.mxu0 0
  %577 = vmatmul.mubr.bf16.gmra.mrb[0].mxu0 %v304
  %v578 = vpop.f32.mrb[0].mxu0
  %v579 = vadd.f32 %v347, %v578
  %v580 = vpop.f32.mrb[0].mxu0
  %v581 = vadd.f32 %v351, %v580
  %v582 = vpop.f32.mrb[0].mxu0
  %v583 = vadd.f32 %v347, %v582
  %v584 = vpop.f32.mrb[0].mxu0
  %v585 = vadd.f32 %v351, %v584
  %586 = vmatprep.mubr.bf16.mxu0 0
  %587 = vmatmul.mubr.bf16.gmra.mrb[0].mxu0 %v305
  %v588 = vpop.f32.mrb[0].mxu0
  %v589 = vadd.f32 %v347, %v588
  %v590 = vpop.f32.mrb[0].mxu0
  %v591 = vadd.f32 %v351, %v590
  %v592 = vpop.f32.mrb[0].mxu0
  %v593 = vadd.f32 %v347, %v592
  %v594 = vpop.f32.mrb[0].mxu0
  %v595 = vadd.f32 %v351, %v594
  %596 = vmatprep.mubr.bf16.mxu0 0
  %597 = vmatmul.mubr.bf16.gmra.mrb[0].mxu0 %v306
  %v598 = vpop.f32.mrb[0].mxu0
  %v599 = vadd.f32 %v347, %v598
  %v600 = vpop.f32.mrb[0].mxu0
  %v601 = vadd.f32 %v351, %v600
  %v602 = vpop.f32.mrb[0].mxu0
  %v603 = vadd.f32 %v347, %v602
  %v604 = vpop.f32.mrb[0].mxu0
  %v605 = vadd.f32 %v351, %v604
  %606 = vmatprep.mubr.bf16.mxu0 0
  %607 = vmatmul.mubr.bf16.gmra.mrb[0].mxu0 %v307
  %v608 = vpop.f32.mrb[0].mxu0
  %v609 = vadd.f32 %v347, %v608
  %v610 = vpop.f32.mrb[0].mxu0
  %v611 = vadd.f32 %v351, %v610
  %v612 = vpop.f32.mrb[0].mxu0
  %v613 = vadd.f32 %v347, %v612
  %v614 = vpop.f32.mrb[0].mxu0
  %v615 = vadd.f32 %v351, %v614
  %616 = vmatprep.mubr.bf16.mxu0 0
  %617 = vmatmul.mubr.bf16.gmra.mrb[0].mxu0 %v308
  %v618 = vpop.f32.mrb[0].mxu0
  %v619 = vadd.f32 %v347, %v618
  %v620 = vpop.f32.mrb[0].mxu0
  %v621 = vadd.f32 %v351, %v620
  %v622 = vpop.f32.mrb[0].mxu0
  %v623 = vadd.f32 %v347, %v622
  %v624 = vpop.f32.mrb[0].mxu0
  %v625 = vadd.f32 %v351, %v624
  %626 = vmatprep.mubr.bf16.mxu0 0
  %627 = vmatmul.mubr.bf16.gmra.mrb[0].mxu0 %v309
  %v628 = vpop.f32.mrb[0].mxu0
  %v629 = vadd.f32 %v347, %v628
  %v630 = vpop.f32.mrb[0].mxu0
  %v631 = vadd.f32 %v351, %v630
  %v632 = vpop.f32.mrb[0].mxu0
  %v633 = vadd.f32 %v347, %v632
  %v634 = vpop.f32.mrb[0].mxu0
  %v635 = vadd.f32 %v351, %v634
  %636 = vdwg.mxu0
  %637 = vmatprep.subr.bf16.mxu0 %v463
  %638 = vmatpush1.bf16.msra.mxu0 %v462
  %639 = vmatprep.subr.bf16.mxu0 %v467
  %640 = vmatpush1.bf16.msra.mxu0 %v466
  %641 = vmatprep.subr.bf16.mxu0 %v471
  %642 = vmatpush1.bf16.msra.mxu0 %v470
  %643 = vmatprep.subr.bf16.mxu0 %v475
  %644 = vmatpush1.bf16.msra.mxu0 %v474
  %645 = vmatprep.subr.bf16.mxu0 %v479
  %646 = vmatpush1.bf16.msra.mxu0 %v478
  %647 = vmatprep.subr.bf16.mxu0 %v483
  %648 = vmatpush1.bf16.msra.mxu0 %v482
  %649 = vmatprep.subr.bf16.mxu0 %v487
  %650 = vmatpush1.bf16.msra.mxu0 %v486
  %651 = vmatprep.subr.bf16.mxu0 %v491
  %652 = vmatpush1.bf16.msra.mxu0 %v490
  %653 = vmatprep.subr.bf16.mxu0 0
  %654 = vmatpush1.bf16.msra.mxu0 0
  %655 = vmatprep.subr.bf16.mxu0 0
  %656 = vmatpush1.bf16.msra.mxu0 0
  %657 = vmatprep.subr.bf16.mxu0 0
  %658 = vmatpush1.bf16.msra.mxu0 0
  %659 = vmatprep.subr.bf16.mxu0 0
  %660 = vmatpush1.bf16.msra.mxu0 0
  %661 = vmatprep.subr.bf16.mxu0 0
  %662 = vmatpush1.bf16.msra.mxu0 0
  %663 = vmatprep.subr.bf16.mxu0 0
  %664 = vmatpush1.bf16.msra.mxu0 0
  %665 = vmatprep.subr.bf16.mxu0 0
  %666 = vmatpush1.bf16.msra.mxu0 0
  %667 = vmatprep.subr.bf16.mxu0 0
  %668 = vmatpush1.bf16.msra.mxu0 0
  %669 = vmatprep.mubr.bf16.mxu0 0
  %670 = vmatmul.mubr.bf16.gmra.mrb[0].mxu0 %v302
  %v671 = vpop.f32.mrb[0].mxu0
  %v672 = vadd.f32 %v355, %v671
  %v673 = vpop.f32.mrb[0].mxu0
  %v674 = vadd.f32 %v359, %v673
  %v675 = vpop.f32.mrb[0].mxu0
  %v676 = vadd.f32 %v355, %v675
  %v677 = vpop.f32.mrb[0].mxu0
  %v678 = vadd.f32 %v359, %v677
  %679 = vmatprep.mubr.bf16.mxu0 0
  %680 = vmatmul.mubr.bf16.gmra.mrb[0].mxu0 %v303
  %v681 = vpop.f32.mrb[0].mxu0
  %v682 = vadd.f32 %v355, %v681
  %v683 = vpop.f32.mrb[0].mxu0
  %v684 = vadd.f32 %v359, %v683
  %v685 = vpop.f32.mrb[0].mxu0
  %v686 = vadd.f32 %v355, %v685
  %v687 = vpop.f32.mrb[0].mxu0
  %v688 = vadd.f32 %v359, %v687
  %689 = vmatprep.mubr.bf16.mxu0 0
  %690 = vmatmul.mubr.bf16.gmra.mrb[0].mxu0 %v304
  %v691 = vpop.f32.mrb[0].mxu0
  %v692 = vadd.f32 %v355, %v691
  %v693 = vpop.f32.mrb[0].mxu0
  %v694 = vadd.f32 %v359, %v693
  %v695 = vpop.f32.mrb[0].mxu0
  %v696 = vadd.f32 %v355, %v695
  %v697 = vpop.f32.mrb[0].mxu0
  %v698 = vadd.f32 %v359, %v697
  %699 = vmatprep.mubr.bf16.mxu0 0
  %700 = vmatmul.mubr.bf16.gmra.mrb[0].mxu0 %v305
  %v701 = vpop.f32.mrb[0].mxu0
  %v702 = vadd.f32 %v355, %v701
  %v703 = vpop.f32.mrb[0].mxu0
  %v704 = vadd.f32 %v359, %v703
  %v705 = vpop.f32.mrb[0].mxu0
  %v706 = vadd.f32 %v355, %v705
  %v707 = vpop.f32.mrb[0].mxu0
  %v708 = vadd.f32 %v359, %v707
  %709 = vmatprep.mubr.bf16.mxu0 0
  %710 = vmatmul.mubr.bf16.gmra.mrb[0].mxu0 %v306
  %v711 = vpop.f32.mrb[0].mxu0
  %v712 = vadd.f32 %v355, %v711
  %v713 = vpop.f32.mrb[0].mxu0
  %v714 = vadd.f32 %v359, %v713
  %v715 = vpop.f32.mrb[0].mxu0
  %v716 = vadd.f32 %v355, %v715
  %v717 = vpop.f32.mrb[0].mxu0
  %v718 = vadd.f32 %v359, %v717
  %719 = vmatprep.mubr.bf16.mxu0 0
  %720 = vmatmul.mubr.bf16.gmra.mrb[0].mxu0 %v307
  %v721 = vpop.f32.mrb[0].mxu0
  %v722 = vadd.f32 %v355, %v721
  %v723 = vpop.f32.mrb[0].mxu0
  %v724 = vadd.f32 %v359, %v723
  %v725 = vpop.f32.mrb[0].mxu0
  %v726 = vadd.f32 %v355, %v725
  %v727 = vpop.f32.mrb[0].mxu0
  %v728 = vadd.f32 %v359, %v727
  %729 = vmatprep.mubr.bf16.mxu0 0
  %730 = vmatmul.mubr.bf16.gmra.mrb[0].mxu0 %v308
  %v731 = vpop.f32.mrb[0].mxu0
  %v732 = vadd.f32 %v355, %v731
  %v733 = vpop.f32.mrb[0].mxu0
  %v734 = vadd.f32 %v359, %v733
  %v735 = vpop.f32.mrb[0].mxu0
  %v736 = vadd.f32 %v355, %v735
  %v737 = vpop.f32.mrb[0].mxu0
  %v738 = vadd.f32 %v359, %v737
  %739 = vmatprep.mubr.bf16.mxu0 0
  %740 = vmatmul.mubr.bf16.gmra.mrb[0].mxu0 %v309
  %v741 = vpop.f32.mrb[0].mxu0
  %v742 = vadd.f32 %v355, %v741
  %v743 = vpop.f32.mrb[0].mxu0
  %v744 = vadd.f32 %v359, %v743
  %v745 = vpop.f32.mrb[0].mxu0
  %v746 = vadd.f32 %v355, %v745
  %v747 = vpop.f32.mrb[0].mxu0
  %v748 = vadd.f32 %v359, %v747
  %749 = vdwg.mxu0
  %v750 = vmul.f32 %v559, 0.5
  %v751 = vmul.f32 %v561, 0.5
  %v752 = vmul.f32 %v672, 0.5
  %v753 = vmul.f32 %v674, 0.5
  %v754 = vmul.f32 %v563, 0.5
  %v755 = vmul.f32 %v565, 0.5
  %v756 = vmul.f32 %v676, 0.5
  %v757 = vmul.f32 %v678, 0.5
  %v758 = vmul.f32 %v569, 0.5
  %v759 = vmul.f32 %v571, 0.5
  %v760 = vmul.f32 %v682, 0.5
  %v761 = vmul.f32 %v684, 0.5
  %v762 = vmul.f32 %v573, 0.5
  %v763 = vmul.f32 %v575, 0.5
  %v764 = vmul.f32 %v686, 0.5
  %v765 = vmul.f32 %v688, 0.5
  %v766 = vmul.f32 %v579, 0.5
  %v767 = vmul.f32 %v581, 0.5
  %v768 = vmul.f32 %v692, 0.5
  %v769 = vmul.f32 %v694, 0.5
  %v770 = vmul.f32 %v583, 0.5
  %v771 = vmul.f32 %v585, 0.5
  %v772 = vmul.f32 %v696, 0.5
  %v773 = vmul.f32 %v698, 0.5
  %v774 = vmul.f32 %v589, 0.5
  %v775 = vmul.f32 %v591, 0.5
  %v776 = vmul.f32 %v702, 0.5
  %v777 = vmul.f32 %v704, 0.5
  %v778 = vmul.f32 %v593, 0.5
  %v779 = vmul.f32 %v595, 0.5
  %v780 = vmul.f32 %v706, 0.5
  %v781 = vmul.f32 %v708, 0.5
  %v782 = vmul.f32 %v599, 0.5
  %v783 = vmul.f32 %v601, 0.5
  %v784 = vmul.f32 %v712, 0.5
  %v785 = vmul.f32 %v714, 0.5
  %v786 = vmul.f32 %v603, 0.5
  %v787 = vmul.f32 %v605, 0.5
  %v788 = vmul.f32 %v716, 0.5
  %v789 = vmul.f32 %v718, 0.5
  %v790 = vmul.f32 %v609, 0.5
  %v791 = vmul.f32 %v611, 0.5
  %v792 = vmul.f32 %v722, 0.5
  %v793 = vmul.f32 %v724, 0.5
  %v794 = vmul.f32 %v613, 0.5
  %v795 = vmul.f32 %v615, 0.5
  %v796 = vmul.f32 %v726, 0.5
  %v797 = vmul.f32 %v728, 0.5
  %v798 = vmul.f32 %v619, 0.5
  %v799 = vmul.f32 %v621, 0.5
  %v800 = vmul.f32 %v732, 0.5
  %v801 = vmul.f32 %v734, 0.5
  %v802 = vmul.f32 %v623, 0.5
  %v803 = vmul.f32 %v625, 0.5
  %v804 = vmul.f32 %v736, 0.5
  %v805 = vmul.f32 %v738, 0.5
  %v806 = vmul.f32 %v629, 0.5
  %v807 = vmul.f32 %v631, 0.5
  %v808 = vmul.f32 %v742, 0.5
  %v809 = vmul.f32 %v744, 0.5
  %v810 = vmul.f32 %v633, 0.5
  %v811 = vmul.f32 %v635, 0.5
  %v812 = vmul.f32 %v746, 0.5
  %v813 = vmul.f32 %v748, 0.5
  %v814 = vmul.f32 %v559, 0.70710677
  %v815 = vmul.f32 %v561, 0.70710677
  %v816 = vmul.f32 %v672, 0.70710677
  %v817 = vmul.f32 %v674, 0.70710677
  %v818 = vmul.f32 %v563, 0.70710677
  %v819 = vmul.f32 %v565, 0.70710677
  %v820 = vmul.f32 %v676, 0.70710677
  %v821 = vmul.f32 %v678, 0.70710677
  %v822 = vmul.f32 %v569, 0.70710677
  %v823 = vmul.f32 %v571, 0.70710677
  %v824 = vmul.f32 %v682, 0.70710677
  %v825 = vmul.f32 %v684, 0.70710677
  %v826 = vmul.f32 %v573, 0.70710677
  %v827 = vmul.f32 %v575, 0.70710677
  %v828 = vmul.f32 %v686, 0.70710677
  %v829 = vmul.f32 %v688, 0.70710677
  %v830 = vmul.f32 %v579, 0.70710677
  %v831 = vmul.f32 %v581, 0.70710677
  %v832 = vmul.f32 %v692, 0.70710677
  %v833 = vmul.f32 %v694, 0.70710677
  %v834 = vmul.f32 %v583, 0.70710677
  %v835 = vmul.f32 %v585, 0.70710677
  %v836 = vmul.f32 %v696, 0.70710677
  %v837 = vmul.f32 %v698, 0.70710677
  %v838 = vmul.f32 %v589, 0.70710677
  %v839 = vmul.f32 %v591, 0.70710677
  %v840 = vmul.f32 %v702, 0.70710677
  %v841 = vmul.f32 %v704, 0.70710677
  %v842 = vmul.f32 %v593, 0.70710677
  %v843 = vmul.f32 %v595, 0.70710677
  %v844 = vmul.f32 %v706, 0.70710677
  %v845 = vmul.f32 %v708, 0.70710677
  %v846 = vmul.f32 %v599, 0.70710677
  %v847 = vmul.f32 %v601, 0.70710677
  %v848 = vmul.f32 %v712, 0.70710677
  %v849 = vmul.f32 %v714, 0.70710677
  %v850 = vmul.f32 %v603, 0.70710677
  %v851 = vmul.f32 %v605, 0.70710677
  %v852 = vmul.f32 %v716, 0.70710677
  %v853 = vmul.f32 %v718, 0.70710677
  %v854 = vmul.f32 %v609, 0.70710677
  %v855 = vmul.f32 %v611, 0.70710677
  %v856 = vmul.f32 %v722, 0.70710677
  %v857 = vmul.f32 %v724, 0.70710677
  %v858 = vmul.f32 %v613, 0.70710677
  %v859 = vmul.f32 %v615, 0.70710677
  %v860 = vmul.f32 %v726, 0.70710677
  %v861 = vmul.f32 %v728, 0.70710677
  %v862 = vmul.f32 %v619, 0.70710677
  %v863 = vmul.f32 %v621, 0.70710677
  %v864 = vmul.f32 %v732, 0.70710677
  %v865 = vmul.f32 %v734, 0.70710677
  %v866 = vmul.f32 %v623, 0.70710677
  %v867 = vmul.f32 %v625, 0.70710677
  %v868 = vmul.f32 %v736, 0.70710677
  %v869 = vmul.f32 %v738, 0.70710677
  %v870 = vmul.f32 %v629, 0.70710677
  %v871 = vmul.f32 %v631, 0.70710677
  %v872 = vmul.f32 %v742, 0.70710677
  %v873 = vmul.f32 %v744, 0.70710677
  %v874 = vmul.f32 %v633, 0.70710677
  %v875 = vmul.f32 %v635, 0.70710677
  %v876 = vmul.f32 %v746, 0.70710677
  %v877 = vmul.f32 %v748, 0.70710677
  %vm878 = vcmp.ge.f32.partialorder %v814, 0.0
  %vm879 = vcmp.ge.f32.partialorder %v815, 0.0
  %vm880 = vcmp.ge.f32.partialorder %v816, 0.0
  %vm881 = vcmp.ge.f32.partialorder %v817, 0.0
  %vm882 = vcmp.ge.f32.partialorder %v818, 0.0
  %vm883 = vcmp.ge.f32.partialorder %v819, 0.0
  %vm884 = vcmp.ge.f32.partialorder %v820, 0.0
  %vm885 = vcmp.ge.f32.partialorder %v821, 0.0
  %vm886 = vcmp.ge.f32.partialorder %v822, 0.0
  %vm887 = vcmp.ge.f32.partialorder %v823, 0.0
  %vm888 = vcmp.ge.f32.partialorder %v824, 0.0
  %vm889 = vcmp.ge.f32.partialorder %v825, 0.0
  %vm890 = vcmp.ge.f32.partialorder %v826, 0.0
  %vm891 = vcmp.ge.f32.partialorder %v827, 0.0
  %vm892 = vcmp.ge.f32.partialorder %v828, 0.0
  %vm893 = vcmp.ge.f32.partialorder %v829, 0.0
  %vm894 = vcmp.ge.f32.partialorder %v830, 0.0
  %vm895 = vcmp.ge.f32.partialorder %v831, 0.0
  %vm896 = vcmp.ge.f32.partialorder %v832, 0.0
  %vm897 = vcmp.ge.f32.partialorder %v833, 0.0
  %vm898 = vcmp.ge.f32.partialorder %v834, 0.0
  %vm899 = vcmp.ge.f32.partialorder %v835, 0.0
  %vm900 = vcmp.ge.f32.partialorder %v836, 0.0
  %vm901 = vcmp.ge.f32.partialorder %v837, 0.0
  %vm902 = vcmp.ge.f32.partialorder %v838, 0.0
  %vm903 = vcmp.ge.f32.partialorder %v839, 0.0
  %vm904 = vcmp.ge.f32.partialorder %v840, 0.0
  %vm905 = vcmp.ge.f32.partialorder %v841, 0.0
  %vm906 = vcmp.ge.f32.partialorder %v842, 0.0
  %vm907 = vcmp.ge.f32.partialorder %v843, 0.0
  %vm908 = vcmp.ge.f32.partialorder %v844, 0.0
  %vm909 = vcmp.ge.f32.partialorder %v845, 0.0
  %vm910 = vcmp.ge.f32.partialorder %v846, 0.0
  %vm911 = vcmp.ge.f32.partialorder %v847, 0.0
  %vm912 = vcmp.ge.f32.partialorder %v848, 0.0
  %vm913 = vcmp.ge.f32.partialorder %v849, 0.0
  %vm914 = vcmp.ge.f32.partialorder %v850, 0.0
  %vm915 = vcmp.ge.f32.partialorder %v851, 0.0
  %vm916 = vcmp.ge.f32.partialorder %v852, 0.0
  %vm917 = vcmp.ge.f32.partialorder %v853, 0.0
  %vm918 = vcmp.ge.f32.partialorder %v854, 0.0
  %vm919 = vcmp.ge.f32.partialorder %v855, 0.0
  %vm920 = vcmp.ge.f32.partialorder %v856, 0.0
  %vm921 = vcmp.ge.f32.partialorder %v857, 0.0
  %vm922 = vcmp.ge.f32.partialorder %v858, 0.0
  %vm923 = vcmp.ge.f32.partialorder %v859, 0.0
  %vm924 = vcmp.ge.f32.partialorder %v860, 0.0
  %vm925 = vcmp.ge.f32.partialorder %v861, 0.0
  %vm926 = vcmp.ge.f32.partialorder %v862, 0.0
  %vm927 = vcmp.ge.f32.partialorder %v863, 0.0
  %vm928 = vcmp.ge.f32.partialorder %v864, 0.0
  %vm929 = vcmp.ge.f32.partialorder %v865, 0.0
  %vm930 = vcmp.ge.f32.partialorder %v866, 0.0
  %vm931 = vcmp.ge.f32.partialorder %v867, 0.0
  %vm932 = vcmp.ge.f32.partialorder %v868, 0.0
  %vm933 = vcmp.ge.f32.partialorder %v869, 0.0
  %vm934 = vcmp.ge.f32.partialorder %v870, 0.0
  %vm935 = vcmp.ge.f32.partialorder %v871, 0.0
  %vm936 = vcmp.ge.f32.partialorder %v872, 0.0
  %vm937 = vcmp.ge.f32.partialorder %v873, 0.0
  %vm938 = vcmp.ge.f32.partialorder %v874, 0.0
  %vm939 = vcmp.ge.f32.partialorder %v875, 0.0
  %vm940 = vcmp.ge.f32.partialorder %v876, 0.0
  %vm941 = vcmp.ge.f32.partialorder %v877, 0.0
  %v942 = vsel %vm878, 1.0, -1.0
  %v943 = vsel %vm879, 1.0, -1.0
  %v944 = vsel %vm880, 1.0, -1.0
  %v945 = vsel %vm881, 1.0, -1.0
  %v946 = vsel %vm882, 1.0, -1.0
  %v947 = vsel %vm883, 1.0, -1.0
  %v948 = vsel %vm884, 1.0, -1.0
  %v949 = vsel %vm885, 1.0, -1.0
  %v950 = vsel %vm886, 1.0, -1.0
  %v951 = vsel %vm887, 1.0, -1.0
  %v952 = vsel %vm888, 1.0, -1.0
  %v953 = vsel %vm889, 1.0, -1.0
  %v954 = vsel %vm890, 1.0, -1.0
  %v955 = vsel %vm891, 1.0, -1.0
  %v956 = vsel %vm892, 1.0, -1.0
  %v957 = vsel %vm893, 1.0, -1.0
  %v958 = vsel %vm894, 1.0, -1.0
  %v959 = vsel %vm895, 1.0, -1.0
  %v960 = vsel %vm896, 1.0, -1.0
  %v961 = vsel %vm897, 1.0, -1.0
  %v962 = vsel %vm898, 1.0, -1.0
  %v963 = vsel %vm899, 1.0, -1.0
  %v964 = vsel %vm900, 1.0, -1.0
  %v965 = vsel %vm901, 1.0, -1.0
  %v966 = vsel %vm902, 1.0, -1.0
  %v967 = vsel %vm903, 1.0, -1.0
  %v968 = vsel %vm904, 1.0, -1.0
  %v969 = vsel %vm905, 1.0, -1.0
  %v970 = vsel %vm906, 1.0, -1.0
  %v971 = vsel %vm907, 1.0, -1.0
  %v972 = vsel %vm908, 1.0, -1.0
  %v973 = vsel %vm909, 1.0, -1.0
  %v974 = vsel %vm910, 1.0, -1.0
  %v975 = vsel %vm911, 1.0, -1.0
  %v976 = vsel %vm912, 1.0, -1.0
  %v977 = vsel %vm913, 1.0, -1.0
  %v978 = vsel %vm914, 1.0, -1.0
  %v979 = vsel %vm915, 1.0, -1.0
  %v980 = vsel %vm916, 1.0, -1.0
  %v981 = vsel %vm917, 1.0, -1.0
  %v982 = vsel %vm918, 1.0, -1.0
  %v983 = vsel %vm919, 1.0, -1.0
  %v984 = vsel %vm920, 1.0, -1.0
  %v985 = vsel %vm921, 1.0, -1.0
  %v986 = vsel %vm922, 1.0, -1.0
  %v987 = vsel %vm923, 1.0, -1.0
  %v988 = vsel %vm924, 1.0, -1.0
  %v989 = vsel %vm925, 1.0, -1.0
  %v990 = vsel %vm926, 1.0, -1.0
  %v991 = vsel %vm927, 1.0, -1.0
  %v992 = vsel %vm928, 1.0, -1.0
  %v993 = vsel %vm929, 1.0, -1.0
  %v994 = vsel %vm930, 1.0, -1.0
  %v995 = vsel %vm931, 1.0, -1.0
  %v996 = vsel %vm932, 1.0, -1.0
  %v997 = vsel %vm933, 1.0, -1.0
  %v998 = vsel %vm934, 1.0, -1.0
  %v999 = vsel %vm935, 1.0, -1.0
  %v1000 = vsel %vm936, 1.0, -1.0
  %v1001 = vsel %vm937, 1.0, -1.0
  %v1002 = vsel %vm938, 1.0, -1.0
  %v1003 = vsel %vm939, 1.0, -1.0
  %v1004 = vsel %vm940, 1.0, -1.0
  %v1005 = vsel %vm941, 1.0, -1.0
  %v1006 = vand.u32 2147483647, %v814
  %v1007 = vand.u32 2147483647, %v815
  %v1008 = vand.u32 2147483647, %v816
  %v1009 = vand.u32 2147483647, %v817
  %v1010 = vand.u32 2147483647, %v818
  %v1011 = vand.u32 2147483647, %v819
  %v1012 = vand.u32 2147483647, %v820
  %v1013 = vand.u32 2147483647, %v821
  %v1014 = vand.u32 2147483647, %v822
  %v1015 = vand.u32 2147483647, %v823
  %v1016 = vand.u32 2147483647, %v824
  %v1017 = vand.u32 2147483647, %v825
  %v1018 = vand.u32 2147483647, %v826
  %v1019 = vand.u32 2147483647, %v827
  %v1020 = vand.u32 2147483647, %v828
  %v1021 = vand.u32 2147483647, %v829
  %v1022 = vand.u32 2147483647, %v830
  %v1023 = vand.u32 2147483647, %v831
  %v1024 = vand.u32 2147483647, %v832
  %v1025 = vand.u32 2147483647, %v833
  %v1026 = vand.u32 2147483647, %v834
  %v1027 = vand.u32 2147483647, %v835
  %v1028 = vand.u32 2147483647, %v836
  %v1029 = vand.u32 2147483647, %v837
  %v1030 = vand.u32 2147483647, %v838
  %v1031 = vand.u32 2147483647, %v839
  %v1032 = vand.u32 2147483647, %v840
  %v1033 = vand.u32 2147483647, %v841
  %v1034 = vand.u32 2147483647, %v842
  %v1035 = vand.u32 2147483647, %v843
  %v1036 = vand.u32 2147483647, %v844
  %v1037 = vand.u32 2147483647, %v845
  %v1038 = vand.u32 2147483647, %v846
  %v1039 = vand.u32 2147483647, %v847
  %v1040 = vand.u32 2147483647, %v848
  %v1041 = vand.u32 2147483647, %v849
  %v1042 = vand.u32 2147483647, %v850
  %v1043 = vand.u32 2147483647, %v851
  %v1044 = vand.u32 2147483647, %v852
  %v1045 = vand.u32 2147483647, %v853
  %v1046 = vand.u32 2147483647, %v854
  %v1047 = vand.u32 2147483647, %v855
  %v1048 = vand.u32 2147483647, %v856
  %v1049 = vand.u32 2147483647, %v857
  %v1050 = vand.u32 2147483647, %v858
  %v1051 = vand.u32 2147483647, %v859
  %v1052 = vand.u32 2147483647, %v860
  %v1053 = vand.u32 2147483647, %v861
  %v1054 = vand.u32 2147483647, %v862
  %v1055 = vand.u32 2147483647, %v863
  %v1056 = vand.u32 2147483647, %v864
  %v1057 = vand.u32 2147483647, %v865
  %v1058 = vand.u32 2147483647, %v866
  %v1059 = vand.u32 2147483647, %v867
  %v1060 = vand.u32 2147483647, %v868
  %v1061 = vand.u32 2147483647, %v869
  %v1062 = vand.u32 2147483647, %v870
  %v1063 = vand.u32 2147483647, %v871
  %v1064 = vand.u32 2147483647, %v872
  %v1065 = vand.u32 2147483647, %v873
  %v1066 = vand.u32 2147483647, %v874
  %v1067 = vand.u32 2147483647, %v875
  %v1068 = vand.u32 2147483647, %v876
  %v1069 = vand.u32 2147483647, %v877
  %v1070 = vmul.f32 %v1006, 0.3275911
  %v1071 = vmul.f32 %v1007, 0.3275911
  %v1072 = vmul.f32 %v1008, 0.3275911
  %v1073 = vmul.f32 %v1009, 0.3275911
  %v1074 = vmul.f32 %v1010, 0.3275911
  %v1075 = vmul.f32 %v1011, 0.3275911
  %v1076 = vmul.f32 %v1012, 0.3275911
  %v1077 = vmul.f32 %v1013, 0.3275911
  %v1078 = vmul.f32 %v1014, 0.3275911
  %v1079 = vmul.f32 %v1015, 0.3275911
  %v1080 = vmul.f32 %v1016, 0.3275911
  %v1081 = vmul.f32 %v1017, 0.3275911
  %v1082 = vmul.f32 %v1018, 0.3275911
  %v1083 = vmul.f32 %v1019, 0.3275911
  %v1084 = vmul.f32 %v1020, 0.3275911
  %v1085 = vmul.f32 %v1021, 0.3275911
  %v1086 = vmul.f32 %v1022, 0.3275911
  %v1087 = vmul.f32 %v1023, 0.3275911
  %v1088 = vmul.f32 %v1024, 0.3275911
  %v1089 = vmul.f32 %v1025, 0.3275911
  %v1090 = vmul.f32 %v1026, 0.3275911
  %v1091 = vmul.f32 %v1027, 0.3275911
  %v1092 = vmul.f32 %v1028, 0.3275911
  %v1093 = vmul.f32 %v1029, 0.3275911
  %v1094 = vmul.f32 %v1030, 0.3275911
  %v1095 = vmul.f32 %v1031, 0.3275911
  %v1096 = vmul.f32 %v1032, 0.3275911
  %v1097 = vmul.f32 %v1033, 0.3275911
  %v1098 = vmul.f32 %v1034, 0.3275911
  %v1099 = vmul.f32 %v1035, 0.3275911
  %v1100 = vmul.f32 %v1036, 0.3275911
  %v1101 = vmul.f32 %v1037, 0.3275911
  %v1102 = vmul.f32 %v1038, 0.3275911
  %v1103 = vmul.f32 %v1039, 0.3275911
  %v1104 = vmul.f32 %v1040, 0.3275911
  %v1105 = vmul.f32 %v1041, 0.3275911
  %v1106 = vmul.f32 %v1042, 0.3275911
  %v1107 = vmul.f32 %v1043, 0.3275911
  %v1108 = vmul.f32 %v1044, 0.3275911
  %v1109 = vmul.f32 %v1045, 0.3275911
  %v1110 = vmul.f32 %v1046, 0.3275911
  %v1111 = vmul.f32 %v1047, 0.3275911
  %v1112 = vmul.f32 %v1048, 0.3275911
  %v1113 = vmul.f32 %v1049, 0.3275911
  %v1114 = vmul.f32 %v1050, 0.3275911
  %v1115 = vmul.f32 %v1051, 0.3275911
  %v1116 = vmul.f32 %v1052, 0.3275911
  %v1117 = vmul.f32 %v1053, 0.3275911
  %v1118 = vmul.f32 %v1054, 0.3275911
  %v1119 = vmul.f32 %v1055, 0.3275911
  %v1120 = vmul.f32 %v1056, 0.3275911
  %v1121 = vmul.f32 %v1057, 0.3275911
  %v1122 = vmul.f32 %v1058, 0.3275911
  %v1123 = vmul.f32 %v1059, 0.3275911
  %v1124 = vmul.f32 %v1060, 0.3275911
  %v1125 = vmul.f32 %v1061, 0.3275911
  %v1126 = vmul.f32 %v1062, 0.3275911
  %v1127 = vmul.f32 %v1063, 0.3275911
  %v1128 = vmul.f32 %v1064, 0.3275911
  %v1129 = vmul.f32 %v1065, 0.3275911
  %v1130 = vmul.f32 %v1066, 0.3275911
  %v1131 = vmul.f32 %v1067, 0.3275911
  %v1132 = vmul.f32 %v1068, 0.3275911
  %v1133 = vmul.f32 %v1069, 0.3275911
  %v1134 = vadd.f32 %v1070, 1.0
  %v1135 = vadd.f32 %v1071, 1.0
  %v1136 = vadd.f32 %v1072, 1.0
  %v1137 = vadd.f32 %v1073, 1.0
  %v1138 = vadd.f32 %v1074, 1.0
  %v1139 = vadd.f32 %v1075, 1.0
  %v1140 = vadd.f32 %v1076, 1.0
  %v1141 = vadd.f32 %v1077, 1.0
  %v1142 = vadd.f32 %v1078, 1.0
  %v1143 = vadd.f32 %v1079, 1.0
  %v1144 = vadd.f32 %v1080, 1.0
  %v1145 = vadd.f32 %v1081, 1.0
  %v1146 = vadd.f32 %v1082, 1.0
  %v1147 = vadd.f32 %v1083, 1.0
  %v1148 = vadd.f32 %v1084, 1.0
  %v1149 = vadd.f32 %v1085, 1.0
  %v1150 = vadd.f32 %v1086, 1.0
  %v1151 = vadd.f32 %v1087, 1.0
  %v1152 = vadd.f32 %v1088, 1.0
  %v1153 = vadd.f32 %v1089, 1.0
  %v1154 = vadd.f32 %v1090, 1.0
  %v1155 = vadd.f32 %v1091, 1.0
  %v1156 = vadd.f32 %v1092, 1.0
  %v1157 = vadd.f32 %v1093, 1.0
  %v1158 = vadd.f32 %v1094, 1.0
  %v1159 = vadd.f32 %v1095, 1.0
  %v1160 = vadd.f32 %v1096, 1.0
  %v1161 = vadd.f32 %v1097, 1.0
  %v1162 = vadd.f32 %v1098, 1.0
  %v1163 = vadd.f32 %v1099, 1.0
  %v1164 = vadd.f32 %v1100, 1.0
  %v1165 = vadd.f32 %v1101, 1.0
  %v1166 = vadd.f32 %v1102, 1.0
  %v1167 = vadd.f32 %v1103, 1.0
  %v1168 = vadd.f32 %v1104, 1.0
  %v1169 = vadd.f32 %v1105, 1.0
  %v1170 = vadd.f32 %v1106, 1.0
  %v1171 = vadd.f32 %v1107, 1.0
  %v1172 = vadd.f32 %v1108, 1.0
  %v1173 = vadd.f32 %v1109, 1.0
  %v1174 = vadd.f32 %v1110, 1.0
  %v1175 = vadd.f32 %v1111, 1.0
  %v1176 = vadd.f32 %v1112, 1.0
  %v1177 = vadd.f32 %v1113, 1.0
  %v1178 = vadd.f32 %v1114, 1.0
  %v1179 = vadd.f32 %v1115, 1.0
  %v1180 = vadd.f32 %v1116, 1.0
  %v1181 = vadd.f32 %v1117, 1.0
  %v1182 = vadd.f32 %v1118, 1.0
  %v1183 = vadd.f32 %v1119, 1.0
  %v1184 = vadd.f32 %v1120, 1.0
  %v1185 = vadd.f32 %v1121, 1.0
  %v1186 = vadd.f32 %v1122, 1.0
  %v1187 = vadd.f32 %v1123, 1.0
  %v1188 = vadd.f32 %v1124, 1.0
  %v1189 = vadd.f32 %v1125, 1.0
  %v1190 = vadd.f32 %v1126, 1.0
  %v1191 = vadd.f32 %v1127, 1.0
  %v1192 = vadd.f32 %v1128, 1.0
  %v1193 = vadd.f32 %v1129, 1.0
  %v1194 = vadd.f32 %v1130, 1.0
  %v1195 = vadd.f32 %v1131, 1.0
  %v1196 = vadd.f32 %v1132, 1.0
  %v1197 = vadd.f32 %v1133, 1.0
  %v1198 = vrcp.pop %v1134
  %v1199 = vmul.f32 1.0, %v1198
  %v1200 = vrcp.pop %v1135
  %v1201 = vmul.f32 1.0, %v1200
  %v1202 = vrcp.pop %v1136
  %v1203 = vmul.f32 1.0, %v1202
  %v1204 = vrcp.pop %v1137
  %v1205 = vmul.f32 1.0, %v1204
  %v1206 = vrcp.pop %v1138
  %v1207 = vmul.f32 1.0, %v1206
  %v1208 = vrcp.pop %v1139
  %v1209 = vmul.f32 1.0, %v1208
  %v1210 = vrcp.pop %v1140
  %v1211 = vmul.f32 1.0, %v1210
  %v1212 = vrcp.pop %v1141
  %v1213 = vmul.f32 1.0, %v1212
  %v1214 = vrcp.pop %v1142
  %v1215 = vmul.f32 1.0, %v1214
  %v1216 = vrcp.pop %v1143
  %v1217 = vmul.f32 1.0, %v1216
  %v1218 = vrcp.pop %v1144
  %v1219 = vmul.f32 1.0, %v1218
  %v1220 = vrcp.pop %v1145
  %v1221 = vmul.f32 1.0, %v1220
  %v1222 = vrcp.pop %v1146
  %v1223 = vmul.f32 1.0, %v1222
  %v1224 = vrcp.pop %v1147
  %v1225 = vmul.f32 1.0, %v1224
  %v1226 = vrcp.pop %v1148
  %v1227 = vmul.f32 1.0, %v1226
  %v1228 = vrcp.pop %v1149
  %v1229 = vmul.f32 1.0, %v1228
  %v1230 = vrcp.pop %v1150
  %v1231 = vmul.f32 1.0, %v1230
  %v1232 = vrcp.pop %v1151
  %v1233 = vmul.f32 1.0, %v1232
  %v1234 = vrcp.pop %v1152
  %v1235 = vmul.f32 1.0, %v1234
  %v1236 = vrcp.pop %v1153
  %v1237 = vmul.f32 1.0, %v1236
  %v1238 = vrcp.pop %v1154
  %v1239 = vmul.f32 1.0, %v1238
  %v1240 = vrcp.pop %v1155
  %v1241 = vmul.f32 1.0, %v1240
  %v1242 = vrcp.pop %v1156
  %v1243 = vmul.f32 1.0, %v1242
  %v1244 = vrcp.pop %v1157
  %v1245 = vmul.f32 1.0, %v1244
  %v1246 = vrcp.pop %v1158
  %v1247 = vmul.f32 1.0, %v1246
  %v1248 = vrcp.pop %v1159
  %v1249 = vmul.f32 1.0, %v1248
  %v1250 = vrcp.pop %v1160
  %v1251 = vmul.f32 1.0, %v1250
  %v1252 = vrcp.pop %v1161
  %v1253 = vmul.f32 1.0, %v1252
  %v1254 = vrcp.pop %v1162
  %v1255 = vmul.f32 1.0, %v1254
  %v1256 = vrcp.pop %v1163
  %v1257 = vmul.f32 1.0, %v1256
  %v1258 = vrcp.pop %v1164
  %v1259 = vmul.f32 1.0, %v1258
  %v1260 = vrcp.pop %v1165
  %v1261 = vmul.f32 1.0, %v1260
  %v1262 = vrcp.pop %v1166
  %v1263 = vmul.f32 1.0, %v1262
  %v1264 = vrcp.pop %v1167
  %v1265 = vmul.f32 1.0, %v1264
  %v1266 = vrcp.pop %v1168
  %v1267 = vmul.f32 1.0, %v1266
  %v1268 = vrcp.pop %v1169
  %v1269 = vmul.f32 1.0, %v1268
  %v1270 = vrcp.pop %v1170
  %v1271 = vmul.f32 1.0, %v1270
  %v1272 = vrcp.pop %v1171
  %v1273 = vmul.f32 1.0, %v1272
  %v1274 = vrcp.pop %v1172
  %v1275 = vmul.f32 1.0, %v1274
  %v1276 = vrcp.pop %v1173
  %v1277 = vmul.f32 1.0, %v1276
  %v1278 = vrcp.pop %v1174
  %v1279 = vmul.f32 1.0, %v1278
  %v1280 = vrcp.pop %v1175
  %v1281 = vmul.f32 1.0, %v1280
  %v1282 = vrcp.pop %v1176
  %v1283 = vmul.f32 1.0, %v1282
  %v1284 = vrcp.pop %v1177
  %v1285 = vmul.f32 1.0, %v1284
  %v1286 = vrcp.pop %v1178
  %v1287 = vmul.f32 1.0, %v1286
  %v1288 = vrcp.pop %v1179
  %v1289 = vmul.f32 1.0, %v1288
  %v1290 = vrcp.pop %v1180
  %v1291 = vmul.f32 1.0, %v1290
  %v1292 = vrcp.pop %v1181
  %v1293 = vmul.f32 1.0, %v1292
  %v1294 = vrcp.pop %v1182
  %v1295 = vmul.f32 1.0, %v1294
  %v1296 = vrcp.pop %v1183
  %v1297 = vmul.f32 1.0, %v1296
  %v1298 = vrcp.pop %v1184
  %v1299 = vmul.f32 1.0, %v1298
  %v1300 = vrcp.pop %v1185
  %v1301 = vmul.f32 1.0, %v1300
  %v1302 = vrcp.pop %v1186
  %v1303 = vmul.f32 1.0, %v1302
  %v1304 = vrcp.pop %v1187
  %v1305 = vmul.f32 1.0, %v1304
  %v1306 = vrcp.pop %v1188
  %v1307 = vmul.f32 1.0, %v1306
  %v1308 = vrcp.pop %v1189
  %v1309 = vmul.f32 1.0, %v1308
  %v1310 = vrcp.pop %v1190
  %v1311 = vmul.f32 1.0, %v1310
  %v1312 = vrcp.pop %v1191
  %v1313 = vmul.f32 1.0, %v1312
  %v1314 = vrcp.pop %v1192
  %v1315 = vmul.f32 1.0, %v1314
  %v1316 = vrcp.pop %v1193
  %v1317 = vmul.f32 1.0, %v1316
  %v1318 = vrcp.pop %v1194
  %v1319 = vmul.f32 1.0, %v1318
  %v1320 = vrcp.pop %v1195
  %v1321 = vmul.f32 1.0, %v1320
  %v1322 = vrcp.pop %v1196
  %v1323 = vmul.f32 1.0, %v1322
  %v1324 = vrcp.pop %v1197
  %v1325 = vmul.f32 1.0, %v1324
  %v1326 = vmul.f32 %v1199, 1.0614054
  %v1327 = vmul.f32 %v1201, 1.0614054
  %v1328 = vmul.f32 %v1203, 1.0614054
  %v1329 = vmul.f32 %v1205, 1.0614054
  %v1330 = vmul.f32 %v1207, 1.0614054
  %v1331 = vmul.f32 %v1209, 1.0614054
  %v1332 = vmul.f32 %v1211, 1.0614054
  %v1333 = vmul.f32 %v1213, 1.0614054
  %v1334 = vmul.f32 %v1215, 1.0614054
  %v1335 = vmul.f32 %v1217, 1.0614054
  %v1336 = vmul.f32 %v1219, 1.0614054
  %v1337 = vmul.f32 %v1221, 1.0614054
  %v1338 = vmul.f32 %v1223, 1.0614054
  %v1339 = vmul.f32 %v1225, 1.0614054
  %v1340 = vmul.f32 %v1227, 1.0614054
  %v1341 = vmul.f32 %v1229, 1.0614054
  %v1342 = vmul.f32 %v1231, 1.0614054
  %v1343 = vmul.f32 %v1233, 1.0614054
  %v1344 = vmul.f32 %v1235, 1.0614054
  %v1345 = vmul.f32 %v1237, 1.0614054
  %v1346 = vmul.f32 %v1239, 1.0614054
  %v1347 = vmul.f32 %v1241, 1.0614054
  %v1348 = vmul.f32 %v1243, 1.0614054
  %v1349 = vmul.f32 %v1245, 1.0614054
  %v1350 = vmul.f32 %v1247, 1.0614054
  %v1351 = vmul.f32 %v1249, 1.0614054
  %v1352 = vmul.f32 %v1251, 1.0614054
  %v1353 = vmul.f32 %v1253, 1.0614054
  %v1354 = vmul.f32 %v1255, 1.0614054
  %v1355 = vmul.f32 %v1257, 1.0614054
  %v1356 = vmul.f32 %v1259, 1.0614054
  %v1357 = vmul.f32 %v1261, 1.0614054
  %v1358 = vmul.f32 %v1263, 1.0614054
  %v1359 = vmul.f32 %v1265, 1.0614054
  %v1360 = vmul.f32 %v1267, 1.0614054
  %v1361 = vmul.f32 %v1269, 1.0614054
  %v1362 = vmul.f32 %v1271, 1.0614054
  %v1363 = vmul.f32 %v1273, 1.0614054
  %v1364 = vmul.f32 %v1275, 1.0614054
  %v1365 = vmul.f32 %v1277, 1.0614054
  %v1366 = vmul.f32 %v1279, 1.0614054
  %v1367 = vmul.f32 %v1281, 1.0614054
  %v1368 = vmul.f32 %v1283, 1.0614054
  %v1369 = vmul.f32 %v1285, 1.0614054
  %v1370 = vmul.f32 %v1287, 1.0614054
  %v1371 = vmul.f32 %v1289, 1.0614054
  %v1372 = vmul.f32 %v1291, 1.0614054
  %v1373 = vmul.f32 %v1293, 1.0614054
  %v1374 = vmul.f32 %v1295, 1.0614054
  %v1375 = vmul.f32 %v1297, 1.0614054
  %v1376 = vmul.f32 %v1299, 1.0614054
  %v1377 = vmul.f32 %v1301, 1.0614054
  %v1378 = vmul.f32 %v1303, 1.0614054
  %v1379 = vmul.f32 %v1305, 1.0614054
  %v1380 = vmul.f32 %v1307, 1.0614054
  %v1381 = vmul.f32 %v1309, 1.0614054
  %v1382 = vmul.f32 %v1311, 1.0614054
  %v1383 = vmul.f32 %v1313, 1.0614054
  %v1384 = vmul.f32 %v1315, 1.0614054
  %v1385 = vmul.f32 %v1317, 1.0614054
  %v1386 = vmul.f32 %v1319, 1.0614054
  %v1387 = vmul.f32 %v1321, 1.0614054
  %v1388 = vmul.f32 %v1323, 1.0614054
  %v1389 = vmul.f32 %v1325, 1.0614054
  %v1390 = vadd.f32 %v1326, -1.4531521
  %v1391 = vadd.f32 %v1327, -1.4531521
  %v1392 = vadd.f32 %v1328, -1.4531521
  %v1393 = vadd.f32 %v1329, -1.4531521
  %v1394 = vadd.f32 %v1330, -1.4531521
  %v1395 = vadd.f32 %v1331, -1.4531521
  %v1396 = vadd.f32 %v1332, -1.4531521
  %v1397 = vadd.f32 %v1333, -1.4531521
  %v1398 = vadd.f32 %v1334, -1.4531521
  %v1399 = vadd.f32 %v1335, -1.4531521
  %v1400 = vadd.f32 %v1336, -1.4531521
  %v1401 = vadd.f32 %v1337, -1.4531521
  %v1402 = vadd.f32 %v1338, -1.4531521
  %v1403 = vadd.f32 %v1339, -1.4531521
  %v1404 = vadd.f32 %v1340, -1.4531521
  %v1405 = vadd.f32 %v1341, -1.4531521
  %v1406 = vadd.f32 %v1342, -1.4531521
  %v1407 = vadd.f32 %v1343, -1.4531521
  %v1408 = vadd.f32 %v1344, -1.4531521
  %v1409 = vadd.f32 %v1345, -1.4531521
  %v1410 = vadd.f32 %v1346, -1.4531521
  %v1411 = vadd.f32 %v1347, -1.4531521
  %v1412 = vadd.f32 %v1348, -1.4531521
  %v1413 = vadd.f32 %v1349, -1.4531521
  %v1414 = vadd.f32 %v1350, -1.4531521
  %v1415 = vadd.f32 %v1351, -1.4531521
  %v1416 = vadd.f32 %v1352, -1.4531521
  %v1417 = vadd.f32 %v1353, -1.4531521
  %v1418 = vadd.f32 %v1354, -1.4531521
  %v1419 = vadd.f32 %v1355, -1.4531521
  %v1420 = vadd.f32 %v1356, -1.4531521
  %v1421 = vadd.f32 %v1357, -1.4531521
  %v1422 = vadd.f32 %v1358, -1.4531521
  %v1423 = vadd.f32 %v1359, -1.4531521
  %v1424 = vadd.f32 %v1360, -1.4531521
  %v1425 = vadd.f32 %v1361, -1.4531521
  %v1426 = vadd.f32 %v1362, -1.4531521
  %v1427 = vadd.f32 %v1363, -1.4531521
  %v1428 = vadd.f32 %v1364, -1.4531521
  %v1429 = vadd.f32 %v1365, -1.4531521
  %v1430 = vadd.f32 %v1366, -1.4531521
  %v1431 = vadd.f32 %v1367, -1.4531521
  %v1432 = vadd.f32 %v1368, -1.4531521
  %v1433 = vadd.f32 %v1369, -1.4531521
  %v1434 = vadd.f32 %v1370, -1.4531521
  %v1435 = vadd.f32 %v1371, -1.4531521
  %v1436 = vadd.f32 %v1372, -1.4531521
  %v1437 = vadd.f32 %v1373, -1.4531521
  %v1438 = vadd.f32 %v1374, -1.4531521
  %v1439 = vadd.f32 %v1375, -1.4531521
  %v1440 = vadd.f32 %v1376, -1.4531521
  %v1441 = vadd.f32 %v1377, -1.4531521
  %v1442 = vadd.f32 %v1378, -1.4531521
  %v1443 = vadd.f32 %v1379, -1.4531521
  %v1444 = vadd.f32 %v1380, -1.4531521
  %v1445 = vadd.f32 %v1381, -1.4531521
  %v1446 = vadd.f32 %v1382, -1.4531521
  %v1447 = vadd.f32 %v1383, -1.4531521
  %v1448 = vadd.f32 %v1384, -1.4531521
  %v1449 = vadd.f32 %v1385, -1.4531521
  %v1450 = vadd.f32 %v1386, -1.4531521
  %v1451 = vadd.f32 %v1387, -1.4531521
  %v1452 = vadd.f32 %v1388, -1.4531521
  %v1453 = vadd.f32 %v1389, -1.4531521
  %v1454 = vmul.f32 %v1390, %v1199
  %v1455 = vmul.f32 %v1391, %v1201
  %v1456 = vmul.f32 %v1392, %v1203
  %v1457 = vmul.f32 %v1393, %v1205
  %v1458 = vmul.f32 %v1394, %v1207
  %v1459 = vmul.f32 %v1395, %v1209
  %v1460 = vmul.f32 %v1396, %v1211
  %v1461 = vmul.f32 %v1397, %v1213
  %v1462 = vmul.f32 %v1398, %v1215
  %v1463 = vmul.f32 %v1399, %v1217
  %v1464 = vmul.f32 %v1400, %v1219
  %v1465 = vmul.f32 %v1401, %v1221
  %v1466 = vmul.f32 %v1402, %v1223
  %v1467 = vmul.f32 %v1403, %v1225
  %v1468 = vmul.f32 %v1404, %v1227
  %v1469 = vmul.f32 %v1405, %v1229
  %v1470 = vmul.f32 %v1406, %v1231
  %v1471 = vmul.f32 %v1407, %v1233
  %v1472 = vmul.f32 %v1408, %v1235
  %v1473 = vmul.f32 %v1409, %v1237
  %v1474 = vmul.f32 %v1410, %v1239
  %v1475 = vmul.f32 %v1411, %v1241
  %v1476 = vmul.f32 %v1412, %v1243
  %v1477 = vmul.f32 %v1413, %v1245
  %v1478 = vmul.f32 %v1414, %v1247
  %v1479 = vmul.f32 %v1415, %v1249
  %v1480 = vmul.f32 %v1416, %v1251
  %v1481 = vmul.f32 %v1417, %v1253
  %v1482 = vmul.f32 %v1418, %v1255
  %v1483 = vmul.f32 %v1419, %v1257
  %v1484 = vmul.f32 %v1420, %v1259
  %v1485 = vmul.f32 %v1421, %v1261
  %v1486 = vmul.f32 %v1422, %v1263
  %v1487 = vmul.f32 %v1423, %v1265
  %v1488 = vmul.f32 %v1424, %v1267
  %v1489 = vmul.f32 %v1425, %v1269
  %v1490 = vmul.f32 %v1426, %v1271
  %v1491 = vmul.f32 %v1427, %v1273
  %v1492 = vmul.f32 %v1428, %v1275
  %v1493 = vmul.f32 %v1429, %v1277
  %v1494 = vmul.f32 %v1430, %v1279
  %v1495 = vmul.f32 %v1431, %v1281
  %v1496 = vmul.f32 %v1432, %v1283
  %v1497 = vmul.f32 %v1433, %v1285
  %v1498 = vmul.f32 %v1434, %v1287
  %v1499 = vmul.f32 %v1435, %v1289
  %v1500 = vmul.f32 %v1436, %v1291
  %v1501 = vmul.f32 %v1437, %v1293
  %v1502 = vmul.f32 %v1438, %v1295
  %v1503 = vmul.f32 %v1439, %v1297
  %v1504 = vmul.f32 %v1440, %v1299
  %v1505 = vmul.f32 %v1441, %v1301
  %v1506 = vmul.f32 %v1442, %v1303
  %v1507 = vmul.f32 %v1443, %v1305
  %v1508 = vmul.f32 %v1444, %v1307
  %v1509 = vmul.f32 %v1445, %v1309
  %v1510 = vmul.f32 %v1446, %v1311
  %v1511 = vmul.f32 %v1447, %v1313
  %v1512 = vmul.f32 %v1448, %v1315
  %v1513 = vmul.f32 %v1449, %v1317
  %v1514 = vmul.f32 %v1450, %v1319
  %v1515 = vmul.f32 %v1451, %v1321
  %v1516 = vmul.f32 %v1452, %v1323
  %v1517 = vmul.f32 %v1453, %v1325
  %v1518 = vadd.f32 %v1454, 1.4214138
  %v1519 = vadd.f32 %v1455, 1.4214138
  %v1520 = vadd.f32 %v1456, 1.4214138
  %v1521 = vadd.f32 %v1457, 1.4214138
  %v1522 = vadd.f32 %v1458, 1.4214138
  %v1523 = vadd.f32 %v1459, 1.4214138
  %v1524 = vadd.f32 %v1460, 1.4214138
  %v1525 = vadd.f32 %v1461, 1.4214138
  %v1526 = vadd.f32 %v1462, 1.4214138
  %v1527 = vadd.f32 %v1463, 1.4214138
  %v1528 = vadd.f32 %v1464, 1.4214138
  %v1529 = vadd.f32 %v1465, 1.4214138
  %v1530 = vadd.f32 %v1466, 1.4214138
  %v1531 = vadd.f32 %v1467, 1.4214138
  %v1532 = vadd.f32 %v1468, 1.4214138
  %v1533 = vadd.f32 %v1469, 1.4214138
  %v1534 = vadd.f32 %v1470, 1.4214138
  %v1535 = vadd.f32 %v1471, 1.4214138
  %v1536 = vadd.f32 %v1472, 1.4214138
  %v1537 = vadd.f32 %v1473, 1.4214138
  %v1538 = vadd.f32 %v1474, 1.4214138
  %v1539 = vadd.f32 %v1475, 1.4214138
  %v1540 = vadd.f32 %v1476, 1.4214138
  %v1541 = vadd.f32 %v1477, 1.4214138
  %v1542 = vadd.f32 %v1478, 1.4214138
  %v1543 = vadd.f32 %v1479, 1.4214138
  %v1544 = vadd.f32 %v1480, 1.4214138
  %v1545 = vadd.f32 %v1481, 1.4214138
  %v1546 = vadd.f32 %v1482, 1.4214138
  %v1547 = vadd.f32 %v1483, 1.4214138
  %v1548 = vadd.f32 %v1484, 1.4214138
  %v1549 = vadd.f32 %v1485, 1.4214138
  %v1550 = vadd.f32 %v1486, 1.4214138
  %v1551 = vadd.f32 %v1487, 1.4214138
  %v1552 = vadd.f32 %v1488, 1.4214138
  %v1553 = vadd.f32 %v1489, 1.4214138
  %v1554 = vadd.f32 %v1490, 1.4214138
  %v1555 = vadd.f32 %v1491, 1.4214138
  %v1556 = vadd.f32 %v1492, 1.4214138
  %v1557 = vadd.f32 %v1493, 1.4214138
  %v1558 = vadd.f32 %v1494, 1.4214138
  %v1559 = vadd.f32 %v1495, 1.4214138
  %v1560 = vadd.f32 %v1496, 1.4214138
  %v1561 = vadd.f32 %v1497, 1.4214138
  %v1562 = vadd.f32 %v1498, 1.4214138
  %v1563 = vadd.f32 %v1499, 1.4214138
  %v1564 = vadd.f32 %v1500, 1.4214138
  %v1565 = vadd.f32 %v1501, 1.4214138
  %v1566 = vadd.f32 %v1502, 1.4214138
  %v1567 = vadd.f32 %v1503, 1.4214138
  %v1568 = vadd.f32 %v1504, 1.4214138
  %v1569 = vadd.f32 %v1505, 1.4214138
  %v1570 = vadd.f32 %v1506, 1.4214138
  %v1571 = vadd.f32 %v1507, 1.4214138
  %v1572 = vadd.f32 %v1508, 1.4214138
  %v1573 = vadd.f32 %v1509, 1.4214138
  %v1574 = vadd.f32 %v1510, 1.4214138
  %v1575 = vadd.f32 %v1511, 1.4214138
  %v1576 = vadd.f32 %v1512, 1.4214138
  %v1577 = vadd.f32 %v1513, 1.4214138
  %v1578 = vadd.f32 %v1514, 1.4214138
  %v1579 = vadd.f32 %v1515, 1.4214138
  %v1580 = vadd.f32 %v1516, 1.4214138
  %v1581 = vadd.f32 %v1517, 1.4214138
  %v1582 = vmul.f32 %v1518, %v1199
  %v1583 = vmul.f32 %v1519, %v1201
  %v1584 = vmul.f32 %v1520, %v1203
  %v1585 = vmul.f32 %v1521, %v1205
  %v1586 = vmul.f32 %v1522, %v1207
  %v1587 = vmul.f32 %v1523, %v1209
  %v1588 = vmul.f32 %v1524, %v1211
  %v1589 = vmul.f32 %v1525, %v1213
  %v1590 = vmul.f32 %v1526, %v1215
  %v1591 = vmul.f32 %v1527, %v1217
  %v1592 = vmul.f32 %v1528, %v1219
  %v1593 = vmul.f32 %v1529, %v1221
  %v1594 = vmul.f32 %v1530, %v1223
  %v1595 = vmul.f32 %v1531, %v1225
  %v1596 = vmul.f32 %v1532, %v1227
  %v1597 = vmul.f32 %v1533, %v1229
  %v1598 = vmul.f32 %v1534, %v1231
  %v1599 = vmul.f32 %v1535, %v1233
  %v1600 = vmul.f32 %v1536, %v1235
  %v1601 = vmul.f32 %v1537, %v1237
  %v1602 = vmul.f32 %v1538, %v1239
  %v1603 = vmul.f32 %v1539, %v1241
  %v1604 = vmul.f32 %v1540, %v1243
  %v1605 = vmul.f32 %v1541, %v1245
  %v1606 = vmul.f32 %v1542, %v1247
  %v1607 = vmul.f32 %v1543, %v1249
  %v1608 = vmul.f32 %v1544, %v1251
  %v1609 = vmul.f32 %v1545, %v1253
  %v1610 = vmul.f32 %v1546, %v1255
  %v1611 = vmul.f32 %v1547, %v1257
  %v1612 = vmul.f32 %v1548, %v1259
  %v1613 = vmul.f32 %v1549, %v1261
  %v1614 = vmul.f32 %v1550, %v1263
  %v1615 = vmul.f32 %v1551, %v1265
  %v1616 = vmul.f32 %v1552, %v1267
  %v1617 = vmul.f32 %v1553, %v1269
  %v1618 = vmul.f32 %v1554, %v1271
  %v1619 = vmul.f32 %v1555, %v1273
  %v1620 = vmul.f32 %v1556, %v1275
  %v1621 = vmul.f32 %v1557, %v1277
  %v1622 = vmul.f32 %v1558, %v1279
  %v1623 = vmul.f32 %v1559, %v1281
  %v1624 = vmul.f32 %v1560, %v1283
  %v1625 = vmul.f32 %v1561, %v1285
  %v1626 = vmul.f32 %v1562, %v1287
  %v1627 = vmul.f32 %v1563, %v1289
  %v1628 = vmul.f32 %v1564, %v1291
  %v1629 = vmul.f32 %v1565, %v1293
  %v1630 = vmul.f32 %v1566, %v1295
  %v1631 = vmul.f32 %v1567, %v1297
  %v1632 = vmul.f32 %v1568, %v1299
  %v1633 = vmul.f32 %v1569, %v1301
  %v1634 = vmul.f32 %v1570, %v1303
  %v1635 = vmul.f32 %v1571, %v1305
  %v1636 = vmul.f32 %v1572, %v1307
  %v1637 = vmul.f32 %v1573, %v1309
  %v1638 = vmul.f32 %v1574, %v1311
  %v1639 = vmul.f32 %v1575, %v1313
  %v1640 = vmul.f32 %v1576, %v1315
  %v1641 = vmul.f32 %v1577, %v1317
  %v1642 = vmul.f32 %v1578, %v1319
  %v1643 = vmul.f32 %v1579, %v1321
  %v1644 = vmul.f32 %v1580, %v1323
  %v1645 = vmul.f32 %v1581, %v1325
  %v1646 = vadd.f32 %v1582, -0.28449672
  %v1647 = vadd.f32 %v1583, -0.28449672
  %v1648 = vadd.f32 %v1584, -0.28449672
  %v1649 = vadd.f32 %v1585, -0.28449672
  %v1650 = vadd.f32 %v1586, -0.28449672
  %v1651 = vadd.f32 %v1587, -0.28449672
  %v1652 = vadd.f32 %v1588, -0.28449672
  %v1653 = vadd.f32 %v1589, -0.28449672
  %v1654 = vadd.f32 %v1590, -0.28449672
  %v1655 = vadd.f32 %v1591, -0.28449672
  %v1656 = vadd.f32 %v1592, -0.28449672
  %v1657 = vadd.f32 %v1593, -0.28449672
  %v1658 = vadd.f32 %v1594, -0.28449672
  %v1659 = vadd.f32 %v1595, -0.28449672
  %v1660 = vadd.f32 %v1596, -0.28449672
  %v1661 = vadd.f32 %v1597, -0.28449672
  %v1662 = vadd.f32 %v1598, -0.28449672
  %v1663 = vadd.f32 %v1599, -0.28449672
  %v1664 = vadd.f32 %v1600, -0.28449672
  %v1665 = vadd.f32 %v1601, -0.28449672
  %v1666 = vadd.f32 %v1602, -0.28449672
  %v1667 = vadd.f32 %v1603, -0.28449672
  %v1668 = vadd.f32 %v1604, -0.28449672
  %v1669 = vadd.f32 %v1605, -0.28449672
  %v1670 = vadd.f32 %v1606, -0.28449672
  %v1671 = vadd.f32 %v1607, -0.28449672
  %v1672 = vadd.f32 %v1608, -0.28449672
  %v1673 = vadd.f32 %v1609, -0.28449672
  %v1674 = vadd.f32 %v1610, -0.28449672
  %v1675 = vadd.f32 %v1611, -0.28449672
  %v1676 = vadd.f32 %v1612, -0.28449672
  %v1677 = vadd.f32 %v1613, -0.28449672
  %v1678 = vadd.f32 %v1614, -0.28449672
  %v1679 = vadd.f32 %v1615, -0.28449672
  %v1680 = vadd.f32 %v1616, -0.28449672
  %v1681 = vadd.f32 %v1617, -0.28449672
  %v1682 = vadd.f32 %v1618, -0.28449672
  %v1683 = vadd.f32 %v1619, -0.28449672
  %v1684 = vadd.f32 %v1620, -0.28449672
  %v1685 = vadd.f32 %v1621, -0.28449672
  %v1686 = vadd.f32 %v1622, -0.28449672
  %v1687 = vadd.f32 %v1623, -0.28449672
  %v1688 = vadd.f32 %v1624, -0.28449672
  %v1689 = vadd.f32 %v1625, -0.28449672
  %v1690 = vadd.f32 %v1626, -0.28449672
  %v1691 = vadd.f32 %v1627, -0.28449672
  %v1692 = vadd.f32 %v1628, -0.28449672
  %v1693 = vadd.f32 %v1629, -0.28449672
  %v1694 = vadd.f32 %v1630, -0.28449672
  %v1695 = vadd.f32 %v1631, -0.28449672
  %v1696 = vadd.f32 %v1632, -0.28449672
  %v1697 = vadd.f32 %v1633, -0.28449672
  %v1698 = vadd.f32 %v1634, -0.28449672
  %v1699 = vadd.f32 %v1635, -0.28449672
  %v1700 = vadd.f32 %v1636, -0.28449672
  %v1701 = vadd.f32 %v1637, -0.28449672
  %v1702 = vadd.f32 %v1638, -0.28449672
  %v1703 = vadd.f32 %v1639, -0.28449672
  %v1704 = vadd.f32 %v1640, -0.28449672
  %v1705 = vadd.f32 %v1641, -0.28449672
  %v1706 = vadd.f32 %v1642, -0.28449672
  %v1707 = vadd.f32 %v1643, -0.28449672
  %v1708 = vadd.f32 %v1644, -0.28449672
  %v1709 = vadd.f32 %v1645, -0.28449672
  %v1710 = vmul.f32 %v1646, %v1199
  %v1711 = vmul.f32 %v1647, %v1201
  %v1712 = vmul.f32 %v1648, %v1203
  %v1713 = vmul.f32 %v1649, %v1205
  %v1714 = vmul.f32 %v1650, %v1207
  %v1715 = vmul.f32 %v1651, %v1209
  %v1716 = vmul.f32 %v1652, %v1211
  %v1717 = vmul.f32 %v1653, %v1213
  %v1718 = vmul.f32 %v1654, %v1215
  %v1719 = vmul.f32 %v1655, %v1217
  %v1720 = vmul.f32 %v1656, %v1219
  %v1721 = vmul.f32 %v1657, %v1221
  %v1722 = vmul.f32 %v1658, %v1223
  %v1723 = vmul.f32 %v1659, %v1225
  %v1724 = vmul.f32 %v1660, %v1227
  %v1725 = vmul.f32 %v1661, %v1229
  %v1726 = vmul.f32 %v1662, %v1231
  %v1727 = vmul.f32 %v1663, %v1233
  %v1728 = vmul.f32 %v1664, %v1235
  %v1729 = vmul.f32 %v1665, %v1237
  %v1730 = vmul.f32 %v1666, %v1239
  %v1731 = vmul.f32 %v1667, %v1241
  %v1732 = vmul.f32 %v1668, %v1243
  %v1733 = vmul.f32 %v1669, %v1245
  %v1734 = vmul.f32 %v1670, %v1247
  %v1735 = vmul.f32 %v1671, %v1249
  %v1736 = vmul.f32 %v1672, %v1251
  %v1737 = vmul.f32 %v1673, %v1253
  %v1738 = vmul.f32 %v1674, %v1255
  %v1739 = vmul.f32 %v1675, %v1257
  %v1740 = vmul.f32 %v1676, %v1259
  %v1741 = vmul.f32 %v1677, %v1261
  %v1742 = vmul.f32 %v1678, %v1263
  %v1743 = vmul.f32 %v1679, %v1265
  %v1744 = vmul.f32 %v1680, %v1267
  %v1745 = vmul.f32 %v1681, %v1269
  %v1746 = vmul.f32 %v1682, %v1271
  %v1747 = vmul.f32 %v1683, %v1273
  %v1748 = vmul.f32 %v1684, %v1275
  %v1749 = vmul.f32 %v1685, %v1277
  %v1750 = vmul.f32 %v1686, %v1279
  %v1751 = vmul.f32 %v1687, %v1281
  %v1752 = vmul.f32 %v1688, %v1283
  %v1753 = vmul.f32 %v1689, %v1285
  %v1754 = vmul.f32 %v1690, %v1287
  %v1755 = vmul.f32 %v1691, %v1289
  %v1756 = vmul.f32 %v1692, %v1291
  %v1757 = vmul.f32 %v1693, %v1293
  %v1758 = vmul.f32 %v1694, %v1295
  %v1759 = vmul.f32 %v1695, %v1297
  %v1760 = vmul.f32 %v1696, %v1299
  %v1761 = vmul.f32 %v1697, %v1301
  %v1762 = vmul.f32 %v1698, %v1303
  %v1763 = vmul.f32 %v1699, %v1305
  %v1764 = vmul.f32 %v1700, %v1307
  %v1765 = vmul.f32 %v1701, %v1309
  %v1766 = vmul.f32 %v1702, %v1311
  %v1767 = vmul.f32 %v1703, %v1313
  %v1768 = vmul.f32 %v1704, %v1315
  %v1769 = vmul.f32 %v1705, %v1317
  %v1770 = vmul.f32 %v1706, %v1319
  %v1771 = vmul.f32 %v1707, %v1321
  %v1772 = vmul.f32 %v1708, %v1323
  %v1773 = vmul.f32 %v1709, %v1325
  %v1774 = vadd.f32 %v1710, 0.2548296
  %v1775 = vadd.f32 %v1711, 0.2548296
  %v1776 = vadd.f32 %v1712, 0.2548296
  %v1777 = vadd.f32 %v1713, 0.2548296
  %v1778 = vadd.f32 %v1714, 0.2548296
  %v1779 = vadd.f32 %v1715, 0.2548296
  %v1780 = vadd.f32 %v1716, 0.2548296
  %v1781 = vadd.f32 %v1717, 0.2548296
  %v1782 = vadd.f32 %v1718, 0.2548296
  %v1783 = vadd.f32 %v1719, 0.2548296
  %v1784 = vadd.f32 %v1720, 0.2548296
  %v1785 = vadd.f32 %v1721, 0.2548296
  %v1786 = vadd.f32 %v1722, 0.2548296
  %v1787 = vadd.f32 %v1723, 0.2548296
  %v1788 = vadd.f32 %v1724, 0.2548296
  %v1789 = vadd.f32 %v1725, 0.2548296
  %v1790 = vadd.f32 %v1726, 0.2548296
  %v1791 = vadd.f32 %v1727, 0.2548296
  %v1792 = vadd.f32 %v1728, 0.2548296
  %v1793 = vadd.f32 %v1729, 0.2548296
  %v1794 = vadd.f32 %v1730, 0.2548296
  %v1795 = vadd.f32 %v1731, 0.2548296
  %v1796 = vadd.f32 %v1732, 0.2548296
  %v1797 = vadd.f32 %v1733, 0.2548296
  %v1798 = vadd.f32 %v1734, 0.2548296
  %v1799 = vadd.f32 %v1735, 0.2548296
  %v1800 = vadd.f32 %v1736, 0.2548296
  %v1801 = vadd.f32 %v1737, 0.2548296
  %v1802 = vadd.f32 %v1738, 0.2548296
  %v1803 = vadd.f32 %v1739, 0.2548296
  %v1804 = vadd.f32 %v1740, 0.2548296
  %v1805 = vadd.f32 %v1741, 0.2548296
  %v1806 = vadd.f32 %v1742, 0.2548296
  %v1807 = vadd.f32 %v1743, 0.2548296
  %v1808 = vadd.f32 %v1744, 0.2548296
  %v1809 = vadd.f32 %v1745, 0.2548296
  %v1810 = vadd.f32 %v1746, 0.2548296
  %v1811 = vadd.f32 %v1747, 0.2548296
  %v1812 = vadd.f32 %v1748, 0.2548296
  %v1813 = vadd.f32 %v1749, 0.2548296
  %v1814 = vadd.f32 %v1750, 0.2548296
  %v1815 = vadd.f32 %v1751, 0.2548296
  %v1816 = vadd.f32 %v1752, 0.2548296
  %v1817 = vadd.f32 %v1753, 0.2548296
  %v1818 = vadd.f32 %v1754, 0.2548296
  %v1819 = vadd.f32 %v1755, 0.2548296
  %v1820 = vadd.f32 %v1756, 0.2548296
  %v1821 = vadd.f32 %v1757, 0.2548296
  %v1822 = vadd.f32 %v1758, 0.2548296
  %v1823 = vadd.f32 %v1759, 0.2548296
  %v1824 = vadd.f32 %v1760, 0.2548296
  %v1825 = vadd.f32 %v1761, 0.2548296
  %v1826 = vadd.f32 %v1762, 0.2548296
  %v1827 = vadd.f32 %v1763, 0.2548296
  %v1828 = vadd.f32 %v1764, 0.2548296
  %v1829 = vadd.f32 %v1765, 0.2548296
  %v1830 = vadd.f32 %v1766, 0.2548296
  %v1831 = vadd.f32 %v1767, 0.2548296
  %v1832 = vadd.f32 %v1768, 0.2548296
  %v1833 = vadd.f32 %v1769, 0.2548296
  %v1834 = vadd.f32 %v1770, 0.2548296
  %v1835 = vadd.f32 %v1771, 0.2548296
  %v1836 = vadd.f32 %v1772, 0.2548296
  %v1837 = vadd.f32 %v1773, 0.2548296
  %v1838 = vmul.f32 %v1774, %v1199
  %v1839 = vmul.f32 %v1775, %v1201
  %v1840 = vmul.f32 %v1776, %v1203
  %v1841 = vmul.f32 %v1777, %v1205
  %v1842 = vmul.f32 %v1778, %v1207
  %v1843 = vmul.f32 %v1779, %v1209
  %v1844 = vmul.f32 %v1780, %v1211
  %v1845 = vmul.f32 %v1781, %v1213
  %v1846 = vmul.f32 %v1782, %v1215
  %v1847 = vmul.f32 %v1783, %v1217
  %v1848 = vmul.f32 %v1784, %v1219
  %v1849 = vmul.f32 %v1785, %v1221
  %v1850 = vmul.f32 %v1786, %v1223
  %v1851 = vmul.f32 %v1787, %v1225
  %v1852 = vmul.f32 %v1788, %v1227
  %v1853 = vmul.f32 %v1789, %v1229
  %v1854 = vmul.f32 %v1790, %v1231
  %v1855 = vmul.f32 %v1791, %v1233
  %v1856 = vmul.f32 %v1792, %v1235
  %v1857 = vmul.f32 %v1793, %v1237
  %v1858 = vmul.f32 %v1794, %v1239
  %v1859 = vmul.f32 %v1795, %v1241
  %v1860 = vmul.f32 %v1796, %v1243
  %v1861 = vmul.f32 %v1797, %v1245
  %v1862 = vmul.f32 %v1798, %v1247
  %v1863 = vmul.f32 %v1799, %v1249
  %v1864 = vmul.f32 %v1800, %v1251
  %v1865 = vmul.f32 %v1801, %v1253
  %v1866 = vmul.f32 %v1802, %v1255
  %v1867 = vmul.f32 %v1803, %v1257
  %v1868 = vmul.f32 %v1804, %v1259
  %v1869 = vmul.f32 %v1805, %v1261
  %v1870 = vmul.f32 %v1806, %v1263
  %v1871 = vmul.f32 %v1807, %v1265
  %v1872 = vmul.f32 %v1808, %v1267
  %v1873 = vmul.f32 %v1809, %v1269
  %v1874 = vmul.f32 %v1810, %v1271
  %v1875 = vmul.f32 %v1811, %v1273
  %v1876 = vmul.f32 %v1812, %v1275
  %v1877 = vmul.f32 %v1813, %v1277
  %v1878 = vmul.f32 %v1814, %v1279
  %v1879 = vmul.f32 %v1815, %v1281
  %v1880 = vmul.f32 %v1816, %v1283
  %v1881 = vmul.f32 %v1817, %v1285
  %v1882 = vmul.f32 %v1818, %v1287
  %v1883 = vmul.f32 %v1819, %v1289
  %v1884 = vmul.f32 %v1820, %v1291
  %v1885 = vmul.f32 %v1821, %v1293
  %v1886 = vmul.f32 %v1822, %v1295
  %v1887 = vmul.f32 %v1823, %v1297
  %v1888 = vmul.f32 %v1824, %v1299
  %v1889 = vmul.f32 %v1825, %v1301
  %v1890 = vmul.f32 %v1826, %v1303
  %v1891 = vmul.f32 %v1827, %v1305
  %v1892 = vmul.f32 %v1828, %v1307
  %v1893 = vmul.f32 %v1829, %v1309
  %v1894 = vmul.f32 %v1830, %v1311
  %v1895 = vmul.f32 %v1831, %v1313
  %v1896 = vmul.f32 %v1832, %v1315
  %v1897 = vmul.f32 %v1833, %v1317
  %v1898 = vmul.f32 %v1834, %v1319
  %v1899 = vmul.f32 %v1835, %v1321
  %v1900 = vmul.f32 %v1836, %v1323
  %v1901 = vmul.f32 %v1837, %v1325
  %v1902 = vsub.f32 0.0, %v1006
  %v1903 = vsub.f32 0.0, %v1007
  %v1904 = vsub.f32 0.0, %v1008
  %v1905 = vsub.f32 0.0, %v1009
  %v1906 = vsub.f32 0.0, %v1010
  %v1907 = vsub.f32 0.0, %v1011
  %v1908 = vsub.f32 0.0, %v1012
  %v1909 = vsub.f32 0.0, %v1013
  %v1910 = vsub.f32 0.0, %v1014
  %v1911 = vsub.f32 0.0, %v1015
  %v1912 = vsub.f32 0.0, %v1016
  %v1913 = vsub.f32 0.0, %v1017
  %v1914 = vsub.f32 0.0, %v1018
  %v1915 = vsub.f32 0.0, %v1019
  %v1916 = vsub.f32 0.0, %v1020
  %v1917 = vsub.f32 0.0, %v1021
  %v1918 = vsub.f32 0.0, %v1022
  %v1919 = vsub.f32 0.0, %v1023
  %v1920 = vsub.f32 0.0, %v1024
  %v1921 = vsub.f32 0.0, %v1025
  %v1922 = vsub.f32 0.0, %v1026
  %v1923 = vsub.f32 0.0, %v1027
  %v1924 = vsub.f32 0.0, %v1028
  %v1925 = vsub.f32 0.0, %v1029
  %v1926 = vsub.f32 0.0, %v1030
  %v1927 = vsub.f32 0.0, %v1031
  %v1928 = vsub.f32 0.0, %v1032
  %v1929 = vsub.f32 0.0, %v1033
  %v1930 = vsub.f32 0.0, %v1034
  %v1931 = vsub.f32 0.0, %v1035
  %v1932 = vsub.f32 0.0, %v1036
  %v1933 = vsub.f32 0.0, %v1037
  %v1934 = vsub.f32 0.0, %v1038
  %v1935 = vsub.f32 0.0, %v1039
  %v1936 = vsub.f32 0.0, %v1040
  %v1937 = vsub.f32 0.0, %v1041
  %v1938 = vsub.f32 0.0, %v1042
  %v1939 = vsub.f32 0.0, %v1043
  %v1940 = vsub.f32 0.0, %v1044
  %v1941 = vsub.f32 0.0, %v1045
  %v1942 = vsub.f32 0.0, %v1046
  %v1943 = vsub.f32 0.0, %v1047
  %v1944 = vsub.f32 0.0, %v1048
  %v1945 = vsub.f32 0.0, %v1049
  %v1946 = vsub.f32 0.0, %v1050
  %v1947 = vsub.f32 0.0, %v1051
  %v1948 = vsub.f32 0.0, %v1052
  %v1949 = vsub.f32 0.0, %v1053
  %v1950 = vsub.f32 0.0, %v1054
  %v1951 = vsub.f32 0.0, %v1055
  %v1952 = vsub.f32 0.0, %v1056
  %v1953 = vsub.f32 0.0, %v1057
  %v1954 = vsub.f32 0.0, %v1058
  %v1955 = vsub.f32 0.0, %v1059
  %v1956 = vsub.f32 0.0, %v1060
  %v1957 = vsub.f32 0.0, %v1061
  %v1958 = vsub.f32 0.0, %v1062
  %v1959 = vsub.f32 0.0, %v1063
  %v1960 = vsub.f32 0.0, %v1064
  %v1961 = vsub.f32 0.0, %v1065
  %v1962 = vsub.f32 0.0, %v1066
  %v1963 = vsub.f32 0.0, %v1067
  %v1964 = vsub.f32 0.0, %v1068
  %v1965 = vsub.f32 0.0, %v1069
  %v1966 = vmul.f32 %v1902, %v1006
  %v1967 = vmul.f32 %v1903, %v1007
  %v1968 = vmul.f32 %v1904, %v1008
  %v1969 = vmul.f32 %v1905, %v1009
  %v1970 = vmul.f32 %v1906, %v1010
  %v1971 = vmul.f32 %v1907, %v1011
  %v1972 = vmul.f32 %v1908, %v1012
  %v1973 = vmul.f32 %v1909, %v1013
  %v1974 = vmul.f32 %v1910, %v1014
  %v1975 = vmul.f32 %v1911, %v1015
  %v1976 = vmul.f32 %v1912, %v1016
  %v1977 = vmul.f32 %v1913, %v1017
  %v1978 = vmul.f32 %v1914, %v1018
  %v1979 = vmul.f32 %v1915, %v1019
  %v1980 = vmul.f32 %v1916, %v1020
  %v1981 = vmul.f32 %v1917, %v1021
  %v1982 = vmul.f32 %v1918, %v1022
  %v1983 = vmul.f32 %v1919, %v1023
  %v1984 = vmul.f32 %v1920, %v1024
  %v1985 = vmul.f32 %v1921, %v1025
  %v1986 = vmul.f32 %v1922, %v1026
  %v1987 = vmul.f32 %v1923, %v1027
  %v1988 = vmul.f32 %v1924, %v1028
  %v1989 = vmul.f32 %v1925, %v1029
  %v1990 = vmul.f32 %v1926, %v1030
  %v1991 = vmul.f32 %v1927, %v1031
  %v1992 = vmul.f32 %v1928, %v1032
  %v1993 = vmul.f32 %v1929, %v1033
  %v1994 = vmul.f32 %v1930, %v1034
  %v1995 = vmul.f32 %v1931, %v1035
  %v1996 = vmul.f32 %v1932, %v1036
  %v1997 = vmul.f32 %v1933, %v1037
  %v1998 = vmul.f32 %v1934, %v1038
  %v1999 = vmul.f32 %v1935, %v1039
  %v2000 = vmul.f32 %v1936, %v1040
  %v2001 = vmul.f32 %v1937, %v1041
  %v2002 = vmul.f32 %v1938, %v1042
  %v2003 = vmul.f32 %v1939, %v1043
  %v2004 = vmul.f32 %v1940, %v1044
  %v2005 = vmul.f32 %v1941, %v1045
  %v2006 = vmul.f32 %v1942, %v1046
  %v2007 = vmul.f32 %v1943, %v1047
  %v2008 = vmul.f32 %v1944, %v1048
  %v2009 = vmul.f32 %v1945, %v1049
  %v2010 = vmul.f32 %v1946, %v1050
  %v2011 = vmul.f32 %v1947, %v1051
  %v2012 = vmul.f32 %v1948, %v1052
  %v2013 = vmul.f32 %v1949, %v1053
  %v2014 = vmul.f32 %v1950, %v1054
  %v2015 = vmul.f32 %v1951, %v1055
  %v2016 = vmul.f32 %v1952, %v1056
  %v2017 = vmul.f32 %v1953, %v1057
  %v2018 = vmul.f32 %v1954, %v1058
  %v2019 = vmul.f32 %v1955, %v1059
  %v2020 = vmul.f32 %v1956, %v1060
  %v2021 = vmul.f32 %v1957, %v1061
  %v2022 = vmul.f32 %v1958, %v1062
  %v2023 = vmul.f32 %v1959, %v1063
  %v2024 = vmul.f32 %v1960, %v1064
  %v2025 = vmul.f32 %v1961, %v1065
  %v2026 = vmul.f32 %v1962, %v1066
  %v2027 = vmul.f32 %v1963, %v1067
  %v2028 = vmul.f32 %v1964, %v1068
  %v2029 = vmul.f32 %v1965, %v1069
  %v2030 = vmul.f32 %v1966, 1.442695
  %v2031 = vpow.pop %v2030
  %v2032 = vmul.f32 %v1967, 1.442695
  %v2033 = vpow.pop %v2032
  %v2034 = vmul.f32 %v1968, 1.442695
  %v2035 = vpow.pop %v2034
  %v2036 = vmul.f32 %v1969, 1.442695
  %v2037 = vpow.pop %v2036
  %v2038 = vmul.f32 %v1970, 1.442695
  %v2039 = vpow.pop %v2038
  %v2040 = vmul.f32 %v1971, 1.442695
  %v2041 = vpow.pop %v2040
  %v2042 = vmul.f32 %v1972, 1.442695
  %v2043 = vpow.pop %v2042
  %v2044 = vmul.f32 %v1973, 1.442695
  %v2045 = vpow.pop %v2044
  %v2046 = vmul.f32 %v1974, 1.442695
  %v2047 = vpow.pop %v2046
  %v2048 = vmul.f32 %v1975, 1.442695
  %v2049 = vpow.pop %v2048
  %v2050 = vmul.f32 %v1976, 1.442695
  %v2051 = vpow.pop %v2050
  %v2052 = vmul.f32 %v1977, 1.442695
  %v2053 = vpow.pop %v2052
  %v2054 = vmul.f32 %v1978, 1.442695
  %v2055 = vpow.pop %v2054
  %v2056 = vmul.f32 %v1979, 1.442695
  %v2057 = vpow.pop %v2056
  %v2058 = vmul.f32 %v1980, 1.442695
  %v2059 = vpow.pop %v2058
  %v2060 = vmul.f32 %v1981, 1.442695
  %v2061 = vpow.pop %v2060
  %v2062 = vmul.f32 %v1982, 1.442695
  %v2063 = vpow.pop %v2062
  %v2064 = vmul.f32 %v1983, 1.442695
  %v2065 = vpow.pop %v2064
  %v2066 = vmul.f32 %v1984, 1.442695
  %v2067 = vpow.pop %v2066
  %v2068 = vmul.f32 %v1985, 1.442695
  %v2069 = vpow.pop %v2068
  %v2070 = vmul.f32 %v1986, 1.442695
  %v2071 = vpow.pop %v2070
  %v2072 = vmul.f32 %v1987, 1.442695
  %v2073 = vpow.pop %v2072
  %v2074 = vmul.f32 %v1988, 1.442695
  %v2075 = vpow.pop %v2074
  %v2076 = vmul.f32 %v1989, 1.442695
  %v2077 = vpow.pop %v2076
  %v2078 = vmul.f32 %v1990, 1.442695
  %v2079 = vpow.pop %v2078
  %v2080 = vmul.f32 %v1991, 1.442695
  %v2081 = vpow.pop %v2080
  %v2082 = vmul.f32 %v1992, 1.442695
  %v2083 = vpow.pop %v2082
  %v2084 = vmul.f32 %v1993, 1.442695
  %v2085 = vpow.pop %v2084
  %v2086 = vmul.f32 %v1994, 1.442695
  %v2087 = vpow.pop %v2086
  %v2088 = vmul.f32 %v1995, 1.442695
  %v2089 = vpow.pop %v2088
  %v2090 = vmul.f32 %v1996, 1.442695
  %v2091 = vpow.pop %v2090
  %v2092 = vmul.f32 %v1997, 1.442695
  %v2093 = vpow.pop %v2092
  %v2094 = vmul.f32 %v1998, 1.442695
  %v2095 = vpow.pop %v2094
  %v2096 = vmul.f32 %v1999, 1.442695
  %v2097 = vpow.pop %v2096
  %v2098 = vmul.f32 %v2000, 1.442695
  %v2099 = vpow.pop %v2098
  %v2100 = vmul.f32 %v2001, 1.442695
  %v2101 = vpow.pop %v2100
  %v2102 = vmul.f32 %v2002, 1.442695
  %v2103 = vpow.pop %v2102
  %v2104 = vmul.f32 %v2003, 1.442695
  %v2105 = vpow.pop %v2104
  %v2106 = vmul.f32 %v2004, 1.442695
  %v2107 = vpow.pop %v2106
  %v2108 = vmul.f32 %v2005, 1.442695
  %v2109 = vpow.pop %v2108
  %v2110 = vmul.f32 %v2006, 1.442695
  %v2111 = vpow.pop %v2110
  %v2112 = vmul.f32 %v2007, 1.442695
  %v2113 = vpow.pop %v2112
  %v2114 = vmul.f32 %v2008, 1.442695
  %v2115 = vpow.pop %v2114
  %v2116 = vmul.f32 %v2009, 1.442695
  %v2117 = vpow.pop %v2116
  %v2118 = vmul.f32 %v2010, 1.442695
  %v2119 = vpow.pop %v2118
  %v2120 = vmul.f32 %v2011, 1.442695
  %v2121 = vpow.pop %v2120
  %v2122 = vmul.f32 %v2012, 1.442695
  %v2123 = vpow.pop %v2122
  %v2124 = vmul.f32 %v2013, 1.442695
  %v2125 = vpow.pop %v2124
  %v2126 = vmul.f32 %v2014, 1.442695
  %v2127 = vpow.pop %v2126
  %v2128 = vmul.f32 %v2015, 1.442695
  %v2129 = vpow.pop %v2128
  %v2130 = vmul.f32 %v2016, 1.442695
  %v2131 = vpow.pop %v2130
  %v2132 = vmul.f32 %v2017, 1.442695
  %v2133 = vpow.pop %v2132
  %v2134 = vmul.f32 %v2018, 1.442695
  %v2135 = vpow.pop %v2134
  %v2136 = vmul.f32 %v2019, 1.442695
  %v2137 = vpow.pop %v2136
  %v2138 = vmul.f32 %v2020, 1.442695
  %v2139 = vpow.pop %v2138
  %v2140 = vmul.f32 %v2021, 1.442695
  %v2141 = vpow.pop %v2140
  %v2142 = vmul.f32 %v2022, 1.442695
  %v2143 = vpow.pop %v2142
  %v2144 = vmul.f32 %v2023, 1.442695
  %v2145 = vpow.pop %v2144
  %v2146 = vmul.f32 %v2024, 1.442695
  %v2147 = vpow.pop %v2146
  %v2148 = vmul.f32 %v2025, 1.442695
  %v2149 = vpow.pop %v2148
  %v2150 = vmul.f32 %v2026, 1.442695
  %v2151 = vpow.pop %v2150
  %v2152 = vmul.f32 %v2027, 1.442695
  %v2153 = vpow.pop %v2152
  %v2154 = vmul.f32 %v2028, 1.442695
  %v2155 = vpow.pop %v2154
  %v2156 = vmul.f32 %v2029, 1.442695
  %v2157 = vpow.pop %v2156
  %v2158 = vmul.f32 %v1838, %v2031
  %v2159 = vmul.f32 %v1839, %v2033
  %v2160 = vmul.f32 %v1840, %v2035
  %v2161 = vmul.f32 %v1841, %v2037
  %v2162 = vmul.f32 %v1842, %v2039
  %v2163 = vmul.f32 %v1843, %v2041
  %v2164 = vmul.f32 %v1844, %v2043
  %v2165 = vmul.f32 %v1845, %v2045
  %v2166 = vmul.f32 %v1846, %v2047
  %v2167 = vmul.f32 %v1847, %v2049
  %v2168 = vmul.f32 %v1848, %v2051
  %v2169 = vmul.f32 %v1849, %v2053
  %v2170 = vmul.f32 %v1850, %v2055
  %v2171 = vmul.f32 %v1851, %v2057
  %v2172 = vmul.f32 %v1852, %v2059
  %v2173 = vmul.f32 %v1853, %v2061
  %v2174 = vmul.f32 %v1854, %v2063
  %v2175 = vmul.f32 %v1855, %v2065
  %v2176 = vmul.f32 %v1856, %v2067
  %v2177 = vmul.f32 %v1857, %v2069
  %v2178 = vmul.f32 %v1858, %v2071
  %v2179 = vmul.f32 %v1859, %v2073
  %v2180 = vmul.f32 %v1860, %v2075
  %v2181 = vmul.f32 %v1861, %v2077
  %v2182 = vmul.f32 %v1862, %v2079
  %v2183 = vmul.f32 %v1863, %v2081
  %v2184 = vmul.f32 %v1864, %v2083
  %v2185 = vmul.f32 %v1865, %v2085
  %v2186 = vmul.f32 %v1866, %v2087
  %v2187 = vmul.f32 %v1867, %v2089
  %v2188 = vmul.f32 %v1868, %v2091
  %v2189 = vmul.f32 %v1869, %v2093
  %v2190 = vmul.f32 %v1870, %v2095
  %v2191 = vmul.f32 %v1871, %v2097
  %v2192 = vmul.f32 %v1872, %v2099
  %v2193 = vmul.f32 %v1873, %v2101
  %v2194 = vmul.f32 %v1874, %v2103
  %v2195 = vmul.f32 %v1875, %v2105
  %v2196 = vmul.f32 %v1876, %v2107
  %v2197 = vmul.f32 %v1877, %v2109
  %v2198 = vmul.f32 %v1878, %v2111
  %v2199 = vmul.f32 %v1879, %v2113
  %v2200 = vmul.f32 %v1880, %v2115
  %v2201 = vmul.f32 %v1881, %v2117
  %v2202 = vmul.f32 %v1882, %v2119
  %v2203 = vmul.f32 %v1883, %v2121
  %v2204 = vmul.f32 %v1884, %v2123
  %v2205 = vmul.f32 %v1885, %v2125
  %v2206 = vmul.f32 %v1886, %v2127
  %v2207 = vmul.f32 %v1887, %v2129
  %v2208 = vmul.f32 %v1888, %v2131
  %v2209 = vmul.f32 %v1889, %v2133
  %v2210 = vmul.f32 %v1890, %v2135
  %v2211 = vmul.f32 %v1891, %v2137
  %v2212 = vmul.f32 %v1892, %v2139
  %v2213 = vmul.f32 %v1893, %v2141
  %v2214 = vmul.f32 %v1894, %v2143
  %v2215 = vmul.f32 %v1895, %v2145
  %v2216 = vmul.f32 %v1896, %v2147
  %v2217 = vmul.f32 %v1897, %v2149
  %v2218 = vmul.f32 %v1898, %v2151
  %v2219 = vmul.f32 %v1899, %v2153
  %v2220 = vmul.f32 %v1900, %v2155
  %v2221 = vmul.f32 %v1901, %v2157
  %v2222 = vsub.f32 1.0, %v2158
  %v2223 = vsub.f32 1.0, %v2159
  %v2224 = vsub.f32 1.0, %v2160
  %v2225 = vsub.f32 1.0, %v2161
  %v2226 = vsub.f32 1.0, %v2162
  %v2227 = vsub.f32 1.0, %v2163
  %v2228 = vsub.f32 1.0, %v2164
  %v2229 = vsub.f32 1.0, %v2165
  %v2230 = vsub.f32 1.0, %v2166
  %v2231 = vsub.f32 1.0, %v2167
  %v2232 = vsub.f32 1.0, %v2168
  %v2233 = vsub.f32 1.0, %v2169
  %v2234 = vsub.f32 1.0, %v2170
  %v2235 = vsub.f32 1.0, %v2171
  %v2236 = vsub.f32 1.0, %v2172
  %v2237 = vsub.f32 1.0, %v2173
  %v2238 = vsub.f32 1.0, %v2174
  %v2239 = vsub.f32 1.0, %v2175
  %v2240 = vsub.f32 1.0, %v2176
  %v2241 = vsub.f32 1.0, %v2177
  %v2242 = vsub.f32 1.0, %v2178
  %v2243 = vsub.f32 1.0, %v2179
  %v2244 = vsub.f32 1.0, %v2180
  %v2245 = vsub.f32 1.0, %v2181
  %v2246 = vsub.f32 1.0, %v2182
  %v2247 = vsub.f32 1.0, %v2183
  %v2248 = vsub.f32 1.0, %v2184
  %v2249 = vsub.f32 1.0, %v2185
  %v2250 = vsub.f32 1.0, %v2186
  %v2251 = vsub.f32 1.0, %v2187
  %v2252 = vsub.f32 1.0, %v2188
  %v2253 = vsub.f32 1.0, %v2189
  %v2254 = vsub.f32 1.0, %v2190
  %v2255 = vsub.f32 1.0, %v2191
  %v2256 = vsub.f32 1.0, %v2192
  %v2257 = vsub.f32 1.0, %v2193
  %v2258 = vsub.f32 1.0, %v2194
  %v2259 = vsub.f32 1.0, %v2195
  %v2260 = vsub.f32 1.0, %v2196
  %v2261 = vsub.f32 1.0, %v2197
  %v2262 = vsub.f32 1.0, %v2198
  %v2263 = vsub.f32 1.0, %v2199
  %v2264 = vsub.f32 1.0, %v2200
  %v2265 = vsub.f32 1.0, %v2201
  %v2266 = vsub.f32 1.0, %v2202
  %v2267 = vsub.f32 1.0, %v2203
  %v2268 = vsub.f32 1.0, %v2204
  %v2269 = vsub.f32 1.0, %v2205
  %v2270 = vsub.f32 1.0, %v2206
  %v2271 = vsub.f32 1.0, %v2207
  %v2272 = vsub.f32 1.0, %v2208
  %v2273 = vsub.f32 1.0, %v2209
  %v2274 = vsub.f32 1.0, %v2210
  %v2275 = vsub.f32 1.0, %v2211
  %v2276 = vsub.f32 1.0, %v2212
  %v2277 = vsub.f32 1.0, %v2213
  %v2278 = vsub.f32 1.0, %v2214
  %v2279 = vsub.f32 1.0, %v2215
  %v2280 = vsub.f32 1.0, %v2216
  %v2281 = vsub.f32 1.0, %v2217
  %v2282 = vsub.f32 1.0, %v2218
  %v2283 = vsub.f32 1.0, %v2219
  %v2284 = vsub.f32 1.0, %v2220
  %v2285 = vsub.f32 1.0, %v2221
  %v2286 = vmul.f32 %v942, %v2222
  %v2287 = vmul.f32 %v943, %v2223
  %v2288 = vmul.f32 %v944, %v2224
  %v2289 = vmul.f32 %v945, %v2225
  %v2290 = vmul.f32 %v946, %v2226
  %v2291 = vmul.f32 %v947, %v2227
  %v2292 = vmul.f32 %v948, %v2228
  %v2293 = vmul.f32 %v949, %v2229
  %v2294 = vmul.f32 %v950, %v2230
  %v2295 = vmul.f32 %v951, %v2231
  %v2296 = vmul.f32 %v952, %v2232
  %v2297 = vmul.f32 %v953, %v2233
  %v2298 = vmul.f32 %v954, %v2234
  %v2299 = vmul.f32 %v955, %v2235
  %v2300 = vmul.f32 %v956, %v2236
  %v2301 = vmul.f32 %v957, %v2237
  %v2302 = vmul.f32 %v958, %v2238
  %v2303 = vmul.f32 %v959, %v2239
  %v2304 = vmul.f32 %v960, %v2240
  %v2305 = vmul.f32 %v961, %v2241
  %v2306 = vmul.f32 %v962, %v2242
  %v2307 = vmul.f32 %v963, %v2243
  %v2308 = vmul.f32 %v964, %v2244
  %v2309 = vmul.f32 %v965, %v2245
  %v2310 = vmul.f32 %v966, %v2246
  %v2311 = vmul.f32 %v967, %v2247
  %v2312 = vmul.f32 %v968, %v2248
  %v2313 = vmul.f32 %v969, %v2249
  %v2314 = vmul.f32 %v970, %v2250
  %v2315 = vmul.f32 %v971, %v2251
  %v2316 = vmul.f32 %v972, %v2252
  %v2317 = vmul.f32 %v973, %v2253
  %v2318 = vmul.f32 %v974, %v2254
  %v2319 = vmul.f32 %v975, %v2255
  %v2320 = vmul.f32 %v976, %v2256
  %v2321 = vmul.f32 %v977, %v2257
  %v2322 = vmul.f32 %v978, %v2258
  %v2323 = vmul.f32 %v979, %v2259
  %v2324 = vmul.f32 %v980, %v2260
  %v2325 = vmul.f32 %v981, %v2261
  %v2326 = vmul.f32 %v982, %v2262
  %v2327 = vmul.f32 %v983, %v2263
  %v2328 = vmul.f32 %v984, %v2264
  %v2329 = vmul.f32 %v985, %v2265
  %v2330 = vmul.f32 %v986, %v2266
  %v2331 = vmul.f32 %v987, %v2267
  %v2332 = vmul.f32 %v988, %v2268
  %v2333 = vmul.f32 %v989, %v2269
  %v2334 = vmul.f32 %v990, %v2270
  %v2335 = vmul.f32 %v991, %v2271
  %v2336 = vmul.f32 %v992, %v2272
  %v2337 = vmul.f32 %v993, %v2273
  %v2338 = vmul.f32 %v994, %v2274
  %v2339 = vmul.f32 %v995, %v2275
  %v2340 = vmul.f32 %v996, %v2276
  %v2341 = vmul.f32 %v997, %v2277
  %v2342 = vmul.f32 %v998, %v2278
  %v2343 = vmul.f32 %v999, %v2279
  %v2344 = vmul.f32 %v1000, %v2280
  %v2345 = vmul.f32 %v1001, %v2281
  %v2346 = vmul.f32 %v1002, %v2282
  %v2347 = vmul.f32 %v1003, %v2283
  %v2348 = vmul.f32 %v1004, %v2284
  %v2349 = vmul.f32 %v1005, %v2285
  %v2350 = vadd.f32 %v2286, 1.0
  %v2351 = vadd.f32 %v2287, 1.0
  %v2352 = vadd.f32 %v2288, 1.0
  %v2353 = vadd.f32 %v2289, 1.0
  %v2354 = vadd.f32 %v2290, 1.0
  %v2355 = vadd.f32 %v2291, 1.0
  %v2356 = vadd.f32 %v2292, 1.0
  %v2357 = vadd.f32 %v2293, 1.0
  %v2358 = vadd.f32 %v2294, 1.0
  %v2359 = vadd.f32 %v2295, 1.0
  %v2360 = vadd.f32 %v2296, 1.0
  %v2361 = vadd.f32 %v2297, 1.0
  %v2362 = vadd.f32 %v2298, 1.0
  %v2363 = vadd.f32 %v2299, 1.0
  %v2364 = vadd.f32 %v2300, 1.0
  %v2365 = vadd.f32 %v2301, 1.0
  %v2366 = vadd.f32 %v2302, 1.0
  %v2367 = vadd.f32 %v2303, 1.0
  %v2368 = vadd.f32 %v2304, 1.0
  %v2369 = vadd.f32 %v2305, 1.0
  %v2370 = vadd.f32 %v2306, 1.0
  %v2371 = vadd.f32 %v2307, 1.0
  %v2372 = vadd.f32 %v2308, 1.0
  %v2373 = vadd.f32 %v2309, 1.0
  %v2374 = vadd.f32 %v2310, 1.0
  %v2375 = vadd.f32 %v2311, 1.0
  %v2376 = vadd.f32 %v2312, 1.0
  %v2377 = vadd.f32 %v2313, 1.0
  %v2378 = vadd.f32 %v2314, 1.0
  %v2379 = vadd.f32 %v2315, 1.0
  %v2380 = vadd.f32 %v2316, 1.0
  %v2381 = vadd.f32 %v2317, 1.0
  %v2382 = vadd.f32 %v2318, 1.0
  %v2383 = vadd.f32 %v2319, 1.0
  %v2384 = vadd.f32 %v2320, 1.0
  %v2385 = vadd.f32 %v2321, 1.0
  %v2386 = vadd.f32 %v2322, 1.0
  %v2387 = vadd.f32 %v2323, 1.0
  %v2388 = vadd.f32 %v2324, 1.0
  %v2389 = vadd.f32 %v2325, 1.0
  %v2390 = vadd.f32 %v2326, 1.0
  %v2391 = vadd.f32 %v2327, 1.0
  %v2392 = vadd.f32 %v2328, 1.0
  %v2393 = vadd.f32 %v2329, 1.0
  %v2394 = vadd.f32 %v2330, 1.0
  %v2395 = vadd.f32 %v2331, 1.0
  %v2396 = vadd.f32 %v2332, 1.0
  %v2397 = vadd.f32 %v2333, 1.0
  %v2398 = vadd.f32 %v2334, 1.0
  %v2399 = vadd.f32 %v2335, 1.0
  %v2400 = vadd.f32 %v2336, 1.0
  %v2401 = vadd.f32 %v2337, 1.0
  %v2402 = vadd.f32 %v2338, 1.0
  %v2403 = vadd.f32 %v2339, 1.0
  %v2404 = vadd.f32 %v2340, 1.0
  %v2405 = vadd.f32 %v2341, 1.0
  %v2406 = vadd.f32 %v2342, 1.0
  %v2407 = vadd.f32 %v2343, 1.0
  %v2408 = vadd.f32 %v2344, 1.0
  %v2409 = vadd.f32 %v2345, 1.0
  %v2410 = vadd.f32 %v2346, 1.0
  %v2411 = vadd.f32 %v2347, 1.0
  %v2412 = vadd.f32 %v2348, 1.0
  %v2413 = vadd.f32 %v2349, 1.0
  %v2414 = vmul.f32 %v750, %v2350
  %v2415 = vmul.f32 %v751, %v2351
  %v2416 = vmul.f32 %v752, %v2352
  %v2417 = vmul.f32 %v753, %v2353
  %v2418 = vmul.f32 %v754, %v2354
  %v2419 = vmul.f32 %v755, %v2355
  %v2420 = vmul.f32 %v756, %v2356
  %v2421 = vmul.f32 %v757, %v2357
  %v2422 = vmul.f32 %v758, %v2358
  %v2423 = vmul.f32 %v759, %v2359
  %v2424 = vmul.f32 %v760, %v2360
  %v2425 = vmul.f32 %v761, %v2361
  %v2426 = vmul.f32 %v762, %v2362
  %v2427 = vmul.f32 %v763, %v2363
  %v2428 = vmul.f32 %v764, %v2364
  %v2429 = vmul.f32 %v765, %v2365
  %v2430 = vmul.f32 %v766, %v2366
  %v2431 = vmul.f32 %v767, %v2367
  %v2432 = vmul.f32 %v768, %v2368
  %v2433 = vmul.f32 %v769, %v2369
  %v2434 = vmul.f32 %v770, %v2370
  %v2435 = vmul.f32 %v771, %v2371
  %v2436 = vmul.f32 %v772, %v2372
  %v2437 = vmul.f32 %v773, %v2373
  %v2438 = vmul.f32 %v774, %v2374
  %v2439 = vmul.f32 %v775, %v2375
  %v2440 = vmul.f32 %v776, %v2376
  %v2441 = vmul.f32 %v777, %v2377
  %v2442 = vmul.f32 %v778, %v2378
  %v2443 = vmul.f32 %v779, %v2379
  %v2444 = vmul.f32 %v780, %v2380
  %v2445 = vmul.f32 %v781, %v2381
  %v2446 = vmul.f32 %v782, %v2382
  %v2447 = vmul.f32 %v783, %v2383
  %v2448 = vmul.f32 %v784, %v2384
  %v2449 = vmul.f32 %v785, %v2385
  %v2450 = vmul.f32 %v786, %v2386
  %v2451 = vmul.f32 %v787, %v2387
  %v2452 = vmul.f32 %v788, %v2388
  %v2453 = vmul.f32 %v789, %v2389
  %v2454 = vmul.f32 %v790, %v2390
  %v2455 = vmul.f32 %v791, %v2391
  %v2456 = vmul.f32 %v792, %v2392
  %v2457 = vmul.f32 %v793, %v2393
  %v2458 = vmul.f32 %v794, %v2394
  %v2459 = vmul.f32 %v795, %v2395
  %v2460 = vmul.f32 %v796, %v2396
  %v2461 = vmul.f32 %v797, %v2397
  %v2462 = vmul.f32 %v798, %v2398
  %v2463 = vmul.f32 %v799, %v2399
  %v2464 = vmul.f32 %v800, %v2400
  %v2465 = vmul.f32 %v801, %v2401
  %v2466 = vmul.f32 %v802, %v2402
  %v2467 = vmul.f32 %v803, %v2403
  %v2468 = vmul.f32 %v804, %v2404
  %v2469 = vmul.f32 %v805, %v2405
  %v2470 = vmul.f32 %v806, %v2406
  %v2471 = vmul.f32 %v807, %v2407
  %v2472 = vmul.f32 %v808, %v2408
  %v2473 = vmul.f32 %v809, %v2409
  %v2474 = vmul.f32 %v810, %v2410
  %v2475 = vmul.f32 %v811, %v2411
  %v2476 = vmul.f32 %v812, %v2412
  %v2477 = vmul.f32 %v813, %v2413
  %v2478 = vpack.c.bf16 %v2418, %v2414
  %v2479 = vpack.c.bf16 %v2419, %v2415
  %v2480 = vpack.c.bf16 %v2420, %v2416
  %v2481 = vpack.c.bf16 %v2421, %v2417
  %v2482 = vpack.c.bf16 %v2426, %v2422
  %v2483 = vpack.c.bf16 %v2427, %v2423
  %v2484 = vpack.c.bf16 %v2428, %v2424
  %v2485 = vpack.c.bf16 %v2429, %v2425
  %v2486 = vpack.c.bf16 %v2434, %v2430
  %v2487 = vpack.c.bf16 %v2435, %v2431
  %v2488 = vpack.c.bf16 %v2436, %v2432
  %v2489 = vpack.c.bf16 %v2437, %v2433
  %v2490 = vpack.c.bf16 %v2442, %v2438
  %v2491 = vpack.c.bf16 %v2443, %v2439
  %v2492 = vpack.c.bf16 %v2444, %v2440
  %v2493 = vpack.c.bf16 %v2445, %v2441
  %v2494 = vpack.c.bf16 %v2450, %v2446
  %v2495 = vpack.c.bf16 %v2451, %v2447
  %v2496 = vpack.c.bf16 %v2452, %v2448
  %v2497 = vpack.c.bf16 %v2453, %v2449
  %v2498 = vpack.c.bf16 %v2458, %v2454
  %v2499 = vpack.c.bf16 %v2459, %v2455
  %v2500 = vpack.c.bf16 %v2460, %v2456
  %v2501 = vpack.c.bf16 %v2461, %v2457
  %v2502 = vpack.c.bf16 %v2466, %v2462
  %v2503 = vpack.c.bf16 %v2467, %v2463
  %v2504 = vpack.c.bf16 %v2468, %v2464
  %v2505 = vpack.c.bf16 %v2469, %v2465
  %v2506 = vpack.c.bf16 %v2474, %v2470
  %v2507 = vpack.c.bf16 %v2475, %v2471
  %v2508 = vpack.c.bf16 %v2476, %v2472
  %v2509 = vpack.c.bf16 %v2477, %v2473
  %v2510 = vld [vmem:[#allocation2] sm:$0xff]
  %v2511 = vld [vmem:[#allocation2 + $0x8] sm:$0xff]
  %v2512 = vld [vmem:[#allocation2 + $0x10] sm:$0xff]
  %v2513 = vld [vmem:[#allocation2 + $0x18] sm:$0xff]
  %v2514 = vld [vmem:[#allocation2 + $0x20] sm:$0xff]
  %v2515 = vld [vmem:[#allocation2 + $0x28] sm:$0xff]
  %v2516 = vld [vmem:[#allocation2 + $0x30] sm:$0xff]
  %v2517 = vld [vmem:[#allocation2 + $0x38] sm:$0xff]
  %v2518 = vld [vmem:[#allocation2 + $0x40] sm:$0xff]
  %v2519 = vld [vmem:[#allocation2 + $0x48] sm:$0xff]
  %v2520 = vld [vmem:[#allocation2 + $0x50] sm:$0xff]
  %v2521 = vld [vmem:[#allocation2 + $0x58] sm:$0xff]
  %v2522 = vld [vmem:[#allocation2 + $0x60] sm:$0xff]
  %v2523 = vld [vmem:[#allocation2 + $0x68] sm:$0xff]
  %v2524 = vld [vmem:[#allocation2 + $0x70] sm:$0xff]
  %v2525 = vld [vmem:[#allocation2 + $0x78] sm:$0xff]
  %v2526 = vld [vmem:[%s5] sm:$0xf]
  %v2527 = vld [vmem:[%s5 + $0x4] sm:$0xf]
  %v2528 = vld [vmem:[%s5 + $0x8] sm:$0xf]
  %v2529 = vld [vmem:[%s5 + $0xc] sm:$0xf]
  %v2530 = vld [vmem:[%s5 + $0x10] sm:$0xf]
  %v2531 = vld [vmem:[%s5 + $0x14] sm:$0xf]
  %v2532 = vld [vmem:[%s5 + $0x18] sm:$0xf]
  %v2533 = vld [vmem:[%s5 + $0x1c] sm:$0xf]
  %v2534 = vld [vmem:[%s5 + $0x20] sm:$0xf]
  %v2535 = vld [vmem:[%s5 + $0x24] sm:$0xf]
  %v2536 = vld [vmem:[%s5 + $0x28] sm:$0xf]
  %v2537 = vld [vmem:[%s5 + $0x2c] sm:$0xf]
  %v2538 = vld [vmem:[%s5 + $0x30] sm:$0xf]
  %v2539 = vld [vmem:[%s5 + $0x34] sm:$0xf]
  %v2540 = vld [vmem:[%s5 + $0x38] sm:$0xf]
  %v2541 = vld [vmem:[%s5 + $0x3c] sm:$0xf]
  %v2542 = vld [vmem:[%s5 + $0x40] sm:$0xf]
  %v2543 = vld [vmem:[%s5 + $0x44] sm:$0xf]
  %v2544 = vld [vmem:[%s5 + $0x48] sm:$0xf]
  %v2545 = vld [vmem:[%s5 + $0x4c] sm:$0xf]
  %v2546 = vld [vmem:[%s5 + $0x50] sm:$0xf]
  %v2547 = vld [vmem:[%s5 + $0x54] sm:$0xf]
  %v2548 = vld [vmem:[%s5 + $0x58] sm:$0xf]
  %v2549 = vld [vmem:[%s5 + $0x5c] sm:$0xf]
  %v2550 = vld [vmem:[%s5 + $0x60] sm:$0xf]
  %v2551 = vld [vmem:[%s5 + $0x64] sm:$0xf]
  %v2552 = vld [vmem:[%s5 + $0x68] sm:$0xf]
  %v2553 = vld [vmem:[%s5 + $0x6c] sm:$0xf]
  %v2554 = vld [vmem:[%s5 + $0x70] sm:$0xf]
  %v2555 = vld [vmem:[%s5 + $0x74] sm:$0xf]
  %v2556 = vld [vmem:[%s5 + $0x78] sm:$0xf]
  %v2557 = vld [vmem:[%s5 + $0x7c] sm:$0xf]
  %v2558 = vld [vmem:[%s5 + $0x80] sm:$0xf]
  %v2559 = vld [vmem:[%s5 + $0x84] sm:$0xf]
  %v2560 = vld [vmem:[%s5 + $0x88] sm:$0xf]
  %v2561 = vld [vmem:[%s5 + $0x8c] sm:$0xf]
  %v2562 = vld [vmem:[%s5 + $0x90] sm:$0xf]
  %v2563 = vld [vmem:[%s5 + $0x94] sm:$0xf]
  %v2564 = vld [vmem:[%s5 + $0x98] sm:$0xf]
  %v2565 = vld [vmem:[%s5 + $0x9c] sm:$0xf]
  %v2566 = vld [vmem:[%s5 + $0xa0] sm:$0xf]
  %v2567 = vld [vmem:[%s5 + $0xa4] sm:$0xf]
  %v2568 = vld [vmem:[%s5 + $0xa8] sm:$0xf]
  %v2569 = vld [vmem:[%s5 + $0xac] sm:$0xf]
  %v2570 = vld [vmem:[%s5 + $0xb0] sm:$0xf]
  %v2571 = vld [vmem:[%s5 + $0xb4] sm:$0xf]
  %v2572 = vld [vmem:[%s5 + $0xb8] sm:$0xf]
  %v2573 = vld [vmem:[%s5 + $0xbc] sm:$0xf]
  %v2574 = vld [vmem:[%s5 + $0xc0] sm:$0xf]
  %v2575 = vld [vmem:[%s5 + $0xc4] sm:$0xf]
  %v2576 = vld [vmem:[%s5 + $0xc8] sm:$0xf]
  %v2577 = vld [vmem:[%s5 + $0xcc] sm:$0xf]
  %v2578 = vld [vmem:[%s5 + $0xd0] sm:$0xf]
  %v2579 = vld [vmem:[%s5 + $0xd4] sm:$0xf]
  %v2580 = vld [vmem:[%s5 + $0xd8] sm:$0xf]
  %v2581 = vld [vmem:[%s5 + $0xdc] sm:$0xf]
  %v2582 = vld [vmem:[%s5 + $0xe0] sm:$0xf]
  %v2583 = vld [vmem:[%s5 + $0xe4] sm:$0xf]
  %v2584 = vld [vmem:[%s5 + $0xe8] sm:$0xf]
  %v2585 = vld [vmem:[%s5 + $0xec] sm:$0xf]
  %v2586 = vld [vmem:[%s5 + $0xf0] sm:$0xf]
  %v2587 = vld [vmem:[%s5 + $0xf4] sm:$0xf]
  %v2588 = vld [vmem:[%s5 + $0xf8] sm:$0xf]
  %v2589 = vld [vmem:[%s5 + $0xfc] sm:$0xf]
  %v2654 = vunpack.c.l.b16 %v2526
  %v2655 = vunpack.c.l.b16 %v2527
  %v2656 = vunpack.c.l.b16 %v2528
  %v2657 = vunpack.c.l.b16 %v2529
  %v2658 = vunpack.c.l.b16 %v2530
  %v2659 = vunpack.c.l.b16 %v2531
  %v2660 = vunpack.c.l.b16 %v2532
  %v2661 = vunpack.c.l.b16 %v2533
  %v2662 = vunpack.c.l.b16 %v2534
  %v2663 = vunpack.c.l.b16 %v2535
  %v2664 = vunpack.c.l.b16 %v2536
  %v2665 = vunpack.c.l.b16 %v2537
  %v2666 = vunpack.c.l.b16 %v2538
  %v2667 = vunpack.c.l.b16 %v2539
  %v2668 = vunpack.c.l.b16 %v2540
  %v2669 = vunpack.c.l.b16 %v2541
  %v2670 = vunpack.c.l.b16 %v2542
  %v2671 = vunpack.c.l.b16 %v2543
  %v2672 = vunpack.c.l.b16 %v2544
  %v2673 = vunpack.c.l.b16 %v2545
  %v2674 = vunpack.c.l.b16 %v2546
  %v2675 = vunpack.c.l.b16 %v2547
  %v2676 = vunpack.c.l.b16 %v2548
  %v2677 = vunpack.c.l.b16 %v2549
  %v2678 = vunpack.c.l.b16 %v2550
  %v2679 = vunpack.c.l.b16 %v2551
  %v2680 = vunpack.c.l.b16 %v2552
  %v2681 = vunpack.c.l.b16 %v2553
  %v2682 = vunpack.c.l.b16 %v2554
  %v2683 = vunpack.c.l.b16 %v2555
  %v2684 = vunpack.c.l.b16 %v2556
  %v2685 = vunpack.c.l.b16 %v2557
  %v2686 = vunpack.c.l.b16 %v2558
  %v2687 = vunpack.c.l.b16 %v2559
  %v2688 = vunpack.c.l.b16 %v2560
  %v2689 = vunpack.c.l.b16 %v2561
  %v2690 = vunpack.c.l.b16 %v2562
  %v2691 = vunpack.c.l.b16 %v2563
  %v2692 = vunpack.c.l.b16 %v2564
  %v2693 = vunpack.c.l.b16 %v2565
  %v2694 = vunpack.c.l.b16 %v2566
  %v2695 = vunpack.c.l.b16 %v2567
  %v2696 = vunpack.c.l.b16 %v2568
  %v2697 = vunpack.c.l.b16 %v2569
  %v2698 = vunpack.c.l.b16 %v2570
  %v2699 = vunpack.c.l.b16 %v2571
  %v2700 = vunpack.c.l.b16 %v2572
  %v2701 = vunpack.c.l.b16 %v2573
  %v2702 = vunpack.c.l.b16 %v2574
  %v2703 = vunpack.c.l.b16 %v2575
  %v2704 = vunpack.c.l.b16 %v2576
  %v2705 = vunpack.c.l.b16 %v2577
  %v2706 = vunpack.c.l.b16 %v2578
  %v2707 = vunpack.c.l.b16 %v2579
  %v2708 = vunpack.c.l.b16 %v2580
  %v2709 = vunpack.c.l.b16 %v2581
  %v2710 = vunpack.c.l.b16 %v2582
  %v2711 = vunpack.c.l.b16 %v2583
  %v2712 = vunpack.c.l.b16 %v2584
  %v2713 = vunpack.c.l.b16 %v2585
  %v2714 = vunpack.c.l.b16 %v2586
  %v2715 = vunpack.c.l.b16 %v2587
  %v2716 = vunpack.c.l.b16 %v2588
  %v2717 = vunpack.c.l.b16 %v2589
  %v2718 = vpack.c.b16 %v2655, %v2654
  %v2719 = vpack.c.b16 %v2657, %v2656
  %v2720 = vpack.c.b16 %v2659, %v2658
  %v2721 = vpack.c.b16 %v2661, %v2660
  %v2722 = vpack.c.b16 %v2663, %v2662
  %v2723 = vpack.c.b16 %v2665, %v2664
  %v2724 = vpack.c.b16 %v2667, %v2666
  %v2725 = vpack.c.b16 %v2669, %v2668
  %v2726 = vpack.c.b16 %v2671, %v2670
  %v2727 = vpack.c.b16 %v2673, %v2672
  %v2728 = vpack.c.b16 %v2675, %v2674
  %v2729 = vpack.c.b16 %v2677, %v2676
  %v2730 = vpack.c.b16 %v2679, %v2678
  %v2731 = vpack.c.b16 %v2681, %v2680
  %v2732 = vpack.c.b16 %v2683, %v2682
  %v2733 = vpack.c.b16 %v2685, %v2684
  %v2734 = vpack.c.b16 %v2687, %v2686
  %v2735 = vpack.c.b16 %v2689, %v2688
  %v2736 = vpack.c.b16 %v2691, %v2690
  %v2737 = vpack.c.b16 %v2693, %v2692
  %v2738 = vpack.c.b16 %v2695, %v2694
  %v2739 = vpack.c.b16 %v2697, %v2696
  %v2740 = vpack.c.b16 %v2699, %v2698
  %v2741 = vpack.c.b16 %v2701, %v2700
  %v2742 = vpack.c.b16 %v2703, %v2702
  %v2743 = vpack.c.b16 %v2705, %v2704
  %v2744 = vpack.c.b16 %v2707, %v2706
  %v2745 = vpack.c.b16 %v2709, %v2708
  %v2746 = vpack.c.b16 %v2711, %v2710
  %v2747 = vpack.c.b16 %v2713, %v2712
  %v2748 = vpack.c.b16 %v2715, %v2714
  %v2749 = vpack.c.b16 %v2717, %v2716
  %2782 = vmatprep.subr.bf16.mxu0 0
  %2783 = vmatpush1.bf16.msra.mxu0 %v2718
  %2784 = vmatprep.subr.bf16.mxu0 0
  %2785 = vmatpush1.bf16.msra.mxu0 %v2719
  %2786 = vmatprep.subr.bf16.mxu0 0
  %2787 = vmatpush1.bf16.msra.mxu0 %v2720
  %2788 = vmatprep.subr.bf16.mxu0 0
  %2789 = vmatpush1.bf16.msra.mxu0 %v2721
  %2790 = vmatprep.subr.bf16.mxu0 0
  %2791 = vmatpush1.bf16.msra.mxu0 %v2722
  %2792 = vmatprep.subr.bf16.mxu0 0
  %2793 = vmatpush1.bf16.msra.mxu0 %v2723
  %2794 = vmatprep.subr.bf16.mxu0 0
  %2795 = vmatpush1.bf16.msra.mxu0 %v2724
  %2796 = vmatprep.subr.bf16.mxu0 0
  %2797 = vmatpush1.bf16.msra.mxu0 %v2725
  %2798 = vmatprep.subr.bf16.mxu0 0
  %2799 = vmatpush1.bf16.msra.mxu0 %v2726
  %2800 = vmatprep.subr.bf16.mxu0 0
  %2801 = vmatpush1.bf16.msra.mxu0 %v2727
  %2802 = vmatprep.subr.bf16.mxu0 0
  %2803 = vmatpush1.bf16.msra.mxu0 %v2728
  %2804 = vmatprep.subr.bf16.mxu0 0
  %2805 = vmatpush1.bf16.msra.mxu0 %v2729
  %2806 = vmatprep.subr.bf16.mxu0 0
  %2807 = vmatpush1.bf16.msra.mxu0 %v2730
  %2808 = vmatprep.subr.bf16.mxu0 0
  %2809 = vmatpush1.bf16.msra.mxu0 %v2731
  %2810 = vmatprep.subr.bf16.mxu0 0
  %2811 = vmatpush1.bf16.msra.mxu0 %v2732
  %2812 = vmatprep.subr.bf16.mxu0 0
  %2813 = vmatpush1.bf16.msra.mxu0 %v2733
  %2814 = vmatprep.mubr.bf16.mxu0 %v2479
  %2815 = vmatmul.mubr.bf16.gmra.mrb[0].mxu0 %v2478
  %v2816 = vpop.f32.mrb[0].mxu0
  %v2817 = vadd.f32 0.0, %v2816
  %v2818 = vpop.f32.mrb[0].mxu0
  %v2819 = vpop.f32.mrb[0].mxu0
  %v2820 = vadd.f32 0.0, %v2819
  %v2821 = vpop.f32.mrb[0].mxu0
  %2822 = vmatprep.mubr.bf16.mxu0 %v2483
  %2823 = vmatmul.mubr.bf16.gmra.mrb[0].mxu0 %v2482
  %v2824 = vpop.f32.mrb[0].mxu0
  %v2825 = vadd.f32 0.0, %v2824
  %v2826 = vpop.f32.mrb[0].mxu0
  %v2827 = vpop.f32.mrb[0].mxu0
  %v2828 = vadd.f32 0.0, %v2827
  %v2829 = vpop.f32.mrb[0].mxu0
  %2830 = vmatprep.mubr.bf16.mxu0 %v2487
  %2831 = vmatmul.mubr.bf16.gmra.mrb[0].mxu0 %v2486
  %v2832 = vpop.f32.mrb[0].mxu0
  %v2833 = vadd.f32 0.0, %v2832
  %v2834 = vpop.f32.mrb[0].mxu0
  %v2835 = vpop.f32.mrb[0].mxu0
  %v2836 = vadd.f32 0.0, %v2835
  %v2837 = vpop.f32.mrb[0].mxu0
  %2838 = vmatprep.mubr.bf16.mxu0 %v2491
  %2839 = vmatmul.mubr.bf16.gmra.mrb[0].mxu0 %v2490
  %v2840 = vpop.f32.mrb[0].mxu0
  %v2841 = vadd.f32 0.0, %v2840
  %v2842 = vpop.f32.mrb[0].mxu0
  %v2843 = vpop.f32.mrb[0].mxu0
  %v2844 = vadd.f32 0.0, %v2843
  %v2845 = vpop.f32.mrb[0].mxu0
  %2846 = vmatprep.mubr.bf16.mxu0 %v2495
  %2847 = vmatmul.mubr.bf16.gmra.mrb[0].mxu0 %v2494
  %v2848 = vpop.f32.mrb[0].mxu0
  %v2849 = vadd.f32 0.0, %v2848
  %v2850 = vpop.f32.mrb[0].mxu0
  %v2851 = vpop.f32.mrb[0].mxu0
  %v2852 = vadd.f32 0.0, %v2851
  %v2853 = vpop.f32.mrb[0].mxu0
  %2854 = vmatprep.mubr.bf16.mxu0 %v2499
  %2855 = vmatmul.mubr.bf16.gmra.mrb[0].mxu0 %v2498
  %v2856 = vpop.f32.mrb[0].mxu0
  %v2857 = vadd.f32 0.0, %v2856
  %v2858 = vpop.f32.mrb[0].mxu0
  %v2859 = vpop.f32.mrb[0].mxu0
  %v2860 = vadd.f32 0.0, %v2859
  %v2861 = vpop.f32.mrb[0].mxu0
  %2862 = vmatprep.mubr.bf16.mxu0 %v2503
  %2863 = vmatmul.mubr.bf16.gmra.mrb[0].mxu0 %v2502
  %v2864 = vpop.f32.mrb[0].mxu0
  %v2865 = vadd.f32 0.0, %v2864
  %v2866 = vpop.f32.mrb[0].mxu0
  %v2867 = vpop.f32.mrb[0].mxu0
  %v2868 = vadd.f32 0.0, %v2867
  %v2869 = vpop.f32.mrb[0].mxu0
  %2870 = vmatprep.mubr.bf16.mxu0 %v2507
  %2871 = vmatmul.mubr.bf16.gmra.mrb[0].mxu0 %v2506
  %v2872 = vpop.f32.mrb[0].mxu0
  %v2873 = vadd.f32 0.0, %v2872
  %v2874 = vpop.f32.mrb[0].mxu0
  %v2875 = vpop.f32.mrb[0].mxu0
  %v2876 = vadd.f32 0.0, %v2875
  %v2877 = vpop.f32.mrb[0].mxu0
  %2878 = vdwg.mxu0
  %2879 = vmatprep.subr.bf16.mxu0 0
  %2880 = vmatpush1.bf16.msra.mxu0 %v2734
  %2881 = vmatprep.subr.bf16.mxu0 0
  %2882 = vmatpush1.bf16.msra.mxu0 %v2735
  %2883 = vmatprep.subr.bf16.mxu0 0
  %2884 = vmatpush1.bf16.msra.mxu0 %v2736
  %2885 = vmatprep.subr.bf16.mxu0 0
  %2886 = vmatpush1.bf16.msra.mxu0 %v2737
  %2887 = vmatprep.subr.bf16.mxu0 0
  %2888 = vmatpush1.bf16.msra.mxu0 %v2738
  %2889 = vmatprep.subr.bf16.mxu0 0
  %2890 = vmatpush1.bf16.msra.mxu0 %v2739
  %2891 = vmatprep.subr.bf16.mxu0 0
  %2892 = vmatpush1.bf16.msra.mxu0 %v2740
  %2893 = vmatprep.subr.bf16.mxu0 0
  %2894 = vmatpush1.bf16.msra.mxu0 %v2741
  %2895 = vmatprep.subr.bf16.mxu0 0
  %2896 = vmatpush1.bf16.msra.mxu0 %v2742
  %2897 = vmatprep.subr.bf16.mxu0 0
  %2898 = vmatpush1.bf16.msra.mxu0 %v2743
  %2899 = vmatprep.subr.bf16.mxu0 0
  %2900 = vmatpush1.bf16.msra.mxu0 %v2744
  %2901 = vmatprep.subr.bf16.mxu0 0
  %2902 = vmatpush1.bf16.msra.mxu0 %v2745
  %2903 = vmatprep.subr.bf16.mxu0 0
  %2904 = vmatpush1.bf16.msra.mxu0 %v2746
  %2905 = vmatprep.subr.bf16.mxu0 0
  %2906 = vmatpush1.bf16.msra.mxu0 %v2747
  %2907 = vmatprep.subr.bf16.mxu0 0
  %2908 = vmatpush1.bf16.msra.mxu0 %v2748
  %2909 = vmatprep.subr.bf16.mxu0 0
  %2910 = vmatpush1.bf16.msra.mxu0 %v2749
  %2911 = vmatprep.mubr.bf16.mxu0 %v2481
  %2912 = vmatmul.mubr.bf16.gmra.mrb[0].mxu0 %v2480
  %v2913 = vpop.f32.mrb[0].mxu0
  %v2914 = vadd.f32 %v2817, %v2913
  %v2915 = vpop.f32.mrb[0].mxu0
  %v2916 = vpop.f32.mrb[0].mxu0
  %v2917 = vadd.f32 %v2820, %v2916
  %v2918 = vpop.f32.mrb[0].mxu0
  %2919 = vmatprep.mubr.bf16.mxu0 %v2485
  %2920 = vmatmul.mubr.bf16.gmra.mrb[0].mxu0 %v2484
  %v2921 = vpop.f32.mrb[0].mxu0
  %v2922 = vadd.f32 %v2825, %v2921
  %v2923 = vpop.f32.mrb[0].mxu0
  %v2924 = vpop.f32.mrb[0].mxu0
  %v2925 = vadd.f32 %v2828, %v2924
  %v2926 = vpop.f32.mrb[0].mxu0
  %2927 = vmatprep.mubr.bf16.mxu0 %v2489
  %2928 = vmatmul.mubr.bf16.gmra.mrb[0].mxu0 %v2488
  %v2929 = vpop.f32.mrb[0].mxu0
  %v2930 = vadd.f32 %v2833, %v2929
  %v2931 = vpop.f32.mrb[0].mxu0
  %v2932 = vpop.f32.mrb[0].mxu0
  %v2933 = vadd.f32 %v2836, %v2932
  %v2934 = vpop.f32.mrb[0].mxu0
  %2935 = vmatprep.mubr.bf16.mxu0 %v2493
  %2936 = vmatmul.mubr.bf16.gmra.mrb[0].mxu0 %v2492
  %v2937 = vpop.f32.mrb[0].mxu0
  %v2938 = vadd.f32 %v2841, %v2937
  %v2939 = vpop.f32.mrb[0].mxu0
  %v2940 = vpop.f32.mrb[0].mxu0
  %v2941 = vadd.f32 %v2844, %v2940
  %v2942 = vpop.f32.mrb[0].mxu0
  %2943 = vmatprep.mubr.bf16.mxu0 %v2497
  %2944 = vmatmul.mubr.bf16.gmra.mrb[0].mxu0 %v2496
  %v2945 = vpop.f32.mrb[0].mxu0
  %v2946 = vadd.f32 %v2849, %v2945
  %v2947 = vpop.f32.mrb[0].mxu0
  %v2948 = vpop.f32.mrb[0].mxu0
  %v2949 = vadd.f32 %v2852, %v2948
  %v2950 = vpop.f32.mrb[0].mxu0
  %2951 = vmatprep.mubr.bf16.mxu0 %v2501
  %2952 = vmatmul.mubr.bf16.gmra.mrb[0].mxu0 %v2500
  %v2953 = vpop.f32.mrb[0].mxu0
  %v2954 = vadd.f32 %v2857, %v2953
  %v2955 = vpop.f32.mrb[0].mxu0
  %v2956 = vpop.f32.mrb[0].mxu0
  %v2957 = vadd.f32 %v2860, %v2956
  %v2958 = vpop.f32.mrb[0].mxu0
  %2959 = vmatprep.mubr.bf16.mxu0 %v2505
  %2960 = vmatmul.mubr.bf16.gmra.mrb[0].mxu0 %v2504
  %v2961 = vpop.f32.mrb[0].mxu0
  %v2962 = vadd.f32 %v2865, %v2961
  %v2963 = vpop.f32.mrb[0].mxu0
  %v2964 = vpop.f32.mrb[0].mxu0
  %v2965 = vadd.f32 %v2868, %v2964
  %v2966 = vpop.f32.mrb[0].mxu0
  %2967 = vmatprep.mubr.bf16.mxu0 %v2509
  %2968 = vmatmul.mubr.bf16.gmra.mrb[0].mxu0 %v2508
  %v2969 = vpop.f32.mrb[0].mxu0
  %v2970 = vadd.f32 %v2873, %v2969
  %v2971 = vpop.f32.mrb[0].mxu0
  %v2972 = vpop.f32.mrb[0].mxu0
  %v2973 = vadd.f32 %v2876, %v2972
  %v2974 = vpop.f32.mrb[0].mxu0
  %2975 = vdwg.mxu0
  %v2976 = vadd.f32 %v2510, %v2914
  %v2977 = vadd.f32 %v2511, %v2917
  %v2978 = vadd.f32 %v2512, %v2922
  %v2979 = vadd.f32 %v2513, %v2925
  %v2980 = vadd.f32 %v2514, %v2930
  %v2981 = vadd.f32 %v2515, %v2933
  %v2982 = vadd.f32 %v2516, %v2938
  %v2983 = vadd.f32 %v2517, %v2941
  %v2984 = vadd.f32 %v2518, %v2946
  %v2985 = vadd.f32 %v2519, %v2949
  %v2986 = vadd.f32 %v2520, %v2954
  %v2987 = vadd.f32 %v2521, %v2957
  %v2988 = vadd.f32 %v2522, %v2962
  %v2989 = vadd.f32 %v2523, %v2965
  %v2990 = vadd.f32 %v2524, %v2970
  %v2991 = vadd.f32 %v2525, %v2973
  %2992 = vst [vmem:[#allocation2] sm:$0xff] %v2976
  %2993 = vst [vmem:[#allocation2 + $0x8] sm:$0xff] %v2977
  %2994 = vst [vmem:[#allocation2 + $0x10] sm:$0xff] %v2978
  %2995 = vst [vmem:[#allocation2 + $0x18] sm:$0xff] %v2979
  %2996 = vst [vmem:[#allocation2 + $0x20] sm:$0xff] %v2980
  %2997 = vst [vmem:[#allocation2 + $0x28] sm:$0xff] %v2981
  %2998 = vst [vmem:[#allocation2 + $0x30] sm:$0xff] %v2982
  %2999 = vst [vmem:[#allocation2 + $0x38] sm:$0xff] %v2983
  %3000 = vst [vmem:[#allocation2 + $0x40] sm:$0xff] %v2984
  %3001 = vst [vmem:[#allocation2 + $0x48] sm:$0xff] %v2985
  %3002 = vst [vmem:[#allocation2 + $0x50] sm:$0xff] %v2986
  %3003 = vst [vmem:[#allocation2 + $0x58] sm:$0xff] %v2987
  %3004 = vst [vmem:[#allocation2 + $0x60] sm:$0xff] %v2988
  %3005 = vst [vmem:[#allocation2 + $0x68] sm:$0xff] %v2989
  %3006 = vst [vmem:[#allocation2 + $0x70] sm:$0xff] %v2990
  %3007 = vst [vmem:[#allocation2 + $0x78] sm:$0xff] %v2991
  // Predicated region
  $region34: #{text_decoder_forward.24} parent=0 // pred_check
    %p3008 = pneg %p27
  $region35: #{text_decoder_forward.24} parent=0 // pred_check_branch
    %3010 = sbr.rel (%p3008) target = $region37
  $region36: #{text_decoder_forward.24} parent=0 // pred_region
    %v3011 = vld [vmem:[#allocation2] sm:$0xff]
    %v3012 = vld [vmem:[#allocation2 + $0x8] sm:$0xff]
    %v3013 = vld [vmem:[#allocation2 + $0x10] sm:$0xff]
    %v3014 = vld [vmem:[#allocation2 + $0x18] sm:$0xff]
    %v3015 = vld [vmem:[#allocation2 + $0x20] sm:$0xff]
    %v3016 = vld [vmem:[#allocation2 + $0x28] sm:$0xff]
    %v3017 = vld [vmem:[#allocation2 + $0x30] sm:$0xff]
    %v3018 = vld [vmem:[#allocation2 + $0x38] sm:$0xff]
    %v3019 = vld [vmem:[#allocation2 + $0x40] sm:$0xff]
    %v3020 = vld [vmem:[#allocation2 + $0x48] sm:$0xff]
    %v3021 = vld [vmem:[#allocation2 + $0x50] sm:$0xff]
    %v3022 = vld [vmem:[#allocation2 + $0x58] sm:$0xff]
    %v3023 = vld [vmem:[#allocation2 + $0x60] sm:$0xff]
    %v3024 = vld [vmem:[#allocation2 + $0x68] sm:$0xff]
    %v3025 = vld [vmem:[#allocation2 + $0x70] sm:$0xff]
    %v3026 = vld [vmem:[#allocation2 + $0x78] sm:$0xff]
    %v3027 = vld [vmem:[%s6] sm:$0x1]
    %v3029 = vlaneseq
    %v3030 = vshrl.u32 %v3029, 7
    %v3031 = vsub.s32 0, %v3030
    %v3032 = vrot.slane %v3027, %v3031
    %v3034 = vadd.f32 %v3011, %v3032
    %v3035 = vadd.f32 %v3012, %v3032
    %v3036 = vadd.f32 %v3013, %v3032
    %v3037 = vadd.f32 %v3014, %v3032
    %v3038 = vadd.f32 %v3015, %v3032
    %v3039 = vadd.f32 %v3016, %v3032
    %v3040 = vadd.f32 %v3017, %v3032
    %v3041 = vadd.f32 %v3018, %v3032
    %v3042 = vadd.f32 %v3019, %v3032
    %v3043 = vadd.f32 %v3020, %v3032
    %v3044 = vadd.f32 %v3021, %v3032
    %v3045 = vadd.f32 %v3022, %v3032
    %v3046 = vadd.f32 %v3023, %v3032
    %v3047 = vadd.f32 %v3024, %v3032
    %v3048 = vadd.f32 %v3025, %v3032
    %v3049 = vadd.f32 %v3026, %v3032
    %v3050 = vadd.f32 %v3034, %v63
    %v3051 = vadd.f32 %v3035, %v64
    %v3052 = vadd.f32 %v3036, %v65
    %v3053 = vadd.f32 %v3037, %v66
    %v3054 = vadd.f32 %v3038, %v67
    %v3055 = vadd.f32 %v3039, %v68
    %v3056 = vadd.f32 %v3040, %v69
    %v3057 = vadd.f32 %v3041, %v70
    %v3058 = vadd.f32 %v3042, %v71
    %v3059 = vadd.f32 %v3043, %v72
    %v3060 = vadd.f32 %v3044, %v73
    %v3061 = vadd.f32 %v3045, %v74
    %v3062 = vadd.f32 %v3046, %v75
    %v3063 = vadd.f32 %v3047, %v76
    %v3064 = vadd.f32 %v3048, %v77
    %v3065 = vadd.f32 %v3049, %v78
    %v3066 = vpack.c.bf16 %v3051, %v3050
    %v3067 = vpack.c.bf16 %v3053, %v3052
    %v3068 = vpack.c.bf16 %v3055, %v3054
    %v3069 = vpack.c.bf16 %v3057, %v3056
    %v3070 = vpack.c.bf16 %v3059, %v3058
    %v3071 = vpack.c.bf16 %v3061, %v3060
    %v3072 = vpack.c.bf16 %v3063, %v3062
    %v3073 = vpack.c.bf16 %v3065, %v3064
    %v3082 = vunpack.c.l.b16 %v3066
    %v3083 = vunpack.c.h.b16 %v3066
    %v3084 = vunpack.c.l.b16 %v3067
    %v3085 = vunpack.c.h.b16 %v3067
    %v3086 = vunpack.c.l.b16 %v3068
    %v3087 = vunpack.c.h.b16 %v3068
    %v3088 = vunpack.c.l.b16 %v3069
    %v3089 = vunpack.c.h.b16 %v3069
    %v3090 = vunpack.c.l.b16 %v3070
    %v3091 = vunpack.c.h.b16 %v3070
    %v3092 = vunpack.c.l.b16 %v3071
    %v3093 = vunpack.c.h.b16 %v3071
    %v3094 = vunpack.c.l.b16 %v3072
    %v3095 = vunpack.c.h.b16 %v3072
    %v3096 = vunpack.c.l.b16 %v3073
    %v3097 = vunpack.c.h.b16 %v3073
    %v3098 = vpack.c.b16 %v3082, %v3082
    %v3099 = vpack.c.b16 %v3083, %v3083
    %v3100 = vpack.c.b16 %v3084, %v3084
    %v3101 = vpack.c.b16 %v3085, %v3085
    %v3102 = vpack.c.b16 %v3086, %v3086
    %v3103 = vpack.c.b16 %v3087, %v3087
    %v3104 = vpack.c.b16 %v3088, %v3088
    %v3105 = vpack.c.b16 %v3089, %v3089
    %v3106 = vpack.c.b16 %v3090, %v3090
    %v3107 = vpack.c.b16 %v3091, %v3091
    %v3108 = vpack.c.b16 %v3092, %v3092
    %v3109 = vpack.c.b16 %v3093, %v3093
    %v3110 = vpack.c.b16 %v3094, %v3094
    %v3111 = vpack.c.b16 %v3095, %v3095
    %v3112 = vpack.c.b16 %v3096, %v3096
    %v3113 = vpack.c.b16 %v3097, %v3097
    %3130 = vst [vmem:[%s7] sm:$0xf] %v3098
    %3131 = vst [vmem:[%s7 + $0x4] sm:$0xf] %v3099
    %3132 = vst [vmem:[%s7 + $0x8] sm:$0xf] %v3100
    %3133 = vst [vmem:[%s7 + $0xc] sm:$0xf] %v3101
    %3134 = vst [vmem:[%s7 + $0x10] sm:$0xf] %v3102
    %3135 = vst [vmem:[%s7 + $0x14] sm:$0xf] %v3103
    %3136 = vst [vmem:[%s7 + $0x18] sm:$0xf] %v3104
    %3137 = vst [vmem:[%s7 + $0x1c] sm:$0xf] %v3105
    %3138 = vst [vmem:[%s7 + $0x20] sm:$0xf] %v3106
    %3139 = vst [vmem:[%s7 + $0x24] sm:$0xf] %v3107
    %3140 = vst [vmem:[%s7 + $0x28] sm:$0xf] %v3108
    %3141 = vst [vmem:[%s7 + $0x2c] sm:$0xf] %v3109
    %3142 = vst [vmem:[%s7 + $0x30] sm:$0xf] %v3110
    %3143 = vst [vmem:[%s7 + $0x34] sm:$0xf] %v3111
    %3144 = vst [vmem:[%s7 + $0x38] sm:$0xf] %v3112
    %3145 = vst [vmem:[%s7 + $0x3c] sm:$0xf] %v3113
  $region37: #{text_decoder_forward.24} parent=0 // pred_fallthru
    _
  // Predicated region
  $region38: #{text_decoder_forward.24} parent=0 // pred_check
    _
  $region39: #{text_decoder_forward.24} parent=0 // pred_check_branch
    %3147 = sbr.rel (0) target = $region41
  $region40: #{text_decoder_forward.24} parent=0 // pred_region
    _
  $region41: #{text_decoder_forward.24} parent=0 // pred_fallthru
    _
  // Predicated region
  $region42: #{text_decoder_forward.24} parent=0 // pred_check
    _
  $region43: #{text_decoder_forward.24} parent=0 // pred_check_branch
    %3149 = sbr.rel (0) target = $region45
  $region44: #{text_decoder_forward.24} parent=0 // pred_region
    _
  $region45: #{text_decoder_forward.24} parent=0 // pred_fallthru
    _

</llo_original>
